<compile_context>
chip_gen: v7x
topology: tpu7x:2x2x1
jax: 0.10.0
libtpu: 0.0.40
codegen_flags: <defaults>
</compile_context>

<pallas_src>
import functools

import jax
import jax.numpy as jnp
from jax.experimental import pallas as pl
from jax.experimental.pallas import tpu as pltpu

_CP = 16                            # channel padding unit (full bf16 sublane tile)
_VMEM_LIMIT = 32 * 1024 * 1024      # safe on v5e/v6e (128 MiB) and v7x (64 MiB)


def _round_up(x, m):
    return (x + m - 1) // m * m


# -----------------------------------------------------------------------------
# Pallas kernels
# -----------------------------------------------------------------------------
def _tap_offsets(wp):
    """Lane offsets of the 9 conv taps inside the margin-padded lane-packed batch."""
    margin = wp + 1
    return [margin + (dy - 1) * wp + (dx - 1) for dy in range(3) for dx in range(3)]


def _stack_taps(x, offsets, n_lanes):
    """(C, margin + N*Hp*Wp + margin) -> (9*C, N*Hp*Wp): im2col along the sublanes.

    For interior output pixels, tap (dy,dx) of the zero-ring-padded image is a
    constant lane shift of the packed batch; cross-image garbage only lands on
    padding-ring pixels, which are masked out of the BN statistics and cropped
    (or re-zeroed) before any downstream use.
    """
    return jnp.concatenate([x[:, o:o + n_lanes] for o in offsets], axis=0)


def _make_conv_bn_lrelu_kernel(*, wp, n_lanes, inv_count, has_skip):
    """3x3 conv (+ fused channel-concat skip) + BatchNorm(train) + LeakyReLU(0.2).

    Whole batch per invocation:
      x refs : (Cin_pad, margin + N*Hp*Wp + margin) bf16
      w ref  : (Cout_pad, 9*Cin_pad_z [+ 9*Cin_pad_s]) bf16, columns ordered (tap, cin)
      g/b    : (Cout_pad, 1) f32
      mask   : (1, N*Hp*Wp) f32, 1.0 at interior pixels
      out    : (Cout_pad, N*Hp*Wp) bf16
    """
    offsets = _tap_offsets(wp)

    def kernel(*args):
        if has_skip:
            xz_ref, xs_ref, w_ref, g_ref, b_ref, m_ref, o_ref = args
        else:
            xz_ref, w_ref, g_ref, b_ref, m_ref, o_ref = args

        ops = _stack_taps(xz_ref[...], offsets, n_lanes)
        if has_skip:                                   # fused channel-concat skip
            ops = jnp.concatenate(
                [ops, _stack_taps(xs_ref[...], offsets, n_lanes)], axis=0)
        y = jnp.dot(w_ref[...], ops, preferred_element_type=jnp.float32)

        mask = m_ref[...]                              # (1, N*Hp*Wp)
        mean = jnp.sum(y * mask, axis=1, keepdims=True) * inv_count
        d = (y - mean) * mask                          # mean-subtracted variance
        var = jnp.sum(d * d, axis=1, keepdims=True) * inv_count
        inv = jax.lax.rsqrt(var + 1e-5)
        scale = g_ref[...] * inv
        shift = b_ref[...] - mean * scale
        yn = y * scale + shift                         # folded BN (mul + add)
        act = jnp.where(yn >= 0.0, yn, 0.2 * yn)       # LeakyReLU(0.2)
        # Padding-ring lanes hold junk but are cropped by the host-side unpack.
        o_ref[...] = act.astype(o_ref.dtype)

    return kernel


def _make_conv_bn_lrelu_conv_tanh_kernel(*, wp, n_lanes, inv_count):
    """conv41(+skip) + BN + LReLU fused with conv42 + tanh (no HBM round trip)."""
    offsets = _tap_offsets(wp)
    margin = wp + 1

    def kernel(xz_ref, xs_ref, w41_ref, g_ref, b_ref, w42_ref, m_ref, o_ref, act_ref):
        ops = jnp.concatenate([_stack_taps(xz_ref[...], offsets, n_lanes),
                               _stack_taps(xs_ref[...], offsets, n_lanes)], axis=0)
        y = jnp.dot(w41_ref[...], ops, preferred_element_type=jnp.float32)

        mask = m_ref[...]
        mean = jnp.sum(y * mask, axis=1, keepdims=True) * inv_count
        d = (y - mean) * mask
        var = jnp.sum(d * d, axis=1, keepdims=True) * inv_count
        inv = jax.lax.rsqrt(var + 1e-5)
        scale = g_ref[...] * inv
        shift = b_ref[...] - mean * scale
        yn = y * scale + shift
        act = jnp.where(yn >= 0.0, yn, 0.2 * yn) * mask   # conv42 needs the zero ring

        # Re-add the lane margin in a VMEM scratch and run conv42's taps + tanh.
        act_ref[...] = jnp.zeros_like(act_ref)
        act_ref[:, margin:margin + n_lanes] = act.astype(act_ref.dtype)
        ops2 = _stack_taps(act_ref[...], offsets, n_lanes)
        y2 = jnp.dot(w42_ref[...], ops2, preferred_element_type=jnp.float32)
        o_ref[...] = jnp.tanh(y2)

    return kernel


# -----------------------------------------------------------------------------
# pallas_call wrappers (whole batch per invocation; everything resident in VMEM)
# -----------------------------------------------------------------------------
def _vmem_specs(n):
    return [pl.BlockSpec(memory_space=pltpu.MemorySpace.VMEM) for _ in range(n)]


def conv_bn_lrelu(xz, wk, gamma, beta, mask, *, n_img, h, w, xs=None):
    wp = w + 2
    n_lanes = n_img * (h + 2) * wp
    cop = wk.shape[0]
    kernel = _make_conv_bn_lrelu_kernel(
        wp=wp, n_lanes=n_lanes, inv_count=1.0 / float(n_img * h * w),
        has_skip=xs is not None)
    operands = [xz] + ([xs] if xs is not None else []) + [wk, gamma, beta, mask]
    return pl.pallas_call(
        kernel,
        out_shape=jax.ShapeDtypeStruct((cop, n_lanes), jnp.bfloat16),
        in_specs=_vmem_specs(len(operands)),
        out_specs=pl.BlockSpec(memory_space=pltpu.MemorySpace.VMEM),
        compiler_params=pltpu.CompilerParams(vmem_limit_bytes=_VMEM_LIMIT),
    )(*operands)


def conv_bn_lrelu_conv_tanh(xz, xs, w41, gamma, beta, w42, mask, *, n_img, h, w):
    wp = w + 2
    margin = wp + 1
    n_lanes = n_img * (h + 2) * wp
    c4p = w42.shape[1] // 9
    ocp = w42.shape[0]
    kernel = _make_conv_bn_lrelu_conv_tanh_kernel(
        wp=wp, n_lanes=n_lanes, inv_count=1.0 / float(n_img * h * w))
    return pl.pallas_call(
        kernel,
        out_shape=jax.ShapeDtypeStruct((ocp, n_lanes), jnp.float32),
        in_specs=_vmem_specs(7),
        out_specs=pl.BlockSpec(memory_space=pltpu.MemorySpace.VMEM),
        scratch_shapes=[pltpu.VMEM((c4p, n_lanes + 2 * margin), jnp.bfloat16)],
        compiler_params=pltpu.CompilerParams(vmem_limit_bytes=_VMEM_LIMIT),
    )(xz, xs, w41, gamma, beta, w42, mask)


# -----------------------------------------------------------------------------
# XLA glue (cheap data movement, no gathers)
# -----------------------------------------------------------------------------
def _avgpool2(x):  # NCHW
    n, c, h, w = x.shape
    return x.reshape(n, c, h // 2, 2, w // 2, 2).mean(axis=(3, 5))


def _upsample2x(x):
    """F.interpolate(scale_factor=2, 'bilinear', align_corners=False), closed form."""
    n, c, h, w = x.shape
    prev = jnp.concatenate([x[:, :, :1, :], x[:, :, :-1, :]], axis=2)
    nxt = jnp.concatenate([x[:, :, 1:, :], x[:, :, -1:, :]], axis=2)
    x = jnp.stack([0.75 * x + 0.25 * prev, 0.75 * x + 0.25 * nxt], axis=3)
    x = x.reshape(n, c, 2 * h, w)
    prev = jnp.concatenate([x[:, :, :, :1], x[:, :, :, :-1]], axis=3)
    nxt = jnp.concatenate([x[:, :, :, 1:], x[:, :, :, -1:]], axis=3)
    x = jnp.stack([0.75 * x + 0.25 * prev, 0.75 * x + 0.25 * nxt], axis=4)
    return x.reshape(n, c, 2 * h, 2 * w)


def _interior_mask(n_img, h, w):
    m = jnp.pad(jnp.ones((h, w), jnp.float32), 1).reshape(-1)     # (Hp*Wp,)
    return jnp.tile(m, n_img).reshape(1, -1)                      # (1, N*Hp*Wp)


def _pack_lanes(x, c_pad):
    """NCHW f32 -> (c_pad, margin + N*Hp*Wp + margin) bf16 lane-packed batch."""
    n, c, h, w = x.shape
    hp, wp = h + 2, w + 2
    margin = wp + 1
    x = jnp.pad(x, ((0, 0), (0, c_pad - c), (1, 1), (1, 1)))       # channels + ring
    x = jnp.transpose(x, (1, 0, 2, 3)).reshape(c_pad, n * hp * wp)
    x = jnp.pad(x, ((0, 0), (margin, margin)))                     # tap-shift margin
    return x.astype(jnp.bfloat16)


def _unpack_lanes(y, n_img, h, w):
    """(C, N*Hp*Wp) -> NCHW interior (f32)."""
    c = y.shape[0]
    y = y.reshape(c, n_img, h + 2, w + 2)
    return jnp.transpose(y, (1, 0, 2, 3))[:, :, 1:h + 1, 1:w + 1].astype(jnp.float32)


# -----------------------------------------------------------------------------
# Parameters (PyTorch Conv2d-style uniform init, rearranged/padded for the kernels)
# -----------------------------------------------------------------------------
def init_params(key, ngf, in_nc, out_nc):
    cpi = _round_up(in_nc, _CP)
    c11, c21, c31, c41 = 4 * ngf, 3 * ngf, 2 * ngf, ngf
    c11p, c21p, c31p, c41p = (_round_up(c, _CP) for c in (c11, c21, c31, c41))
    cop = _round_up(out_nc, _CP)

    def torch_conv_w(k, cout, cin):
        bound = 1.0 / float(cin * 9) ** 0.5
        return jax.random.uniform(k, (cout, cin, 3, 3), jnp.float32, -bound, bound)

    def to_layout(w_t, cin_pad, cout_pad):
        # (Cout, Cin, 3, 3) -> (Cout_pad, 9*Cin_pad); column index = tap*Cin_pad + cin
        # with tap = dy*3 + dx.  Zero padding rows/cols are exact.
        cout, cin = w_t.shape[:2]
        w = jnp.transpose(w_t, (0, 2, 3, 1))                      # (Cout, dy, dx, Cin)
        w = jnp.pad(w, ((0, cout_pad - cout), (0, 0), (0, 0), (0, cin_pad - cin)))
        return w.reshape(cout_pad, 9 * cin_pad).astype(jnp.bfloat16)

    ks = jax.random.split(key, 5)
    p = {}

    w = torch_conv_w(ks[0], c11, in_nc)
    p["w11"] = to_layout(w, cpi, c11p)
    p["g11"] = jnp.ones((c11p, 1), jnp.float32)
    p["b11"] = jnp.zeros((c11p, 1), jnp.float32)

    w = torch_conv_w(ks[1], c21, c11 + in_nc)           # cat(z, I8) -> split along Cin
    p["w21z"] = to_layout(w[:, :c11], c11p, c21p)
    p["w21s"] = to_layout(w[:, c11:], cpi, c21p)
    p["g21"] = jnp.ones((c21p, 1), jnp.float32)
    p["b21"] = jnp.zeros((c21p, 1), jnp.float32)

    w = torch_conv_w(ks[2], c31, c21 + in_nc)
    p["w31z"] = to_layout(w[:, :c21], c21p, c31p)
    p["w31s"] = to_layout(w[:, c21:], cpi, c31p)
    p["g31"] = jnp.ones((c31p, 1), jnp.float32)
    p["b31"] = jnp.zeros((c31p, 1), jnp.float32)

    w = torch_conv_w(ks[3], c41, c31 + in_nc)
    p["w41z"] = to_layout(w[:, :c31], c31p, c41p)
    p["w41s"] = to_layout(w[:, c31:], cpi, c41p)
    p["g41"] = jnp.ones((c41p, 1), jnp.float32)
    p["b41"] = jnp.zeros((c41p, 1), jnp.float32)

    w = torch_conv_w(ks[4], out_nc, c41)
    p["w42"] = to_layout(w, c41p, cop)
    return p


# -----------------------------------------------------------------------------
# Full forward pass (mirrors _netT32.forward)
# -----------------------------------------------------------------------------
@functools.partial(jax.jit, static_argnames=("out_nc",))
def net_t32_forward(x_nchw, params, *, out_nc):
    x = x_nchw.astype(jnp.float32)
    n_img, _, hw, _ = x.shape

    i32 = x
    i16 = _avgpool2(i32)
    i8 = _avgpool2(i16)
    i4 = _avgpool2(i8)

    # level 1: conv11 + BN + LReLU on I4
    h = hw // 8
    z = conv_bn_lrelu(_pack_lanes(i4, params["w11"].shape[1] // 9),
                      params["w11"], params["g11"], params["b11"],
                      _interior_mask(n_img, h, h), n_img=n_img, h=h, w=h)

    # levels 2-3: x2 bilinear upsample -> (fused channel-concat skip) conv + BN + LReLU
    for skip_img, name in ((i8, "21"), (i16, "31")):
        z = _upsample2x(_unpack_lanes(z, n_img, h, h))
        h *= 2
        wz, ws = params["w%sz" % name], params["w%ss" % name]
        z = conv_bn_lrelu(_pack_lanes(z, wz.shape[1] // 9),
                          jnp.concatenate([wz, ws], axis=1),
                          params["g%s" % name], params["b%s" % name],
                          _interior_mask(n_img, h, h), n_img=n_img, h=h, w=h,
                          xs=_pack_lanes(skip_img, ws.shape[1] // 9))

    # level 4 (conv41 + BN + LReLU) fused with conv42 + tanh in one pallas_call
    z = _upsample2x(_unpack_lanes(z, n_img, h, h))
    h = hw
    wz, ws = params["w41z"], params["w41s"]
    out = conv_bn_lrelu_conv_tanh(
        _pack_lanes(z, wz.shape[1] // 9), _pack_lanes(i32, ws.shape[1] // 9),
        jnp.concatenate([wz, ws], axis=1), params["g41"], params["b41"],
        params["w42"], _interior_mask(n_img, h, h), n_img=n_img, h=h, w=h)
    return _unpack_lanes(out, n_img, h, h)[:, :out_nc]             # NCHW


# -----------------------------------------------------------------------------
# Pure-JAX reference (f32 im2col conv, gather-based upsample) for a numeric check
# -----------------------------------------------------------------------------
def _ref_conv3x3(x, w_packed):
    """x: NCHW f32; w_packed: (Cout_pad, 9*Cin_pad) bf16 with columns (tap, cin)."""
    n, c, h, w = x.shape
    cop, kc = w_packed.shape
    cinp = kc // 9
    w3 = w_packed.astype(jnp.float32).reshape(cop, 9, cinp)
    xq = x.astype(jnp.bfloat16).astype(jnp.float32)     # mirror the kernels' bf16 inputs
    xp = jnp.pad(xq, ((0, 0), (0, cinp - c), (1, 1), (1, 1)))
    cols = jnp.stack([xp[:, :, dy:dy + h, dx:dx + w]
                      for dy in range(3) for dx in range(3)], axis=1)
    return jnp.einsum('okc,nkchw->nohw', w3, cols)


def _ref_bn_lrelu(y, gamma, beta):
    mean = y.mean(axis=(0, 2, 3), keepdims=True)
    var = ((y - mean) ** 2).mean(axis=(0, 2, 3), keepdims=True)
    yn = (y - mean) * jax.lax.rsqrt(var + 1e-5)
    yn = yn * gamma.reshape(1, -1, 1, 1) + beta.reshape(1, -1, 1, 1)
    return jnp.where(yn >= 0.0, yn, 0.2 * yn)


def _upsample2x_ref(x):
    n, c, h, w = x.shape

    def coords(out_size, in_size):
        src = (jnp.arange(out_size, dtype=jnp.float32) + 0.5) * (in_size / out_size) - 0.5
        src = jnp.maximum(src, 0.0)
        i0 = jnp.minimum(jnp.floor(src).astype(jnp.int32), in_size - 1)
        i1 = jnp.minimum(i0 + 1, in_size - 1)
        w1 = src - i0.astype(jnp.float32)
        return i0, i1, 1.0 - w1, w1

    i0h, i1h, w0h, w1h = coords(2 * h, h)
    i0w, i1w, w0w, w1w = coords(2 * w, w)
    xh = (x[:, :, i0h, :] * w0h[None, None, :, None]
          + x[:, :, i1h, :] * w1h[None, None, :, None])
    return (xh[:, :, :, i0w] * w0w[None, None, None, :]
            + xh[:, :, :, i1w] * w1w[None, None, None, :])


def _ref_forward(x, params, *, out_nc):
    x = x.astype(jnp.float32)
    i32 = x
    i16 = _avgpool2(i32)
    i8 = _avgpool2(i16)
    i4 = _avgpool2(i8)
    z = _ref_bn_lrelu(_ref_conv3x3(i4, params["w11"]), params["g11"], params["b11"])
    z = _upsample2x_ref(z)
    z = _ref_bn_lrelu(_ref_conv3x3(z, params["w21z"]) + _ref_conv3x3(i8, params["w21s"]),
                      params["g21"], params["b21"])
    z = _upsample2x_ref(z)
    z = _ref_bn_lrelu(_ref_conv3x3(z, params["w31z"]) + _ref_conv3x3(i16, params["w31s"]),
                      params["g31"], params["b31"])
    z = _upsample2x_ref(z)
    z = _ref_bn_lrelu(_ref_conv3x3(z, params["w41z"]) + _ref_conv3x3(i32, params["w41s"]),
                      params["g41"], params["b41"])
    z = jnp.tanh(_ref_conv3x3(z, params["w42"]))
    return z[:, :out_nc]


if __name__ == "__main__":
    ngf, in_nc, out_nc = 4, 3, 3
    batch, hw = 2, 32      # spatial must be divisible by 8 (three AvgPool(2) stages)

    key = jax.random.PRNGKey(0)
    k_param, k_input = jax.random.split(key)
    params = init_params(k_param, ngf, in_nc, out_nc)
    x = jax.random.normal(k_input, (batch, in_nc, hw, hw), dtype=jnp.float32)

    out = jax.block_until_ready(net_t32_forward(x, params, out_nc=out_nc))

    assert out.shape == (batch, out_nc, hw, hw), out.shape
    assert bool(jnp.all(jnp.isfinite(out)))
    assert bool(jnp.all(jnp.abs(out) <= 1.0))      # tanh range

    ref = jax.block_until_ready(
        jax.jit(functools.partial(_ref_forward, out_nc=out_nc))(x, params))
    max_err = float(jnp.max(jnp.abs(out - ref)))
    assert max_err < 0.1, "max abs err vs reference: %g" % max_err

    print("KERNEL_OK")
</pallas_src>

<mosaic_0001>
module attributes {stable_mosaic.version = 11 : i64} {
  func.func @kernel(%arg0: memref<16x86xbf16, #tpu.memory_space<vmem>>, %arg1: memref<16x144xbf16, #tpu.memory_space<vmem>>, %arg2: memref<16x1xf32, #tpu.memory_space<vmem>>, %arg3: memref<16x1xf32, #tpu.memory_space<vmem>>, %arg4: memref<1x72xf32, #tpu.memory_space<vmem>>, %arg5: memref<16x72xbf16, #tpu.memory_space<vmem>>) attributes {dimension_semantics = [], scalar_prefetch = 0 : i64, scratch_operands = 0 : i64, tpu.core_type = #tpu.core_type<tc>} {
    %c0 = arith.constant 0 : index
    %c0_0 = arith.constant 0 : index
    %0 = vector.load %arg0[%c0, %c0_0] : memref<16x86xbf16, #tpu.memory_space<vmem>>, vector<16x86xbf16>
    %1 = vector.extract_strided_slice %0 {offsets = [0, 0], sizes = [16, 72], strides = [1, 1]} : vector<16x86xbf16> to vector<16x72xbf16>
    %2 = vector.extract_strided_slice %0 {offsets = [0, 1], sizes = [16, 72], strides = [1, 1]} : vector<16x86xbf16> to vector<16x72xbf16>
    %3 = vector.extract_strided_slice %0 {offsets = [0, 2], sizes = [16, 72], strides = [1, 1]} : vector<16x86xbf16> to vector<16x72xbf16>
    %4 = vector.extract_strided_slice %0 {offsets = [0, 6], sizes = [16, 72], strides = [1, 1]} : vector<16x86xbf16> to vector<16x72xbf16>
    %5 = vector.extract_strided_slice %0 {offsets = [0, 7], sizes = [16, 72], strides = [1, 1]} : vector<16x86xbf16> to vector<16x72xbf16>
    %6 = vector.extract_strided_slice %0 {offsets = [0, 8], sizes = [16, 72], strides = [1, 1]} : vector<16x86xbf16> to vector<16x72xbf16>
    %7 = vector.extract_strided_slice %0 {offsets = [0, 12], sizes = [16, 72], strides = [1, 1]} : vector<16x86xbf16> to vector<16x72xbf16>
    %8 = vector.extract_strided_slice %0 {offsets = [0, 13], sizes = [16, 72], strides = [1, 1]} : vector<16x86xbf16> to vector<16x72xbf16>
    %9 = vector.extract_strided_slice %0 {offsets = [0, 14], sizes = [16, 72], strides = [1, 1]} : vector<16x86xbf16> to vector<16x72xbf16>
    %10 = tpu.concatenate %1, %2, %3, %4, %5, %6, %7, %8, %9 in 0 : vector<16x72xbf16>, vector<16x72xbf16>, vector<16x72xbf16>, vector<16x72xbf16>, vector<16x72xbf16>, vector<16x72xbf16>, vector<16x72xbf16>, vector<16x72xbf16>, vector<16x72xbf16> -> vector<144x72xbf16>
    %c0_1 = arith.constant 0 : index
    %c0_2 = arith.constant 0 : index
    %11 = vector.load %arg1[%c0_1, %c0_2] : memref<16x144xbf16, #tpu.memory_space<vmem>>, vector<16x144xbf16>
    %cst = arith.constant dense<0.000000e+00> : vector<16x72xf32>
    %12 = tpu.matmul %11, %10, %cst {dimension_numbers = #tpu.dot_dimension_numbers<[1], [0], [0], [1], [0, 0, 1, 1], [], []>} : vector<16x144xbf16>, vector<144x72xbf16>, vector<16x72xf32> -> vector<16x72xf32>
    %c0_3 = arith.constant 0 : index
    %c0_4 = arith.constant 0 : index
    %13 = vector.load %arg4[%c0_3, %c0_4] : memref<1x72xf32, #tpu.memory_space<vmem>>, vector<1x72xf32>
    %14 = vector.broadcast %13 : vector<1x72xf32> to vector<16x72xf32>
    %15 = arith.mulf %12, %14 : vector<16x72xf32>
    %cst_5 = arith.constant dense<0.000000e+00> : vector<16xf32>
    %16 = vector.multi_reduction <add>, %15, %cst_5 [1] : vector<16x72xf32> to vector<16xf32>
    %17 = vector.shape_cast %16 : vector<16xf32> to vector<16x1xf32>
    %cst_6 = arith.constant 3.125000e-02 : f32
    %18 = vector.broadcast %cst_6 : f32 to vector<16x1xf32>
    %19 = arith.mulf %17, %18 : vector<16x1xf32>
    %20 = vector.broadcast %19 : vector<16x1xf32> to vector<16x72xf32>
    %21 = arith.subf %12, %20 : vector<16x72xf32>
    %22 = vector.broadcast %13 : vector<1x72xf32> to vector<16x72xf32>
    %23 = arith.mulf %21, %22 : vector<16x72xf32>
    %24 = arith.mulf %23, %23 : vector<16x72xf32>
    %cst_7 = arith.constant dense<0.000000e+00> : vector<16xf32>
    %25 = vector.multi_reduction <add>, %24, %cst_7 [1] : vector<16x72xf32> to vector<16xf32>
    %26 = vector.shape_cast %25 : vector<16xf32> to vector<16x1xf32>
    %cst_8 = arith.constant 3.125000e-02 : f32
    %27 = vector.broadcast %cst_8 : f32 to vector<16x1xf32>
    %28 = arith.mulf %26, %27 : vector<16x1xf32>
    %cst_9 = arith.constant 9.99999974E-6 : f32
    %29 = vector.broadcast %cst_9 : f32 to vector<16x1xf32>
    %30 = arith.addf %28, %29 : vector<16x1xf32>
    %31 = math.rsqrt %30 : vector<16x1xf32>
    %c0_10 = arith.constant 0 : index
    %c0_11 = arith.constant 0 : index
    %32 = vector.load %arg2[%c0_10, %c0_11] : memref<16x1xf32, #tpu.memory_space<vmem>>, vector<16x1xf32>
    %33 = arith.mulf %32, %31 : vector<16x1xf32>
    %c0_12 = arith.constant 0 : index
    %c0_13 = arith.constant 0 : index
    %34 = vector.load %arg3[%c0_12, %c0_13] : memref<16x1xf32, #tpu.memory_space<vmem>>, vector<16x1xf32>
    %35 = arith.mulf %19, %33 : vector<16x1xf32>
    %36 = arith.subf %34, %35 : vector<16x1xf32>
    %37 = vector.broadcast %33 : vector<16x1xf32> to vector<16x72xf32>
    %38 = arith.mulf %12, %37 : vector<16x72xf32>
    %39 = vector.broadcast %36 : vector<16x1xf32> to vector<16x72xf32>
    %40 = arith.addf %38, %39 : vector<16x72xf32>
    %cst_14 = arith.constant 0.000000e+00 : f32
    %41 = vector.broadcast %cst_14 : f32 to vector<16x72xf32>
    %42 = arith.cmpf oge, %40, %41 : vector<16x72xf32>
    %cst_15 = arith.constant 2.000000e-01 : f32
    %43 = vector.broadcast %cst_15 : f32 to vector<16x72xf32>
    %44 = arith.mulf %43, %40 : vector<16x72xf32>
    %45 = arith.select %42, %40, %44 : vector<16x72xi1>, vector<16x72xf32>
    %46 = arith.truncf %45 : vector<16x72xf32> to vector<16x72xbf16>
    %c0_16 = arith.constant 0 : index
    %c0_17 = arith.constant 0 : index
    %47 = vector.load %arg5[%c0_16, %c0_17] : memref<16x72xbf16, #tpu.memory_space<vmem>>, vector<16x72xbf16>
    tpu.vector_store %arg5[%c0_16, %c0_17], %46 {strides = array<i32>} : memref<16x72xbf16, #tpu.memory_space<vmem>>, vector<16x72xbf16>,
    return
  }
}

module attributes {stable_mosaic.version = 11 : i64} {
  func.func @kernel(%arg0: memref<16x222xbf16, #tpu.memory_space<vmem>>, %arg1: memref<16x222xbf16, #tpu.memory_space<vmem>>, %arg2: memref<16x288xbf16, #tpu.memory_space<vmem>>, %arg3: memref<16x1xf32, #tpu.memory_space<vmem>>, %arg4: memref<16x1xf32, #tpu.memory_space<vmem>>, %arg5: memref<1x200xf32, #tpu.memory_space<vmem>>, %arg6: memref<16x200xbf16, #tpu.memory_space<vmem>>) attributes {dimension_semantics = [], scalar_prefetch = 0 : i64, scratch_operands = 0 : i64, tpu.core_type = #tpu.core_type<tc>} {
    %c0 = arith.constant 0 : index
    %c0_0 = arith.constant 0 : index
    %0 = vector.load %arg0[%c0, %c0_0] : memref<16x222xbf16, #tpu.memory_space<vmem>>, vector<16x222xbf16>
    %1 = vector.extract_strided_slice %0 {offsets = [0, 0], sizes = [16, 200], strides = [1, 1]} : vector<16x222xbf16> to vector<16x200xbf16>
    %2 = vector.extract_strided_slice %0 {offsets = [0, 1], sizes = [16, 200], strides = [1, 1]} : vector<16x222xbf16> to vector<16x200xbf16>
    %3 = vector.extract_strided_slice %0 {offsets = [0, 2], sizes = [16, 200], strides = [1, 1]} : vector<16x222xbf16> to vector<16x200xbf16>
    %4 = vector.extract_strided_slice %0 {offsets = [0, 10], sizes = [16, 200], strides = [1, 1]} : vector<16x222xbf16> to vector<16x200xbf16>
    %5 = vector.extract_strided_slice %0 {offsets = [0, 11], sizes = [16, 200], strides = [1, 1]} : vector<16x222xbf16> to vector<16x200xbf16>
    %6 = vector.extract_strided_slice %0 {offsets = [0, 12], sizes = [16, 200], strides = [1, 1]} : vector<16x222xbf16> to vector<16x200xbf16>
    %7 = vector.extract_strided_slice %0 {offsets = [0, 20], sizes = [16, 200], strides = [1, 1]} : vector<16x222xbf16> to vector<16x200xbf16>
    %8 = vector.extract_strided_slice %0 {offsets = [0, 21], sizes = [16, 200], strides = [1, 1]} : vector<16x222xbf16> to vector<16x200xbf16>
    %9 = vector.extract_strided_slice %0 {offsets = [0, 22], sizes = [16, 200], strides = [1, 1]} : vector<16x222xbf16> to vector<16x200xbf16>
    %10 = tpu.concatenate %1, %2, %3, %4, %5, %6, %7, %8, %9 in 0 : vector<16x200xbf16>, vector<16x200xbf16>, vector<16x200xbf16>, vector<16x200xbf16>, vector<16x200xbf16>, vector<16x200xbf16>, vector<16x200xbf16>, vector<16x200xbf16>, vector<16x200xbf16> -> vector<144x200xbf16>
    %c0_1 = arith.constant 0 : index
    %c0_2 = arith.constant 0 : index
    %11 = vector.load %arg1[%c0_1, %c0_2] : memref<16x222xbf16, #tpu.memory_space<vmem>>, vector<16x222xbf16>
    %12 = vector.extract_strided_slice %11 {offsets = [0, 0], sizes = [16, 200], strides = [1, 1]} : vector<16x222xbf16> to vector<16x200xbf16>
    %13 = vector.extract_strided_slice %11 {offsets = [0, 1], sizes = [16, 200], strides = [1, 1]} : vector<16x222xbf16> to vector<16x200xbf16>
    %14 = vector.extract_strided_slice %11 {offsets = [0, 2], sizes = [16, 200], strides = [1, 1]} : vector<16x222xbf16> to vector<16x200xbf16>
    %15 = vector.extract_strided_slice %11 {offsets = [0, 10], sizes = [16, 200], strides = [1, 1]} : vector<16x222xbf16> to vector<16x200xbf16>
    %16 = vector.extract_strided_slice %11 {offsets = [0, 11], sizes = [16, 200], strides = [1, 1]} : vector<16x222xbf16> to vector<16x200xbf16>
    %17 = vector.extract_strided_slice %11 {offsets = [0, 12], sizes = [16, 200], strides = [1, 1]} : vector<16x222xbf16> to vector<16x200xbf16>
    %18 = vector.extract_strided_slice %11 {offsets = [0, 20], sizes = [16, 200], strides = [1, 1]} : vector<16x222xbf16> to vector<16x200xbf16>
    %19 = vector.extract_strided_slice %11 {offsets = [0, 21], sizes = [16, 200], strides = [1, 1]} : vector<16x222xbf16> to vector<16x200xbf16>
    %20 = vector.extract_strided_slice %11 {offsets = [0, 22], sizes = [16, 200], strides = [1, 1]} : vector<16x222xbf16> to vector<16x200xbf16>
    %21 = tpu.concatenate %12, %13, %14, %15, %16, %17, %18, %19, %20 in 0 : vector<16x200xbf16>, vector<16x200xbf16>, vector<16x200xbf16>, vector<16x200xbf16>, vector<16x200xbf16>, vector<16x200xbf16>, vector<16x200xbf16>, vector<16x200xbf16>, vector<16x200xbf16> -> vector<144x200xbf16>
    %22 = tpu.concatenate %10, %21 in 0 : vector<144x200xbf16>, vector<144x200xbf16> -> vector<288x200xbf16>
    %c0_3 = arith.constant 0 : index
    %c0_4 = arith.constant 0 : index
    %23 = vector.load %arg2[%c0_3, %c0_4] : memref<16x288xbf16, #tpu.memory_space<vmem>>, vector<16x288xbf16>
    %cst = arith.constant dense<0.000000e+00> : vector<16x200xf32>
    %24 = tpu.matmul %23, %22, %cst {dimension_numbers = #tpu.dot_dimension_numbers<[1], [0], [0], [1], [0, 0, 1, 1], [], []>} : vector<16x288xbf16>, vector<288x200xbf16>, vector<16x200xf32> -> vector<16x200xf32>
    %c0_5 = arith.constant 0 : index
    %c0_6 = arith.constant 0 : index
    %25 = vector.load %arg5[%c0_5, %c0_6] : memref<1x200xf32, #tpu.memory_space<vmem>>, vector<1x200xf32>
    %26 = vector.broadcast %25 : vector<1x200xf32> to vector<16x200xf32>
    %27 = arith.mulf %24, %26 : vector<16x200xf32>
    %cst_7 = arith.constant dense<0.000000e+00> : vector<16xf32>
    %28 = vector.multi_reduction <add>, %27, %cst_7 [1] : vector<16x200xf32> to vector<16xf32>
    %29 = vector.shape_cast %28 : vector<16xf32> to vector<16x1xf32>
    %cst_8 = arith.constant 7.812500e-03 : f32
    %30 = vector.broadcast %cst_8 : f32 to vector<16x1xf32>
    %31 = arith.mulf %29, %30 : vector<16x1xf32>
    %32 = vector.broadcast %31 : vector<16x1xf32> to vector<16x200xf32>
    %33 = arith.subf %24, %32 : vector<16x200xf32>
    %34 = vector.broadcast %25 : vector<1x200xf32> to vector<16x200xf32>
    %35 = arith.mulf %33, %34 : vector<16x200xf32>
    %36 = arith.mulf %35, %35 : vector<16x200xf32>
    %cst_9 = arith.constant dense<0.000000e+00> : vector<16xf32>
    %37 = vector.multi_reduction <add>, %36, %cst_9 [1] : vector<16x200xf32> to vector<16xf32>
    %38 = vector.shape_cast %37 : vector<16xf32> to vector<16x1xf32>
    %cst_10 = arith.constant 7.812500e-03 : f32
    %39 = vector.broadcast %cst_10 : f32 to vector<16x1xf32>
    %40 = arith.mulf %38, %39 : vector<16x1xf32>
    %cst_11 = arith.constant 9.99999974E-6 : f32
    %41 = vector.broadcast %cst_11 : f32 to vector<16x1xf32>
    %42 = arith.addf %40, %41 : vector<16x1xf32>
    %43 = math.rsqrt %42 : vector<16x1xf32>
    %c0_12 = arith.constant 0 : index
    %c0_13 = arith.constant 0 : index
    %44 = vector.load %arg3[%c0_12, %c0_13] : memref<16x1xf32, #tpu.memory_space<vmem>>, vector<16x1xf32>
    %45 = arith.mulf %44, %43 : vector<16x1xf32>
    %c0_14 = arith.constant 0 : index
    %c0_15 = arith.constant 0 : index
    %46 = vector.load %arg4[%c0_14, %c0_15] : memref<16x1xf32, #tpu.memory_space<vmem>>, vector<16x1xf32>
    %47 = arith.mulf %31, %45 : vector<16x1xf32>
    %48 = arith.subf %46, %47 : vector<16x1xf32>
    %49 = vector.broadcast %45 : vector<16x1xf32> to vector<16x200xf32>
    %50 = arith.mulf %24, %49 : vector<16x200xf32>
    %51 = vector.broadcast %48 : vector<16x1xf32> to vector<16x200xf32>
    %52 = arith.addf %50, %51 : vector<16x200xf32>
    %cst_16 = arith.constant 0.000000e+00 : f32
    %53 = vector.broadcast %cst_16 : f32 to vector<16x200xf32>
    %54 = arith.cmpf oge, %52, %53 : vector<16x200xf32>
    %cst_17 = arith.constant 2.000000e-01 : f32
    %55 = vector.broadcast %cst_17 : f32 to vector<16x200xf32>
    %56 = arith.mulf %55, %52 : vector<16x200xf32>
    %57 = arith.select %54, %52, %56 : vector<16x200xi1>, vector<16x200xf32>
    %58 = arith.truncf %57 : vector<16x200xf32> to vector<16x200xbf16>
    %c0_18 = arith.constant 0 : index
    %c0_19 = arith.constant 0 : index
    %59 = vector.load %arg6[%c0_18, %c0_19] : memref<16x200xbf16, #tpu.memory_space<vmem>>, vector<16x200xbf16>
    tpu.vector_store %arg6[%c0_18, %c0_19], %58 {strides = array<i32>} : memref<16x200xbf16, #tpu.memory_space<vmem>>, vector<16x200xbf16>,
    return
  }
}

module attributes {stable_mosaic.version = 11 : i64} {
  func.func @kernel(%arg0: memref<16x686xbf16, #tpu.memory_space<vmem>>, %arg1: memref<16x686xbf16, #tpu.memory_space<vmem>>, %arg2: memref<16x288xbf16, #tpu.memory_space<vmem>>, %arg3: memref<16x1xf32, #tpu.memory_space<vmem>>, %arg4: memref<16x1xf32, #tpu.memory_space<vmem>>, %arg5: memref<1x648xf32, #tpu.memory_space<vmem>>, %arg6: memref<16x648xbf16, #tpu.memory_space<vmem>>) attributes {dimension_semantics = [], scalar_prefetch = 0 : i64, scratch_operands = 0 : i64, tpu.core_type = #tpu.core_type<tc>} {
    %c0 = arith.constant 0 : index
    %c0_0 = arith.constant 0 : index
    %0 = vector.load %arg0[%c0, %c0_0] : memref<16x686xbf16, #tpu.memory_space<vmem>>, vector<16x686xbf16>
    %1 = vector.extract_strided_slice %0 {offsets = [0, 0], sizes = [16, 648], strides = [1, 1]} : vector<16x686xbf16> to vector<16x648xbf16>
    %2 = vector.extract_strided_slice %0 {offsets = [0, 1], sizes = [16, 648], strides = [1, 1]} : vector<16x686xbf16> to vector<16x648xbf16>
    %3 = vector.extract_strided_slice %0 {offsets = [0, 2], sizes = [16, 648], strides = [1, 1]} : vector<16x686xbf16> to vector<16x648xbf16>
    %4 = vector.extract_strided_slice %0 {offsets = [0, 18], sizes = [16, 648], strides = [1, 1]} : vector<16x686xbf16> to vector<16x648xbf16>
    %5 = vector.extract_strided_slice %0 {offsets = [0, 19], sizes = [16, 648], strides = [1, 1]} : vector<16x686xbf16> to vector<16x648xbf16>
    %6 = vector.extract_strided_slice %0 {offsets = [0, 20], sizes = [16, 648], strides = [1, 1]} : vector<16x686xbf16> to vector<16x648xbf16>
    %7 = vector.extract_strided_slice %0 {offsets = [0, 36], sizes = [16, 648], strides = [1, 1]} : vector<16x686xbf16> to vector<16x648xbf16>
    %8 = vector.extract_strided_slice %0 {offsets = [0, 37], sizes = [16, 648], strides = [1, 1]} : vector<16x686xbf16> to vector<16x648xbf16>
    %9 = vector.extract_strided_slice %0 {offsets = [0, 38], sizes = [16, 648], strides = [1, 1]} : vector<16x686xbf16> to vector<16x648xbf16>
    %10 = tpu.concatenate %1, %2, %3, %4, %5, %6, %7, %8, %9 in 0 : vector<16x648xbf16>, vector<16x648xbf16>, vector<16x648xbf16>, vector<16x648xbf16>, vector<16x648xbf16>, vector<16x648xbf16>, vector<16x648xbf16>, vector<16x648xbf16>, vector<16x648xbf16> -> vector<144x648xbf16>
    %c0_1 = arith.constant 0 : index
    %c0_2 = arith.constant 0 : index
    %11 = vector.load %arg1[%c0_1, %c0_2] : memref<16x686xbf16, #tpu.memory_space<vmem>>, vector<16x686xbf16>
    %12 = vector.extract_strided_slice %11 {offsets = [0, 0], sizes = [16, 648], strides = [1, 1]} : vector<16x686xbf16> to vector<16x648xbf16>
    %13 = vector.extract_strided_slice %11 {offsets = [0, 1], sizes = [16, 648], strides = [1, 1]} : vector<16x686xbf16> to vector<16x648xbf16>
    %14 = vector.extract_strided_slice %11 {offsets = [0, 2], sizes = [16, 648], strides = [1, 1]} : vector<16x686xbf16> to vector<16x648xbf16>
    %15 = vector.extract_strided_slice %11 {offsets = [0, 18], sizes = [16, 648], strides = [1, 1]} : vector<16x686xbf16> to vector<16x648xbf16>
    %16 = vector.extract_strided_slice %11 {offsets = [0, 19], sizes = [16, 648], strides = [1, 1]} : vector<16x686xbf16> to vector<16x648xbf16>
    %17 = vector.extract_strided_slice %11 {offsets = [0, 20], sizes = [16, 648], strides = [1, 1]} : vector<16x686xbf16> to vector<16x648xbf16>
    %18 = vector.extract_strided_slice %11 {offsets = [0, 36], sizes = [16, 648], strides = [1, 1]} : vector<16x686xbf16> to vector<16x648xbf16>
    %19 = vector.extract_strided_slice %11 {offsets = [0, 37], sizes = [16, 648], strides = [1, 1]} : vector<16x686xbf16> to vector<16x648xbf16>
    %20 = vector.extract_strided_slice %11 {offsets = [0, 38], sizes = [16, 648], strides = [1, 1]} : vector<16x686xbf16> to vector<16x648xbf16>
    %21 = tpu.concatenate %12, %13, %14, %15, %16, %17, %18, %19, %20 in 0 : vector<16x648xbf16>, vector<16x648xbf16>, vector<16x648xbf16>, vector<16x648xbf16>, vector<16x648xbf16>, vector<16x648xbf16>, vector<16x648xbf16>, vector<16x648xbf16>, vector<16x648xbf16> -> vector<144x648xbf16>
    %22 = tpu.concatenate %10, %21 in 0 : vector<144x648xbf16>, vector<144x648xbf16> -> vector<288x648xbf16>
    %c0_3 = arith.constant 0 : index
    %c0_4 = arith.constant 0 : index
    %23 = vector.load %arg2[%c0_3, %c0_4] : memref<16x288xbf16, #tpu.memory_space<vmem>>, vector<16x288xbf16>
    %cst = arith.constant dense<0.000000e+00> : vector<16x648xf32>
    %24 = tpu.matmul %23, %22, %cst {dimension_numbers = #tpu.dot_dimension_numbers<[1], [0], [0], [1], [0, 0, 1, 1], [], []>} : vector<16x288xbf16>, vector<288x648xbf16>, vector<16x648xf32> -> vector<16x648xf32>
    %c0_5 = arith.constant 0 : index
    %c0_6 = arith.constant 0 : index
    %25 = vector.load %arg5[%c0_5, %c0_6] : memref<1x648xf32, #tpu.memory_space<vmem>>, vector<1x648xf32>
    %26 = vector.broadcast %25 : vector<1x648xf32> to vector<16x648xf32>
    %27 = arith.mulf %24, %26 : vector<16x648xf32>
    %cst_7 = arith.constant dense<0.000000e+00> : vector<16xf32>
    %28 = vector.multi_reduction <add>, %27, %cst_7 [1] : vector<16x648xf32> to vector<16xf32>
    %29 = vector.shape_cast %28 : vector<16xf32> to vector<16x1xf32>
    %cst_8 = arith.constant 0.001953125 : f32
    %30 = vector.broadcast %cst_8 : f32 to vector<16x1xf32>
    %31 = arith.mulf %29, %30 : vector<16x1xf32>
    %32 = vector.broadcast %31 : vector<16x1xf32> to vector<16x648xf32>
    %33 = arith.subf %24, %32 : vector<16x648xf32>
    %34 = vector.broadcast %25 : vector<1x648xf32> to vector<16x648xf32>
    %35 = arith.mulf %33, %34 : vector<16x648xf32>
    %36 = arith.mulf %35, %35 : vector<16x648xf32>
    %cst_9 = arith.constant dense<0.000000e+00> : vector<16xf32>
    %37 = vector.multi_reduction <add>, %36, %cst_9 [1] : vector<16x648xf32> to vector<16xf32>
    %38 = vector.shape_cast %37 : vector<16xf32> to vector<16x1xf32>
    %cst_10 = arith.constant 0.001953125 : f32
    %39 = vector.broadcast %cst_10 : f32 to vector<16x1xf32>
    %40 = arith.mulf %38, %39 : vector<16x1xf32>
    %cst_11 = arith.constant 9.99999974E-6 : f32
    %41 = vector.broadcast %cst_11 : f32 to vector<16x1xf32>
    %42 = arith.addf %40, %41 : vector<16x1xf32>
    %43 = math.rsqrt %42 : vector<16x1xf32>
    %c0_12 = arith.constant 0 : index
    %c0_13 = arith.constant 0 : index
    %44 = vector.load %arg3[%c0_12, %c0_13] : memref<16x1xf32, #tpu.memory_space<vmem>>, vector<16x1xf32>
    %45 = arith.mulf %44, %43 : vector<16x1xf32>
    %c0_14 = arith.constant 0 : index
    %c0_15 = arith.constant 0 : index
    %46 = vector.load %arg4[%c0_14, %c0_15] : memref<16x1xf32, #tpu.memory_space<vmem>>, vector<16x1xf32>
    %47 = arith.mulf %31, %45 : vector<16x1xf32>
    %48 = arith.subf %46, %47 : vector<16x1xf32>
    %49 = vector.broadcast %45 : vector<16x1xf32> to vector<16x648xf32>
    %50 = arith.mulf %24, %49 : vector<16x648xf32>
    %51 = vector.broadcast %48 : vector<16x1xf32> to vector<16x648xf32>
    %52 = arith.addf %50, %51 : vector<16x648xf32>
    %cst_16 = arith.constant 0.000000e+00 : f32
    %53 = vector.broadcast %cst_16 : f32 to vector<16x648xf32>
    %54 = arith.cmpf oge, %52, %53 : vector<16x648xf32>
    %cst_17 = arith.constant 2.000000e-01 : f32
    %55 = vector.broadcast %cst_17 : f32 to vector<16x648xf32>
    %56 = arith.mulf %55, %52 : vector<16x648xf32>
    %57 = arith.select %54, %52, %56 : vector<16x648xi1>, vector<16x648xf32>
    %58 = arith.truncf %57 : vector<16x648xf32> to vector<16x648xbf16>
    %c0_18 = arith.constant 0 : index
    %c0_19 = arith.constant 0 : index
    %59 = vector.load %arg6[%c0_18, %c0_19] : memref<16x648xbf16, #tpu.memory_space<vmem>>, vector<16x648xbf16>
    tpu.vector_store %arg6[%c0_18, %c0_19], %58 {strides = array<i32>} : memref<16x648xbf16, #tpu.memory_space<vmem>>, vector<16x648xbf16>,
    return
  }
}

module attributes {stable_mosaic.version = 11 : i64} {
  func.func @kernel(%arg0: memref<16x2382xbf16, #tpu.memory_space<vmem>>, %arg1: memref<16x2382xbf16, #tpu.memory_space<vmem>>, %arg2: memref<16x288xbf16, #tpu.memory_space<vmem>>, %arg3: memref<16x1xf32, #tpu.memory_space<vmem>>, %arg4: memref<16x1xf32, #tpu.memory_space<vmem>>, %arg5: memref<16x144xbf16, #tpu.memory_space<vmem>>, %arg6: memref<1x2312xf32, #tpu.memory_space<vmem>>, %arg7: memref<16x2312xf32, #tpu.memory_space<vmem>>, %arg8: memref<16x2382xbf16, #tpu.memory_space<vmem>>) attributes {dimension_semantics = [], scalar_prefetch = 0 : i64, scratch_operands = 1 : i64, tpu.core_type = #tpu.core_type<tc>} {
    %c0 = arith.constant 0 : index
    %c0_0 = arith.constant 0 : index
    %0 = vector.load %arg0[%c0, %c0_0] : memref<16x2382xbf16, #tpu.memory_space<vmem>>, vector<16x2382xbf16>
    %1 = vector.extract_strided_slice %0 {offsets = [0, 0], sizes = [16, 2312], strides = [1, 1]} : vector<16x2382xbf16> to vector<16x2312xbf16>
    %2 = vector.extract_strided_slice %0 {offsets = [0, 1], sizes = [16, 2312], strides = [1, 1]} : vector<16x2382xbf16> to vector<16x2312xbf16>
    %3 = vector.extract_strided_slice %0 {offsets = [0, 2], sizes = [16, 2312], strides = [1, 1]} : vector<16x2382xbf16> to vector<16x2312xbf16>
    %4 = vector.extract_strided_slice %0 {offsets = [0, 34], sizes = [16, 2312], strides = [1, 1]} : vector<16x2382xbf16> to vector<16x2312xbf16>
    %5 = vector.extract_strided_slice %0 {offsets = [0, 35], sizes = [16, 2312], strides = [1, 1]} : vector<16x2382xbf16> to vector<16x2312xbf16>
    %6 = vector.extract_strided_slice %0 {offsets = [0, 36], sizes = [16, 2312], strides = [1, 1]} : vector<16x2382xbf16> to vector<16x2312xbf16>
    %7 = vector.extract_strided_slice %0 {offsets = [0, 68], sizes = [16, 2312], strides = [1, 1]} : vector<16x2382xbf16> to vector<16x2312xbf16>
    %8 = vector.extract_strided_slice %0 {offsets = [0, 69], sizes = [16, 2312], strides = [1, 1]} : vector<16x2382xbf16> to vector<16x2312xbf16>
    %9 = vector.extract_strided_slice %0 {offsets = [0, 70], sizes = [16, 2312], strides = [1, 1]} : vector<16x2382xbf16> to vector<16x2312xbf16>
    %10 = tpu.concatenate %1, %2, %3, %4, %5, %6, %7, %8, %9 in 0 : vector<16x2312xbf16>, vector<16x2312xbf16>, vector<16x2312xbf16>, vector<16x2312xbf16>, vector<16x2312xbf16>, vector<16x2312xbf16>, vector<16x2312xbf16>, vector<16x2312xbf16>, vector<16x2312xbf16> -> vector<144x2312xbf16>
    %c0_1 = arith.constant 0 : index
    %c0_2 = arith.constant 0 : index
    %11 = vector.load %arg1[%c0_1, %c0_2] : memref<16x2382xbf16, #tpu.memory_space<vmem>>, vector<16x2382xbf16>
    %12 = vector.extract_strided_slice %11 {offsets = [0, 0], sizes = [16, 2312], strides = [1, 1]} : vector<16x2382xbf16> to vector<16x2312xbf16>
    %13 = vector.extract_strided_slice %11 {offsets = [0, 1], sizes = [16, 2312], strides = [1, 1]} : vector<16x2382xbf16> to vector<16x2312xbf16>
    %14 = vector.extract_strided_slice %11 {offsets = [0, 2], sizes = [16, 2312], strides = [1, 1]} : vector<16x2382xbf16> to vector<16x2312xbf16>
    %15 = vector.extract_strided_slice %11 {offsets = [0, 34], sizes = [16, 2312], strides = [1, 1]} : vector<16x2382xbf16> to vector<16x2312xbf16>
    %16 = vector.extract_strided_slice %11 {offsets = [0, 35], sizes = [16, 2312], strides = [1, 1]} : vector<16x2382xbf16> to vector<16x2312xbf16>
    %17 = vector.extract_strided_slice %11 {offsets = [0, 36], sizes = [16, 2312], strides = [1, 1]} : vector<16x2382xbf16> to vector<16x2312xbf16>
    %18 = vector.extract_strided_slice %11 {offsets = [0, 68], sizes = [16, 2312], strides = [1, 1]} : vector<16x2382xbf16> to vector<16x2312xbf16>
    %19 = vector.extract_strided_slice %11 {offsets = [0, 69], sizes = [16, 2312], strides = [1, 1]} : vector<16x2382xbf16> to vector<16x2312xbf16>
    %20 = vector.extract_strided_slice %11 {offsets = [0, 70], sizes = [16, 2312], strides = [1, 1]} : vector<16x2382xbf16> to vector<16x2312xbf16>
    %21 = tpu.concatenate %12, %13, %14, %15, %16, %17, %18, %19, %20 in 0 : vector<16x2312xbf16>, vector<16x2312xbf16>, vector<16x2312xbf16>, vector<16x2312xbf16>, vector<16x2312xbf16>, vector<16x2312xbf16>, vector<16x2312xbf16>, vector<16x2312xbf16>, vector<16x2312xbf16> -> vector<144x2312xbf16>
    %22 = tpu.concatenate %10, %21 in 0 : vector<144x2312xbf16>, vector<144x2312xbf16> -> vector<288x2312xbf16>
    %c0_3 = arith.constant 0 : index
    %c0_4 = arith.constant 0 : index
    %23 = vector.load %arg2[%c0_3, %c0_4] : memref<16x288xbf16, #tpu.memory_space<vmem>>, vector<16x288xbf16>
    %cst = arith.constant dense<0.000000e+00> : vector<16x2312xf32>
    %24 = tpu.matmul %23, %22, %cst {dimension_numbers = #tpu.dot_dimension_numbers<[1], [0], [0], [1], [0, 0, 1, 1], [], []>} : vector<16x288xbf16>, vector<288x2312xbf16>, vector<16x2312xf32> -> vector<16x2312xf32>
    %c0_5 = arith.constant 0 : index
    %c0_6 = arith.constant 0 : index
    %25 = vector.load %arg6[%c0_5, %c0_6] : memref<1x2312xf32, #tpu.memory_space<vmem>>, vector<1x2312xf32>
    %26 = vector.broadcast %25 : vector<1x2312xf32> to vector<16x2312xf32>
    %27 = arith.mulf %24, %26 : vector<16x2312xf32>
    %cst_7 = arith.constant dense<0.000000e+00> : vector<16xf32>
    %28 = vector.multi_reduction <add>, %27, %cst_7 [1] : vector<16x2312xf32> to vector<16xf32>
    %29 = vector.shape_cast %28 : vector<16xf32> to vector<16x1xf32>
    %cst_8 = arith.constant 4.8828125E-4 : f32
    %30 = vector.broadcast %cst_8 : f32 to vector<16x1xf32>
    %31 = arith.mulf %29, %30 : vector<16x1xf32>
    %32 = vector.broadcast %31 : vector<16x1xf32> to vector<16x2312xf32>
    %33 = arith.subf %24, %32 : vector<16x2312xf32>
    %34 = vector.broadcast %25 : vector<1x2312xf32> to vector<16x2312xf32>
    %35 = arith.mulf %33, %34 : vector<16x2312xf32>
    %36 = arith.mulf %35, %35 : vector<16x2312xf32>
    %cst_9 = arith.constant dense<0.000000e+00> : vector<16xf32>
    %37 = vector.multi_reduction <add>, %36, %cst_9 [1] : vector<16x2312xf32> to vector<16xf32>
    %38 = vector.shape_cast %37 : vector<16xf32> to vector<16x1xf32>
    %cst_10 = arith.constant 4.8828125E-4 : f32
    %39 = vector.broadcast %cst_10 : f32 to vector<16x1xf32>
    %40 = arith.mulf %38, %39 : vector<16x1xf32>
    %cst_11 = arith.constant 9.99999974E-6 : f32
    %41 = vector.broadcast %cst_11 : f32 to vector<16x1xf32>
    %42 = arith.addf %40, %41 : vector<16x1xf32>
    %43 = math.rsqrt %42 : vector<16x1xf32>
    %c0_12 = arith.constant 0 : index
    %c0_13 = arith.constant 0 : index
    %44 = vector.load %arg3[%c0_12, %c0_13] : memref<16x1xf32, #tpu.memory_space<vmem>>, vector<16x1xf32>
    %45 = arith.mulf %44, %43 : vector<16x1xf32>
    %c0_14 = arith.constant 0 : index
    %c0_15 = arith.constant 0 : index
    %46 = vector.load %arg4[%c0_14, %c0_15] : memref<16x1xf32, #tpu.memory_space<vmem>>, vector<16x1xf32>
    %47 = arith.mulf %31, %45 : vector<16x1xf32>
    %48 = arith.subf %46, %47 : vector<16x1xf32>
    %49 = vector.broadcast %45 : vector<16x1xf32> to vector<16x2312xf32>
    %50 = arith.mulf %24, %49 : vector<16x2312xf32>
    %51 = vector.broadcast %48 : vector<16x1xf32> to vector<16x2312xf32>
    %52 = arith.addf %50, %51 : vector<16x2312xf32>
    %cst_16 = arith.constant 0.000000e+00 : f32
    %53 = vector.broadcast %cst_16 : f32 to vector<16x2312xf32>
    %54 = arith.cmpf oge, %52, %53 : vector<16x2312xf32>
    %cst_17 = arith.constant 2.000000e-01 : f32
    %55 = vector.broadcast %cst_17 : f32 to vector<16x2312xf32>
    %56 = arith.mulf %55, %52 : vector<16x2312xf32>
    %57 = arith.select %54, %52, %56 : vector<16x2312xi1>, vector<16x2312xf32>
    %58 = vector.broadcast %25 : vector<1x2312xf32> to vector<16x2312xf32>
    %59 = arith.mulf %57, %58 : vector<16x2312xf32>
    %cst_18 = arith.constant 0.000000e+00 : bf16
    %60 = vector.broadcast %cst_18 : bf16 to vector<16x2382xbf16>
    %c0_19 = arith.constant 0 : index
    %c0_20 = arith.constant 0 : index
    %61 = vector.load %arg8[%c0_19, %c0_20] : memref<16x2382xbf16, #tpu.memory_space<vmem>>, vector<16x2382xbf16>
    tpu.vector_store %arg8[%c0_19, %c0_20], %60 {strides = array<i32>} : memref<16x2382xbf16, #tpu.memory_space<vmem>>, vector<16x2382xbf16>,
    %62 = arith.truncf %59 : vector<16x2312xf32> to vector<16x2312xbf16>
    %c0_21 = arith.constant 0 : index
    %c35 = arith.constant 35 : index
    %63 = vector.load %arg8[%c0_21, %c35] : memref<16x2382xbf16, #tpu.memory_space<vmem>>, vector<16x2312xbf16>
    tpu.vector_store %arg8[%c0_21, %c35], %62 {strides = array<i32>} : memref<16x2382xbf16, #tpu.memory_space<vmem>>, vector<16x2312xbf16>,
    %c0_22 = arith.constant 0 : index
    %c0_23 = arith.constant 0 : index
    %64 = vector.load %arg8[%c0_22, %c0_23] : memref<16x2382xbf16, #tpu.memory_space<vmem>>, vector<16x2382xbf16>
    %65 = vector.extract_strided_slice %64 {offsets = [0, 0], sizes = [16, 2312], strides = [1, 1]} : vector<16x2382xbf16> to vector<16x2312xbf16>
    %66 = vector.extract_strided_slice %64 {offsets = [0, 1], sizes = [16, 2312], strides = [1, 1]} : vector<16x2382xbf16> to vector<16x2312xbf16>
    %67 = vector.extract_strided_slice %64 {offsets = [0, 2], sizes = [16, 2312], strides = [1, 1]} : vector<16x2382xbf16> to vector<16x2312xbf16>
    %68 = vector.extract_strided_slice %64 {offsets = [0, 34], sizes = [16, 2312], strides = [1, 1]} : vector<16x2382xbf16> to vector<16x2312xbf16>
    %69 = vector.extract_strided_slice %64 {offsets = [0, 35], sizes = [16, 2312], strides = [1, 1]} : vector<16x2382xbf16> to vector<16x2312xbf16>
    %70 = vector.extract_strided_slice %64 {offsets = [0, 36], sizes = [16, 2312], strides = [1, 1]} : vector<16x2382xbf16> to vector<16x2312xbf16>
    %71 = vector.extract_strided_slice %64 {offsets = [0, 68], sizes = [16, 2312], strides = [1, 1]} : vector<16x2382xbf16> to vector<16x2312xbf16>
    %72 = vector.extract_strided_slice %64 {offsets = [0, 69], sizes = [16, 2312], strides = [1, 1]} : vector<16x2382xbf16> to vector<16x2312xbf16>
    %73 = vector.extract_strided_slice %64 {offsets = [0, 70], sizes = [16, 2312], strides = [1, 1]} : vector<16x2382xbf16> to vector<16x2312xbf16>
    %74 = tpu.concatenate %65, %66, %67, %68, %69, %70, %71, %72, %73 in 0 : vector<16x2312xbf16>, vector<16x2312xbf16>, vector<16x2312xbf16>, vector<16x2312xbf16>, vector<16x2312xbf16>, vector<16x2312xbf16>, vector<16x2312xbf16>, vector<16x2312xbf16>, vector<16x2312xbf16> -> vector<144x2312xbf16>
    %c0_24 = arith.constant 0 : index
    %c0_25 = arith.constant 0 : index
    %75 = vector.load %arg5[%c0_24, %c0_25] : memref<16x144xbf16, #tpu.memory_space<vmem>>, vector<16x144xbf16>
    %cst_26 = arith.constant dense<0.000000e+00> : vector<16x2312xf32>
    %76 = tpu.matmul %75, %74, %cst_26 {dimension_numbers = #tpu.dot_dimension_numbers<[1], [0], [0], [1], [0, 0, 1, 1], [], []>} : vector<16x144xbf16>, vector<144x2312xbf16>, vector<16x2312xf32> -> vector<16x2312xf32>
    %77 = math.tanh %76 : vector<16x2312xf32>
    %c0_27 = arith.constant 0 : index
    %c0_28 = arith.constant 0 : index
    %78 = vector.load %arg7[%c0_27, %c0_28] : memref<16x2312xf32, #tpu.memory_space<vmem>>, vector<16x2312xf32>
    tpu.vector_store %arg7[%c0_27, %c0_28], %77 {strides = array<i32>} : memref<16x2312xf32, #tpu.memory_space<vmem>>, vector<16x2312xf32>,
    return
  }
}

</mosaic_0001>

<llo_original>
// kernel: tile.17
$region0: #{tile.17}
  %s0 = inlined_call_operand.vmem [shape: f32[6,6], index: 0, kind: input, shape index: {}]
  %s1 = inlined_call_operand.vmem [shape: f32[36], index: 1, kind: output, shape index: {}]
  $region1: #{tile.17} parent=0
    #allocation0 [shape = 'u8[4096]{0}', space=vmem, size = 0x1000, scoped, tag = 'scoped mem for output reshape']
    %v2 = vld [vmem:[%s0] sm:$0x1]
    %vm3 = vcmask 48128
    %4 = vst.msk [vmem:[#allocation0] sm:$0x1] %vm3, %v2
    %s5 = scalar_lea.vmem %s0, 5
    %v6 = vld [vmem:[%s5] sm:$0x1]
    %7 = vrot.lane.b32.xlu0 %v6, 30
    %v8 = vpop.permute.xlu0 %7
    %vm9 = vcmask 294128
    %10 = vst.msk [vmem:[#allocation0] sm:$0x1] %vm9, %v8
    %s11 = scalar_lea.vmem %s0, 4
    %v12 = vld [vmem:[%s11] sm:$0x1]
    %13 = vrot.lane.b32.xlu0 %v12, 24
    %v14 = vpop.permute.xlu0 %13
    %vm15 = vcmask 244928
    %16 = vst.msk [vmem:[#allocation0] sm:$0x1] %vm15, %v14
    %s17 = scalar_lea.vmem %s0, 3
    %v18 = vld [vmem:[%s17] sm:$0x1]
    %19 = vrot.lane.b32.xlu0 %v18, 18
    %v20 = vpop.permute.xlu0 %19
    %vm21 = vcmask 195728
    %22 = vst.msk [vmem:[#allocation0] sm:$0x1] %vm21, %v20
    %s23 = scalar_lea.vmem %s0, 2
    %v24 = vld [vmem:[%s23] sm:$0x1]
    %25 = vrot.lane.b32.xlu0 %v24, 12
    %v26 = vpop.permute.xlu0 %25
    %vm27 = vcmask 146528
    %28 = vst.msk [vmem:[#allocation0] sm:$0x1] %vm27, %v26
    %s29 = scalar_lea.vmem %s0, 1
    %v30 = vld [vmem:[%s29] sm:$0x1]
    %31 = vrot.lane.b32.xlu0 %v30, 6
    %v32 = vpop.permute.xlu0 %31
    %vm33 = vcmask 97328
    %34 = vst.msk [vmem:[#allocation0] sm:$0x1] %vm33, %v32
    %s36 = sshllo.u32 0, 1
    %v38 = vld [vmem:[#allocation0] sm:%s36]
    %s39 = sshllo.u32 0, 1
    %40 = vst [vmem:[%s1] sm:%s39] %v38

// kernel: tile.18
$region0: #{tile.18}
  #allocation0 [shape = 's32[1]{0}', space=sflag, size = 0x4, scoped, tag = 'scoped memory for tile.18']
  %s0 = inlined_call_operand.vmem [shape: f32[36], index: 0, kind: input, shape index: {}]
  %s1 = inlined_call_operand.vmem [shape: f32[2,36], index: 1, kind: output, shape index: {}]
  // Predicated region
  $region2: #{tile.18} parent=0 // pred_check
    _
  $region3: #{tile.18} parent=0 // pred_check_branch
    %3 = sbr.rel (0) target = $region5
  $region4: #{tile.18} parent=0 // pred_region
    _
  $region5: #{tile.18} parent=0 // pred_fallthru
    _
  %v4 = vld [vmem:[%s0] ss:$0 sm:$0xff]
  %5 = vst [vmem:[%s1] sm:$0x3] %v4

// kernel: tile.19
$region0: #{tile.19}
  %s0 = inlined_call_operand.vmem [shape: f32[2,36], index: 0, kind: input, shape index: {}]
  %s1 = inlined_call_operand.vmem [shape: f32[1,72], index: 1, kind: output, shape index: {}]
  $region1: #{tile.19} parent=0
    #allocation0 [shape = 'u8[4096]{0}', space=vmem, size = 0x1000, scoped, tag = 'scoped mem for output reshape']
    #allocation1 [shape = 'u8[4096]{0}', space=vmem, size = 0x1000, scoped, tag = 'scoped mem for input reshape']
    %s3 = sshllo.u32 0, 2
    %v4 = vld [vmem:[%s0] sm:%s3]
    %5 = vst [vmem:[#allocation1] sm:%s3] %v4
    %v6 = vld [vmem:[#allocation1] sm:$0x1]
    %vm7 = vcmask 293888
    %8 = vst.msk [vmem:[#allocation0] sm:$0x1] %vm7, %v6
    %s9 = scalar_lea.vmem [#allocation1], 1
    %v10 = vld [vmem:[%s9] sm:$0x1]
    %11 = vrot.lane.b32.xlu0 %v10, 36
    %v12 = vpop.permute.xlu0 %11
    %vm13 = vcmask 589088
    %14 = vst.msk [vmem:[#allocation0] sm:$0x1] %vm13, %v12
    %s16 = sshllo.u32 0, 1
    %v18 = vld [vmem:[#allocation0] sm:%s16]
    %s19 = sshllo.u32 0, 1
    %20 = vst [vmem:[%s1] sm:%s19] %v18

// kernel: net_t32_forward.4
$region0: #{net_t32_forward.4}
  #allocation0 [shape = 'u32[]', space=smem, size = 0x4, offset = 0x4, fixed_abs, tag = 'smem constant byte address 0x4 - core index']
  #allocation1 [shape = 'u32[144,128]{1,0:T(1,128)}', space=vmem, size = 0x12000, scoped, tag = 'internal scratch']
  %s0 = inlined_call_operand.vmem [shape: bf16[16,86], index: 0, kind: input, shape index: {}]
  %s1 = inlined_call_operand.vmem [shape: bf16[16,144], index: 1, kind: input, shape index: {}]
  %s2 = inlined_call_operand.vmem [shape: f32[16,1], index: 2, kind: input, shape index: {}]
  %s3 = inlined_call_operand.vmem [shape: f32[16,1], index: 3, kind: input, shape index: {}]
  %s4 = inlined_call_operand.vmem [shape: f32[1,72], index: 4, kind: input, shape index: {}]
  %s5 = inlined_call_operand.vmem [shape: bf16[16,72], index: 5, kind: output, shape index: {}]
  %s6 = sld [smem:[#allocation0]]
  $region30: #{net_t32_forward.4} parent=0
    _
  %s8 = ssub.s32 1, %s6
  %s9 = scalar_select 0, %s8, %s6
  // Predicated region
  $region2: #{net_t32_forward.4} parent=0 // pred_check
    _
  $region3: #{net_t32_forward.4} parent=0 // pred_check_branch
    %11 = sbr.rel (0) target = $region5
  $region4: #{net_t32_forward.4} parent=0 // pred_region
    _
  $region5: #{net_t32_forward.4} parent=0 // pred_fallthru
    _
  // Predicated region
  $region6: #{net_t32_forward.4} parent=0 // pred_check
    _
  $region7: #{net_t32_forward.4} parent=0 // pred_check_branch
    %13 = sbr.rel (0) target = $region9
  $region8: #{net_t32_forward.4} parent=0 // pred_region
    _
  $region9: #{net_t32_forward.4} parent=0 // pred_fallthru
    _
  // Predicated region
  $region10: #{net_t32_forward.4} parent=0 // pred_check
    _
  $region11: #{net_t32_forward.4} parent=0 // pred_check_branch
    %15 = sbr.rel (0) target = $region13
  $region12: #{net_t32_forward.4} parent=0 // pred_region
    _
  $region13: #{net_t32_forward.4} parent=0 // pred_fallthru
    _
  // Predicated region
  $region14: #{net_t32_forward.4} parent=0 // pred_check
    _
  $region15: #{net_t32_forward.4} parent=0 // pred_check_branch
    %17 = sbr.rel (0) target = $region17
  $region16: #{net_t32_forward.4} parent=0 // pred_region
    _
  $region17: #{net_t32_forward.4} parent=0 // pred_fallthru
    _
  // Predicated region
  $region18: #{net_t32_forward.4} parent=0 // pred_check
    _
  $region19: #{net_t32_forward.4} parent=0 // pred_check_branch
    %19 = sbr.rel (0) target = $region21
  $region20: #{net_t32_forward.4} parent=0 // pred_region
    _
  $region21: #{net_t32_forward.4} parent=0 // pred_fallthru
    _
  %v21 = vld [vmem:[%s0] sm:$0xf]
  %v22 = vld [vmem:[%s0 + $0x4] sm:$0xf]
  %v25 = vunpack.c.l.b16 %v21
  %v26 = vunpack.c.l.b16 %v22
  %v27 = vpack.c.b16 %v26, %v25
  %29 = vrot.lane.b32.xlu0 %v27, 127
  %v30 = vpop.permute.xlu0 %29
  %32 = vrot.lane.b32.xlu0 %v27, 126
  %v33 = vpop.permute.xlu0 %32
  %35 = vrot.lane.b32.xlu0 %v27, 122
  %v36 = vpop.permute.xlu0 %35
  %38 = vrot.lane.b32.xlu0 %v27, 121
  %v39 = vpop.permute.xlu0 %38
  %41 = vrot.lane.b32.xlu0 %v27, 120
  %v42 = vpop.permute.xlu0 %41
  %44 = vrot.lane.b32.xlu0 %v27, 116
  %v45 = vpop.permute.xlu0 %44
  %47 = vrot.lane.b32.xlu0 %v27, 115
  %v48 = vpop.permute.xlu0 %47
  %50 = vrot.lane.b32.xlu0 %v27, 114
  %v51 = vpop.permute.xlu0 %50
  %v53 = vld [vmem:[%s1] sm:$0xff]
  %v54 = vld [vmem:[%s1 + $0x8] sm:$0xff]
  %v57 = vunpack.c.l.b16 %v53
  %v58 = vunpack.c.h.b16 %v53
  %v59 = vunpack.c.l.b16 %v54
  %v60 = vunpack.c.h.b16 %v54
  %v61 = vpack.c.b16 %v59, %v57
  %v62 = vpack.c.b16 %v60, %v58
  %vm64 = vcmask 130048
  %v66 = vsel %vm64, %v62, 0
  %68 = vmatprep.subr.bf16.mxu0 0
  %69 = vmatpush1.bf16.msra.mxu0 %v27
  %70 = vmatprep.subr.bf16.mxu0 0
  %71 = vmatpush1.bf16.msra.mxu0 %v30
  %72 = vmatprep.subr.bf16.mxu0 0
  %73 = vmatpush1.bf16.msra.mxu0 %v33
  %74 = vmatprep.subr.bf16.mxu0 0
  %75 = vmatpush1.bf16.msra.mxu0 %v36
  %76 = vmatprep.subr.bf16.mxu0 0
  %77 = vmatpush1.bf16.msra.mxu0 %v39
  %78 = vmatprep.subr.bf16.mxu0 0
  %79 = vmatpush1.bf16.msra.mxu0 %v42
  %80 = vmatprep.subr.bf16.mxu0 0
  %81 = vmatpush1.bf16.msra.mxu0 %v45
  %82 = vmatprep.subr.bf16.mxu0 0
  %83 = vmatpush1.bf16.msra.mxu0 %v48
  %84 = vmatprep.subr.bf16.mxu0 0
  %85 = vmatpush1.bf16.msra.mxu0 %v51
  %86 = vmatprep.subr.bf16.mxu0 0
  %87 = vmatpush1.bf16.msra.mxu0 0
  %88 = vmatprep.subr.bf16.mxu0 0
  %89 = vmatpush1.bf16.msra.mxu0 0
  %90 = vmatprep.subr.bf16.mxu0 0
  %91 = vmatpush1.bf16.msra.mxu0 0
  %92 = vmatprep.subr.bf16.mxu0 0
  %93 = vmatpush1.bf16.msra.mxu0 0
  %94 = vmatprep.subr.bf16.mxu0 0
  %95 = vmatpush1.bf16.msra.mxu0 0
  %96 = vmatprep.subr.bf16.mxu0 0
  %97 = vmatpush1.bf16.msra.mxu0 0
  %98 = vmatprep.subr.bf16.mxu0 0
  %99 = vmatpush1.bf16.msra.mxu0 0
  %100 = vmatprep.mubr.bf16.mxu0 %v66
  %101 = vmatmul.mubr.bf16.gmra.mrb[0].mxu0 %v61
  %v102 = vpop.f32.mrb[0].mxu0
  %v103 = vadd.f32 0.0, %v102
  %v104 = vpop.f32.mrb[0].mxu0
  %v105 = vpop.f32.mrb[0].mxu0
  %v106 = vadd.f32 0.0, %v105
  %v107 = vpop.f32.mrb[0].mxu0
  %108 = vdwg.mxu0
  %v109 = vld [vmem:[%s4] sm:$0x1]
  %v111 = vlaneseq
  %v112 = vshrl.u32 %v111, 7
  %v113 = vsub.s32 0, %v112
  %v114 = vrot.slane %v109, %v113
  %v116 = vmul.f32 %v103, %v114
  %v117 = vmul.f32 %v106, %v114
  %vm118 = vcmask 588800
  %v119 = vsel %vm118, %v116, 0.0
  %120 = vadd.xlane.f32.xlu0 %v119
  %v121 = vpop.xlane.xlu0 %120
  %v122 = vsel %vm118, %v117, 0.0
  %123 = vadd.xlane.f32.xlu0 %v122
  %v124 = vpop.xlane.xlu0 %123
  %v125 = vmul.f32 %v121, 0.03125
  %v126 = vmul.f32 %v124, 0.03125
  %v127 = vsub.f32 %v103, %v125
  %v128 = vsub.f32 %v106, %v126
  %v129 = vmul.f32 %v127, %v114
  %v130 = vmul.f32 %v128, %v114
  %v131 = vmul.f32 %v129, %v129
  %v132 = vmul.f32 %v130, %v130
  %v133 = vsel %vm118, %v131, 0.0
  %134 = vadd.xlane.f32.xlu0 %v133
  %v135 = vpop.xlane.xlu0 %134
  %v136 = vsel %vm118, %v132, 0.0
  %137 = vadd.xlane.f32.xlu0 %v136
  %v138 = vpop.xlane.xlu0 %137
  %v139 = vmul.f32 %v135, 0.03125
  %v140 = vmul.f32 %v138, 0.03125
  %v141 = vadd.f32 %v139, 1e-05
  %v142 = vadd.f32 %v140, 1e-05
  %v143 = vrsqrt.pop %v141
  %v144 = vrsqrt.pop %v142
  %v145 = vld [vmem:[%s2] sm:$0xff]
  %v146 = vld [vmem:[%s2 + $0x8] sm:$0xff]
  %v147 = vmul.f32 %v145, %v143
  %v148 = vmul.f32 %v146, %v144
  %v149 = vld [vmem:[%s3] sm:$0xff]
  %v150 = vld [vmem:[%s3 + $0x8] sm:$0xff]
  %v151 = vmul.f32 %v125, %v147
  %v152 = vmul.f32 %v126, %v148
  %v153 = vsub.f32 %v149, %v151
  %v154 = vsub.f32 %v150, %v152
  %156 = vset.pattern.permute.xlu0 0
  %157 = vperm.xlu0 %156, %v147
  %v158 = vpop.permute.xlu0 %157
  %161 = vset.pattern.permute.xlu0 0
  %162 = vperm.xlu0 %161, %v148
  %v163 = vpop.permute.xlu0 %162
  %v165 = vmul.f32 %v103, %v158
  %v166 = vmul.f32 %v106, %v163
  %168 = vset.pattern.permute.xlu0 0
  %169 = vperm.xlu0 %168, %v153
  %v170 = vpop.permute.xlu0 %169
  %173 = vset.pattern.permute.xlu0 0
  %174 = vperm.xlu0 %173, %v154
  %v175 = vpop.permute.xlu0 %174
  %v177 = vadd.f32 %v165, %v170
  %v178 = vadd.f32 %v166, %v175
  %vm179 = vcmp.ge.f32.partialorder %v177, 0.0
  %vm180 = vcmp.ge.f32.partialorder %v178, 0.0
  %v181 = vmul.f32 %v177, 0.2
  %v182 = vmul.f32 %v178, 0.2
  %v183 = vsel %vm179, %v177, %v181
  %v184 = vsel %vm180, %v178, %v182
  %v185 = vpack.c.bf16 %v184, %v183
  %v187 = vunpack.c.l.b16 %v185
  %v188 = vunpack.c.h.b16 %v185
  %v189 = vpack.c.b16 %v187, %v187
  %v190 = vpack.c.b16 %v188, %v188
  %vm193 = vcmask 584704
  %194 = vst.msk [vmem:[%s5] sm:$0xf] %vm193, %v189
  %195 = vst.msk [vmem:[%s5 + $0x4] sm:$0xf] %vm193, %v190
  // Predicated region
  $region22: #{net_t32_forward.4} parent=0 // pred_check
    _
  $region23: #{net_t32_forward.4} parent=0 // pred_check_branch
    %197 = sbr.rel (0) target = $region25
  $region24: #{net_t32_forward.4} parent=0 // pred_region
    _
  $region25: #{net_t32_forward.4} parent=0 // pred_fallthru
    _
  // Predicated region
  $region26: #{net_t32_forward.4} parent=0 // pred_check
    _
  $region27: #{net_t32_forward.4} parent=0 // pred_check_branch
    %199 = sbr.rel (0) target = $region29
  $region28: #{net_t32_forward.4} parent=0 // pred_region
    _
  $region29: #{net_t32_forward.4} parent=0 // pred_fallthru
    _

// kernel: tile.21
$region0: #{tile.21}
  %s0 = inlined_call_operand.vmem [shape: f32[10,10], index: 0, kind: input, shape index: {}]
  %s1 = inlined_call_operand.vmem [shape: f32[100], index: 1, kind: output, shape index: {}]
  $region1: #{tile.21} parent=0
    #allocation0 [shape = 'u8[4096]{0}', space=vmem, size = 0x1000, scoped, tag = 'scoped mem for output reshape']
    %v2 = vld [vmem:[%s0] sm:$0x1]
    %vm3 = vcmask 80896
    %4 = vst.msk [vmem:[#allocation0] sm:$0x1] %vm3, %v2
    %s5 = scalar_lea.vmem %s0, 9
    %v6 = vld [vmem:[%s5] sm:$0x1]
    %7 = vrot.lane.b32.xlu0 %v6, 90
    %v8 = vpop.permute.xlu0 %7
    %vm9 = vcmask 818896
    %10 = vst.msk [vmem:[#allocation0] sm:$0x1] %vm9, %v8
    %s11 = scalar_lea.vmem %s0, 8
    %v12 = vld [vmem:[%s11] sm:$0x1]
    %13 = vrot.lane.b32.xlu0 %v12, 80
    %v14 = vpop.permute.xlu0 %13
    %vm15 = vcmask 736896
    %16 = vst.msk [vmem:[#allocation0] sm:$0x1] %vm15, %v14
    %s17 = scalar_lea.vmem %s0, 7
    %v18 = vld [vmem:[%s17] sm:$0x1]
    %19 = vrot.lane.b32.xlu0 %v18, 70
    %v20 = vpop.permute.xlu0 %19
    %vm21 = vcmask 654896
    %22 = vst.msk [vmem:[#allocation0] sm:$0x1] %vm21, %v20
    %s23 = scalar_lea.vmem %s0, 6
    %v24 = vld [vmem:[%s23] sm:$0x1]
    %25 = vrot.lane.b32.xlu0 %v24, 60
    %v26 = vpop.permute.xlu0 %25
    %vm27 = vcmask 572896
    %28 = vst.msk [vmem:[#allocation0] sm:$0x1] %vm27, %v26
    %s29 = scalar_lea.vmem %s0, 5
    %v30 = vld [vmem:[%s29] sm:$0x1]
    %31 = vrot.lane.b32.xlu0 %v30, 50
    %v32 = vpop.permute.xlu0 %31
    %vm33 = vcmask 490896
    %34 = vst.msk [vmem:[#allocation0] sm:$0x1] %vm33, %v32
    %s35 = scalar_lea.vmem %s0, 4
    %v36 = vld [vmem:[%s35] sm:$0x1]
    %37 = vrot.lane.b32.xlu0 %v36, 40
    %v38 = vpop.permute.xlu0 %37
    %vm39 = vcmask 408896
    %40 = vst.msk [vmem:[#allocation0] sm:$0x1] %vm39, %v38
    %s41 = scalar_lea.vmem %s0, 3
    %v42 = vld [vmem:[%s41] sm:$0x1]
    %43 = vrot.lane.b32.xlu0 %v42, 30
    %v44 = vpop.permute.xlu0 %43
    %vm45 = vcmask 326896
    %46 = vst.msk [vmem:[#allocation0] sm:$0x1] %vm45, %v44
    %s47 = scalar_lea.vmem %s0, 2
    %v48 = vld [vmem:[%s47] sm:$0x1]
    %49 = vrot.lane.b32.xlu0 %v48, 20
    %v50 = vpop.permute.xlu0 %49
    %vm51 = vcmask 244896
    %52 = vst.msk [vmem:[#allocation0] sm:$0x1] %vm51, %v50
    %s53 = scalar_lea.vmem %s0, 1
    %v54 = vld [vmem:[%s53] sm:$0x1]
    %55 = vrot.lane.b32.xlu0 %v54, 10
    %v56 = vpop.permute.xlu0 %55
    %vm57 = vcmask 162896
    %58 = vst.msk [vmem:[#allocation0] sm:$0x1] %vm57, %v56
    %s60 = sshllo.u32 0, 1
    %v62 = vld [vmem:[#allocation0] sm:%s60]
    %s63 = sshllo.u32 0, 1
    %64 = vst [vmem:[%s1] sm:%s63] %v62

// kernel: tile.22
$region0: #{tile.22}
  #allocation0 [shape = 's32[1]{0}', space=sflag, size = 0x4, scoped, tag = 'scoped memory for tile.22']
  %s0 = inlined_call_operand.vmem [shape: f32[100], index: 0, kind: input, shape index: {}]
  %s1 = inlined_call_operand.vmem [shape: f32[2,100], index: 1, kind: output, shape index: {}]
  // Predicated region
  $region2: #{tile.22} parent=0 // pred_check
    _
  $region3: #{tile.22} parent=0 // pred_check_branch
    %3 = sbr.rel (0) target = $region5
  $region4: #{tile.22} parent=0 // pred_region
    _
  $region5: #{tile.22} parent=0 // pred_fallthru
    _
  %v4 = vld [vmem:[%s0] ss:$0 sm:$0xff]
  %5 = vst [vmem:[%s1] sm:$0x3] %v4

// kernel: tile.23
$region0: #{tile.23}
  %s0 = inlined_call_operand.vmem [shape: f32[2,100], index: 0, kind: input, shape index: {}]
  %s1 = inlined_call_operand.vmem [shape: f32[1,200], index: 1, kind: output, shape index: {}]
  $region1: #{tile.23} parent=0
    #allocation0 [shape = 'u8[8192]{0}', space=vmem, size = 0x2000, scoped, tag = 'scoped mem for output reshape']
    #allocation1 [shape = 'u8[4096]{0}', space=vmem, size = 0x1000, scoped, tag = 'scoped mem for input reshape']
    %s3 = sshllo.u32 0, 2
    %v4 = vld [vmem:[%s0] sm:%s3]
    %5 = vst [vmem:[#allocation1] sm:%s3] %v4
    %v6 = vld [vmem:[#allocation1] sm:$0x1]
    %vm7 = vcmask 818176
    %8 = vst.msk [vmem:[#allocation0] sm:$0x1] %vm7, %v6
    %s9 = scalar_lea.vmem [#allocation1], 1
    %v10 = vld [vmem:[%s9] sm:$0x1]
    %s11 = scalar_lea.vmem [#allocation1], 1
    %v12 = vld [vmem:[%s11] sm:$0x1]
    %vm13 = vcmask 228352
    %v14 = vsel %vm13, %v12, %v10
    %15 = vrot.lane.b32.xlu0 %v14, 100
    %v16 = vpop.permute.xlu0 %15
    %vm17 = vcmask 588800
    %s18 = scalar_lea.vmem [#allocation0], 8
    %19 = vst.msk [vmem:[%s18] sm:$0x1] %vm17, %v16
    %vm20 = vcmask 1048352
    %21 = vst.msk [vmem:[#allocation0] sm:$0x1] %vm20, %v16
    %s23 = sshllo.u32 0, 1
    %v25 = vld [vmem:[#allocation0] sm:%s23]
    %s26 = sshllo.u32 0, 1
    %27 = vst [vmem:[%s1] sm:%s26] %v25
    %s28 = scalar_lea.vmem [#allocation0], 8
    %v29 = vld [vmem:[%s28] sm:%s23]
    %s30 = sshllo.u32 0, 1
    %s31 = scalar_lea.vmem %s1, 1
    %32 = vst [vmem:[%s31] sm:%s30] %v29

// kernel: net_t32_forward.5
$region0: #{net_t32_forward.5}
  #allocation0 [shape = 'u32[]', space=smem, size = 0x4, offset = 0x4, fixed_abs, tag = 'smem constant byte address 0x4 - core index']
  #allocation1 [shape = 'u32[144,128]{1,0:T(1,128)}', space=vmem, size = 0x12000, scoped, tag = 'internal scratch']
  %s0 = inlined_call_operand.vmem [shape: bf16[16,222], index: 0, kind: input, shape index: {}]
  %s1 = inlined_call_operand.vmem [shape: bf16[16,222], index: 1, kind: input, shape index: {}]
  %s2 = inlined_call_operand.vmem [shape: bf16[16,288], index: 2, kind: input, shape index: {}]
  %s3 = inlined_call_operand.vmem [shape: f32[16,1], index: 3, kind: input, shape index: {}]
  %s4 = inlined_call_operand.vmem [shape: f32[16,1], index: 4, kind: input, shape index: {}]
  %s5 = inlined_call_operand.vmem [shape: f32[1,200], index: 5, kind: input, shape index: {}]
  %s6 = inlined_call_operand.vmem [shape: bf16[16,200], index: 6, kind: output, shape index: {}]
  %s7 = sld [smem:[#allocation0]]
  $region34: #{net_t32_forward.5} parent=0
    _
  %s9 = ssub.s32 1, %s7
  %s10 = scalar_select 0, %s9, %s7
  // Predicated region
  $region2: #{net_t32_forward.5} parent=0 // pred_check
    _
  $region3: #{net_t32_forward.5} parent=0 // pred_check_branch
    %12 = sbr.rel (0) target = $region5
  $region4: #{net_t32_forward.5} parent=0 // pred_region
    _
  $region5: #{net_t32_forward.5} parent=0 // pred_fallthru
    _
  // Predicated region
  $region6: #{net_t32_forward.5} parent=0 // pred_check
    _
  $region7: #{net_t32_forward.5} parent=0 // pred_check_branch
    %14 = sbr.rel (0) target = $region9
  $region8: #{net_t32_forward.5} parent=0 // pred_region
    _
  $region9: #{net_t32_forward.5} parent=0 // pred_fallthru
    _
  // Predicated region
  $region10: #{net_t32_forward.5} parent=0 // pred_check
    _
  $region11: #{net_t32_forward.5} parent=0 // pred_check_branch
    %16 = sbr.rel (0) target = $region13
  $region12: #{net_t32_forward.5} parent=0 // pred_region
    _
  $region13: #{net_t32_forward.5} parent=0 // pred_fallthru
    _
  // Predicated region
  $region14: #{net_t32_forward.5} parent=0 // pred_check
    _
  $region15: #{net_t32_forward.5} parent=0 // pred_check_branch
    %18 = sbr.rel (0) target = $region17
  $region16: #{net_t32_forward.5} parent=0 // pred_region
    _
  $region17: #{net_t32_forward.5} parent=0 // pred_fallthru
    _
  // Predicated region
  $region18: #{net_t32_forward.5} parent=0 // pred_check
    _
  $region19: #{net_t32_forward.5} parent=0 // pred_check_branch
    %20 = sbr.rel (0) target = $region21
  $region20: #{net_t32_forward.5} parent=0 // pred_region
    _
  $region21: #{net_t32_forward.5} parent=0 // pred_fallthru
    _
  // Predicated region
  $region22: #{net_t32_forward.5} parent=0 // pred_check
    _
  $region23: #{net_t32_forward.5} parent=0 // pred_check_branch
    %22 = sbr.rel (0) target = $region25
  $region24: #{net_t32_forward.5} parent=0 // pred_region
    _
  $region25: #{net_t32_forward.5} parent=0 // pred_fallthru
    _
  %v24 = vld [vmem:[%s0] sm:$0xff]
  %v25 = vld [vmem:[%s0 + $0x8] sm:$0xff]
  %v28 = vunpack.c.l.b16 %v24
  %v29 = vunpack.c.h.b16 %v24
  %v30 = vunpack.c.l.b16 %v25
  %v31 = vunpack.c.h.b16 %v25
  %v32 = vpack.c.b16 %v30, %v28
  %v33 = vpack.c.b16 %v31, %v29
  %36 = vrot.lane.b32.xlu0 %v32, 127
  %v37 = vpop.permute.xlu0 %36
  %38 = vrot.lane.b32.xlu0 %v33, 127
  %v39 = vpop.permute.xlu0 %38
  %vm40 = vcmask 1039360
  %v41 = vsel %vm40, %v37, %v39
  %44 = vrot.lane.b32.xlu0 %v32, 126
  %v45 = vpop.permute.xlu0 %44
  %46 = vrot.lane.b32.xlu0 %v33, 126
  %v47 = vpop.permute.xlu0 %46
  %vm48 = vcmask 1031168
  %v49 = vsel %vm48, %v45, %v47
  %52 = vrot.lane.b32.xlu0 %v32, 118
  %v53 = vpop.permute.xlu0 %52
  %54 = vrot.lane.b32.xlu0 %v33, 118
  %v55 = vpop.permute.xlu0 %54
  %vm56 = vcmask 965632
  %v57 = vsel %vm56, %v53, %v55
  %60 = vrot.lane.b32.xlu0 %v32, 117
  %v61 = vpop.permute.xlu0 %60
  %62 = vrot.lane.b32.xlu0 %v33, 117
  %v63 = vpop.permute.xlu0 %62
  %vm64 = vcmask 957440
  %v65 = vsel %vm64, %v61, %v63
  %68 = vrot.lane.b32.xlu0 %v32, 116
  %v69 = vpop.permute.xlu0 %68
  %70 = vrot.lane.b32.xlu0 %v33, 116
  %v71 = vpop.permute.xlu0 %70
  %vm72 = vcmask 949248
  %v73 = vsel %vm72, %v69, %v71
  %76 = vrot.lane.b32.xlu0 %v32, 108
  %v77 = vpop.permute.xlu0 %76
  %78 = vrot.lane.b32.xlu0 %v33, 108
  %v79 = vpop.permute.xlu0 %78
  %vm80 = vcmask 883712
  %v81 = vsel %vm80, %v77, %v79
  %84 = vrot.lane.b32.xlu0 %v32, 107
  %v85 = vpop.permute.xlu0 %84
  %86 = vrot.lane.b32.xlu0 %v33, 107
  %v87 = vpop.permute.xlu0 %86
  %vm88 = vcmask 875520
  %v89 = vsel %vm88, %v85, %v87
  %92 = vrot.lane.b32.xlu0 %v32, 106
  %v93 = vpop.permute.xlu0 %92
  %94 = vrot.lane.b32.xlu0 %v33, 106
  %v95 = vpop.permute.xlu0 %94
  %vm96 = vcmask 867328
  %v97 = vsel %vm96, %v93, %v95
  %v100 = vld [vmem:[%s1] sm:$0xff]
  %v101 = vld [vmem:[%s1 + $0x8] sm:$0xff]
  %v104 = vunpack.c.l.b16 %v100
  %v105 = vunpack.c.h.b16 %v100
  %v106 = vunpack.c.l.b16 %v101
  %v107 = vunpack.c.h.b16 %v101
  %v108 = vpack.c.b16 %v106, %v104
  %v109 = vpack.c.b16 %v107, %v105
  %112 = vrot.lane.b32.xlu0 %v108, 127
  %v113 = vpop.permute.xlu0 %112
  %114 = vrot.lane.b32.xlu0 %v109, 127
  %v115 = vpop.permute.xlu0 %114
  %v116 = vsel %vm40, %v113, %v115
  %119 = vrot.lane.b32.xlu0 %v108, 126
  %v120 = vpop.permute.xlu0 %119
  %121 = vrot.lane.b32.xlu0 %v109, 126
  %v122 = vpop.permute.xlu0 %121
  %v123 = vsel %vm48, %v120, %v122
  %126 = vrot.lane.b32.xlu0 %v108, 118
  %v127 = vpop.permute.xlu0 %126
  %128 = vrot.lane.b32.xlu0 %v109, 118
  %v129 = vpop.permute.xlu0 %128
  %v130 = vsel %vm56, %v127, %v129
  %133 = vrot.lane.b32.xlu0 %v108, 117
  %v134 = vpop.permute.xlu0 %133
  %135 = vrot.lane.b32.xlu0 %v109, 117
  %v136 = vpop.permute.xlu0 %135
  %v137 = vsel %vm64, %v134, %v136
  %140 = vrot.lane.b32.xlu0 %v108, 116
  %v141 = vpop.permute.xlu0 %140
  %142 = vrot.lane.b32.xlu0 %v109, 116
  %v143 = vpop.permute.xlu0 %142
  %v144 = vsel %vm72, %v141, %v143
  %147 = vrot.lane.b32.xlu0 %v108, 108
  %v148 = vpop.permute.xlu0 %147
  %149 = vrot.lane.b32.xlu0 %v109, 108
  %v150 = vpop.permute.xlu0 %149
  %v151 = vsel %vm80, %v148, %v150
  %154 = vrot.lane.b32.xlu0 %v108, 107
  %v155 = vpop.permute.xlu0 %154
  %156 = vrot.lane.b32.xlu0 %v109, 107
  %v157 = vpop.permute.xlu0 %156
  %v158 = vsel %vm88, %v155, %v157
  %161 = vrot.lane.b32.xlu0 %v108, 106
  %v162 = vpop.permute.xlu0 %161
  %163 = vrot.lane.b32.xlu0 %v109, 106
  %v164 = vpop.permute.xlu0 %163
  %v165 = vsel %vm96, %v162, %v164
  %v168 = vld [vmem:[%s2] sm:$0xff]
  %v169 = vld [vmem:[%s2 + $0x8] sm:$0xf]
  %v170 = vld [vmem:[%s2 + $0xc] sm:$0xff]
  %v171 = vld [vmem:[%s2 + $0x14] sm:$0xf]
  %v176 = vunpack.c.l.b16 %v168
  %v177 = vunpack.c.h.b16 %v168
  %v178 = vunpack.c.l.b16 %v169
  %v179 = vunpack.c.l.b16 %v170
  %v180 = vunpack.c.h.b16 %v170
  %v181 = vunpack.c.l.b16 %v171
  %v182 = vpack.c.b16 %v179, %v176
  %v183 = vpack.c.b16 %v180, %v177
  %v184 = vpack.c.b16 %v181, %v178
  %vm187 = vcmask 261120
  %v189 = vsel %vm187, %v184, 0
  %191 = vmatprep.subr.bf16.mxu0 %v33
  %192 = vmatpush1.bf16.msra.mxu0 %v32
  %193 = vmatprep.subr.bf16.mxu0 %v39
  %194 = vmatpush1.bf16.msra.mxu0 %v41
  %195 = vmatprep.subr.bf16.mxu0 %v47
  %196 = vmatpush1.bf16.msra.mxu0 %v49
  %197 = vmatprep.subr.bf16.mxu0 %v55
  %198 = vmatpush1.bf16.msra.mxu0 %v57
  %199 = vmatprep.subr.bf16.mxu0 %v63
  %200 = vmatpush1.bf16.msra.mxu0 %v65
  %201 = vmatprep.subr.bf16.mxu0 %v71
  %202 = vmatpush1.bf16.msra.mxu0 %v73
  %203 = vmatprep.subr.bf16.mxu0 %v79
  %204 = vmatpush1.bf16.msra.mxu0 %v81
  %205 = vmatprep.subr.bf16.mxu0 %v87
  %206 = vmatpush1.bf16.msra.mxu0 %v89
  %207 = vmatprep.subr.bf16.mxu0 %v95
  %208 = vmatpush1.bf16.msra.mxu0 %v97
  %209 = vmatprep.subr.bf16.mxu0 %v109
  %210 = vmatpush1.bf16.msra.mxu0 %v108
  %211 = vmatprep.subr.bf16.mxu0 %v115
  %212 = vmatpush1.bf16.msra.mxu0 %v116
  %213 = vmatprep.subr.bf16.mxu0 %v122
  %214 = vmatpush1.bf16.msra.mxu0 %v123
  %215 = vmatprep.subr.bf16.mxu0 %v129
  %216 = vmatpush1.bf16.msra.mxu0 %v130
  %217 = vmatprep.subr.bf16.mxu0 %v136
  %218 = vmatpush1.bf16.msra.mxu0 %v137
  %219 = vmatprep.subr.bf16.mxu0 %v143
  %220 = vmatpush1.bf16.msra.mxu0 %v144
  %221 = vmatprep.subr.bf16.mxu0 %v150
  %222 = vmatpush1.bf16.msra.mxu0 %v151
  %223 = vmatprep.mubr.bf16.mxu0 %v183
  %224 = vmatmul.mubr.bf16.gmra.mrb[0].mxu0 %v182
  %v225 = vpop.f32.mrb[0].mxu0
  %v226 = vadd.f32 0.0, %v225
  %v227 = vpop.f32.mrb[0].mxu0
  %v228 = vadd.f32 0.0, %v227
  %v229 = vpop.f32.mrb[0].mxu0
  %v230 = vadd.f32 0.0, %v229
  %v231 = vpop.f32.mrb[0].mxu0
  %v232 = vadd.f32 0.0, %v231
  %233 = vdwg.mxu0
  %234 = vmatprep.subr.bf16.mxu0 %v157
  %235 = vmatpush1.bf16.msra.mxu0 %v158
  %236 = vmatprep.subr.bf16.mxu0 %v164
  %237 = vmatpush1.bf16.msra.mxu0 %v165
  %238 = vmatprep.subr.bf16.mxu0 0
  %239 = vmatpush1.bf16.msra.mxu0 0
  %240 = vmatprep.subr.bf16.mxu0 0
  %241 = vmatpush1.bf16.msra.mxu0 0
  %242 = vmatprep.subr.bf16.mxu0 0
  %243 = vmatpush1.bf16.msra.mxu0 0
  %244 = vmatprep.subr.bf16.mxu0 0
  %245 = vmatpush1.bf16.msra.mxu0 0
  %246 = vmatprep.subr.bf16.mxu0 0
  %247 = vmatpush1.bf16.msra.mxu0 0
  %248 = vmatprep.subr.bf16.mxu0 0
  %249 = vmatpush1.bf16.msra.mxu0 0
  %250 = vmatprep.subr.bf16.mxu0 0
  %251 = vmatpush1.bf16.msra.mxu0 0
  %252 = vmatprep.subr.bf16.mxu0 0
  %253 = vmatpush1.bf16.msra.mxu0 0
  %254 = vmatprep.subr.bf16.mxu0 0
  %255 = vmatpush1.bf16.msra.mxu0 0
  %256 = vmatprep.subr.bf16.mxu0 0
  %257 = vmatpush1.bf16.msra.mxu0 0
  %258 = vmatprep.subr.bf16.mxu0 0
  %259 = vmatpush1.bf16.msra.mxu0 0
  %260 = vmatprep.subr.bf16.mxu0 0
  %261 = vmatpush1.bf16.msra.mxu0 0
  %262 = vmatprep.subr.bf16.mxu0 0
  %263 = vmatpush1.bf16.msra.mxu0 0
  %264 = vmatprep.subr.bf16.mxu0 0
  %265 = vmatpush1.bf16.msra.mxu0 0
  %266 = vmatprep.mubr.bf16.mxu0 0
  %267 = vmatmul.mubr.bf16.gmra.mrb[0].mxu0 %v189
  %v268 = vpop.f32.mrb[0].mxu0
  %v269 = vadd.f32 %v226, %v268
  %v270 = vpop.f32.mrb[0].mxu0
  %v271 = vadd.f32 %v228, %v270
  %v272 = vpop.f32.mrb[0].mxu0
  %v273 = vadd.f32 %v230, %v272
  %v274 = vpop.f32.mrb[0].mxu0
  %v275 = vadd.f32 %v232, %v274
  %276 = vdwg.mxu0
  %v277 = vld [vmem:[%s5] sm:$0x3]
  %v279 = vlaneseq
  %v280 = vshrl.u32 %v279, 7
  %v281 = vsub.s32 0, %v280
  %v282 = vrot.slane %v277, %v281
  %v283 = vlaneseq
  %v284 = vshrl.u32 %v283, 7
  %v285 = vsub.s32 1, %v284
  %v286 = vrot.slane %v277, %v285
  %v289 = vmul.f32 %v269, %v282
  %v290 = vmul.f32 %v271, %v286
  %v291 = vmul.f32 %v273, %v282
  %v292 = vmul.f32 %v275, %v286
  %vm293 = vcmask 588800
  %v294 = vsel %vm293, %v290, 0.0
  %v295 = vadd.f32 %v289, %v294
  %296 = vadd.xlane.f32.xlu0 %v295
  %v297 = vpop.xlane.xlu0 %296
  %v298 = vsel %vm293, %v292, 0.0
  %v299 = vadd.f32 %v291, %v298
  %300 = vadd.xlane.f32.xlu0 %v299
  %v301 = vpop.xlane.xlu0 %300
  %v302 = vmul.f32 %v297, 0.0078125
  %v303 = vmul.f32 %v301, 0.0078125
  %v304 = vsub.f32 %v269, %v302
  %v305 = vsub.f32 %v271, %v302
  %v306 = vsub.f32 %v273, %v303
  %v307 = vsub.f32 %v275, %v303
  %v308 = vmul.f32 %v304, %v282
  %v309 = vmul.f32 %v305, %v286
  %v310 = vmul.f32 %v306, %v282
  %v311 = vmul.f32 %v307, %v286
  %v312 = vmul.f32 %v308, %v308
  %v313 = vmul.f32 %v309, %v309
  %v314 = vmul.f32 %v310, %v310
  %v315 = vmul.f32 %v311, %v311
  %v316 = vsel %vm293, %v313, 0.0
  %v317 = vadd.f32 %v312, %v316
  %318 = vadd.xlane.f32.xlu0 %v317
  %v319 = vpop.xlane.xlu0 %318
  %v320 = vsel %vm293, %v315, 0.0
  %v321 = vadd.f32 %v314, %v320
  %322 = vadd.xlane.f32.xlu0 %v321
  %v323 = vpop.xlane.xlu0 %322
  %v324 = vmul.f32 %v319, 0.0078125
  %v325 = vmul.f32 %v323, 0.0078125
  %v326 = vadd.f32 %v324, 1e-05
  %v327 = vadd.f32 %v325, 1e-05
  %v328 = vrsqrt.pop %v326
  %v329 = vrsqrt.pop %v327
  %v330 = vld [vmem:[%s3] sm:$0xff]
  %v331 = vld [vmem:[%s3 + $0x8] sm:$0xff]
  %v332 = vmul.f32 %v330, %v328
  %v333 = vmul.f32 %v331, %v329
  %v334 = vld [vmem:[%s4] sm:$0xff]
  %v335 = vld [vmem:[%s4 + $0x8] sm:$0xff]
  %v336 = vmul.f32 %v302, %v332
  %v337 = vmul.f32 %v303, %v333
  %v338 = vsub.f32 %v334, %v336
  %v339 = vsub.f32 %v335, %v337
  %341 = vset.pattern.permute.xlu0 0
  %342 = vperm.xlu0 %341, %v332
  %v343 = vpop.permute.xlu0 %342
  %346 = vset.pattern.permute.xlu0 0
  %347 = vperm.xlu0 %346, %v333
  %v348 = vpop.permute.xlu0 %347
  %v350 = vmul.f32 %v269, %v343
  %v351 = vmul.f32 %v271, %v343
  %v352 = vmul.f32 %v273, %v348
  %v353 = vmul.f32 %v275, %v348
  %355 = vset.pattern.permute.xlu0 0
  %356 = vperm.xlu0 %355, %v338
  %v357 = vpop.permute.xlu0 %356
  %360 = vset.pattern.permute.xlu0 0
  %361 = vperm.xlu0 %360, %v339
  %v362 = vpop.permute.xlu0 %361
  %v364 = vadd.f32 %v350, %v357
  %v365 = vadd.f32 %v351, %v357
  %v366 = vadd.f32 %v352, %v362
  %v367 = vadd.f32 %v353, %v362
  %vm368 = vcmp.ge.f32.partialorder %v364, 0.0
  %vm369 = vcmp.ge.f32.partialorder %v365, 0.0
  %vm370 = vcmp.ge.f32.partialorder %v366, 0.0
  %vm371 = vcmp.ge.f32.partialorder %v367, 0.0
  %v372 = vmul.f32 %v364, 0.2
  %v373 = vmul.f32 %v365, 0.2
  %v374 = vmul.f32 %v366, 0.2
  %v375 = vmul.f32 %v367, 0.2
  %v376 = vsel %vm368, %v364, %v372
  %v377 = vsel %vm369, %v365, %v373
  %v378 = vsel %vm370, %v366, %v374
  %v379 = vsel %vm371, %v367, %v375
  %v380 = vpack.c.bf16 %v378, %v376
  %v381 = vpack.c.bf16 %v379, %v377
  %v384 = vunpack.c.l.b16 %v380
  %v385 = vunpack.c.l.b16 %v381
  %v386 = vunpack.c.h.b16 %v380
  %v387 = vunpack.c.h.b16 %v381
  %v388 = vpack.c.b16 %v385, %v384
  %v389 = vpack.c.b16 %v387, %v386
  %vm392 = vcmask 1043456
  %vm393 = vcmask 588804
  %vm394 = vmor %vm393, %vm392
  %395 = vst.msk [vmem:[%s6] sm:$0xff] %vm394, %v388
  %396 = vst.msk [vmem:[%s6 + $0x8] sm:$0xff] %vm394, %v389
  // Predicated region
  $region26: #{net_t32_forward.5} parent=0 // pred_check
    _
  $region27: #{net_t32_forward.5} parent=0 // pred_check_branch
    %398 = sbr.rel (0) target = $region29
  $region28: #{net_t32_forward.5} parent=0 // pred_region
    _
  $region29: #{net_t32_forward.5} parent=0 // pred_fallthru
    _
  // Predicated region
  $region30: #{net_t32_forward.5} parent=0 // pred_check
    _
  $region31: #{net_t32_forward.5} parent=0 // pred_check_branch
    %400 = sbr.rel (0) target = $region33
  $region32: #{net_t32_forward.5} parent=0 // pred_region
    _
  $region33: #{net_t32_forward.5} parent=0 // pred_fallthru
    _

// kernel: tile.25
$region0: #{tile.25}
  %s0 = inlined_call_operand.vmem [shape: f32[18,18], index: 0, kind: input, shape index: {}]
  %s1 = inlined_call_operand.vmem [shape: f32[324], index: 1, kind: output, shape index: {}]
  $region1: #{tile.25} parent=0
    #allocation0 [shape = 'u8[4096]{0}', space=vmem, size = 0x1000, scoped, tag = 'scoped mem for output reshape']
    %v2 = vld [vmem:[%s0] sm:$0x1]
    %vm3 = vcmask 146432
    %4 = vst.msk [vmem:[#allocation0] sm:$0x1] %vm3, %v2
    %s5 = scalar_lea.vmem %s0, 7
    %v6 = vld [vmem:[%s5] sm:$0x1]
    %s7 = scalar_lea.vmem %s0, 7
    %v8 = vld [vmem:[%s7] sm:$0x1]
    %vm9 = vcmask 15360
    %v10 = vsel %vm9, %v8, %v6
    %11 = vrot.lane.b32.xlu0 %v10, 126
    %v12 = vpop.permute.xlu0 %11
    %vm13 = vcmask 130048
    %s14 = scalar_lea.vmem [#allocation0], 1
    %15 = vst.msk [vmem:[%s14] sm:$0x1] %vm13, %v12
    %vm16 = vcmask 1048560
    %17 = vst.msk [vmem:[#allocation0] sm:$0x1] %vm16, %v12
    %s18 = scalar_lea.vmem %s0, 14
    %v19 = vld [vmem:[%s18] sm:$0x1]
    %s20 = scalar_lea.vmem %s0, 14
    %v21 = vld [vmem:[%s20] sm:$0x1]
    %vm22 = vcmask 31744
    %v23 = vsel %vm22, %v21, %v19
    %24 = vrot.lane.b32.xlu0 %v23, 124
    %v25 = vpop.permute.xlu0 %24
    %vm26 = vcmask 113664
    %s27 = scalar_lea.vmem [#allocation0], 2
    %28 = vst.msk [vmem:[%s27] sm:$0x1] %vm26, %v25
    %vm29 = vcmask 1048544
    %s30 = scalar_lea.vmem [#allocation0], 1
    %31 = vst.msk [vmem:[%s30] sm:$0x1] %vm29, %v25
    %s32 = scalar_lea.vmem %s0, 6
    %v33 = vld [vmem:[%s32] sm:$0x1]
    %34 = vrot.lane.b32.xlu0 %v33, 108
    %v35 = vpop.permute.xlu0 %34
    %vm36 = vcmask 1032032
    %37 = vst.msk [vmem:[#allocation0] sm:$0x1] %vm36, %v35
    %s38 = scalar_lea.vmem %s0, 13
    %v39 = vld [vmem:[%s38] sm:$0x1]
    %40 = vrot.lane.b32.xlu0 %v39, 106
    %v41 = vpop.permute.xlu0 %40
    %vm42 = vcmask 1015632
    %s43 = scalar_lea.vmem [#allocation0], 1
    %44 = vst.msk [vmem:[%s43] sm:$0x1] %vm42, %v41
    %s45 = scalar_lea.vmem %s0, 5
    %v46 = vld [vmem:[%s45] sm:$0x1]
    %47 = vrot.lane.b32.xlu0 %v46, 90
    %v48 = vpop.permute.xlu0 %47
    %vm49 = vcmask 884432
    %50 = vst.msk [vmem:[#allocation0] sm:$0x1] %vm49, %v48
    %s51 = scalar_lea.vmem %s0, 12
    %v52 = vld [vmem:[%s51] sm:$0x1]
    %53 = vrot.lane.b32.xlu0 %v52, 88
    %v54 = vpop.permute.xlu0 %53
    %vm55 = vcmask 868032
    %s56 = scalar_lea.vmem [#allocation0], 1
    %57 = vst.msk [vmem:[%s56] sm:$0x1] %vm55, %v54
    %s58 = scalar_lea.vmem %s0, 4
    %v59 = vld [vmem:[%s58] sm:$0x1]
    %60 = vrot.lane.b32.xlu0 %v59, 72
    %v61 = vpop.permute.xlu0 %60
    %vm62 = vcmask 736832
    %63 = vst.msk [vmem:[#allocation0] sm:$0x1] %vm62, %v61
    %s64 = scalar_lea.vmem %s0, 11
    %v65 = vld [vmem:[%s64] sm:$0x1]
    %66 = vrot.lane.b32.xlu0 %v65, 70
    %v67 = vpop.permute.xlu0 %66
    %vm68 = vcmask 720432
    %s69 = scalar_lea.vmem [#allocation0], 1
    %70 = vst.msk [vmem:[%s69] sm:$0x1] %vm68, %v67
    %s71 = scalar_lea.vmem %s0, 3
    %v72 = vld [vmem:[%s71] sm:$0x1]
    %73 = vrot.lane.b32.xlu0 %v72, 54
    %v74 = vpop.permute.xlu0 %73
    %vm75 = vcmask 589232
    %76 = vst.msk [vmem:[#allocation0] sm:$0x1] %vm75, %v74
    %s77 = scalar_lea.vmem %s0, 10
    %v78 = vld [vmem:[%s77] sm:$0x1]
    %79 = vrot.lane.b32.xlu0 %v78, 52
    %v80 = vpop.permute.xlu0 %79
    %vm81 = vcmask 572832
    %s82 = scalar_lea.vmem [#allocation0], 1
    %83 = vst.msk [vmem:[%s82] sm:$0x1] %vm81, %v80
    %s84 = scalar_lea.vmem %s0, 17
    %v85 = vld [vmem:[%s84] sm:$0x1]
    %86 = vrot.lane.b32.xlu0 %v85, 50
    %v87 = vpop.permute.xlu0 %86
    %vm88 = vcmask 556432
    %s89 = scalar_lea.vmem [#allocation0], 2
    %90 = vst.msk [vmem:[%s89] sm:$0x1] %vm88, %v87
    %s91 = scalar_lea.vmem %s0, 2
    %v92 = vld [vmem:[%s91] sm:$0x1]
    %93 = vrot.lane.b32.xlu0 %v92, 36
    %v94 = vpop.permute.xlu0 %93
    %vm95 = vcmask 441632
    %96 = vst.msk [vmem:[#allocation0] sm:$0x1] %vm95, %v94
    %s97 = scalar_lea.vmem %s0, 9
    %v98 = vld [vmem:[%s97] sm:$0x1]
    %99 = vrot.lane.b32.xlu0 %v98, 34
    %v100 = vpop.permute.xlu0 %99
    %vm101 = vcmask 425232
    %s102 = scalar_lea.vmem [#allocation0], 1
    %103 = vst.msk [vmem:[%s102] sm:$0x1] %vm101, %v100
    %s104 = scalar_lea.vmem %s0, 16
    %v105 = vld [vmem:[%s104] sm:$0x1]
    %106 = vrot.lane.b32.xlu0 %v105, 32
    %v107 = vpop.permute.xlu0 %106
    %vm108 = vcmask 408832
    %s109 = scalar_lea.vmem [#allocation0], 2
    %110 = vst.msk [vmem:[%s109] sm:$0x1] %vm108, %v107
    %s111 = scalar_lea.vmem %s0, 1
    %v112 = vld [vmem:[%s111] sm:$0x1]
    %113 = vrot.lane.b32.xlu0 %v112, 18
    %v114 = vpop.permute.xlu0 %113
    %vm115 = vcmask 294032
    %116 = vst.msk [vmem:[#allocation0] sm:$0x1] %vm115, %v114
    %s117 = scalar_lea.vmem %s0, 8
    %v118 = vld [vmem:[%s117] sm:$0x1]
    %119 = vrot.lane.b32.xlu0 %v118, 16
    %v120 = vpop.permute.xlu0 %119
    %vm121 = vcmask 277632
    %s122 = scalar_lea.vmem [#allocation0], 1
    %123 = vst.msk [vmem:[%s122] sm:$0x1] %vm121, %v120
    %s124 = scalar_lea.vmem %s0, 15
    %v125 = vld [vmem:[%s124] sm:$0x1]
    %126 = vrot.lane.b32.xlu0 %v125, 14
    %v127 = vpop.permute.xlu0 %126
    %vm128 = vcmask 261232
    %s129 = scalar_lea.vmem [#allocation0], 2
    %130 = vst.msk [vmem:[%s129] sm:$0x1] %vm128, %v127
    %s132 = sshllo.u32 0, 4
    %v134 = vld [vmem:[#allocation0] sm:%s132]
    %s135 = sshllo.u32 0, 4
    %136 = vst [vmem:[%s1] sm:%s135] %v134

// kernel: tile.26
$region0: #{tile.26}
  #allocation0 [shape = 's32[1]{0}', space=sflag, size = 0x4, scoped, tag = 'scoped memory for tile.26']
  %s0 = inlined_call_operand.vmem [shape: f32[324], index: 0, kind: input, shape index: {}]
  %s1 = inlined_call_operand.vmem [shape: f32[2,324], index: 1, kind: output, shape index: {}]
  // Predicated region
  $region2: #{tile.26} parent=0 // pred_check
    _
  $region3: #{tile.26} parent=0 // pred_check_branch
    %3 = sbr.rel (0) target = $region5
  $region4: #{tile.26} parent=0 // pred_region
    _
  $region5: #{tile.26} parent=0 // pred_fallthru
    _
  %v4 = vld [vmem:[%s0] ss:$0 sm:$0xff]
  %5 = vst [vmem:[%s1] sm:$0x3] %v4
  %s6 = scalar_lea.vmem %s0, 1
  %v7 = vld [vmem:[%s6] ss:$0 sm:$0xff]
  %s8 = scalar_lea.vmem %s1, 2
  %9 = vst [vmem:[%s8] sm:$0x3] %v7
  %s10 = scalar_lea.vmem %s0, 2
  %v11 = vld [vmem:[%s10] ss:$0 sm:$0xff]
  %s12 = scalar_lea.vmem %s1, 4
  %13 = vst [vmem:[%s12] sm:$0x3] %v11

// kernel: tile.27
$region0: #{tile.27}
  %s0 = inlined_call_operand.vmem [shape: f32[2,324], index: 0, kind: input, shape index: {}]
  %s1 = inlined_call_operand.vmem [shape: f32[1,648], index: 1, kind: output, shape index: {}]
  $region1: #{tile.27} parent=0
    #allocation0 [shape = 'u8[24576]{0}', space=vmem, size = 0x6000, scoped, tag = 'scoped mem for output reshape']
    #allocation1 [shape = 'u8[12288]{0}', space=vmem, size = 0x3000, scoped, tag = 'scoped mem for input reshape']
    %s3 = sshllo.u32 0, 2
    %s4 = smul.addr 2, 2
    %s5 = scalar_lea.vmem %s0, %s4
    %v6 = vld [vmem:[%s5] sm:%s3]
    %s7 = scalar_lea.vmem [#allocation1], 16
    %8 = vst [vmem:[%s7] sm:%s3] %v6
    %s9 = scalar_lea.vmem %s0, 2
    %v10 = vld [vmem:[%s9] sm:%s3]
    %s11 = scalar_lea.vmem [#allocation1], 8
    %12 = vst [vmem:[%s11] sm:%s3] %v10
    %v13 = vld [vmem:[%s0] sm:%s3]
    %14 = vst [vmem:[#allocation1] sm:%s3] %v13
    %s15 = scalar_lea.vmem [#allocation1], 16
    %v16 = vld [vmem:[%s15] sm:$0x1]
    %vm17 = vcmask 556032
    %s18 = scalar_lea.vmem [#allocation0], 16
    %19 = vst.msk [vmem:[%s18] sm:$0x1] %vm17, %v16
    %s20 = smov 3
    %v21 = vld [vmem:[#allocation1] ss:$8 sm:%s20]
    %22 = vst [vmem:[#allocation0] ss:$8 sm:$0x3] %v21
    %s23 = scalar_lea.vmem [#allocation1], 17
    %v24 = vld [vmem:[%s23] sm:$0x1]
    %s25 = scalar_lea.vmem [#allocation1], 17
    %s26 = smov 3
    %v27 = vld [vmem:[%s25] ss:$-16 sm:%s26]
    %s28 = scalar_lea.vmem [#allocation1], 7
    %v29 = vld [vmem:[%s28] sm:$0x4]
    %vm30 = vcmask 1042434
    %v31 = vsel %vm30, %v29, %v27
    %vm32 = vcmask 490496
    %v33 = vsel %vm32, %v31, %v24
    %34 = vrot.lane.b32.xlu0 %v33, 68
    %v35 = vpop.permute.xlu0 %34
    %vm36 = vcmask 64512
    %s37 = scalar_lea.vmem [#allocation0], 40
    %38 = vst.msk [vmem:[%s37] sm:$0x1] %vm36, %v35
    %vm39 = vcmask 1048096
    %s40 = scalar_lea.vmem [#allocation0], 32
    %41 = vst.msk [vmem:[%s40] ss:$-16 sm:$0x3] %vm39, %v35
    %s42 = scalar_lea.vmem [#allocation0], 22
    %43 = vst.msk [vmem:[%s42] sm:$0x4] %vm39, %v35
    %s44 = scalar_lea.vmem [#allocation1], 9
    %s45 = smov 3
    %v46 = vld [vmem:[%s44] ss:$-8 sm:%s45]
    %47 = vrot.lane.b32.xlu0 %v46, 68
    %v48 = vpop.permute.xlu0 %47
    %vm49 = vcmask 556032
    %s50 = scalar_lea.vmem [#allocation0], 32
    %51 = vst.msk [vmem:[%s50] ss:$-8 sm:$0x3] %vm49, %v48
    %s53 = sshllo.u32 0, 1
    %v55 = vld [vmem:[#allocation0] sm:%s53]
    %s56 = sshllo.u32 0, 1
    %57 = vst [vmem:[%s1] sm:%s56] %v55
    %s58 = scalar_lea.vmem [#allocation0], 8
    %v59 = vld [vmem:[%s58] sm:%s53]
    %s60 = sshllo.u32 0, 1
    %s61 = scalar_lea.vmem %s1, 1
    %62 = vst [vmem:[%s61] sm:%s60] %v59
    %s63 = scalar_lea.vmem [#allocation0], 16
    %v64 = vld [vmem:[%s63] sm:%s53]
    %s65 = sshllo.u32 0, 1
    %s66 = smul.addr 1, 2
    %s67 = scalar_lea.vmem %s1, %s66
    %68 = vst [vmem:[%s67] sm:%s65] %v64
    %s69 = scalar_lea.vmem [#allocation0], 24
    %v70 = vld [vmem:[%s69] sm:%s53]
    %s71 = sshllo.u32 0, 1
    %s72 = smul.addr 1, 3
    %s73 = scalar_lea.vmem %s1, %s72
    %74 = vst [vmem:[%s73] sm:%s71] %v70
    %s75 = scalar_lea.vmem [#allocation0], 32
    %v76 = vld [vmem:[%s75] sm:%s53]
    %s77 = sshllo.u32 0, 1
    %s78 = smul.addr 1, 4
    %s79 = scalar_lea.vmem %s1, %s78
    %80 = vst [vmem:[%s79] sm:%s77] %v76
    %s81 = scalar_lea.vmem [#allocation0], 40
    %v82 = vld [vmem:[%s81] sm:%s53]
    %s83 = sshllo.u32 0, 1
    %s84 = smul.addr 1, 5
    %s85 = scalar_lea.vmem %s1, %s84
    %86 = vst [vmem:[%s85] sm:%s83] %v82

// kernel: net_t32_forward.6
$region0: #{net_t32_forward.6}
  #allocation0 [shape = 'u32[]', space=smem, size = 0x4, offset = 0x4, fixed_abs, tag = 'smem constant byte address 0x4 - core index']
  #allocation1 [shape = 'u32[144,128]{1,0:T(1,128)}', space=vmem, size = 0x12000, scoped, tag = 'internal scratch']
  %s0 = inlined_call_operand.vmem [shape: bf16[16,686], index: 0, kind: input, shape index: {}]
  %s1 = inlined_call_operand.vmem [shape: bf16[16,686], index: 1, kind: input, shape index: {}]
  %s2 = inlined_call_operand.vmem [shape: bf16[16,288], index: 2, kind: input, shape index: {}]
  %s3 = inlined_call_operand.vmem [shape: f32[16,1], index: 3, kind: input, shape index: {}]
  %s4 = inlined_call_operand.vmem [shape: f32[16,1], index: 4, kind: input, shape index: {}]
  %s5 = inlined_call_operand.vmem [shape: f32[1,648], index: 5, kind: input, shape index: {}]
  %s6 = inlined_call_operand.vmem [shape: bf16[16,648], index: 6, kind: output, shape index: {}]
  %s7 = sld [smem:[#allocation0]]
  $region34: #{net_t32_forward.6} parent=0
    _
  %s9 = ssub.s32 1, %s7
  %s10 = scalar_select 0, %s9, %s7
  // Predicated region
  $region2: #{net_t32_forward.6} parent=0 // pred_check
    _
  $region3: #{net_t32_forward.6} parent=0 // pred_check_branch
    %12 = sbr.rel (0) target = $region5
  $region4: #{net_t32_forward.6} parent=0 // pred_region
    _
  $region5: #{net_t32_forward.6} parent=0 // pred_fallthru
    _
  // Predicated region
  $region6: #{net_t32_forward.6} parent=0 // pred_check
    _
  $region7: #{net_t32_forward.6} parent=0 // pred_check_branch
    %14 = sbr.rel (0) target = $region9
  $region8: #{net_t32_forward.6} parent=0 // pred_region
    _
  $region9: #{net_t32_forward.6} parent=0 // pred_fallthru
    _
  // Predicated region
  $region10: #{net_t32_forward.6} parent=0 // pred_check
    _
  $region11: #{net_t32_forward.6} parent=0 // pred_check_branch
    %16 = sbr.rel (0) target = $region13
  $region12: #{net_t32_forward.6} parent=0 // pred_region
    _
  $region13: #{net_t32_forward.6} parent=0 // pred_fallthru
    _
  // Predicated region
  $region14: #{net_t32_forward.6} parent=0 // pred_check
    _
  $region15: #{net_t32_forward.6} parent=0 // pred_check_branch
    %18 = sbr.rel (0) target = $region17
  $region16: #{net_t32_forward.6} parent=0 // pred_region
    _
  $region17: #{net_t32_forward.6} parent=0 // pred_fallthru
    _
  // Predicated region
  $region18: #{net_t32_forward.6} parent=0 // pred_check
    _
  $region19: #{net_t32_forward.6} parent=0 // pred_check_branch
    %20 = sbr.rel (0) target = $region21
  $region20: #{net_t32_forward.6} parent=0 // pred_region
    _
  $region21: #{net_t32_forward.6} parent=0 // pred_fallthru
    _
  // Predicated region
  $region22: #{net_t32_forward.6} parent=0 // pred_check
    _
  $region23: #{net_t32_forward.6} parent=0 // pred_check_branch
    %22 = sbr.rel (0) target = $region25
  $region24: #{net_t32_forward.6} parent=0 // pred_region
    _
  $region25: #{net_t32_forward.6} parent=0 // pred_fallthru
    _
  %v24 = vld [vmem:[%s0] sm:$0xff]
  %v25 = vld [vmem:[%s0 + $0x8] sm:$0xff]
  %v26 = vld [vmem:[%s0 + $0x10] sm:$0xff]
  %v27 = vld [vmem:[%s0 + $0x18] sm:$0xff]
  %v28 = vld [vmem:[%s0 + $0x20] sm:$0xff]
  %v29 = vld [vmem:[%s0 + $0x28] sm:$0xff]
  %v36 = vunpack.c.l.b16 %v24
  %v37 = vunpack.c.h.b16 %v24
  %v38 = vunpack.c.l.b16 %v25
  %v39 = vunpack.c.h.b16 %v25
  %v40 = vunpack.c.l.b16 %v26
  %v41 = vunpack.c.h.b16 %v26
  %v42 = vunpack.c.l.b16 %v27
  %v43 = vunpack.c.h.b16 %v27
  %v44 = vunpack.c.l.b16 %v28
  %v45 = vunpack.c.h.b16 %v28
  %v46 = vunpack.c.l.b16 %v29
  %v47 = vunpack.c.h.b16 %v29
  %v48 = vpack.c.b16 %v42, %v36
  %v49 = vpack.c.b16 %v43, %v37
  %v50 = vpack.c.b16 %v44, %v38
  %v51 = vpack.c.b16 %v45, %v39
  %v52 = vpack.c.b16 %v46, %v40
  %v53 = vpack.c.b16 %v47, %v41
  %60 = vrot.lane.b32.xlu0 %v48, 127
  %v61 = vpop.permute.xlu0 %60
  %62 = vrot.lane.b32.xlu0 %v49, 127
  %v63 = vpop.permute.xlu0 %62
  %64 = vrot.lane.b32.xlu0 %v50, 127
  %v65 = vpop.permute.xlu0 %64
  %66 = vrot.lane.b32.xlu0 %v51, 127
  %v67 = vpop.permute.xlu0 %66
  %68 = vrot.lane.b32.xlu0 %v52, 127
  %v69 = vpop.permute.xlu0 %68
  %70 = vrot.lane.b32.xlu0 %v53, 127
  %v71 = vpop.permute.xlu0 %70
  %vm72 = vcmask 1039360
  %v73 = vsel %vm72, %v61, %v63
  %v74 = vsel %vm72, %v63, %v65
  %v75 = vsel %vm72, %v65, %v67
  %v76 = vsel %vm72, %v67, %v69
  %v77 = vsel %vm72, %v69, %v71
  %84 = vrot.lane.b32.xlu0 %v48, 126
  %v85 = vpop.permute.xlu0 %84
  %86 = vrot.lane.b32.xlu0 %v49, 126
  %v87 = vpop.permute.xlu0 %86
  %88 = vrot.lane.b32.xlu0 %v50, 126
  %v89 = vpop.permute.xlu0 %88
  %90 = vrot.lane.b32.xlu0 %v51, 126
  %v91 = vpop.permute.xlu0 %90
  %92 = vrot.lane.b32.xlu0 %v52, 126
  %v93 = vpop.permute.xlu0 %92
  %94 = vrot.lane.b32.xlu0 %v53, 126
  %v95 = vpop.permute.xlu0 %94
  %vm96 = vcmask 1031168
  %v97 = vsel %vm96, %v85, %v87
  %v98 = vsel %vm96, %v87, %v89
  %v99 = vsel %vm96, %v89, %v91
  %v100 = vsel %vm96, %v91, %v93
  %v101 = vsel %vm96, %v93, %v95
  %108 = vrot.lane.b32.xlu0 %v48, 110
  %v109 = vpop.permute.xlu0 %108
  %110 = vrot.lane.b32.xlu0 %v49, 110
  %v111 = vpop.permute.xlu0 %110
  %112 = vrot.lane.b32.xlu0 %v50, 110
  %v113 = vpop.permute.xlu0 %112
  %114 = vrot.lane.b32.xlu0 %v51, 110
  %v115 = vpop.permute.xlu0 %114
  %116 = vrot.lane.b32.xlu0 %v52, 110
  %v117 = vpop.permute.xlu0 %116
  %118 = vrot.lane.b32.xlu0 %v53, 110
  %v119 = vpop.permute.xlu0 %118
  %vm120 = vcmask 900096
  %v121 = vsel %vm120, %v109, %v111
  %v122 = vsel %vm120, %v111, %v113
  %v123 = vsel %vm120, %v113, %v115
  %v124 = vsel %vm120, %v115, %v117
  %v125 = vsel %vm120, %v117, %v119
  %132 = vrot.lane.b32.xlu0 %v48, 109
  %v133 = vpop.permute.xlu0 %132
  %134 = vrot.lane.b32.xlu0 %v49, 109
  %v135 = vpop.permute.xlu0 %134
  %136 = vrot.lane.b32.xlu0 %v50, 109
  %v137 = vpop.permute.xlu0 %136
  %138 = vrot.lane.b32.xlu0 %v51, 109
  %v139 = vpop.permute.xlu0 %138
  %140 = vrot.lane.b32.xlu0 %v52, 109
  %v141 = vpop.permute.xlu0 %140
  %142 = vrot.lane.b32.xlu0 %v53, 109
  %v143 = vpop.permute.xlu0 %142
  %vm144 = vcmask 891904
  %v145 = vsel %vm144, %v133, %v135
  %v146 = vsel %vm144, %v135, %v137
  %v147 = vsel %vm144, %v137, %v139
  %v148 = vsel %vm144, %v139, %v141
  %v149 = vsel %vm144, %v141, %v143
  %156 = vrot.lane.b32.xlu0 %v48, 108
  %v157 = vpop.permute.xlu0 %156
  %158 = vrot.lane.b32.xlu0 %v49, 108
  %v159 = vpop.permute.xlu0 %158
  %160 = vrot.lane.b32.xlu0 %v50, 108
  %v161 = vpop.permute.xlu0 %160
  %162 = vrot.lane.b32.xlu0 %v51, 108
  %v163 = vpop.permute.xlu0 %162
  %164 = vrot.lane.b32.xlu0 %v52, 108
  %v165 = vpop.permute.xlu0 %164
  %166 = vrot.lane.b32.xlu0 %v53, 108
  %v167 = vpop.permute.xlu0 %166
  %vm168 = vcmask 883712
  %v169 = vsel %vm168, %v157, %v159
  %v170 = vsel %vm168, %v159, %v161
  %v171 = vsel %vm168, %v161, %v163
  %v172 = vsel %vm168, %v163, %v165
  %v173 = vsel %vm168, %v165, %v167
  %180 = vrot.lane.b32.xlu0 %v48, 92
  %v181 = vpop.permute.xlu0 %180
  %182 = vrot.lane.b32.xlu0 %v49, 92
  %v183 = vpop.permute.xlu0 %182
  %184 = vrot.lane.b32.xlu0 %v50, 92
  %v185 = vpop.permute.xlu0 %184
  %186 = vrot.lane.b32.xlu0 %v51, 92
  %v187 = vpop.permute.xlu0 %186
  %188 = vrot.lane.b32.xlu0 %v52, 92
  %v189 = vpop.permute.xlu0 %188
  %190 = vrot.lane.b32.xlu0 %v53, 92
  %v191 = vpop.permute.xlu0 %190
  %vm192 = vcmask 752640
  %v193 = vsel %vm192, %v181, %v183
  %v194 = vsel %vm192, %v183, %v185
  %v195 = vsel %vm192, %v185, %v187
  %v196 = vsel %vm192, %v187, %v189
  %v197 = vsel %vm192, %v189, %v191
  %204 = vrot.lane.b32.xlu0 %v48, 91
  %v205 = vpop.permute.xlu0 %204
  %206 = vrot.lane.b32.xlu0 %v49, 91
  %v207 = vpop.permute.xlu0 %206
  %208 = vrot.lane.b32.xlu0 %v50, 91
  %v209 = vpop.permute.xlu0 %208
  %210 = vrot.lane.b32.xlu0 %v51, 91
  %v211 = vpop.permute.xlu0 %210
  %212 = vrot.lane.b32.xlu0 %v52, 91
  %v213 = vpop.permute.xlu0 %212
  %214 = vrot.lane.b32.xlu0 %v53, 91
  %v215 = vpop.permute.xlu0 %214
  %vm216 = vcmask 744448
  %v217 = vsel %vm216, %v205, %v207
  %v218 = vsel %vm216, %v207, %v209
  %v219 = vsel %vm216, %v209, %v211
  %v220 = vsel %vm216, %v211, %v213
  %v221 = vsel %vm216, %v213, %v215
  %228 = vrot.lane.b32.xlu0 %v48, 90
  %v229 = vpop.permute.xlu0 %228
  %230 = vrot.lane.b32.xlu0 %v49, 90
  %v231 = vpop.permute.xlu0 %230
  %232 = vrot.lane.b32.xlu0 %v50, 90
  %v233 = vpop.permute.xlu0 %232
  %234 = vrot.lane.b32.xlu0 %v51, 90
  %v235 = vpop.permute.xlu0 %234
  %236 = vrot.lane.b32.xlu0 %v52, 90
  %v237 = vpop.permute.xlu0 %236
  %238 = vrot.lane.b32.xlu0 %v53, 90
  %v239 = vpop.permute.xlu0 %238
  %vm240 = vcmask 736256
  %v241 = vsel %vm240, %v229, %v231
  %v242 = vsel %vm240, %v231, %v233
  %v243 = vsel %vm240, %v233, %v235
  %v244 = vsel %vm240, %v235, %v237
  %v245 = vsel %vm240, %v237, %v239
  %v252 = vld [vmem:[%s1] sm:$0xff]
  %v253 = vld [vmem:[%s1 + $0x8] sm:$0xff]
  %v254 = vld [vmem:[%s1 + $0x10] sm:$0xff]
  %v255 = vld [vmem:[%s1 + $0x18] sm:$0xff]
  %v256 = vld [vmem:[%s1 + $0x20] sm:$0xff]
  %v257 = vld [vmem:[%s1 + $0x28] sm:$0xff]
  %v264 = vunpack.c.l.b16 %v252
  %v265 = vunpack.c.h.b16 %v252
  %v266 = vunpack.c.l.b16 %v253
  %v267 = vunpack.c.h.b16 %v253
  %v268 = vunpack.c.l.b16 %v254
  %v269 = vunpack.c.h.b16 %v254
  %v270 = vunpack.c.l.b16 %v255
  %v271 = vunpack.c.h.b16 %v255
  %v272 = vunpack.c.l.b16 %v256
  %v273 = vunpack.c.h.b16 %v256
  %v274 = vunpack.c.l.b16 %v257
  %v275 = vunpack.c.h.b16 %v257
  %v276 = vpack.c.b16 %v270, %v264
  %v277 = vpack.c.b16 %v271, %v265
  %v278 = vpack.c.b16 %v272, %v266
  %v279 = vpack.c.b16 %v273, %v267
  %v280 = vpack.c.b16 %v274, %v268
  %v281 = vpack.c.b16 %v275, %v269
  %288 = vrot.lane.b32.xlu0 %v276, 127
  %v289 = vpop.permute.xlu0 %288
  %290 = vrot.lane.b32.xlu0 %v277, 127
  %v291 = vpop.permute.xlu0 %290
  %292 = vrot.lane.b32.xlu0 %v278, 127
  %v293 = vpop.permute.xlu0 %292
  %294 = vrot.lane.b32.xlu0 %v279, 127
  %v295 = vpop.permute.xlu0 %294
  %296 = vrot.lane.b32.xlu0 %v280, 127
  %v297 = vpop.permute.xlu0 %296
  %298 = vrot.lane.b32.xlu0 %v281, 127
  %v299 = vpop.permute.xlu0 %298
  %v300 = vsel %vm72, %v289, %v291
  %v301 = vsel %vm72, %v291, %v293
  %v302 = vsel %vm72, %v293, %v295
  %v303 = vsel %vm72, %v295, %v297
  %v304 = vsel %vm72, %v297, %v299
  %311 = vrot.lane.b32.xlu0 %v276, 126
  %v312 = vpop.permute.xlu0 %311
  %313 = vrot.lane.b32.xlu0 %v277, 126
  %v314 = vpop.permute.xlu0 %313
  %315 = vrot.lane.b32.xlu0 %v278, 126
  %v316 = vpop.permute.xlu0 %315
  %317 = vrot.lane.b32.xlu0 %v279, 126
  %v318 = vpop.permute.xlu0 %317
  %319 = vrot.lane.b32.xlu0 %v280, 126
  %v320 = vpop.permute.xlu0 %319
  %321 = vrot.lane.b32.xlu0 %v281, 126
  %v322 = vpop.permute.xlu0 %321
  %v323 = vsel %vm96, %v312, %v314
  %v324 = vsel %vm96, %v314, %v316
  %v325 = vsel %vm96, %v316, %v318
  %v326 = vsel %vm96, %v318, %v320
  %v327 = vsel %vm96, %v320, %v322
  %334 = vrot.lane.b32.xlu0 %v276, 110
  %v335 = vpop.permute.xlu0 %334
  %336 = vrot.lane.b32.xlu0 %v277, 110
  %v337 = vpop.permute.xlu0 %336
  %338 = vrot.lane.b32.xlu0 %v278, 110
  %v339 = vpop.permute.xlu0 %338
  %340 = vrot.lane.b32.xlu0 %v279, 110
  %v341 = vpop.permute.xlu0 %340
  %342 = vrot.lane.b32.xlu0 %v280, 110
  %v343 = vpop.permute.xlu0 %342
  %344 = vrot.lane.b32.xlu0 %v281, 110
  %v345 = vpop.permute.xlu0 %344
  %v346 = vsel %vm120, %v335, %v337
  %v347 = vsel %vm120, %v337, %v339
  %v348 = vsel %vm120, %v339, %v341
  %v349 = vsel %vm120, %v341, %v343
  %v350 = vsel %vm120, %v343, %v345
  %357 = vrot.lane.b32.xlu0 %v276, 109
  %v358 = vpop.permute.xlu0 %357
  %359 = vrot.lane.b32.xlu0 %v277, 109
  %v360 = vpop.permute.xlu0 %359
  %361 = vrot.lane.b32.xlu0 %v278, 109
  %v362 = vpop.permute.xlu0 %361
  %363 = vrot.lane.b32.xlu0 %v279, 109
  %v364 = vpop.permute.xlu0 %363
  %365 = vrot.lane.b32.xlu0 %v280, 109
  %v366 = vpop.permute.xlu0 %365
  %367 = vrot.lane.b32.xlu0 %v281, 109
  %v368 = vpop.permute.xlu0 %367
  %v369 = vsel %vm144, %v358, %v360
  %v370 = vsel %vm144, %v360, %v362
  %v371 = vsel %vm144, %v362, %v364
  %v372 = vsel %vm144, %v364, %v366
  %v373 = vsel %vm144, %v366, %v368
  %380 = vrot.lane.b32.xlu0 %v276, 108
  %v381 = vpop.permute.xlu0 %380
  %382 = vrot.lane.b32.xlu0 %v277, 108
  %v383 = vpop.permute.xlu0 %382
  %384 = vrot.lane.b32.xlu0 %v278, 108
  %v385 = vpop.permute.xlu0 %384
  %386 = vrot.lane.b32.xlu0 %v279, 108
  %v387 = vpop.permute.xlu0 %386
  %388 = vrot.lane.b32.xlu0 %v280, 108
  %v389 = vpop.permute.xlu0 %388
  %390 = vrot.lane.b32.xlu0 %v281, 108
  %v391 = vpop.permute.xlu0 %390
  %v392 = vsel %vm168, %v381, %v383
  %v393 = vsel %vm168, %v383, %v385
  %v394 = vsel %vm168, %v385, %v387
  %v395 = vsel %vm168, %v387, %v389
  %v396 = vsel %vm168, %v389, %v391
  %403 = vrot.lane.b32.xlu0 %v276, 92
  %v404 = vpop.permute.xlu0 %403
  %405 = vrot.lane.b32.xlu0 %v277, 92
  %v406 = vpop.permute.xlu0 %405
  %407 = vrot.lane.b32.xlu0 %v278, 92
  %v408 = vpop.permute.xlu0 %407
  %409 = vrot.lane.b32.xlu0 %v279, 92
  %v410 = vpop.permute.xlu0 %409
  %411 = vrot.lane.b32.xlu0 %v280, 92
  %v412 = vpop.permute.xlu0 %411
  %413 = vrot.lane.b32.xlu0 %v281, 92
  %v414 = vpop.permute.xlu0 %413
  %v415 = vsel %vm192, %v404, %v406
  %v416 = vsel %vm192, %v406, %v408
  %v417 = vsel %vm192, %v408, %v410
  %v418 = vsel %vm192, %v410, %v412
  %v419 = vsel %vm192, %v412, %v414
  %426 = vrot.lane.b32.xlu0 %v276, 91
  %v427 = vpop.permute.xlu0 %426
  %428 = vrot.lane.b32.xlu0 %v277, 91
  %v429 = vpop.permute.xlu0 %428
  %430 = vrot.lane.b32.xlu0 %v278, 91
  %v431 = vpop.permute.xlu0 %430
  %432 = vrot.lane.b32.xlu0 %v279, 91
  %v433 = vpop.permute.xlu0 %432
  %434 = vrot.lane.b32.xlu0 %v280, 91
  %v435 = vpop.permute.xlu0 %434
  %436 = vrot.lane.b32.xlu0 %v281, 91
  %v437 = vpop.permute.xlu0 %436
  %v438 = vsel %vm216, %v427, %v429
  %v439 = vsel %vm216, %v429, %v431
  %v440 = vsel %vm216, %v431, %v433
  %v441 = vsel %vm216, %v433, %v435
  %v442 = vsel %vm216, %v435, %v437
  %449 = vrot.lane.b32.xlu0 %v276, 90
  %v450 = vpop.permute.xlu0 %449
  %451 = vrot.lane.b32.xlu0 %v277, 90
  %v452 = vpop.permute.xlu0 %451
  %453 = vrot.lane.b32.xlu0 %v278, 90
  %v454 = vpop.permute.xlu0 %453
  %455 = vrot.lane.b32.xlu0 %v279, 90
  %v456 = vpop.permute.xlu0 %455
  %457 = vrot.lane.b32.xlu0 %v280, 90
  %v458 = vpop.permute.xlu0 %457
  %459 = vrot.lane.b32.xlu0 %v281, 90
  %v460 = vpop.permute.xlu0 %459
  %v461 = vsel %vm240, %v450, %v452
  %v462 = vsel %vm240, %v452, %v454
  %v463 = vsel %vm240, %v454, %v456
  %v464 = vsel %vm240, %v456, %v458
  %v465 = vsel %vm240, %v458, %v460
  %v472 = vld [vmem:[%s2] sm:$0xff]
  %v473 = vld [vmem:[%s2 + $0x8] sm:$0xf]
  %v474 = vld [vmem:[%s2 + $0xc] sm:$0xff]
  %v475 = vld [vmem:[%s2 + $0x14] sm:$0xf]
  %v480 = vunpack.c.l.b16 %v472
  %v481 = vunpack.c.h.b16 %v472
  %v482 = vunpack.c.l.b16 %v473
  %v483 = vunpack.c.l.b16 %v474
  %v484 = vunpack.c.h.b16 %v474
  %v485 = vunpack.c.l.b16 %v475
  %v486 = vpack.c.b16 %v483, %v480
  %v487 = vpack.c.b16 %v484, %v481
  %v488 = vpack.c.b16 %v485, %v482
  %vm491 = vcmask 261120
  %v493 = vsel %vm491, %v488, 0
  %495 = vmatprep.subr.bf16.mxu0 %v49
  %496 = vmatpush1.bf16.msra.mxu0 %v48
  %497 = vmatprep.subr.bf16.mxu0 %v74
  %498 = vmatpush1.bf16.msra.mxu0 %v73
  %499 = vmatprep.subr.bf16.mxu0 %v98
  %500 = vmatpush1.bf16.msra.mxu0 %v97
  %501 = vmatprep.subr.bf16.mxu0 %v122
  %502 = vmatpush1.bf16.msra.mxu0 %v121
  %503 = vmatprep.subr.bf16.mxu0 %v146
  %504 = vmatpush1.bf16.msra.mxu0 %v145
  %505 = vmatprep.subr.bf16.mxu0 %v170
  %506 = vmatpush1.bf16.msra.mxu0 %v169
  %507 = vmatprep.subr.bf16.mxu0 %v194
  %508 = vmatpush1.bf16.msra.mxu0 %v193
  %509 = vmatprep.subr.bf16.mxu0 %v218
  %510 = vmatpush1.bf16.msra.mxu0 %v217
  %511 = vmatprep.subr.bf16.mxu0 %v242
  %512 = vmatpush1.bf16.msra.mxu0 %v241
  %513 = vmatprep.subr.bf16.mxu0 %v277
  %514 = vmatpush1.bf16.msra.mxu0 %v276
  %515 = vmatprep.subr.bf16.mxu0 %v301
  %516 = vmatpush1.bf16.msra.mxu0 %v300
  %517 = vmatprep.subr.bf16.mxu0 %v324
  %518 = vmatpush1.bf16.msra.mxu0 %v323
  %519 = vmatprep.subr.bf16.mxu0 %v347
  %520 = vmatpush1.bf16.msra.mxu0 %v346
  %521 = vmatprep.subr.bf16.mxu0 %v370
  %522 = vmatpush1.bf16.msra.mxu0 %v369
  %523 = vmatprep.subr.bf16.mxu0 %v393
  %524 = vmatpush1.bf16.msra.mxu0 %v392
  %525 = vmatprep.subr.bf16.mxu0 %v416
  %526 = vmatpush1.bf16.msra.mxu0 %v415
  %527 = vmatprep.mubr.bf16.mxu0 %v487
  %528 = vmatmul.mubr.bf16.gmra.mrb[0].mxu0 %v486
  %v529 = vpop.f32.mrb[0].mxu0
  %v530 = vadd.f32 0.0, %v529
  %v531 = vpop.f32.mrb[0].mxu0
  %v532 = vadd.f32 0.0, %v531
  %v533 = vpop.f32.mrb[0].mxu0
  %v534 = vadd.f32 0.0, %v533
  %v535 = vpop.f32.mrb[0].mxu0
  %v536 = vadd.f32 0.0, %v535
  %537 = vdwg.mxu0
  %538 = vmatprep.subr.bf16.mxu0 %v439
  %539 = vmatpush1.bf16.msra.mxu0 %v438
  %540 = vmatprep.subr.bf16.mxu0 %v462
  %541 = vmatpush1.bf16.msra.mxu0 %v461
  %542 = vmatprep.subr.bf16.mxu0 0
  %543 = vmatpush1.bf16.msra.mxu0 0
  %544 = vmatprep.subr.bf16.mxu0 0
  %545 = vmatpush1.bf16.msra.mxu0 0
  %546 = vmatprep.subr.bf16.mxu0 0
  %547 = vmatpush1.bf16.msra.mxu0 0
  %548 = vmatprep.subr.bf16.mxu0 0
  %549 = vmatpush1.bf16.msra.mxu0 0
  %550 = vmatprep.subr.bf16.mxu0 0
  %551 = vmatpush1.bf16.msra.mxu0 0
  %552 = vmatprep.subr.bf16.mxu0 0
  %553 = vmatpush1.bf16.msra.mxu0 0
  %554 = vmatprep.subr.bf16.mxu0 0
  %555 = vmatpush1.bf16.msra.mxu0 0
  %556 = vmatprep.subr.bf16.mxu0 0
  %557 = vmatpush1.bf16.msra.mxu0 0
  %558 = vmatprep.subr.bf16.mxu0 0
  %559 = vmatpush1.bf16.msra.mxu0 0
  %560 = vmatprep.subr.bf16.mxu0 0
  %561 = vmatpush1.bf16.msra.mxu0 0
  %562 = vmatprep.subr.bf16.mxu0 0
  %563 = vmatpush1.bf16.msra.mxu0 0
  %564 = vmatprep.subr.bf16.mxu0 0
  %565 = vmatpush1.bf16.msra.mxu0 0
  %566 = vmatprep.subr.bf16.mxu0 0
  %567 = vmatpush1.bf16.msra.mxu0 0
  %568 = vmatprep.subr.bf16.mxu0 0
  %569 = vmatpush1.bf16.msra.mxu0 0
  %570 = vmatprep.mubr.bf16.mxu0 0
  %571 = vmatmul.mubr.bf16.gmra.mrb[0].mxu0 %v493
  %v572 = vpop.f32.mrb[0].mxu0
  %v573 = vadd.f32 %v530, %v572
  %v574 = vpop.f32.mrb[0].mxu0
  %v575 = vadd.f32 %v532, %v574
  %v576 = vpop.f32.mrb[0].mxu0
  %v577 = vadd.f32 %v534, %v576
  %v578 = vpop.f32.mrb[0].mxu0
  %v579 = vadd.f32 %v536, %v578
  %580 = vdwg.mxu0
  %581 = vmatprep.subr.bf16.mxu0 %v51
  %582 = vmatpush1.bf16.msra.mxu0 %v50
  %583 = vmatprep.subr.bf16.mxu0 %v76
  %584 = vmatpush1.bf16.msra.mxu0 %v75
  %585 = vmatprep.subr.bf16.mxu0 %v100
  %586 = vmatpush1.bf16.msra.mxu0 %v99
  %587 = vmatprep.subr.bf16.mxu0 %v124
  %588 = vmatpush1.bf16.msra.mxu0 %v123
  %589 = vmatprep.subr.bf16.mxu0 %v148
  %590 = vmatpush1.bf16.msra.mxu0 %v147
  %591 = vmatprep.subr.bf16.mxu0 %v172
  %592 = vmatpush1.bf16.msra.mxu0 %v171
  %593 = vmatprep.subr.bf16.mxu0 %v196
  %594 = vmatpush1.bf16.msra.mxu0 %v195
  %595 = vmatprep.subr.bf16.mxu0 %v220
  %596 = vmatpush1.bf16.msra.mxu0 %v219
  %597 = vmatprep.subr.bf16.mxu0 %v244
  %598 = vmatpush1.bf16.msra.mxu0 %v243
  %599 = vmatprep.subr.bf16.mxu0 %v279
  %600 = vmatpush1.bf16.msra.mxu0 %v278
  %601 = vmatprep.subr.bf16.mxu0 %v303
  %602 = vmatpush1.bf16.msra.mxu0 %v302
  %603 = vmatprep.subr.bf16.mxu0 %v326
  %604 = vmatpush1.bf16.msra.mxu0 %v325
  %605 = vmatprep.subr.bf16.mxu0 %v349
  %606 = vmatpush1.bf16.msra.mxu0 %v348
  %607 = vmatprep.subr.bf16.mxu0 %v372
  %608 = vmatpush1.bf16.msra.mxu0 %v371
  %609 = vmatprep.subr.bf16.mxu0 %v395
  %610 = vmatpush1.bf16.msra.mxu0 %v394
  %611 = vmatprep.subr.bf16.mxu0 %v418
  %612 = vmatpush1.bf16.msra.mxu0 %v417
  %613 = vmatprep.mubr.bf16.mxu0 %v487
  %614 = vmatmul.mubr.bf16.gmra.mrb[0].mxu0 %v486
  %v615 = vpop.f32.mrb[0].mxu0
  %v616 = vadd.f32 0.0, %v615
  %v617 = vpop.f32.mrb[0].mxu0
  %v618 = vadd.f32 0.0, %v617
  %v619 = vpop.f32.mrb[0].mxu0
  %v620 = vadd.f32 0.0, %v619
  %v621 = vpop.f32.mrb[0].mxu0
  %v622 = vadd.f32 0.0, %v621
  %623 = vdwg.mxu0
  %624 = vmatprep.subr.bf16.mxu0 %v441
  %625 = vmatpush1.bf16.msra.mxu0 %v440
  %626 = vmatprep.subr.bf16.mxu0 %v464
  %627 = vmatpush1.bf16.msra.mxu0 %v463
  %628 = vmatprep.subr.bf16.mxu0 0
  %629 = vmatpush1.bf16.msra.mxu0 0
  %630 = vmatprep.subr.bf16.mxu0 0
  %631 = vmatpush1.bf16.msra.mxu0 0
  %632 = vmatprep.subr.bf16.mxu0 0
  %633 = vmatpush1.bf16.msra.mxu0 0
  %634 = vmatprep.subr.bf16.mxu0 0
  %635 = vmatpush1.bf16.msra.mxu0 0
  %636 = vmatprep.subr.bf16.mxu0 0
  %637 = vmatpush1.bf16.msra.mxu0 0
  %638 = vmatprep.subr.bf16.mxu0 0
  %639 = vmatpush1.bf16.msra.mxu0 0
  %640 = vmatprep.subr.bf16.mxu0 0
  %641 = vmatpush1.bf16.msra.mxu0 0
  %642 = vmatprep.subr.bf16.mxu0 0
  %643 = vmatpush1.bf16.msra.mxu0 0
  %644 = vmatprep.subr.bf16.mxu0 0
  %645 = vmatpush1.bf16.msra.mxu0 0
  %646 = vmatprep.subr.bf16.mxu0 0
  %647 = vmatpush1.bf16.msra.mxu0 0
  %648 = vmatprep.subr.bf16.mxu0 0
  %649 = vmatpush1.bf16.msra.mxu0 0
  %650 = vmatprep.subr.bf16.mxu0 0
  %651 = vmatpush1.bf16.msra.mxu0 0
  %652 = vmatprep.subr.bf16.mxu0 0
  %653 = vmatpush1.bf16.msra.mxu0 0
  %654 = vmatprep.subr.bf16.mxu0 0
  %655 = vmatpush1.bf16.msra.mxu0 0
  %656 = vmatprep.mubr.bf16.mxu0 0
  %657 = vmatmul.mubr.bf16.gmra.mrb[0].mxu0 %v493
  %v658 = vpop.f32.mrb[0].mxu0
  %v659 = vadd.f32 %v616, %v658
  %v660 = vpop.f32.mrb[0].mxu0
  %v661 = vadd.f32 %v618, %v660
  %v662 = vpop.f32.mrb[0].mxu0
  %v663 = vadd.f32 %v620, %v662
  %v664 = vpop.f32.mrb[0].mxu0
  %v665 = vadd.f32 %v622, %v664
  %666 = vdwg.mxu0
  %667 = vmatprep.subr.bf16.mxu0 %v53
  %668 = vmatpush1.bf16.msra.mxu0 %v52
  %669 = vmatprep.subr.bf16.mxu0 %v71
  %670 = vmatpush1.bf16.msra.mxu0 %v77
  %671 = vmatprep.subr.bf16.mxu0 %v95
  %672 = vmatpush1.bf16.msra.mxu0 %v101
  %673 = vmatprep.subr.bf16.mxu0 %v119
  %674 = vmatpush1.bf16.msra.mxu0 %v125
  %675 = vmatprep.subr.bf16.mxu0 %v143
  %676 = vmatpush1.bf16.msra.mxu0 %v149
  %677 = vmatprep.subr.bf16.mxu0 %v167
  %678 = vmatpush1.bf16.msra.mxu0 %v173
  %679 = vmatprep.subr.bf16.mxu0 %v191
  %680 = vmatpush1.bf16.msra.mxu0 %v197
  %681 = vmatprep.subr.bf16.mxu0 %v215
  %682 = vmatpush1.bf16.msra.mxu0 %v221
  %683 = vmatprep.subr.bf16.mxu0 %v239
  %684 = vmatpush1.bf16.msra.mxu0 %v245
  %685 = vmatprep.subr.bf16.mxu0 %v281
  %686 = vmatpush1.bf16.msra.mxu0 %v280
  %687 = vmatprep.subr.bf16.mxu0 %v299
  %688 = vmatpush1.bf16.msra.mxu0 %v304
  %689 = vmatprep.subr.bf16.mxu0 %v322
  %690 = vmatpush1.bf16.msra.mxu0 %v327
  %691 = vmatprep.subr.bf16.mxu0 %v345
  %692 = vmatpush1.bf16.msra.mxu0 %v350
  %693 = vmatprep.subr.bf16.mxu0 %v368
  %694 = vmatpush1.bf16.msra.mxu0 %v373
  %695 = vmatprep.subr.bf16.mxu0 %v391
  %696 = vmatpush1.bf16.msra.mxu0 %v396
  %697 = vmatprep.subr.bf16.mxu0 %v414
  %698 = vmatpush1.bf16.msra.mxu0 %v419
  %699 = vmatprep.mubr.bf16.mxu0 %v487
  %700 = vmatmul.mubr.bf16.gmra.mrb[0].mxu0 %v486
  %v701 = vpop.f32.mrb[0].mxu0
  %v702 = vadd.f32 0.0, %v701
  %v703 = vpop.f32.mrb[0].mxu0
  %v704 = vadd.f32 0.0, %v703
  %v705 = vpop.f32.mrb[0].mxu0
  %v706 = vadd.f32 0.0, %v705
  %v707 = vpop.f32.mrb[0].mxu0
  %v708 = vadd.f32 0.0, %v707
  %709 = vdwg.mxu0
  %710 = vmatprep.subr.bf16.mxu0 %v437
  %711 = vmatpush1.bf16.msra.mxu0 %v442
  %712 = vmatprep.subr.bf16.mxu0 %v460
  %713 = vmatpush1.bf16.msra.mxu0 %v465
  %714 = vmatprep.subr.bf16.mxu0 0
  %715 = vmatpush1.bf16.msra.mxu0 0
  %716 = vmatprep.subr.bf16.mxu0 0
  %717 = vmatpush1.bf16.msra.mxu0 0
  %718 = vmatprep.subr.bf16.mxu0 0
  %719 = vmatpush1.bf16.msra.mxu0 0
  %720 = vmatprep.subr.bf16.mxu0 0
  %721 = vmatpush1.bf16.msra.mxu0 0
  %722 = vmatprep.subr.bf16.mxu0 0
  %723 = vmatpush1.bf16.msra.mxu0 0
  %724 = vmatprep.subr.bf16.mxu0 0
  %725 = vmatpush1.bf16.msra.mxu0 0
  %726 = vmatprep.subr.bf16.mxu0 0
  %727 = vmatpush1.bf16.msra.mxu0 0
  %728 = vmatprep.subr.bf16.mxu0 0
  %729 = vmatpush1.bf16.msra.mxu0 0
  %730 = vmatprep.subr.bf16.mxu0 0
  %731 = vmatpush1.bf16.msra.mxu0 0
  %732 = vmatprep.subr.bf16.mxu0 0
  %733 = vmatpush1.bf16.msra.mxu0 0
  %734 = vmatprep.subr.bf16.mxu0 0
  %735 = vmatpush1.bf16.msra.mxu0 0
  %736 = vmatprep.subr.bf16.mxu0 0
  %737 = vmatpush1.bf16.msra.mxu0 0
  %738 = vmatprep.subr.bf16.mxu0 0
  %739 = vmatpush1.bf16.msra.mxu0 0
  %740 = vmatprep.subr.bf16.mxu0 0
  %741 = vmatpush1.bf16.msra.mxu0 0
  %742 = vmatprep.mubr.bf16.mxu0 0
  %743 = vmatmul.mubr.bf16.gmra.mrb[0].mxu0 %v493
  %v744 = vpop.f32.mrb[0].mxu0
  %v745 = vadd.f32 %v702, %v744
  %v746 = vpop.f32.mrb[0].mxu0
  %v747 = vadd.f32 %v704, %v746
  %v748 = vpop.f32.mrb[0].mxu0
  %v749 = vadd.f32 %v706, %v748
  %v750 = vpop.f32.mrb[0].mxu0
  %v751 = vadd.f32 %v708, %v750
  %752 = vdwg.mxu0
  %v753 = vld [vmem:[%s5] sm:$0x3f]
  %v755 = vlaneseq
  %v756 = vshrl.u32 %v755, 7
  %v757 = vsub.s32 0, %v756
  %v758 = vrot.slane %v753, %v757
  %v759 = vlaneseq
  %v760 = vshrl.u32 %v759, 7
  %v761 = vsub.s32 1, %v760
  %v762 = vrot.slane %v753, %v761
  %v763 = vlaneseq
  %v764 = vshrl.u32 %v763, 7
  %v765 = vsub.s32 2, %v764
  %v766 = vrot.slane %v753, %v765
  %v767 = vlaneseq
  %v768 = vshrl.u32 %v767, 7
  %v769 = vsub.s32 3, %v768
  %v770 = vrot.slane %v753, %v769
  %v771 = vlaneseq
  %v772 = vshrl.u32 %v771, 7
  %v773 = vsub.s32 4, %v772
  %v774 = vrot.slane %v753, %v773
  %v775 = vlaneseq
  %v776 = vshrl.u32 %v775, 7
  %v777 = vsub.s32 5, %v776
  %v778 = vrot.slane %v753, %v777
  %v785 = vmul.f32 %v573, %v758
  %v786 = vmul.f32 %v575, %v762
  %v787 = vmul.f32 %v659, %v766
  %v788 = vmul.f32 %v661, %v770
  %v789 = vmul.f32 %v745, %v774
  %v790 = vmul.f32 %v747, %v778
  %v791 = vmul.f32 %v577, %v758
  %v792 = vmul.f32 %v579, %v762
  %v793 = vmul.f32 %v663, %v766
  %v794 = vmul.f32 %v665, %v770
  %v795 = vmul.f32 %v749, %v774
  %v796 = vmul.f32 %v751, %v778
  %v797 = vadd.f32 %v785, %v786
  %v798 = vadd.f32 %v797, %v787
  %v799 = vadd.f32 %v798, %v788
  %v800 = vadd.f32 %v799, %v789
  %vm801 = vcmask 64512
  %v802 = vsel %vm801, %v790, 0.0
  %v803 = vadd.f32 %v800, %v802
  %804 = vadd.xlane.f32.xlu0 %v803
  %v805 = vpop.xlane.xlu0 %804
  %v806 = vadd.f32 %v791, %v792
  %v807 = vadd.f32 %v806, %v793
  %v808 = vadd.f32 %v807, %v794
  %v809 = vadd.f32 %v808, %v795
  %v810 = vsel %vm801, %v796, 0.0
  %v811 = vadd.f32 %v809, %v810
  %812 = vadd.xlane.f32.xlu0 %v811
  %v813 = vpop.xlane.xlu0 %812
  %v814 = vmul.f32 %v805, 0.001953125
  %v815 = vmul.f32 %v813, 0.001953125
  %v816 = vsub.f32 %v573, %v814
  %v817 = vsub.f32 %v575, %v814
  %v818 = vsub.f32 %v659, %v814
  %v819 = vsub.f32 %v661, %v814
  %v820 = vsub.f32 %v745, %v814
  %v821 = vsub.f32 %v747, %v814
  %v822 = vsub.f32 %v577, %v815
  %v823 = vsub.f32 %v579, %v815
  %v824 = vsub.f32 %v663, %v815
  %v825 = vsub.f32 %v665, %v815
  %v826 = vsub.f32 %v749, %v815
  %v827 = vsub.f32 %v751, %v815
  %v828 = vmul.f32 %v816, %v758
  %v829 = vmul.f32 %v817, %v762
  %v830 = vmul.f32 %v818, %v766
  %v831 = vmul.f32 %v819, %v770
  %v832 = vmul.f32 %v820, %v774
  %v833 = vmul.f32 %v821, %v778
  %v834 = vmul.f32 %v822, %v758
  %v835 = vmul.f32 %v823, %v762
  %v836 = vmul.f32 %v824, %v766
  %v837 = vmul.f32 %v825, %v770
  %v838 = vmul.f32 %v826, %v774
  %v839 = vmul.f32 %v827, %v778
  %v840 = vmul.f32 %v828, %v828
  %v841 = vmul.f32 %v829, %v829
  %v842 = vmul.f32 %v830, %v830
  %v843 = vmul.f32 %v831, %v831
  %v844 = vmul.f32 %v832, %v832
  %v845 = vmul.f32 %v833, %v833
  %v846 = vmul.f32 %v834, %v834
  %v847 = vmul.f32 %v835, %v835
  %v848 = vmul.f32 %v836, %v836
  %v849 = vmul.f32 %v837, %v837
  %v850 = vmul.f32 %v838, %v838
  %v851 = vmul.f32 %v839, %v839
  %v852 = vadd.f32 %v840, %v841
  %v853 = vadd.f32 %v852, %v842
  %v854 = vadd.f32 %v853, %v843
  %v855 = vadd.f32 %v854, %v844
  %v856 = vsel %vm801, %v845, 0.0
  %v857 = vadd.f32 %v855, %v856
  %858 = vadd.xlane.f32.xlu0 %v857
  %v859 = vpop.xlane.xlu0 %858
  %v860 = vadd.f32 %v846, %v847
  %v861 = vadd.f32 %v860, %v848
  %v862 = vadd.f32 %v861, %v849
  %v863 = vadd.f32 %v862, %v850
  %v864 = vsel %vm801, %v851, 0.0
  %v865 = vadd.f32 %v863, %v864
  %866 = vadd.xlane.f32.xlu0 %v865
  %v867 = vpop.xlane.xlu0 %866
  %v868 = vmul.f32 %v859, 0.001953125
  %v869 = vmul.f32 %v867, 0.001953125
  %v870 = vadd.f32 %v868, 1e-05
  %v871 = vadd.f32 %v869, 1e-05
  %v872 = vrsqrt.pop %v870
  %v873 = vrsqrt.pop %v871
  %v874 = vld [vmem:[%s3] sm:$0xff]
  %v875 = vld [vmem:[%s3 + $0x8] sm:$0xff]
  %v876 = vmul.f32 %v874, %v872
  %v877 = vmul.f32 %v875, %v873
  %v878 = vld [vmem:[%s4] sm:$0xff]
  %v879 = vld [vmem:[%s4 + $0x8] sm:$0xff]
  %v880 = vmul.f32 %v814, %v876
  %v881 = vmul.f32 %v815, %v877
  %v882 = vsub.f32 %v878, %v880
  %v883 = vsub.f32 %v879, %v881
  %885 = vset.pattern.permute.xlu0 0
  %886 = vperm.xlu0 %885, %v876
  %v887 = vpop.permute.xlu0 %886
  %890 = vset.pattern.permute.xlu0 0
  %891 = vperm.xlu0 %890, %v877
  %v892 = vpop.permute.xlu0 %891
  %v894 = vmul.f32 %v573, %v887
  %v895 = vmul.f32 %v575, %v887
  %v896 = vmul.f32 %v659, %v887
  %v897 = vmul.f32 %v661, %v887
  %v898 = vmul.f32 %v745, %v887
  %v899 = vmul.f32 %v747, %v887
  %v900 = vmul.f32 %v577, %v892
  %v901 = vmul.f32 %v579, %v892
  %v902 = vmul.f32 %v663, %v892
  %v903 = vmul.f32 %v665, %v892
  %v904 = vmul.f32 %v749, %v892
  %v905 = vmul.f32 %v751, %v892
  %907 = vset.pattern.permute.xlu0 0
  %908 = vperm.xlu0 %907, %v882
  %v909 = vpop.permute.xlu0 %908
  %912 = vset.pattern.permute.xlu0 0
  %913 = vperm.xlu0 %912, %v883
  %v914 = vpop.permute.xlu0 %913
  %v916 = vadd.f32 %v894, %v909
  %v917 = vadd.f32 %v895, %v909
  %v918 = vadd.f32 %v896, %v909
  %v919 = vadd.f32 %v897, %v909
  %v920 = vadd.f32 %v898, %v909
  %v921 = vadd.f32 %v899, %v909
  %v922 = vadd.f32 %v900, %v914
  %v923 = vadd.f32 %v901, %v914
  %v924 = vadd.f32 %v902, %v914
  %v925 = vadd.f32 %v903, %v914
  %v926 = vadd.f32 %v904, %v914
  %v927 = vadd.f32 %v905, %v914
  %vm928 = vcmp.ge.f32.partialorder %v916, 0.0
  %vm929 = vcmp.ge.f32.partialorder %v917, 0.0
  %vm930 = vcmp.ge.f32.partialorder %v918, 0.0
  %vm931 = vcmp.ge.f32.partialorder %v919, 0.0
  %vm932 = vcmp.ge.f32.partialorder %v920, 0.0
  %vm933 = vcmp.ge.f32.partialorder %v921, 0.0
  %vm934 = vcmp.ge.f32.partialorder %v922, 0.0
  %vm935 = vcmp.ge.f32.partialorder %v923, 0.0
  %vm936 = vcmp.ge.f32.partialorder %v924, 0.0
  %vm937 = vcmp.ge.f32.partialorder %v925, 0.0
  %vm938 = vcmp.ge.f32.partialorder %v926, 0.0
  %vm939 = vcmp.ge.f32.partialorder %v927, 0.0
  %v940 = vmul.f32 %v916, 0.2
  %v941 = vmul.f32 %v917, 0.2
  %v942 = vmul.f32 %v918, 0.2
  %v943 = vmul.f32 %v919, 0.2
  %v944 = vmul.f32 %v920, 0.2
  %v945 = vmul.f32 %v921, 0.2
  %v946 = vmul.f32 %v922, 0.2
  %v947 = vmul.f32 %v923, 0.2
  %v948 = vmul.f32 %v924, 0.2
  %v949 = vmul.f32 %v925, 0.2
  %v950 = vmul.f32 %v926, 0.2
  %v951 = vmul.f32 %v927, 0.2
  %v952 = vsel %vm928, %v916, %v940
  %v953 = vsel %vm929, %v917, %v941
  %v954 = vsel %vm930, %v918, %v942
  %v955 = vsel %vm931, %v919, %v943
  %v956 = vsel %vm932, %v920, %v944
  %v957 = vsel %vm933, %v921, %v945
  %v958 = vsel %vm934, %v922, %v946
  %v959 = vsel %vm935, %v923, %v947
  %v960 = vsel %vm936, %v924, %v948
  %v961 = vsel %vm937, %v925, %v949
  %v962 = vsel %vm938, %v926, %v950
  %v963 = vsel %vm939, %v927, %v951
  %v964 = vpack.c.bf16 %v958, %v952
  %v965 = vpack.c.bf16 %v959, %v953
  %v966 = vpack.c.bf16 %v960, %v954
  %v967 = vpack.c.bf16 %v961, %v955
  %v968 = vpack.c.bf16 %v962, %v956
  %v969 = vpack.c.bf16 %v963, %v957
  %v976 = vunpack.c.l.b16 %v964
  %v977 = vunpack.c.l.b16 %v965
  %v978 = vunpack.c.l.b16 %v966
  %v979 = vunpack.c.l.b16 %v967
  %v980 = vunpack.c.l.b16 %v968
  %v981 = vunpack.c.l.b16 %v969
  %v982 = vunpack.c.h.b16 %v964
  %v983 = vunpack.c.h.b16 %v965
  %v984 = vunpack.c.h.b16 %v966
  %v985 = vunpack.c.h.b16 %v967
  %v986 = vunpack.c.h.b16 %v968
  %v987 = vunpack.c.h.b16 %v969
  %v988 = vpack.c.b16 %v977, %v976
  %v989 = vpack.c.b16 %v979, %v978
  %v990 = vpack.c.b16 %v981, %v980
  %v991 = vpack.c.b16 %v983, %v982
  %v992 = vpack.c.b16 %v985, %v984
  %v993 = vpack.c.b16 %v987, %v986
  %1000 = vst [vmem:[%s6] sm:$0xff] %v988
  %1001 = vst [vmem:[%s6 + $0x8] sm:$0xff] %v989
  %vm1002 = vcmask 1043456
  %vm1003 = vcmask 64516
  %vm1004 = vmor %vm1003, %vm1002
  %1005 = vst.msk [vmem:[%s6 + $0x10] sm:$0xff] %vm1004, %v990
  %1006 = vst [vmem:[%s6 + $0x18] sm:$0xff] %v991
  %1007 = vst [vmem:[%s6 + $0x20] sm:$0xff] %v992
  %1008 = vst.msk [vmem:[%s6 + $0x28] sm:$0xff] %vm1004, %v993
  // Predicated region
  $region26: #{net_t32_forward.6} parent=0 // pred_check
    _
  $region27: #{net_t32_forward.6} parent=0 // pred_check_branch
    %1010 = sbr.rel (0) target = $region29
  $region28: #{net_t32_forward.6} parent=0 // pred_region
    _
  $region29: #{net_t32_forward.6} parent=0 // pred_fallthru
    _
  // Predicated region
  $region30: #{net_t32_forward.6} parent=0 // pred_check
    _
  $region31: #{net_t32_forward.6} parent=0 // pred_check_branch
    %1012 = sbr.rel (0) target = $region33
  $region32: #{net_t32_forward.6} parent=0 // pred_region
    _
  $region33: #{net_t32_forward.6} parent=0 // pred_fallthru
    _

// kernel: tile.29
$region0: #{tile.29}
  %s0 = inlined_call_operand.vmem [shape: f32[34,34], index: 0, kind: input, shape index: {}]
  %s1 = inlined_call_operand.vmem [shape: f32[1156], index: 1, kind: output, shape index: {}]
  %v2 = vld [vmem:[%s0] sm:$0x1]
  %vm3 = vcmask 277504
  %4 = vst.msk [vmem:[%s1] sm:$0x1] %vm3, %v2
  %s5 = scalar_lea.vmem %s0, 15
  %v6 = vld [vmem:[%s5] sm:$0x1]
  %s7 = scalar_lea.vmem %s0, 15
  %v8 = vld [vmem:[%s7] sm:$0x1]
  %vm9 = vcmask 15360
  %v10 = vsel %vm9, %v8, %v6
  %11 = vrot.lane.b32.xlu0 %v10, 126
  %v12 = vpop.permute.xlu0 %11
  %vm13 = vcmask 261120
  %s14 = scalar_lea.vmem %s1, 4
  %15 = vst.msk [vmem:[%s14] sm:$0x1] %vm13, %v12
  %vm16 = vcmask 1048560
  %s17 = scalar_lea.vmem %s1, 3
  %18 = vst.msk [vmem:[%s17] sm:$0x1] %vm16, %v12
  %s19 = scalar_lea.vmem %s0, 30
  %v20 = vld [vmem:[%s19] sm:$0x1]
  %s21 = scalar_lea.vmem %s0, 30
  %v22 = vld [vmem:[%s21] sm:$0x1]
  %vm23 = vcmask 31744
  %v24 = vsel %vm23, %v22, %v20
  %25 = vrot.lane.b32.xlu0 %v24, 124
  %v26 = vpop.permute.xlu0 %25
  %vm27 = vcmask 244736
  %s28 = scalar_lea.vmem %s1, 8
  %29 = vst.msk [vmem:[%s28] sm:$0x1] %vm27, %v26
  %vm30 = vcmask 1048544
  %s31 = scalar_lea.vmem %s1, 7
  %32 = vst.msk [vmem:[%s31] sm:$0x1] %vm30, %v26
  %s33 = scalar_lea.vmem %s0, 11
  %v34 = vld [vmem:[%s33] sm:$0x1]
  %s35 = scalar_lea.vmem %s0, 11
  %v36 = vld [vmem:[%s35] sm:$0x1]
  %vm37 = vcmask 80896
  %v38 = vsel %vm37, %v36, %v34
  %39 = vrot.lane.b32.xlu0 %v38, 118
  %v40 = vpop.permute.xlu0 %39
  %vm41 = vcmask 195584
  %s42 = scalar_lea.vmem %s1, 3
  %43 = vst.msk [vmem:[%s42] sm:$0x1] %vm41, %v40
  %vm44 = vcmask 1048496
  %s45 = scalar_lea.vmem %s1, 2
  %46 = vst.msk [vmem:[%s45] sm:$0x1] %vm44, %v40
  %s47 = scalar_lea.vmem %s0, 26
  %v48 = vld [vmem:[%s47] sm:$0x1]
  %s49 = scalar_lea.vmem %s0, 26
  %v50 = vld [vmem:[%s49] sm:$0x1]
  %vm51 = vcmask 97280
  %v52 = vsel %vm51, %v50, %v48
  %53 = vrot.lane.b32.xlu0 %v52, 116
  %v54 = vpop.permute.xlu0 %53
  %vm55 = vcmask 179200
  %s56 = scalar_lea.vmem %s1, 7
  %57 = vst.msk [vmem:[%s56] sm:$0x1] %vm55, %v54
  %vm58 = vcmask 1048480
  %s59 = scalar_lea.vmem %s1, 6
  %60 = vst.msk [vmem:[%s59] sm:$0x1] %vm58, %v54
  %s61 = scalar_lea.vmem %s0, 7
  %v62 = vld [vmem:[%s61] sm:$0x1]
  %s63 = scalar_lea.vmem %s0, 7
  %v64 = vld [vmem:[%s63] sm:$0x1]
  %vm65 = vcmask 146432
  %v66 = vsel %vm65, %v64, %v62
  %67 = vrot.lane.b32.xlu0 %v66, 110
  %v68 = vpop.permute.xlu0 %67
  %vm69 = vcmask 130048
  %s70 = scalar_lea.vmem %s1, 2
  %71 = vst.msk [vmem:[%s70] sm:$0x1] %vm69, %v68
  %vm72 = vcmask 1048432
  %s73 = scalar_lea.vmem %s1, 1
  %74 = vst.msk [vmem:[%s73] sm:$0x1] %vm72, %v68
  %s75 = scalar_lea.vmem %s0, 22
  %v76 = vld [vmem:[%s75] sm:$0x1]
  %s77 = scalar_lea.vmem %s0, 22
  %v78 = vld [vmem:[%s77] sm:$0x1]
  %vm79 = vcmask 162816
  %v80 = vsel %vm79, %v78, %v76
  %81 = vrot.lane.b32.xlu0 %v80, 108
  %v82 = vpop.permute.xlu0 %81
  %vm83 = vcmask 113664
  %s84 = scalar_lea.vmem %s1, 6
  %85 = vst.msk [vmem:[%s84] sm:$0x1] %vm83, %v82
  %vm86 = vcmask 1048416
  %s87 = scalar_lea.vmem %s1, 5
  %88 = vst.msk [vmem:[%s87] sm:$0x1] %vm86, %v82
  %s89 = scalar_lea.vmem %s0, 3
  %v90 = vld [vmem:[%s89] sm:$0x1]
  %s91 = scalar_lea.vmem %s0, 3
  %v92 = vld [vmem:[%s91] sm:$0x1]
  %vm93 = vcmask 211968
  %v94 = vsel %vm93, %v92, %v90
  %95 = vrot.lane.b32.xlu0 %v94, 102
  %v96 = vpop.permute.xlu0 %95
  %vm97 = vcmask 64512
  %s98 = scalar_lea.vmem %s1, 1
  %99 = vst.msk [vmem:[%s98] sm:$0x1] %vm97, %v96
  %vm100 = vcmask 1048368
  %101 = vst.msk [vmem:[%s1] sm:$0x1] %vm100, %v96
  %s102 = scalar_lea.vmem %s0, 18
  %v103 = vld [vmem:[%s102] sm:$0x1]
  %s104 = scalar_lea.vmem %s0, 18
  %v105 = vld [vmem:[%s104] sm:$0x1]
  %vm106 = vcmask 228352
  %v107 = vsel %vm106, %v105, %v103
  %108 = vrot.lane.b32.xlu0 %v107, 100
  %v109 = vpop.permute.xlu0 %108
  %vm110 = vcmask 48128
  %s111 = scalar_lea.vmem %s1, 5
  %112 = vst.msk [vmem:[%s111] sm:$0x1] %vm110, %v109
  %vm113 = vcmask 1048352
  %s114 = scalar_lea.vmem %s1, 4
  %115 = vst.msk [vmem:[%s114] sm:$0x1] %vm113, %v109
  %s116 = scalar_lea.vmem %s0, 33
  %v117 = vld [vmem:[%s116] sm:$0x1]
  %s118 = scalar_lea.vmem %s0, 33
  %v119 = vld [vmem:[%s118] sm:$0x1]
  %vm120 = vcmask 244736
  %v121 = vsel %vm120, %v119, %v117
  %122 = vrot.lane.b32.xlu0 %v121, 98
  %v123 = vpop.permute.xlu0 %122
  %vm124 = vcmask 31744
  %s125 = scalar_lea.vmem %s1, 9
  %126 = vst.msk [vmem:[%s125] sm:$0x1] %vm124, %v123
  %vm127 = vcmask 1048336
  %s128 = scalar_lea.vmem %s1, 8
  %129 = vst.msk [vmem:[%s128] sm:$0x1] %vm127, %v123
  %s130 = scalar_lea.vmem %s0, 14
  %v131 = vld [vmem:[%s130] sm:$0x1]
  %132 = vrot.lane.b32.xlu0 %v131, 92
  %v133 = vpop.permute.xlu0 %132
  %vm134 = vcmask 1031904
  %s135 = scalar_lea.vmem %s1, 3
  %136 = vst.msk [vmem:[%s135] sm:$0x1] %vm134, %v133
  %s137 = scalar_lea.vmem %s0, 29
  %v138 = vld [vmem:[%s137] sm:$0x1]
  %139 = vrot.lane.b32.xlu0 %v138, 90
  %v140 = vpop.permute.xlu0 %139
  %vm141 = vcmask 1015504
  %s142 = scalar_lea.vmem %s1, 7
  %143 = vst.msk [vmem:[%s142] sm:$0x1] %vm141, %v140
  %s144 = scalar_lea.vmem %s0, 10
  %v145 = vld [vmem:[%s144] sm:$0x1]
  %146 = vrot.lane.b32.xlu0 %v145, 84
  %v147 = vpop.permute.xlu0 %146
  %vm148 = vcmask 966304
  %s149 = scalar_lea.vmem %s1, 2
  %150 = vst.msk [vmem:[%s149] sm:$0x1] %vm148, %v147
  %s151 = scalar_lea.vmem %s0, 25
  %v152 = vld [vmem:[%s151] sm:$0x1]
  %153 = vrot.lane.b32.xlu0 %v152, 82
  %v154 = vpop.permute.xlu0 %153
  %vm155 = vcmask 949904
  %s156 = scalar_lea.vmem %s1, 6
  %157 = vst.msk [vmem:[%s156] sm:$0x1] %vm155, %v154
  %s158 = scalar_lea.vmem %s0, 6
  %v159 = vld [vmem:[%s158] sm:$0x1]
  %160 = vrot.lane.b32.xlu0 %v159, 76
  %v161 = vpop.permute.xlu0 %160
  %vm162 = vcmask 900704
  %s163 = scalar_lea.vmem %s1, 1
  %164 = vst.msk [vmem:[%s163] sm:$0x1] %vm162, %v161
  %s165 = scalar_lea.vmem %s0, 21
  %v166 = vld [vmem:[%s165] sm:$0x1]
  %167 = vrot.lane.b32.xlu0 %v166, 74
  %v168 = vpop.permute.xlu0 %167
  %vm169 = vcmask 884304
  %s170 = scalar_lea.vmem %s1, 5
  %171 = vst.msk [vmem:[%s170] sm:$0x1] %vm169, %v168
  %s172 = scalar_lea.vmem %s0, 2
  %v173 = vld [vmem:[%s172] sm:$0x1]
  %174 = vrot.lane.b32.xlu0 %v173, 68
  %v175 = vpop.permute.xlu0 %174
  %vm176 = vcmask 835104
  %177 = vst.msk [vmem:[%s1] sm:$0x1] %vm176, %v175
  %s178 = scalar_lea.vmem %s0, 17
  %v179 = vld [vmem:[%s178] sm:$0x1]
  %180 = vrot.lane.b32.xlu0 %v179, 66
  %v181 = vpop.permute.xlu0 %180
  %vm182 = vcmask 818704
  %s183 = scalar_lea.vmem %s1, 4
  %184 = vst.msk [vmem:[%s183] sm:$0x1] %vm182, %v181
  %s185 = scalar_lea.vmem %s0, 32
  %v186 = vld [vmem:[%s185] sm:$0x1]
  %187 = vrot.lane.b32.xlu0 %v186, 64
  %v188 = vpop.permute.xlu0 %187
  %vm189 = vcmask 802304
  %s190 = scalar_lea.vmem %s1, 8
  %191 = vst.msk [vmem:[%s190] sm:$0x1] %vm189, %v188
  %s192 = scalar_lea.vmem %s0, 13
  %v193 = vld [vmem:[%s192] sm:$0x1]
  %194 = vrot.lane.b32.xlu0 %v193, 58
  %v195 = vpop.permute.xlu0 %194
  %vm196 = vcmask 753104
  %s197 = scalar_lea.vmem %s1, 3
  %198 = vst.msk [vmem:[%s197] sm:$0x1] %vm196, %v195
  %s199 = scalar_lea.vmem %s0, 28
  %v200 = vld [vmem:[%s199] sm:$0x1]
  %201 = vrot.lane.b32.xlu0 %v200, 56
  %v202 = vpop.permute.xlu0 %201
  %vm203 = vcmask 736704
  %s204 = scalar_lea.vmem %s1, 7
  %205 = vst.msk [vmem:[%s204] sm:$0x1] %vm203, %v202
  %s206 = scalar_lea.vmem %s0, 9
  %v207 = vld [vmem:[%s206] sm:$0x1]
  %208 = vrot.lane.b32.xlu0 %v207, 50
  %v209 = vpop.permute.xlu0 %208
  %vm210 = vcmask 687504
  %s211 = scalar_lea.vmem %s1, 2
  %212 = vst.msk [vmem:[%s211] sm:$0x1] %vm210, %v209
  %s213 = scalar_lea.vmem %s0, 24
  %v214 = vld [vmem:[%s213] sm:$0x1]
  %215 = vrot.lane.b32.xlu0 %v214, 48
  %v216 = vpop.permute.xlu0 %215
  %vm217 = vcmask 671104
  %s218 = scalar_lea.vmem %s1, 6
  %219 = vst.msk [vmem:[%s218] sm:$0x1] %vm217, %v216
  %s220 = scalar_lea.vmem %s0, 5
  %v221 = vld [vmem:[%s220] sm:$0x1]
  %222 = vrot.lane.b32.xlu0 %v221, 42
  %v223 = vpop.permute.xlu0 %222
  %vm224 = vcmask 621904
  %s225 = scalar_lea.vmem %s1, 1
  %226 = vst.msk [vmem:[%s225] sm:$0x1] %vm224, %v223
  %s227 = scalar_lea.vmem %s0, 20
  %v228 = vld [vmem:[%s227] sm:$0x1]
  %229 = vrot.lane.b32.xlu0 %v228, 40
  %v230 = vpop.permute.xlu0 %229
  %vm231 = vcmask 605504
  %s232 = scalar_lea.vmem %s1, 5
  %233 = vst.msk [vmem:[%s232] sm:$0x1] %vm231, %v230
  %s234 = scalar_lea.vmem %s0, 1
  %v235 = vld [vmem:[%s234] sm:$0x1]
  %236 = vrot.lane.b32.xlu0 %v235, 34
  %v237 = vpop.permute.xlu0 %236
  %vm238 = vcmask 556304
  %239 = vst.msk [vmem:[%s1] sm:$0x1] %vm238, %v237
  %s240 = scalar_lea.vmem %s0, 16
  %v241 = vld [vmem:[%s240] sm:$0x1]
  %242 = vrot.lane.b32.xlu0 %v241, 32
  %v243 = vpop.permute.xlu0 %242
  %vm244 = vcmask 539904
  %s245 = scalar_lea.vmem %s1, 4
  %246 = vst.msk [vmem:[%s245] sm:$0x1] %vm244, %v243
  %s247 = scalar_lea.vmem %s0, 31
  %v248 = vld [vmem:[%s247] sm:$0x1]
  %249 = vrot.lane.b32.xlu0 %v248, 30
  %v250 = vpop.permute.xlu0 %249
  %vm251 = vcmask 523504
  %s252 = scalar_lea.vmem %s1, 8
  %253 = vst.msk [vmem:[%s252] sm:$0x1] %vm251, %v250
  %s254 = scalar_lea.vmem %s0, 12
  %v255 = vld [vmem:[%s254] sm:$0x1]
  %256 = vrot.lane.b32.xlu0 %v255, 24
  %v257 = vpop.permute.xlu0 %256
  %vm258 = vcmask 474304
  %s259 = scalar_lea.vmem %s1, 3
  %260 = vst.msk [vmem:[%s259] sm:$0x1] %vm258, %v257
  %s261 = scalar_lea.vmem %s0, 27
  %v262 = vld [vmem:[%s261] sm:$0x1]
  %263 = vrot.lane.b32.xlu0 %v262, 22
  %v264 = vpop.permute.xlu0 %263
  %vm265 = vcmask 457904
  %s266 = scalar_lea.vmem %s1, 7
  %267 = vst.msk [vmem:[%s266] sm:$0x1] %vm265, %v264
  %s268 = scalar_lea.vmem %s0, 8
  %v269 = vld [vmem:[%s268] sm:$0x1]
  %270 = vrot.lane.b32.xlu0 %v269, 16
  %v271 = vpop.permute.xlu0 %270
  %vm272 = vcmask 408704
  %s273 = scalar_lea.vmem %s1, 2
  %274 = vst.msk [vmem:[%s273] sm:$0x1] %vm272, %v271
  %s275 = scalar_lea.vmem %s0, 23
  %v276 = vld [vmem:[%s275] sm:$0x1]
  %277 = vrot.lane.b32.xlu0 %v276, 14
  %v278 = vpop.permute.xlu0 %277
  %vm279 = vcmask 392304
  %s280 = scalar_lea.vmem %s1, 6
  %281 = vst.msk [vmem:[%s280] sm:$0x1] %vm279, %v278
  %s282 = scalar_lea.vmem %s0, 4
  %v283 = vld [vmem:[%s282] sm:$0x1]
  %284 = vrot.lane.b32.xlu0 %v283, 8
  %v285 = vpop.permute.xlu0 %284
  %vm286 = vcmask 343104
  %s287 = scalar_lea.vmem %s1, 1
  %288 = vst.msk [vmem:[%s287] sm:$0x1] %vm286, %v285
  %s289 = scalar_lea.vmem %s0, 19
  %v290 = vld [vmem:[%s289] sm:$0x1]
  %291 = vrot.lane.b32.xlu0 %v290, 6
  %v292 = vpop.permute.xlu0 %291
  %vm293 = vcmask 326704
  %s294 = scalar_lea.vmem %s1, 5
  %295 = vst.msk [vmem:[%s294] sm:$0x1] %vm293, %v292

// kernel: tile.30
$region0: #{tile.30}
  #allocation0 [shape = 's32[1]{0}', space=sflag, size = 0x4, scoped, tag = 'scoped memory for tile.30']
  %s0 = inlined_call_operand.vmem [shape: f32[1156], index: 0, kind: input, shape index: {}]
  %s1 = inlined_call_operand.vmem [shape: f32[2,1156], index: 1, kind: output, shape index: {}]
  // Predicated region
  $region2: #{tile.30} parent=0 // pred_check
    _
  $region3: #{tile.30} parent=0 // pred_check_branch
    %3 = sbr.rel (0) target = $region5
  $region4: #{tile.30} parent=0 // pred_region
    _
  $region5: #{tile.30} parent=0 // pred_fallthru
    _
  %v4 = vld [vmem:[%s0] ss:$0 sm:$0xff]
  %5 = vst [vmem:[%s1] sm:$0x3] %v4
  %s6 = scalar_lea.vmem %s0, 1
  %v7 = vld [vmem:[%s6] ss:$0 sm:$0xff]
  %s8 = scalar_lea.vmem %s1, 2
  %9 = vst [vmem:[%s8] sm:$0x3] %v7
  %s10 = scalar_lea.vmem %s0, 2
  %v11 = vld [vmem:[%s10] ss:$0 sm:$0xff]
  %s12 = scalar_lea.vmem %s1, 4
  %13 = vst [vmem:[%s12] sm:$0x3] %v11
  %s14 = scalar_lea.vmem %s0, 3
  %v15 = vld [vmem:[%s14] ss:$0 sm:$0xff]
  %s16 = scalar_lea.vmem %s1, 6
  %17 = vst [vmem:[%s16] sm:$0x3] %v15
  %s18 = scalar_lea.vmem %s0, 4
  %v19 = vld [vmem:[%s18] ss:$0 sm:$0xff]
  %s20 = scalar_lea.vmem %s1, 8
  %21 = vst [vmem:[%s20] sm:$0x3] %v19
  %s22 = scalar_lea.vmem %s0, 5
  %v23 = vld [vmem:[%s22] ss:$0 sm:$0xff]
  %s24 = scalar_lea.vmem %s1, 10
  %25 = vst [vmem:[%s24] sm:$0x3] %v23
  %s26 = scalar_lea.vmem %s0, 6
  %v27 = vld [vmem:[%s26] ss:$0 sm:$0xff]
  %s28 = scalar_lea.vmem %s1, 12
  %29 = vst [vmem:[%s28] sm:$0x3] %v27
  %s30 = scalar_lea.vmem %s0, 7
  %v31 = vld [vmem:[%s30] ss:$0 sm:$0xff]
  %s32 = scalar_lea.vmem %s1, 14
  %33 = vst [vmem:[%s32] sm:$0x3] %v31
  %s34 = scalar_lea.vmem %s0, 8
  %v35 = vld [vmem:[%s34] ss:$0 sm:$0xff]
  %s36 = scalar_lea.vmem %s1, 16
  %37 = vst [vmem:[%s36] sm:$0x3] %v35
  %s38 = scalar_lea.vmem %s0, 8
  %s39 = scalar_lea.vmem %s38, 1
  %v40 = vld [vmem:[%s39] ss:$0 sm:$0xff]
  %s41 = scalar_lea.vmem %s1, 18
  %42 = vst [vmem:[%s41] sm:$0x3] %v40

// kernel: tile.31
$region0: #{tile.31}
  %s0 = inlined_call_operand.vmem [shape: f32[2,1156], index: 0, kind: input, shape index: {}]
  %s1 = inlined_call_operand.vmem [shape: f32[1,2312], index: 1, kind: output, shape index: {}]
  $region1: #{tile.31} parent=0
    #allocation0 [shape = 'u8[77824]{0}', space=vmem, size = 0x13000, scoped, tag = 'scoped mem for output reshape']
    #allocation1 [shape = 'u8[40960]{0}', space=vmem, size = 0xa000, scoped, tag = 'scoped mem for input reshape']
    %s3 = sshllo.u32 0, 2
    %s4 = smul.addr 2, 9
    %s5 = scalar_lea.vmem %s0, %s4
    %v6 = vld [vmem:[%s5] sm:%s3]
    %s7 = scalar_lea.vmem [#allocation1], 72
    %8 = vst [vmem:[%s7] sm:%s3] %v6
    %s9 = smul.addr 2, 8
    %s10 = scalar_lea.vmem %s0, %s9
    %v11 = vld [vmem:[%s10] sm:%s3]
    %s12 = scalar_lea.vmem [#allocation1], 64
    %13 = vst [vmem:[%s12] sm:%s3] %v11
    %s14 = smul.addr 2, 7
    %s15 = scalar_lea.vmem %s0, %s14
    %v16 = vld [vmem:[%s15] sm:%s3]
    %s17 = scalar_lea.vmem [#allocation1], 56
    %18 = vst [vmem:[%s17] sm:%s3] %v16
    %s19 = smul.addr 2, 6
    %s20 = scalar_lea.vmem %s0, %s19
    %v21 = vld [vmem:[%s20] sm:%s3]
    %s22 = scalar_lea.vmem [#allocation1], 48
    %23 = vst [vmem:[%s22] sm:%s3] %v21
    %s24 = smul.addr 2, 5
    %s25 = scalar_lea.vmem %s0, %s24
    %v26 = vld [vmem:[%s25] sm:%s3]
    %s27 = scalar_lea.vmem [#allocation1], 40
    %28 = vst [vmem:[%s27] sm:%s3] %v26
    %s29 = smul.addr 2, 4
    %s30 = scalar_lea.vmem %s0, %s29
    %v31 = vld [vmem:[%s30] sm:%s3]
    %s32 = scalar_lea.vmem [#allocation1], 32
    %33 = vst [vmem:[%s32] sm:%s3] %v31
    %s34 = smul.addr 2, 3
    %s35 = scalar_lea.vmem %s0, %s34
    %v36 = vld [vmem:[%s35] sm:%s3]
    %s37 = scalar_lea.vmem [#allocation1], 24
    %38 = vst [vmem:[%s37] sm:%s3] %v36
    %s39 = smul.addr 2, 2
    %s40 = scalar_lea.vmem %s0, %s39
    %v41 = vld [vmem:[%s40] sm:%s3]
    %s42 = scalar_lea.vmem [#allocation1], 16
    %43 = vst [vmem:[%s42] sm:%s3] %v41
    %s44 = scalar_lea.vmem %s0, 2
    %v45 = vld [vmem:[%s44] sm:%s3]
    %s46 = scalar_lea.vmem [#allocation1], 8
    %47 = vst [vmem:[%s46] sm:%s3] %v45
    %v48 = vld [vmem:[%s0] sm:%s3]
    %49 = vst [vmem:[#allocation1] sm:%s3] %v48
    %s50 = scalar_lea.vmem [#allocation1], 72
    %v51 = vld [vmem:[%s50] sm:$0x1]
    %vm52 = vcmask 31744
    %s53 = scalar_lea.vmem [#allocation0], 72
    %54 = vst.msk [vmem:[%s53] sm:$0x1] %vm52, %v51
    %v55 = vld [vmem:[#allocation1] ss:$8 sm:$0xf]
    %v56 = vld [vmem:[#allocation1] ss:$8 sm:$0xf0]
    %vm57 = vcmask 1047556
    %v58 = vsel %vm57, %v56, %v55
    %59 = vst [vmem:[#allocation0] ss:$8 sm:$0xf] %v58
    %60 = vst [vmem:[#allocation0] ss:$8 sm:$0xf0] %v58
    %s61 = scalar_lea.vmem [#allocation1], 64
    %v62 = vld [vmem:[%s61] sm:$0x1]
    %s63 = scalar_lea.vmem [#allocation0], 64
    %64 = vst [vmem:[%s63] sm:$0x1] %v62
    %s65 = scalar_lea.vmem [#allocation1], 17
    %s66 = smov 3
    %v67 = vld [vmem:[%s65] ss:$8 sm:%s66]
    %s68 = scalar_lea.vmem [#allocation1], 4294967281
    %s69 = smov 12
    %v70 = vld [vmem:[%s68] ss:$8 sm:%s69]
    %vm71 = vcmask 1043458
    %v72 = vsel %vm71, %v70, %v67
    %s73 = scalar_lea.vmem [#allocation1], 17
    %s74 = smov 48
    %v75 = vld [vmem:[%s73] ss:$8 sm:%s74]
    %vm76 = vcmask 1045508
    %v77 = vsel %vm76, %v75, %v72
    %s78 = scalar_lea.vmem [#allocation1], 4294967281
    %s79 = smov 192
    %v80 = vld [vmem:[%s78] ss:$8 sm:%s79]
    %vm81 = vcmask 1047558
    %v82 = vsel %vm81, %v80, %v77
    %s83 = scalar_lea.vmem [#allocation1], 73
    %v84 = vld [vmem:[%s83] sm:$0x1]
    %vm85 = vcmask 1014784
    %v86 = vsel %vm85, %v84, %v82
    %87 = vrot.lane.b32.xlu0 %v86, 4
    %v88 = vpop.permute.xlu0 %87
    %vm89 = vcmask 31744
    %s90 = scalar_lea.vmem [#allocation0], 96
    %91 = vst.msk [vmem:[%s90] ss:$8 sm:$0x3] %vm89, %v88
    %s92 = scalar_lea.vmem [#allocation0], 64
    %93 = vst.msk [vmem:[%s92] ss:$8 sm:$0xc] %vm89, %v88
    %s94 = scalar_lea.vmem [#allocation0], 96
    %95 = vst.msk [vmem:[%s94] ss:$8 sm:$0x30] %vm89, %v88
    %s96 = scalar_lea.vmem [#allocation0], 64
    %97 = vst.msk [vmem:[%s96] ss:$8 sm:$0xc0] %vm89, %v88
    %vm98 = vcmask 64544
    %s99 = scalar_lea.vmem [#allocation0], 144
    %100 = vst.msk [vmem:[%s99] sm:$0x1] %vm98, %v88
    %s101 = scalar_lea.vmem [#allocation1], 65
    %v102 = vld [vmem:[%s101] sm:$0x1]
    %s103 = scalar_lea.vmem [#allocation1], 25
    %s104 = smov 3
    %v105 = vld [vmem:[%s103] ss:$-24 sm:%s104]
    %s106 = scalar_lea.vmem [#allocation1], 4294967289
    %s107 = smov 12
    %v108 = vld [vmem:[%s106] ss:$8 sm:%s107]
    %vm109 = vcmask 1043458
    %v110 = vsel %vm109, %v108, %v105
    %s111 = scalar_lea.vmem [#allocation1], 153
    %s112 = smov 48
    %v113 = vld [vmem:[%s111] ss:$-24 sm:%s112]
    %vm114 = vcmask 1045508
    %v115 = vsel %vm114, %v113, %v110
    %s116 = scalar_lea.vmem [#allocation1], 4294967289
    %s117 = smov 192
    %v118 = vld [vmem:[%s116] ss:$8 sm:%s117]
    %vm119 = vcmask 1047558
    %v120 = vsel %vm119, %v118, %v115
    %vm121 = vcmask 1014784
    %v122 = vsel %vm121, %v120, %v102
    %123 = vrot.lane.b32.xlu0 %v122, 4
    %v124 = vpop.permute.xlu0 %123
    %vm125 = vcmask 31744
    %s126 = scalar_lea.vmem [#allocation0], 144
    %127 = vst.msk [vmem:[%s126] sm:$0x1] %vm125, %v124
    %vm128 = vcmask 1047584
    %s129 = scalar_lea.vmem [#allocation0], 96
    %130 = vst.msk [vmem:[%s129] ss:$-24 sm:$0x3] %vm128, %v124
    %s131 = scalar_lea.vmem [#allocation0], 64
    %132 = vst.msk [vmem:[%s131] ss:$8 sm:$0xc] %vm128, %v124
    %s133 = scalar_lea.vmem [#allocation0], 224
    %134 = vst.msk [vmem:[%s133] ss:$-24 sm:$0x30] %vm128, %v124
    %s135 = scalar_lea.vmem [#allocation0], 64
    %136 = vst.msk [vmem:[%s135] ss:$8 sm:$0xc0] %vm128, %v124
    %s137 = scalar_lea.vmem [#allocation1], 65
    %v138 = vld [vmem:[%s137] sm:$0x1]
    %139 = vrot.lane.b32.xlu0 %v138, 4
    %v140 = vpop.permute.xlu0 %139
    %vm141 = vcmask 1047584
    %s142 = scalar_lea.vmem [#allocation0], 136
    %143 = vst.msk [vmem:[%s142] sm:$0x1] %vm141, %v140
    %s145 = sshllo.u32 0, 1
    %v147 = vld [vmem:[#allocation0] sm:%s145]
    %s148 = sshllo.u32 0, 1
    %149 = vst [vmem:[%s1] sm:%s148] %v147
    %s150 = scalar_lea.vmem [#allocation0], 8
    %v151 = vld [vmem:[%s150] sm:%s145]
    %s152 = sshllo.u32 0, 1
    %s153 = scalar_lea.vmem %s1, 1
    %154 = vst [vmem:[%s153] sm:%s152] %v151
    %s155 = scalar_lea.vmem [#allocation0], 16
    %v156 = vld [vmem:[%s155] sm:%s145]
    %s157 = sshllo.u32 0, 1
    %s158 = smul.addr 1, 2
    %s159 = scalar_lea.vmem %s1, %s158
    %160 = vst [vmem:[%s159] sm:%s157] %v156
    %s161 = scalar_lea.vmem [#allocation0], 24
    %v162 = vld [vmem:[%s161] sm:%s145]
    %s163 = sshllo.u32 0, 1
    %s164 = smul.addr 1, 3
    %s165 = scalar_lea.vmem %s1, %s164
    %166 = vst [vmem:[%s165] sm:%s163] %v162
    %s167 = scalar_lea.vmem [#allocation0], 32
    %v168 = vld [vmem:[%s167] sm:%s145]
    %s169 = sshllo.u32 0, 1
    %s170 = smul.addr 1, 4
    %s171 = scalar_lea.vmem %s1, %s170
    %172 = vst [vmem:[%s171] sm:%s169] %v168
    %s173 = scalar_lea.vmem [#allocation0], 40
    %v174 = vld [vmem:[%s173] sm:%s145]
    %s175 = sshllo.u32 0, 1
    %s176 = smul.addr 1, 5
    %s177 = scalar_lea.vmem %s1, %s176
    %178 = vst [vmem:[%s177] sm:%s175] %v174
    %s179 = scalar_lea.vmem [#allocation0], 48
    %v180 = vld [vmem:[%s179] sm:%s145]
    %s181 = sshllo.u32 0, 1
    %s182 = smul.addr 1, 6
    %s183 = scalar_lea.vmem %s1, %s182
    %184 = vst [vmem:[%s183] sm:%s181] %v180
    %s185 = scalar_lea.vmem [#allocation0], 56
    %v186 = vld [vmem:[%s185] sm:%s145]
    %s187 = sshllo.u32 0, 1
    %s188 = smul.addr 1, 7
    %s189 = scalar_lea.vmem %s1, %s188
    %190 = vst [vmem:[%s189] sm:%s187] %v186
    %s191 = scalar_lea.vmem [#allocation0], 64
    %v192 = vld [vmem:[%s191] sm:%s145]
    %s193 = sshllo.u32 0, 1
    %s194 = smul.addr 1, 8
    %s195 = scalar_lea.vmem %s1, %s194
    %196 = vst [vmem:[%s195] sm:%s193] %v192
    %s197 = scalar_lea.vmem [#allocation0], 72
    %v198 = vld [vmem:[%s197] sm:%s145]
    %s199 = sshllo.u32 0, 1
    %s200 = smul.addr 1, 9
    %s201 = scalar_lea.vmem %s1, %s200
    %202 = vst [vmem:[%s201] sm:%s199] %v198
    %s203 = scalar_lea.vmem [#allocation0], 80
    %v204 = vld [vmem:[%s203] sm:%s145]
    %s205 = sshllo.u32 0, 1
    %s206 = smul.addr 1, 10
    %s207 = scalar_lea.vmem %s1, %s206
    %208 = vst [vmem:[%s207] sm:%s205] %v204
    %s209 = scalar_lea.vmem [#allocation0], 88
    %v210 = vld [vmem:[%s209] sm:%s145]
    %s211 = sshllo.u32 0, 1
    %s212 = smul.addr 1, 11
    %s213 = scalar_lea.vmem %s1, %s212
    %214 = vst [vmem:[%s213] sm:%s211] %v210
    %s215 = scalar_lea.vmem [#allocation0], 96
    %v216 = vld [vmem:[%s215] sm:%s145]
    %s217 = sshllo.u32 0, 1
    %s218 = smul.addr 1, 12
    %s219 = scalar_lea.vmem %s1, %s218
    %220 = vst [vmem:[%s219] sm:%s217] %v216
    %s221 = scalar_lea.vmem [#allocation0], 104
    %v222 = vld [vmem:[%s221] sm:%s145]
    %s223 = sshllo.u32 0, 1
    %s224 = smul.addr 1, 13
    %s225 = scalar_lea.vmem %s1, %s224
    %226 = vst [vmem:[%s225] sm:%s223] %v222
    %s227 = scalar_lea.vmem [#allocation0], 112
    %v228 = vld [vmem:[%s227] sm:%s145]
    %s229 = sshllo.u32 0, 1
    %s230 = smul.addr 1, 14
    %s231 = scalar_lea.vmem %s1, %s230
    %232 = vst [vmem:[%s231] sm:%s229] %v228
    %s233 = scalar_lea.vmem [#allocation0], 120
    %v234 = vld [vmem:[%s233] sm:%s145]
    %s235 = sshllo.u32 0, 1
    %s236 = smul.addr 1, 15
    %s237 = scalar_lea.vmem %s1, %s236
    %238 = vst [vmem:[%s237] sm:%s235] %v234
    %s239 = scalar_lea.vmem [#allocation0], 128
    %v240 = vld [vmem:[%s239] sm:%s145]
    %s241 = sshllo.u32 0, 1
    %s242 = smul.addr 1, 16
    %s243 = scalar_lea.vmem %s1, %s242
    %244 = vst [vmem:[%s243] sm:%s241] %v240
    %s245 = scalar_lea.vmem [#allocation0], 136
    %v246 = vld [vmem:[%s245] sm:%s145]
    %s247 = sshllo.u32 0, 1
    %s248 = smul.addr 1, 17
    %s249 = scalar_lea.vmem %s1, %s248
    %250 = vst [vmem:[%s249] sm:%s247] %v246
    %s251 = scalar_lea.vmem [#allocation0], 144
    %v252 = vld [vmem:[%s251] sm:%s145]
    %s253 = sshllo.u32 0, 1
    %s254 = smul.addr 1, 18
    %s255 = scalar_lea.vmem %s1, %s254
    %256 = vst [vmem:[%s255] sm:%s253] %v252

// kernel: net_t32_forward.7
$region0: #{net_t32_forward.7}
  #allocation0 [shape = 'u32[]', space=smem, size = 0x4, offset = 0x4, fixed_abs, tag = 'smem constant byte address 0x4 - core index']
  #allocation1 [shape = 'u32[144,128]{1,0:T(1,128)}', space=vmem, size = 0x12000, scoped, tag = 'internal scratch']
  #allocation2 [shape = 'bf16[16,2382]{1,0:T(16,128)(2,1)}', space=vmem, size = 0x13000, scoped, tag = 'scratch operand']
  %s0 = inlined_call_operand.vmem [shape: bf16[16,2382], index: 0, kind: input, shape index: {}]
  %s1 = inlined_call_operand.vmem [shape: bf16[16,2382], index: 1, kind: input, shape index: {}]
  %s2 = inlined_call_operand.vmem [shape: bf16[16,288], index: 2, kind: input, shape index: {}]
  %s3 = inlined_call_operand.vmem [shape: f32[16,1], index: 3, kind: input, shape index: {}]
  %s4 = inlined_call_operand.vmem [shape: f32[16,1], index: 4, kind: input, shape index: {}]
  %s5 = inlined_call_operand.vmem [shape: bf16[16,144], index: 5, kind: input, shape index: {}]
  %s6 = inlined_call_operand.vmem [shape: f32[1,2312], index: 6, kind: input, shape index: {}]
  %s7 = inlined_call_operand.vmem [shape: f32[16,2312], index: 7, kind: output, shape index: {}]
  %s8 = sld [smem:[#allocation0]]
  $region38: #{net_t32_forward.7} parent=0
    _
  %s10 = ssub.s32 1, %s8
  %s11 = scalar_select 0, %s10, %s8
  // Predicated region
  $region2: #{net_t32_forward.7} parent=0 // pred_check
    _
  $region3: #{net_t32_forward.7} parent=0 // pred_check_branch
    %13 = sbr.rel (0) target = $region5
  $region4: #{net_t32_forward.7} parent=0 // pred_region
    _
  $region5: #{net_t32_forward.7} parent=0 // pred_fallthru
    _
  // Predicated region
  $region6: #{net_t32_forward.7} parent=0 // pred_check
    _
  $region7: #{net_t32_forward.7} parent=0 // pred_check_branch
    %15 = sbr.rel (0) target = $region9
  $region8: #{net_t32_forward.7} parent=0 // pred_region
    _
  $region9: #{net_t32_forward.7} parent=0 // pred_fallthru
    _
  // Predicated region
  $region10: #{net_t32_forward.7} parent=0 // pred_check
    _
  $region11: #{net_t32_forward.7} parent=0 // pred_check_branch
    %17 = sbr.rel (0) target = $region13
  $region12: #{net_t32_forward.7} parent=0 // pred_region
    _
  $region13: #{net_t32_forward.7} parent=0 // pred_fallthru
    _
  // Predicated region
  $region14: #{net_t32_forward.7} parent=0 // pred_check
    _
  $region15: #{net_t32_forward.7} parent=0 // pred_check_branch
    %19 = sbr.rel (0) target = $region17
  $region16: #{net_t32_forward.7} parent=0 // pred_region
    _
  $region17: #{net_t32_forward.7} parent=0 // pred_fallthru
    _
  // Predicated region
  $region18: #{net_t32_forward.7} parent=0 // pred_check
    _
  $region19: #{net_t32_forward.7} parent=0 // pred_check_branch
    %21 = sbr.rel (0) target = $region21
  $region20: #{net_t32_forward.7} parent=0 // pred_region
    _
  $region21: #{net_t32_forward.7} parent=0 // pred_fallthru
    _
  // Predicated region
  $region22: #{net_t32_forward.7} parent=0 // pred_check
    _
  $region23: #{net_t32_forward.7} parent=0 // pred_check_branch
    %23 = sbr.rel (0) target = $region25
  $region24: #{net_t32_forward.7} parent=0 // pred_region
    _
  $region25: #{net_t32_forward.7} parent=0 // pred_fallthru
    _
  // Predicated region
  $region26: #{net_t32_forward.7} parent=0 // pred_check
    _
  $region27: #{net_t32_forward.7} parent=0 // pred_check_branch
    %25 = sbr.rel (0) target = $region29
  $region28: #{net_t32_forward.7} parent=0 // pred_region
    _
  $region29: #{net_t32_forward.7} parent=0 // pred_fallthru
    _
  %v27 = vld [vmem:[%s0] sm:$0xff]
  %v28 = vld [vmem:[%s0 + $0x8] sm:$0xff]
  %v29 = vld [vmem:[%s0 + $0x10] sm:$0xff]
  %v30 = vld [vmem:[%s0 + $0x18] sm:$0xff]
  %v31 = vld [vmem:[%s0 + $0x20] sm:$0xff]
  %v32 = vld [vmem:[%s0 + $0x28] sm:$0xff]
  %v33 = vld [vmem:[%s0 + $0x30] sm:$0xff]
  %v34 = vld [vmem:[%s0 + $0x38] sm:$0xff]
  %v35 = vld [vmem:[%s0 + $0x40] sm:$0xff]
  %v36 = vld [vmem:[%s0 + $0x48] sm:$0xf]
  %v37 = vld [vmem:[%s0 + $0x4c] sm:$0xff]
  %v38 = vld [vmem:[%s0 + $0x54] sm:$0xff]
  %v39 = vld [vmem:[%s0 + $0x5c] sm:$0xff]
  %v40 = vld [vmem:[%s0 + $0x64] sm:$0xff]
  %v41 = vld [vmem:[%s0 + $0x6c] sm:$0xff]
  %v42 = vld [vmem:[%s0 + $0x74] sm:$0xff]
  %v43 = vld [vmem:[%s0 + $0x7c] sm:$0xff]
  %v44 = vld [vmem:[%s0 + $0x84] sm:$0xff]
  %v45 = vld [vmem:[%s0 + $0x8c] sm:$0xff]
  %v46 = vld [vmem:[%s0 + $0x94] sm:$0xf]
  %v67 = vunpack.c.l.b16 %v27
  %v68 = vunpack.c.h.b16 %v27
  %v69 = vunpack.c.l.b16 %v28
  %v70 = vunpack.c.h.b16 %v28
  %v71 = vunpack.c.l.b16 %v29
  %v72 = vunpack.c.h.b16 %v29
  %v73 = vunpack.c.l.b16 %v30
  %v74 = vunpack.c.h.b16 %v30
  %v75 = vunpack.c.l.b16 %v31
  %v76 = vunpack.c.h.b16 %v31
  %v77 = vunpack.c.l.b16 %v32
  %v78 = vunpack.c.h.b16 %v32
  %v79 = vunpack.c.l.b16 %v33
  %v80 = vunpack.c.h.b16 %v33
  %v81 = vunpack.c.l.b16 %v34
  %v82 = vunpack.c.h.b16 %v34
  %v83 = vunpack.c.l.b16 %v35
  %v84 = vunpack.c.h.b16 %v35
  %v85 = vunpack.c.l.b16 %v36
  %v86 = vunpack.c.l.b16 %v37
  %v87 = vunpack.c.h.b16 %v37
  %v88 = vunpack.c.l.b16 %v38
  %v89 = vunpack.c.h.b16 %v38
  %v90 = vunpack.c.l.b16 %v39
  %v91 = vunpack.c.h.b16 %v39
  %v92 = vunpack.c.l.b16 %v40
  %v93 = vunpack.c.h.b16 %v40
  %v94 = vunpack.c.l.b16 %v41
  %v95 = vunpack.c.h.b16 %v41
  %v96 = vunpack.c.l.b16 %v42
  %v97 = vunpack.c.h.b16 %v42
  %v98 = vunpack.c.l.b16 %v43
  %v99 = vunpack.c.h.b16 %v43
  %v100 = vunpack.c.l.b16 %v44
  %v101 = vunpack.c.h.b16 %v44
  %v102 = vunpack.c.l.b16 %v45
  %v103 = vunpack.c.h.b16 %v45
  %v104 = vunpack.c.l.b16 %v46
  %v105 = vpack.c.b16 %v86, %v67
  %v106 = vpack.c.b16 %v87, %v68
  %v107 = vpack.c.b16 %v88, %v69
  %v108 = vpack.c.b16 %v89, %v70
  %v109 = vpack.c.b16 %v90, %v71
  %v110 = vpack.c.b16 %v91, %v72
  %v111 = vpack.c.b16 %v92, %v73
  %v112 = vpack.c.b16 %v93, %v74
  %v113 = vpack.c.b16 %v94, %v75
  %v114 = vpack.c.b16 %v95, %v76
  %v115 = vpack.c.b16 %v96, %v77
  %v116 = vpack.c.b16 %v97, %v78
  %v117 = vpack.c.b16 %v98, %v79
  %v118 = vpack.c.b16 %v99, %v80
  %v119 = vpack.c.b16 %v100, %v81
  %v120 = vpack.c.b16 %v101, %v82
  %v121 = vpack.c.b16 %v102, %v83
  %v122 = vpack.c.b16 %v103, %v84
  %v123 = vpack.c.b16 %v104, %v85
  %143 = vrot.lane.b32.xlu0 %v105, 127
  %v144 = vpop.permute.xlu0 %143
  %145 = vrot.lane.b32.xlu0 %v106, 127
  %v146 = vpop.permute.xlu0 %145
  %147 = vrot.lane.b32.xlu0 %v107, 127
  %v148 = vpop.permute.xlu0 %147
  %149 = vrot.lane.b32.xlu0 %v108, 127
  %v150 = vpop.permute.xlu0 %149
  %151 = vrot.lane.b32.xlu0 %v109, 127
  %v152 = vpop.permute.xlu0 %151
  %153 = vrot.lane.b32.xlu0 %v110, 127
  %v154 = vpop.permute.xlu0 %153
  %155 = vrot.lane.b32.xlu0 %v111, 127
  %v156 = vpop.permute.xlu0 %155
  %157 = vrot.lane.b32.xlu0 %v112, 127
  %v158 = vpop.permute.xlu0 %157
  %159 = vrot.lane.b32.xlu0 %v113, 127
  %v160 = vpop.permute.xlu0 %159
  %161 = vrot.lane.b32.xlu0 %v114, 127
  %v162 = vpop.permute.xlu0 %161
  %163 = vrot.lane.b32.xlu0 %v115, 127
  %v164 = vpop.permute.xlu0 %163
  %165 = vrot.lane.b32.xlu0 %v116, 127
  %v166 = vpop.permute.xlu0 %165
  %167 = vrot.lane.b32.xlu0 %v117, 127
  %v168 = vpop.permute.xlu0 %167
  %169 = vrot.lane.b32.xlu0 %v118, 127
  %v170 = vpop.permute.xlu0 %169
  %171 = vrot.lane.b32.xlu0 %v119, 127
  %v172 = vpop.permute.xlu0 %171
  %173 = vrot.lane.b32.xlu0 %v120, 127
  %v174 = vpop.permute.xlu0 %173
  %175 = vrot.lane.b32.xlu0 %v121, 127
  %v176 = vpop.permute.xlu0 %175
  %177 = vrot.lane.b32.xlu0 %v122, 127
  %v178 = vpop.permute.xlu0 %177
  %179 = vrot.lane.b32.xlu0 %v123, 127
  %v180 = vpop.permute.xlu0 %179
  %vm181 = vcmask 1039360
  %v182 = vsel %vm181, %v144, %v146
  %v183 = vsel %vm181, %v146, %v148
  %v184 = vsel %vm181, %v148, %v150
  %v185 = vsel %vm181, %v150, %v152
  %v186 = vsel %vm181, %v152, %v154
  %v187 = vsel %vm181, %v154, %v156
  %v188 = vsel %vm181, %v156, %v158
  %v189 = vsel %vm181, %v158, %v160
  %v190 = vsel %vm181, %v160, %v162
  %v191 = vsel %vm181, %v162, %v164
  %v192 = vsel %vm181, %v164, %v166
  %v193 = vsel %vm181, %v166, %v168
  %v194 = vsel %vm181, %v168, %v170
  %v195 = vsel %vm181, %v170, %v172
  %v196 = vsel %vm181, %v172, %v174
  %v197 = vsel %vm181, %v174, %v176
  %v198 = vsel %vm181, %v176, %v178
  %v199 = vsel %vm181, %v178, %v180
  %219 = vrot.lane.b32.xlu0 %v105, 126
  %v220 = vpop.permute.xlu0 %219
  %221 = vrot.lane.b32.xlu0 %v106, 126
  %v222 = vpop.permute.xlu0 %221
  %223 = vrot.lane.b32.xlu0 %v107, 126
  %v224 = vpop.permute.xlu0 %223
  %225 = vrot.lane.b32.xlu0 %v108, 126
  %v226 = vpop.permute.xlu0 %225
  %227 = vrot.lane.b32.xlu0 %v109, 126
  %v228 = vpop.permute.xlu0 %227
  %229 = vrot.lane.b32.xlu0 %v110, 126
  %v230 = vpop.permute.xlu0 %229
  %231 = vrot.lane.b32.xlu0 %v111, 126
  %v232 = vpop.permute.xlu0 %231
  %233 = vrot.lane.b32.xlu0 %v112, 126
  %v234 = vpop.permute.xlu0 %233
  %235 = vrot.lane.b32.xlu0 %v113, 126
  %v236 = vpop.permute.xlu0 %235
  %237 = vrot.lane.b32.xlu0 %v114, 126
  %v238 = vpop.permute.xlu0 %237
  %239 = vrot.lane.b32.xlu0 %v115, 126
  %v240 = vpop.permute.xlu0 %239
  %241 = vrot.lane.b32.xlu0 %v116, 126
  %v242 = vpop.permute.xlu0 %241
  %243 = vrot.lane.b32.xlu0 %v117, 126
  %v244 = vpop.permute.xlu0 %243
  %245 = vrot.lane.b32.xlu0 %v118, 126
  %v246 = vpop.permute.xlu0 %245
  %247 = vrot.lane.b32.xlu0 %v119, 126
  %v248 = vpop.permute.xlu0 %247
  %249 = vrot.lane.b32.xlu0 %v120, 126
  %v250 = vpop.permute.xlu0 %249
  %251 = vrot.lane.b32.xlu0 %v121, 126
  %v252 = vpop.permute.xlu0 %251
  %253 = vrot.lane.b32.xlu0 %v122, 126
  %v254 = vpop.permute.xlu0 %253
  %255 = vrot.lane.b32.xlu0 %v123, 126
  %v256 = vpop.permute.xlu0 %255
  %vm257 = vcmask 1031168
  %v258 = vsel %vm257, %v220, %v222
  %v259 = vsel %vm257, %v222, %v224
  %v260 = vsel %vm257, %v224, %v226
  %v261 = vsel %vm257, %v226, %v228
  %v262 = vsel %vm257, %v228, %v230
  %v263 = vsel %vm257, %v230, %v232
  %v264 = vsel %vm257, %v232, %v234
  %v265 = vsel %vm257, %v234, %v236
  %v266 = vsel %vm257, %v236, %v238
  %v267 = vsel %vm257, %v238, %v240
  %v268 = vsel %vm257, %v240, %v242
  %v269 = vsel %vm257, %v242, %v244
  %v270 = vsel %vm257, %v244, %v246
  %v271 = vsel %vm257, %v246, %v248
  %v272 = vsel %vm257, %v248, %v250
  %v273 = vsel %vm257, %v250, %v252
  %v274 = vsel %vm257, %v252, %v254
  %v275 = vsel %vm257, %v254, %v256
  %295 = vrot.lane.b32.xlu0 %v105, 94
  %v296 = vpop.permute.xlu0 %295
  %297 = vrot.lane.b32.xlu0 %v106, 94
  %v298 = vpop.permute.xlu0 %297
  %299 = vrot.lane.b32.xlu0 %v107, 94
  %v300 = vpop.permute.xlu0 %299
  %301 = vrot.lane.b32.xlu0 %v108, 94
  %v302 = vpop.permute.xlu0 %301
  %303 = vrot.lane.b32.xlu0 %v109, 94
  %v304 = vpop.permute.xlu0 %303
  %305 = vrot.lane.b32.xlu0 %v110, 94
  %v306 = vpop.permute.xlu0 %305
  %307 = vrot.lane.b32.xlu0 %v111, 94
  %v308 = vpop.permute.xlu0 %307
  %309 = vrot.lane.b32.xlu0 %v112, 94
  %v310 = vpop.permute.xlu0 %309
  %311 = vrot.lane.b32.xlu0 %v113, 94
  %v312 = vpop.permute.xlu0 %311
  %313 = vrot.lane.b32.xlu0 %v114, 94
  %v314 = vpop.permute.xlu0 %313
  %315 = vrot.lane.b32.xlu0 %v115, 94
  %v316 = vpop.permute.xlu0 %315
  %317 = vrot.lane.b32.xlu0 %v116, 94
  %v318 = vpop.permute.xlu0 %317
  %319 = vrot.lane.b32.xlu0 %v117, 94
  %v320 = vpop.permute.xlu0 %319
  %321 = vrot.lane.b32.xlu0 %v118, 94
  %v322 = vpop.permute.xlu0 %321
  %323 = vrot.lane.b32.xlu0 %v119, 94
  %v324 = vpop.permute.xlu0 %323
  %325 = vrot.lane.b32.xlu0 %v120, 94
  %v326 = vpop.permute.xlu0 %325
  %327 = vrot.lane.b32.xlu0 %v121, 94
  %v328 = vpop.permute.xlu0 %327
  %329 = vrot.lane.b32.xlu0 %v122, 94
  %v330 = vpop.permute.xlu0 %329
  %331 = vrot.lane.b32.xlu0 %v123, 94
  %v332 = vpop.permute.xlu0 %331
  %vm333 = vcmask 769024
  %v334 = vsel %vm333, %v296, %v298
  %v335 = vsel %vm333, %v298, %v300
  %v336 = vsel %vm333, %v300, %v302
  %v337 = vsel %vm333, %v302, %v304
  %v338 = vsel %vm333, %v304, %v306
  %v339 = vsel %vm333, %v306, %v308
  %v340 = vsel %vm333, %v308, %v310
  %v341 = vsel %vm333, %v310, %v312
  %v342 = vsel %vm333, %v312, %v314
  %v343 = vsel %vm333, %v314, %v316
  %v344 = vsel %vm333, %v316, %v318
  %v345 = vsel %vm333, %v318, %v320
  %v346 = vsel %vm333, %v320, %v322
  %v347 = vsel %vm333, %v322, %v324
  %v348 = vsel %vm333, %v324, %v326
  %v349 = vsel %vm333, %v326, %v328
  %v350 = vsel %vm333, %v328, %v330
  %v351 = vsel %vm333, %v330, %v332
  %371 = vrot.lane.b32.xlu0 %v105, 93
  %v372 = vpop.permute.xlu0 %371
  %373 = vrot.lane.b32.xlu0 %v106, 93
  %v374 = vpop.permute.xlu0 %373
  %375 = vrot.lane.b32.xlu0 %v107, 93
  %v376 = vpop.permute.xlu0 %375
  %377 = vrot.lane.b32.xlu0 %v108, 93
  %v378 = vpop.permute.xlu0 %377
  %379 = vrot.lane.b32.xlu0 %v109, 93
  %v380 = vpop.permute.xlu0 %379
  %381 = vrot.lane.b32.xlu0 %v110, 93
  %v382 = vpop.permute.xlu0 %381
  %383 = vrot.lane.b32.xlu0 %v111, 93
  %v384 = vpop.permute.xlu0 %383
  %385 = vrot.lane.b32.xlu0 %v112, 93
  %v386 = vpop.permute.xlu0 %385
  %387 = vrot.lane.b32.xlu0 %v113, 93
  %v388 = vpop.permute.xlu0 %387
  %389 = vrot.lane.b32.xlu0 %v114, 93
  %v390 = vpop.permute.xlu0 %389
  %391 = vrot.lane.b32.xlu0 %v115, 93
  %v392 = vpop.permute.xlu0 %391
  %393 = vrot.lane.b32.xlu0 %v116, 93
  %v394 = vpop.permute.xlu0 %393
  %395 = vrot.lane.b32.xlu0 %v117, 93
  %v396 = vpop.permute.xlu0 %395
  %397 = vrot.lane.b32.xlu0 %v118, 93
  %v398 = vpop.permute.xlu0 %397
  %399 = vrot.lane.b32.xlu0 %v119, 93
  %v400 = vpop.permute.xlu0 %399
  %401 = vrot.lane.b32.xlu0 %v120, 93
  %v402 = vpop.permute.xlu0 %401
  %403 = vrot.lane.b32.xlu0 %v121, 93
  %v404 = vpop.permute.xlu0 %403
  %405 = vrot.lane.b32.xlu0 %v122, 93
  %v406 = vpop.permute.xlu0 %405
  %407 = vrot.lane.b32.xlu0 %v123, 93
  %v408 = vpop.permute.xlu0 %407
  %vm409 = vcmask 760832
  %v410 = vsel %vm409, %v372, %v374
  %v411 = vsel %vm409, %v374, %v376
  %v412 = vsel %vm409, %v376, %v378
  %v413 = vsel %vm409, %v378, %v380
  %v414 = vsel %vm409, %v380, %v382
  %v415 = vsel %vm409, %v382, %v384
  %v416 = vsel %vm409, %v384, %v386
  %v417 = vsel %vm409, %v386, %v388
  %v418 = vsel %vm409, %v388, %v390
  %v419 = vsel %vm409, %v390, %v392
  %v420 = vsel %vm409, %v392, %v394
  %v421 = vsel %vm409, %v394, %v396
  %v422 = vsel %vm409, %v396, %v398
  %v423 = vsel %vm409, %v398, %v400
  %v424 = vsel %vm409, %v400, %v402
  %v425 = vsel %vm409, %v402, %v404
  %v426 = vsel %vm409, %v404, %v406
  %v427 = vsel %vm409, %v406, %v408
  %447 = vrot.lane.b32.xlu0 %v105, 92
  %v448 = vpop.permute.xlu0 %447
  %449 = vrot.lane.b32.xlu0 %v106, 92
  %v450 = vpop.permute.xlu0 %449
  %451 = vrot.lane.b32.xlu0 %v107, 92
  %v452 = vpop.permute.xlu0 %451
  %453 = vrot.lane.b32.xlu0 %v108, 92
  %v454 = vpop.permute.xlu0 %453
  %455 = vrot.lane.b32.xlu0 %v109, 92
  %v456 = vpop.permute.xlu0 %455
  %457 = vrot.lane.b32.xlu0 %v110, 92
  %v458 = vpop.permute.xlu0 %457
  %459 = vrot.lane.b32.xlu0 %v111, 92
  %v460 = vpop.permute.xlu0 %459
  %461 = vrot.lane.b32.xlu0 %v112, 92
  %v462 = vpop.permute.xlu0 %461
  %463 = vrot.lane.b32.xlu0 %v113, 92
  %v464 = vpop.permute.xlu0 %463
  %465 = vrot.lane.b32.xlu0 %v114, 92
  %v466 = vpop.permute.xlu0 %465
  %467 = vrot.lane.b32.xlu0 %v115, 92
  %v468 = vpop.permute.xlu0 %467
  %469 = vrot.lane.b32.xlu0 %v116, 92
  %v470 = vpop.permute.xlu0 %469
  %471 = vrot.lane.b32.xlu0 %v117, 92
  %v472 = vpop.permute.xlu0 %471
  %473 = vrot.lane.b32.xlu0 %v118, 92
  %v474 = vpop.permute.xlu0 %473
  %475 = vrot.lane.b32.xlu0 %v119, 92
  %v476 = vpop.permute.xlu0 %475
  %477 = vrot.lane.b32.xlu0 %v120, 92
  %v478 = vpop.permute.xlu0 %477
  %479 = vrot.lane.b32.xlu0 %v121, 92
  %v480 = vpop.permute.xlu0 %479
  %481 = vrot.lane.b32.xlu0 %v122, 92
  %v482 = vpop.permute.xlu0 %481
  %483 = vrot.lane.b32.xlu0 %v123, 92
  %v484 = vpop.permute.xlu0 %483
  %vm485 = vcmask 752640
  %v486 = vsel %vm485, %v448, %v450
  %v487 = vsel %vm485, %v450, %v452
  %v488 = vsel %vm485, %v452, %v454
  %v489 = vsel %vm485, %v454, %v456
  %v490 = vsel %vm485, %v456, %v458
  %v491 = vsel %vm485, %v458, %v460
  %v492 = vsel %vm485, %v460, %v462
  %v493 = vsel %vm485, %v462, %v464
  %v494 = vsel %vm485, %v464, %v466
  %v495 = vsel %vm485, %v466, %v468
  %v496 = vsel %vm485, %v468, %v470
  %v497 = vsel %vm485, %v470, %v472
  %v498 = vsel %vm485, %v472, %v474
  %v499 = vsel %vm485, %v474, %v476
  %v500 = vsel %vm485, %v476, %v478
  %v501 = vsel %vm485, %v478, %v480
  %v502 = vsel %vm485, %v480, %v482
  %v503 = vsel %vm485, %v482, %v484
  %523 = vrot.lane.b32.xlu0 %v105, 60
  %v524 = vpop.permute.xlu0 %523
  %525 = vrot.lane.b32.xlu0 %v106, 60
  %v526 = vpop.permute.xlu0 %525
  %527 = vrot.lane.b32.xlu0 %v107, 60
  %v528 = vpop.permute.xlu0 %527
  %529 = vrot.lane.b32.xlu0 %v108, 60
  %v530 = vpop.permute.xlu0 %529
  %531 = vrot.lane.b32.xlu0 %v109, 60
  %v532 = vpop.permute.xlu0 %531
  %533 = vrot.lane.b32.xlu0 %v110, 60
  %v534 = vpop.permute.xlu0 %533
  %535 = vrot.lane.b32.xlu0 %v111, 60
  %v536 = vpop.permute.xlu0 %535
  %537 = vrot.lane.b32.xlu0 %v112, 60
  %v538 = vpop.permute.xlu0 %537
  %539 = vrot.lane.b32.xlu0 %v113, 60
  %v540 = vpop.permute.xlu0 %539
  %541 = vrot.lane.b32.xlu0 %v114, 60
  %v542 = vpop.permute.xlu0 %541
  %543 = vrot.lane.b32.xlu0 %v115, 60
  %v544 = vpop.permute.xlu0 %543
  %545 = vrot.lane.b32.xlu0 %v116, 60
  %v546 = vpop.permute.xlu0 %545
  %547 = vrot.lane.b32.xlu0 %v117, 60
  %v548 = vpop.permute.xlu0 %547
  %549 = vrot.lane.b32.xlu0 %v118, 60
  %v550 = vpop.permute.xlu0 %549
  %551 = vrot.lane.b32.xlu0 %v119, 60
  %v552 = vpop.permute.xlu0 %551
  %553 = vrot.lane.b32.xlu0 %v120, 60
  %v554 = vpop.permute.xlu0 %553
  %555 = vrot.lane.b32.xlu0 %v121, 60
  %v556 = vpop.permute.xlu0 %555
  %557 = vrot.lane.b32.xlu0 %v122, 60
  %v558 = vpop.permute.xlu0 %557
  %559 = vrot.lane.b32.xlu0 %v123, 60
  %v560 = vpop.permute.xlu0 %559
  %vm561 = vcmask 490496
  %v562 = vsel %vm561, %v524, %v526
  %v563 = vsel %vm561, %v526, %v528
  %v564 = vsel %vm561, %v528, %v530
  %v565 = vsel %vm561, %v530, %v532
  %v566 = vsel %vm561, %v532, %v534
  %v567 = vsel %vm561, %v534, %v536
  %v568 = vsel %vm561, %v536, %v538
  %v569 = vsel %vm561, %v538, %v540
  %v570 = vsel %vm561, %v540, %v542
  %v571 = vsel %vm561, %v542, %v544
  %v572 = vsel %vm561, %v544, %v546
  %v573 = vsel %vm561, %v546, %v548
  %v574 = vsel %vm561, %v548, %v550
  %v575 = vsel %vm561, %v550, %v552
  %v576 = vsel %vm561, %v552, %v554
  %v577 = vsel %vm561, %v554, %v556
  %v578 = vsel %vm561, %v556, %v558
  %v579 = vsel %vm561, %v558, %v560
  %599 = vrot.lane.b32.xlu0 %v105, 59
  %v600 = vpop.permute.xlu0 %599
  %601 = vrot.lane.b32.xlu0 %v106, 59
  %v602 = vpop.permute.xlu0 %601
  %603 = vrot.lane.b32.xlu0 %v107, 59
  %v604 = vpop.permute.xlu0 %603
  %605 = vrot.lane.b32.xlu0 %v108, 59
  %v606 = vpop.permute.xlu0 %605
  %607 = vrot.lane.b32.xlu0 %v109, 59
  %v608 = vpop.permute.xlu0 %607
  %609 = vrot.lane.b32.xlu0 %v110, 59
  %v610 = vpop.permute.xlu0 %609
  %611 = vrot.lane.b32.xlu0 %v111, 59
  %v612 = vpop.permute.xlu0 %611
  %613 = vrot.lane.b32.xlu0 %v112, 59
  %v614 = vpop.permute.xlu0 %613
  %615 = vrot.lane.b32.xlu0 %v113, 59
  %v616 = vpop.permute.xlu0 %615
  %617 = vrot.lane.b32.xlu0 %v114, 59
  %v618 = vpop.permute.xlu0 %617
  %619 = vrot.lane.b32.xlu0 %v115, 59
  %v620 = vpop.permute.xlu0 %619
  %621 = vrot.lane.b32.xlu0 %v116, 59
  %v622 = vpop.permute.xlu0 %621
  %623 = vrot.lane.b32.xlu0 %v117, 59
  %v624 = vpop.permute.xlu0 %623
  %625 = vrot.lane.b32.xlu0 %v118, 59
  %v626 = vpop.permute.xlu0 %625
  %627 = vrot.lane.b32.xlu0 %v119, 59
  %v628 = vpop.permute.xlu0 %627
  %629 = vrot.lane.b32.xlu0 %v120, 59
  %v630 = vpop.permute.xlu0 %629
  %631 = vrot.lane.b32.xlu0 %v121, 59
  %v632 = vpop.permute.xlu0 %631
  %633 = vrot.lane.b32.xlu0 %v122, 59
  %v634 = vpop.permute.xlu0 %633
  %635 = vrot.lane.b32.xlu0 %v123, 59
  %v636 = vpop.permute.xlu0 %635
  %vm637 = vcmask 482304
  %v638 = vsel %vm637, %v600, %v602
  %v639 = vsel %vm637, %v602, %v604
  %v640 = vsel %vm637, %v604, %v606
  %v641 = vsel %vm637, %v606, %v608
  %v642 = vsel %vm637, %v608, %v610
  %v643 = vsel %vm637, %v610, %v612
  %v644 = vsel %vm637, %v612, %v614
  %v645 = vsel %vm637, %v614, %v616
  %v646 = vsel %vm637, %v616, %v618
  %v647 = vsel %vm637, %v618, %v620
  %v648 = vsel %vm637, %v620, %v622
  %v649 = vsel %vm637, %v622, %v624
  %v650 = vsel %vm637, %v624, %v626
  %v651 = vsel %vm637, %v626, %v628
  %v652 = vsel %vm637, %v628, %v630
  %v653 = vsel %vm637, %v630, %v632
  %v654 = vsel %vm637, %v632, %v634
  %v655 = vsel %vm637, %v634, %v636
  %675 = vrot.lane.b32.xlu0 %v105, 58
  %v676 = vpop.permute.xlu0 %675
  %677 = vrot.lane.b32.xlu0 %v106, 58
  %v678 = vpop.permute.xlu0 %677
  %679 = vrot.lane.b32.xlu0 %v107, 58
  %v680 = vpop.permute.xlu0 %679
  %681 = vrot.lane.b32.xlu0 %v108, 58
  %v682 = vpop.permute.xlu0 %681
  %683 = vrot.lane.b32.xlu0 %v109, 58
  %v684 = vpop.permute.xlu0 %683
  %685 = vrot.lane.b32.xlu0 %v110, 58
  %v686 = vpop.permute.xlu0 %685
  %687 = vrot.lane.b32.xlu0 %v111, 58
  %v688 = vpop.permute.xlu0 %687
  %689 = vrot.lane.b32.xlu0 %v112, 58
  %v690 = vpop.permute.xlu0 %689
  %691 = vrot.lane.b32.xlu0 %v113, 58
  %v692 = vpop.permute.xlu0 %691
  %693 = vrot.lane.b32.xlu0 %v114, 58
  %v694 = vpop.permute.xlu0 %693
  %695 = vrot.lane.b32.xlu0 %v115, 58
  %v696 = vpop.permute.xlu0 %695
  %697 = vrot.lane.b32.xlu0 %v116, 58
  %v698 = vpop.permute.xlu0 %697
  %699 = vrot.lane.b32.xlu0 %v117, 58
  %v700 = vpop.permute.xlu0 %699
  %701 = vrot.lane.b32.xlu0 %v118, 58
  %v702 = vpop.permute.xlu0 %701
  %703 = vrot.lane.b32.xlu0 %v119, 58
  %v704 = vpop.permute.xlu0 %703
  %705 = vrot.lane.b32.xlu0 %v120, 58
  %v706 = vpop.permute.xlu0 %705
  %707 = vrot.lane.b32.xlu0 %v121, 58
  %v708 = vpop.permute.xlu0 %707
  %709 = vrot.lane.b32.xlu0 %v122, 58
  %v710 = vpop.permute.xlu0 %709
  %711 = vrot.lane.b32.xlu0 %v123, 58
  %v712 = vpop.permute.xlu0 %711
  %vm713 = vcmask 474112
  %v714 = vsel %vm713, %v676, %v678
  %v715 = vsel %vm713, %v678, %v680
  %v716 = vsel %vm713, %v680, %v682
  %v717 = vsel %vm713, %v682, %v684
  %v718 = vsel %vm713, %v684, %v686
  %v719 = vsel %vm713, %v686, %v688
  %v720 = vsel %vm713, %v688, %v690
  %v721 = vsel %vm713, %v690, %v692
  %v722 = vsel %vm713, %v692, %v694
  %v723 = vsel %vm713, %v694, %v696
  %v724 = vsel %vm713, %v696, %v698
  %v725 = vsel %vm713, %v698, %v700
  %v726 = vsel %vm713, %v700, %v702
  %v727 = vsel %vm713, %v702, %v704
  %v728 = vsel %vm713, %v704, %v706
  %v729 = vsel %vm713, %v706, %v708
  %v730 = vsel %vm713, %v708, %v710
  %v731 = vsel %vm713, %v710, %v712
  %v751 = vld [vmem:[%s1] sm:$0xff]
  %v752 = vld [vmem:[%s1 + $0x8] sm:$0xff]
  %v753 = vld [vmem:[%s1 + $0x10] sm:$0xff]
  %v754 = vld [vmem:[%s1 + $0x18] sm:$0xff]
  %v755 = vld [vmem:[%s1 + $0x20] sm:$0xff]
  %v756 = vld [vmem:[%s1 + $0x28] sm:$0xff]
  %v757 = vld [vmem:[%s1 + $0x30] sm:$0xff]
  %v758 = vld [vmem:[%s1 + $0x38] sm:$0xff]
  %v759 = vld [vmem:[%s1 + $0x40] sm:$0xff]
  %v760 = vld [vmem:[%s1 + $0x48] sm:$0xf]
  %v761 = vld [vmem:[%s1 + $0x4c] sm:$0xff]
  %v762 = vld [vmem:[%s1 + $0x54] sm:$0xff]
  %v763 = vld [vmem:[%s1 + $0x5c] sm:$0xff]
  %v764 = vld [vmem:[%s1 + $0x64] sm:$0xff]
  %v765 = vld [vmem:[%s1 + $0x6c] sm:$0xff]
  %v766 = vld [vmem:[%s1 + $0x74] sm:$0xff]
  %v767 = vld [vmem:[%s1 + $0x7c] sm:$0xff]
  %v768 = vld [vmem:[%s1 + $0x84] sm:$0xff]
  %v769 = vld [vmem:[%s1 + $0x8c] sm:$0xff]
  %v770 = vld [vmem:[%s1 + $0x94] sm:$0xf]
  %v791 = vunpack.c.l.b16 %v751
  %v792 = vunpack.c.h.b16 %v751
  %v793 = vunpack.c.l.b16 %v752
  %v794 = vunpack.c.h.b16 %v752
  %v795 = vunpack.c.l.b16 %v753
  %v796 = vunpack.c.h.b16 %v753
  %v797 = vunpack.c.l.b16 %v754
  %v798 = vunpack.c.h.b16 %v754
  %v799 = vunpack.c.l.b16 %v755
  %v800 = vunpack.c.h.b16 %v755
  %v801 = vunpack.c.l.b16 %v756
  %v802 = vunpack.c.h.b16 %v756
  %v803 = vunpack.c.l.b16 %v757
  %v804 = vunpack.c.h.b16 %v757
  %v805 = vunpack.c.l.b16 %v758
  %v806 = vunpack.c.h.b16 %v758
  %v807 = vunpack.c.l.b16 %v759
  %v808 = vunpack.c.h.b16 %v759
  %v809 = vunpack.c.l.b16 %v760
  %v810 = vunpack.c.l.b16 %v761
  %v811 = vunpack.c.h.b16 %v761
  %v812 = vunpack.c.l.b16 %v762
  %v813 = vunpack.c.h.b16 %v762
  %v814 = vunpack.c.l.b16 %v763
  %v815 = vunpack.c.h.b16 %v763
  %v816 = vunpack.c.l.b16 %v764
  %v817 = vunpack.c.h.b16 %v764
  %v818 = vunpack.c.l.b16 %v765
  %v819 = vunpack.c.h.b16 %v765
  %v820 = vunpack.c.l.b16 %v766
  %v821 = vunpack.c.h.b16 %v766
  %v822 = vunpack.c.l.b16 %v767
  %v823 = vunpack.c.h.b16 %v767
  %v824 = vunpack.c.l.b16 %v768
  %v825 = vunpack.c.h.b16 %v768
  %v826 = vunpack.c.l.b16 %v769
  %v827 = vunpack.c.h.b16 %v769
  %v828 = vunpack.c.l.b16 %v770
  %v829 = vpack.c.b16 %v810, %v791
  %v830 = vpack.c.b16 %v811, %v792
  %v831 = vpack.c.b16 %v812, %v793
  %v832 = vpack.c.b16 %v813, %v794
  %v833 = vpack.c.b16 %v814, %v795
  %v834 = vpack.c.b16 %v815, %v796
  %v835 = vpack.c.b16 %v816, %v797
  %v836 = vpack.c.b16 %v817, %v798
  %v837 = vpack.c.b16 %v818, %v799
  %v838 = vpack.c.b16 %v819, %v800
  %v839 = vpack.c.b16 %v820, %v801
  %v840 = vpack.c.b16 %v821, %v802
  %v841 = vpack.c.b16 %v822, %v803
  %v842 = vpack.c.b16 %v823, %v804
  %v843 = vpack.c.b16 %v824, %v805
  %v844 = vpack.c.b16 %v825, %v806
  %v845 = vpack.c.b16 %v826, %v807
  %v846 = vpack.c.b16 %v827, %v808
  %v847 = vpack.c.b16 %v828, %v809
  %867 = vrot.lane.b32.xlu0 %v829, 127
  %v868 = vpop.permute.xlu0 %867
  %869 = vrot.lane.b32.xlu0 %v830, 127
  %v870 = vpop.permute.xlu0 %869
  %871 = vrot.lane.b32.xlu0 %v831, 127
  %v872 = vpop.permute.xlu0 %871
  %873 = vrot.lane.b32.xlu0 %v832, 127
  %v874 = vpop.permute.xlu0 %873
  %875 = vrot.lane.b32.xlu0 %v833, 127
  %v876 = vpop.permute.xlu0 %875
  %877 = vrot.lane.b32.xlu0 %v834, 127
  %v878 = vpop.permute.xlu0 %877
  %879 = vrot.lane.b32.xlu0 %v835, 127
  %v880 = vpop.permute.xlu0 %879
  %881 = vrot.lane.b32.xlu0 %v836, 127
  %v882 = vpop.permute.xlu0 %881
  %883 = vrot.lane.b32.xlu0 %v837, 127
  %v884 = vpop.permute.xlu0 %883
  %885 = vrot.lane.b32.xlu0 %v838, 127
  %v886 = vpop.permute.xlu0 %885
  %887 = vrot.lane.b32.xlu0 %v839, 127
  %v888 = vpop.permute.xlu0 %887
  %889 = vrot.lane.b32.xlu0 %v840, 127
  %v890 = vpop.permute.xlu0 %889
  %891 = vrot.lane.b32.xlu0 %v841, 127
  %v892 = vpop.permute.xlu0 %891
  %893 = vrot.lane.b32.xlu0 %v842, 127
  %v894 = vpop.permute.xlu0 %893
  %895 = vrot.lane.b32.xlu0 %v843, 127
  %v896 = vpop.permute.xlu0 %895
  %897 = vrot.lane.b32.xlu0 %v844, 127
  %v898 = vpop.permute.xlu0 %897
  %899 = vrot.lane.b32.xlu0 %v845, 127
  %v900 = vpop.permute.xlu0 %899
  %901 = vrot.lane.b32.xlu0 %v846, 127
  %v902 = vpop.permute.xlu0 %901
  %903 = vrot.lane.b32.xlu0 %v847, 127
  %v904 = vpop.permute.xlu0 %903
  %v905 = vsel %vm181, %v868, %v870
  %v906 = vsel %vm181, %v870, %v872
  %v907 = vsel %vm181, %v872, %v874
  %v908 = vsel %vm181, %v874, %v876
  %v909 = vsel %vm181, %v876, %v878
  %v910 = vsel %vm181, %v878, %v880
  %v911 = vsel %vm181, %v880, %v882
  %v912 = vsel %vm181, %v882, %v884
  %v913 = vsel %vm181, %v884, %v886
  %v914 = vsel %vm181, %v886, %v888
  %v915 = vsel %vm181, %v888, %v890
  %v916 = vsel %vm181, %v890, %v892
  %v917 = vsel %vm181, %v892, %v894
  %v918 = vsel %vm181, %v894, %v896
  %v919 = vsel %vm181, %v896, %v898
  %v920 = vsel %vm181, %v898, %v900
  %v921 = vsel %vm181, %v900, %v902
  %v922 = vsel %vm181, %v902, %v904
  %942 = vrot.lane.b32.xlu0 %v829, 126
  %v943 = vpop.permute.xlu0 %942
  %944 = vrot.lane.b32.xlu0 %v830, 126
  %v945 = vpop.permute.xlu0 %944
  %946 = vrot.lane.b32.xlu0 %v831, 126
  %v947 = vpop.permute.xlu0 %946
  %948 = vrot.lane.b32.xlu0 %v832, 126
  %v949 = vpop.permute.xlu0 %948
  %950 = vrot.lane.b32.xlu0 %v833, 126
  %v951 = vpop.permute.xlu0 %950
  %952 = vrot.lane.b32.xlu0 %v834, 126
  %v953 = vpop.permute.xlu0 %952
  %954 = vrot.lane.b32.xlu0 %v835, 126
  %v955 = vpop.permute.xlu0 %954
  %956 = vrot.lane.b32.xlu0 %v836, 126
  %v957 = vpop.permute.xlu0 %956
  %958 = vrot.lane.b32.xlu0 %v837, 126
  %v959 = vpop.permute.xlu0 %958
  %960 = vrot.lane.b32.xlu0 %v838, 126
  %v961 = vpop.permute.xlu0 %960
  %962 = vrot.lane.b32.xlu0 %v839, 126
  %v963 = vpop.permute.xlu0 %962
  %964 = vrot.lane.b32.xlu0 %v840, 126
  %v965 = vpop.permute.xlu0 %964
  %966 = vrot.lane.b32.xlu0 %v841, 126
  %v967 = vpop.permute.xlu0 %966
  %968 = vrot.lane.b32.xlu0 %v842, 126
  %v969 = vpop.permute.xlu0 %968
  %970 = vrot.lane.b32.xlu0 %v843, 126
  %v971 = vpop.permute.xlu0 %970
  %972 = vrot.lane.b32.xlu0 %v844, 126
  %v973 = vpop.permute.xlu0 %972
  %974 = vrot.lane.b32.xlu0 %v845, 126
  %v975 = vpop.permute.xlu0 %974
  %976 = vrot.lane.b32.xlu0 %v846, 126
  %v977 = vpop.permute.xlu0 %976
  %978 = vrot.lane.b32.xlu0 %v847, 126
  %v979 = vpop.permute.xlu0 %978
  %v980 = vsel %vm257, %v943, %v945
  %v981 = vsel %vm257, %v945, %v947
  %v982 = vsel %vm257, %v947, %v949
  %v983 = vsel %vm257, %v949, %v951
  %v984 = vsel %vm257, %v951, %v953
  %v985 = vsel %vm257, %v953, %v955
  %v986 = vsel %vm257, %v955, %v957
  %v987 = vsel %vm257, %v957, %v959
  %v988 = vsel %vm257, %v959, %v961
  %v989 = vsel %vm257, %v961, %v963
  %v990 = vsel %vm257, %v963, %v965
  %v991 = vsel %vm257, %v965, %v967
  %v992 = vsel %vm257, %v967, %v969
  %v993 = vsel %vm257, %v969, %v971
  %v994 = vsel %vm257, %v971, %v973
  %v995 = vsel %vm257, %v973, %v975
  %v996 = vsel %vm257, %v975, %v977
  %v997 = vsel %vm257, %v977, %v979
  %1017 = vrot.lane.b32.xlu0 %v829, 94
  %v1018 = vpop.permute.xlu0 %1017
  %1019 = vrot.lane.b32.xlu0 %v830, 94
  %v1020 = vpop.permute.xlu0 %1019
  %1021 = vrot.lane.b32.xlu0 %v831, 94
  %v1022 = vpop.permute.xlu0 %1021
  %1023 = vrot.lane.b32.xlu0 %v832, 94
  %v1024 = vpop.permute.xlu0 %1023
  %1025 = vrot.lane.b32.xlu0 %v833, 94
  %v1026 = vpop.permute.xlu0 %1025
  %1027 = vrot.lane.b32.xlu0 %v834, 94
  %v1028 = vpop.permute.xlu0 %1027
  %1029 = vrot.lane.b32.xlu0 %v835, 94
  %v1030 = vpop.permute.xlu0 %1029
  %1031 = vrot.lane.b32.xlu0 %v836, 94
  %v1032 = vpop.permute.xlu0 %1031
  %1033 = vrot.lane.b32.xlu0 %v837, 94
  %v1034 = vpop.permute.xlu0 %1033
  %1035 = vrot.lane.b32.xlu0 %v838, 94
  %v1036 = vpop.permute.xlu0 %1035
  %1037 = vrot.lane.b32.xlu0 %v839, 94
  %v1038 = vpop.permute.xlu0 %1037
  %1039 = vrot.lane.b32.xlu0 %v840, 94
  %v1040 = vpop.permute.xlu0 %1039
  %1041 = vrot.lane.b32.xlu0 %v841, 94
  %v1042 = vpop.permute.xlu0 %1041
  %1043 = vrot.lane.b32.xlu0 %v842, 94
  %v1044 = vpop.permute.xlu0 %1043
  %1045 = vrot.lane.b32.xlu0 %v843, 94
  %v1046 = vpop.permute.xlu0 %1045
  %1047 = vrot.lane.b32.xlu0 %v844, 94
  %v1048 = vpop.permute.xlu0 %1047
  %1049 = vrot.lane.b32.xlu0 %v845, 94
  %v1050 = vpop.permute.xlu0 %1049
  %1051 = vrot.lane.b32.xlu0 %v846, 94
  %v1052 = vpop.permute.xlu0 %1051
  %1053 = vrot.lane.b32.xlu0 %v847, 94
  %v1054 = vpop.permute.xlu0 %1053
  %v1055 = vsel %vm333, %v1018, %v1020
  %v1056 = vsel %vm333, %v1020, %v1022
  %v1057 = vsel %vm333, %v1022, %v1024
  %v1058 = vsel %vm333, %v1024, %v1026
  %v1059 = vsel %vm333, %v1026, %v1028
  %v1060 = vsel %vm333, %v1028, %v1030
  %v1061 = vsel %vm333, %v1030, %v1032
  %v1062 = vsel %vm333, %v1032, %v1034
  %v1063 = vsel %vm333, %v1034, %v1036
  %v1064 = vsel %vm333, %v1036, %v1038
  %v1065 = vsel %vm333, %v1038, %v1040
  %v1066 = vsel %vm333, %v1040, %v1042
  %v1067 = vsel %vm333, %v1042, %v1044
  %v1068 = vsel %vm333, %v1044, %v1046
  %v1069 = vsel %vm333, %v1046, %v1048
  %v1070 = vsel %vm333, %v1048, %v1050
  %v1071 = vsel %vm333, %v1050, %v1052
  %v1072 = vsel %vm333, %v1052, %v1054
  %1092 = vrot.lane.b32.xlu0 %v829, 93
  %v1093 = vpop.permute.xlu0 %1092
  %1094 = vrot.lane.b32.xlu0 %v830, 93
  %v1095 = vpop.permute.xlu0 %1094
  %1096 = vrot.lane.b32.xlu0 %v831, 93
  %v1097 = vpop.permute.xlu0 %1096
  %1098 = vrot.lane.b32.xlu0 %v832, 93
  %v1099 = vpop.permute.xlu0 %1098
  %1100 = vrot.lane.b32.xlu0 %v833, 93
  %v1101 = vpop.permute.xlu0 %1100
  %1102 = vrot.lane.b32.xlu0 %v834, 93
  %v1103 = vpop.permute.xlu0 %1102
  %1104 = vrot.lane.b32.xlu0 %v835, 93
  %v1105 = vpop.permute.xlu0 %1104
  %1106 = vrot.lane.b32.xlu0 %v836, 93
  %v1107 = vpop.permute.xlu0 %1106
  %1108 = vrot.lane.b32.xlu0 %v837, 93
  %v1109 = vpop.permute.xlu0 %1108
  %1110 = vrot.lane.b32.xlu0 %v838, 93
  %v1111 = vpop.permute.xlu0 %1110
  %1112 = vrot.lane.b32.xlu0 %v839, 93
  %v1113 = vpop.permute.xlu0 %1112
  %1114 = vrot.lane.b32.xlu0 %v840, 93
  %v1115 = vpop.permute.xlu0 %1114
  %1116 = vrot.lane.b32.xlu0 %v841, 93
  %v1117 = vpop.permute.xlu0 %1116
  %1118 = vrot.lane.b32.xlu0 %v842, 93
  %v1119 = vpop.permute.xlu0 %1118
  %1120 = vrot.lane.b32.xlu0 %v843, 93
  %v1121 = vpop.permute.xlu0 %1120
  %1122 = vrot.lane.b32.xlu0 %v844, 93
  %v1123 = vpop.permute.xlu0 %1122
  %1124 = vrot.lane.b32.xlu0 %v845, 93
  %v1125 = vpop.permute.xlu0 %1124
  %1126 = vrot.lane.b32.xlu0 %v846, 93
  %v1127 = vpop.permute.xlu0 %1126
  %1128 = vrot.lane.b32.xlu0 %v847, 93
  %v1129 = vpop.permute.xlu0 %1128
  %v1130 = vsel %vm409, %v1093, %v1095
  %v1131 = vsel %vm409, %v1095, %v1097
  %v1132 = vsel %vm409, %v1097, %v1099
  %v1133 = vsel %vm409, %v1099, %v1101
  %v1134 = vsel %vm409, %v1101, %v1103
  %v1135 = vsel %vm409, %v1103, %v1105
  %v1136 = vsel %vm409, %v1105, %v1107
  %v1137 = vsel %vm409, %v1107, %v1109
  %v1138 = vsel %vm409, %v1109, %v1111
  %v1139 = vsel %vm409, %v1111, %v1113
  %v1140 = vsel %vm409, %v1113, %v1115
  %v1141 = vsel %vm409, %v1115, %v1117
  %v1142 = vsel %vm409, %v1117, %v1119
  %v1143 = vsel %vm409, %v1119, %v1121
  %v1144 = vsel %vm409, %v1121, %v1123
  %v1145 = vsel %vm409, %v1123, %v1125
  %v1146 = vsel %vm409, %v1125, %v1127
  %v1147 = vsel %vm409, %v1127, %v1129
  %1167 = vrot.lane.b32.xlu0 %v829, 92
  %v1168 = vpop.permute.xlu0 %1167
  %1169 = vrot.lane.b32.xlu0 %v830, 92
  %v1170 = vpop.permute.xlu0 %1169
  %1171 = vrot.lane.b32.xlu0 %v831, 92
  %v1172 = vpop.permute.xlu0 %1171
  %1173 = vrot.lane.b32.xlu0 %v832, 92
  %v1174 = vpop.permute.xlu0 %1173
  %1175 = vrot.lane.b32.xlu0 %v833, 92
  %v1176 = vpop.permute.xlu0 %1175
  %1177 = vrot.lane.b32.xlu0 %v834, 92
  %v1178 = vpop.permute.xlu0 %1177
  %1179 = vrot.lane.b32.xlu0 %v835, 92
  %v1180 = vpop.permute.xlu0 %1179
  %1181 = vrot.lane.b32.xlu0 %v836, 92
  %v1182 = vpop.permute.xlu0 %1181
  %1183 = vrot.lane.b32.xlu0 %v837, 92
  %v1184 = vpop.permute.xlu0 %1183
  %1185 = vrot.lane.b32.xlu0 %v838, 92
  %v1186 = vpop.permute.xlu0 %1185
  %1187 = vrot.lane.b32.xlu0 %v839, 92
  %v1188 = vpop.permute.xlu0 %1187
  %1189 = vrot.lane.b32.xlu0 %v840, 92
  %v1190 = vpop.permute.xlu0 %1189
  %1191 = vrot.lane.b32.xlu0 %v841, 92
  %v1192 = vpop.permute.xlu0 %1191
  %1193 = vrot.lane.b32.xlu0 %v842, 92
  %v1194 = vpop.permute.xlu0 %1193
  %1195 = vrot.lane.b32.xlu0 %v843, 92
  %v1196 = vpop.permute.xlu0 %1195
  %1197 = vrot.lane.b32.xlu0 %v844, 92
  %v1198 = vpop.permute.xlu0 %1197
  %1199 = vrot.lane.b32.xlu0 %v845, 92
  %v1200 = vpop.permute.xlu0 %1199
  %1201 = vrot.lane.b32.xlu0 %v846, 92
  %v1202 = vpop.permute.xlu0 %1201
  %1203 = vrot.lane.b32.xlu0 %v847, 92
  %v1204 = vpop.permute.xlu0 %1203
  %v1205 = vsel %vm485, %v1168, %v1170
  %v1206 = vsel %vm485, %v1170, %v1172
  %v1207 = vsel %vm485, %v1172, %v1174
  %v1208 = vsel %vm485, %v1174, %v1176
  %v1209 = vsel %vm485, %v1176, %v1178
  %v1210 = vsel %vm485, %v1178, %v1180
  %v1211 = vsel %vm485, %v1180, %v1182
  %v1212 = vsel %vm485, %v1182, %v1184
  %v1213 = vsel %vm485, %v1184, %v1186
  %v1214 = vsel %vm485, %v1186, %v1188
  %v1215 = vsel %vm485, %v1188, %v1190
  %v1216 = vsel %vm485, %v1190, %v1192
  %v1217 = vsel %vm485, %v1192, %v1194
  %v1218 = vsel %vm485, %v1194, %v1196
  %v1219 = vsel %vm485, %v1196, %v1198
  %v1220 = vsel %vm485, %v1198, %v1200
  %v1221 = vsel %vm485, %v1200, %v1202
  %v1222 = vsel %vm485, %v1202, %v1204
  %1242 = vrot.lane.b32.xlu0 %v829, 60
  %v1243 = vpop.permute.xlu0 %1242
  %1244 = vrot.lane.b32.xlu0 %v830, 60
  %v1245 = vpop.permute.xlu0 %1244
  %1246 = vrot.lane.b32.xlu0 %v831, 60
  %v1247 = vpop.permute.xlu0 %1246
  %1248 = vrot.lane.b32.xlu0 %v832, 60
  %v1249 = vpop.permute.xlu0 %1248
  %1250 = vrot.lane.b32.xlu0 %v833, 60
  %v1251 = vpop.permute.xlu0 %1250
  %1252 = vrot.lane.b32.xlu0 %v834, 60
  %v1253 = vpop.permute.xlu0 %1252
  %1254 = vrot.lane.b32.xlu0 %v835, 60
  %v1255 = vpop.permute.xlu0 %1254
  %1256 = vrot.lane.b32.xlu0 %v836, 60
  %v1257 = vpop.permute.xlu0 %1256
  %1258 = vrot.lane.b32.xlu0 %v837, 60
  %v1259 = vpop.permute.xlu0 %1258
  %1260 = vrot.lane.b32.xlu0 %v838, 60
  %v1261 = vpop.permute.xlu0 %1260
  %1262 = vrot.lane.b32.xlu0 %v839, 60
  %v1263 = vpop.permute.xlu0 %1262
  %1264 = vrot.lane.b32.xlu0 %v840, 60
  %v1265 = vpop.permute.xlu0 %1264
  %1266 = vrot.lane.b32.xlu0 %v841, 60
  %v1267 = vpop.permute.xlu0 %1266
  %1268 = vrot.lane.b32.xlu0 %v842, 60
  %v1269 = vpop.permute.xlu0 %1268
  %1270 = vrot.lane.b32.xlu0 %v843, 60
  %v1271 = vpop.permute.xlu0 %1270
  %1272 = vrot.lane.b32.xlu0 %v844, 60
  %v1273 = vpop.permute.xlu0 %1272
  %1274 = vrot.lane.b32.xlu0 %v845, 60
  %v1275 = vpop.permute.xlu0 %1274
  %1276 = vrot.lane.b32.xlu0 %v846, 60
  %v1277 = vpop.permute.xlu0 %1276
  %1278 = vrot.lane.b32.xlu0 %v847, 60
  %v1279 = vpop.permute.xlu0 %1278
  %v1280 = vsel %vm561, %v1243, %v1245
  %v1281 = vsel %vm561, %v1245, %v1247
  %v1282 = vsel %vm561, %v1247, %v1249
  %v1283 = vsel %vm561, %v1249, %v1251
  %v1284 = vsel %vm561, %v1251, %v1253
  %v1285 = vsel %vm561, %v1253, %v1255
  %v1286 = vsel %vm561, %v1255, %v1257
  %v1287 = vsel %vm561, %v1257, %v1259
  %v1288 = vsel %vm561, %v1259, %v1261
  %v1289 = vsel %vm561, %v1261, %v1263
  %v1290 = vsel %vm561, %v1263, %v1265
  %v1291 = vsel %vm561, %v1265, %v1267
  %v1292 = vsel %vm561, %v1267, %v1269
  %v1293 = vsel %vm561, %v1269, %v1271
  %v1294 = vsel %vm561, %v1271, %v1273
  %v1295 = vsel %vm561, %v1273, %v1275
  %v1296 = vsel %vm561, %v1275, %v1277
  %v1297 = vsel %vm561, %v1277, %v1279
  %1317 = vrot.lane.b32.xlu0 %v829, 59
  %v1318 = vpop.permute.xlu0 %1317
  %1319 = vrot.lane.b32.xlu0 %v830, 59
  %v1320 = vpop.permute.xlu0 %1319
  %1321 = vrot.lane.b32.xlu0 %v831, 59
  %v1322 = vpop.permute.xlu0 %1321
  %1323 = vrot.lane.b32.xlu0 %v832, 59
  %v1324 = vpop.permute.xlu0 %1323
  %1325 = vrot.lane.b32.xlu0 %v833, 59
  %v1326 = vpop.permute.xlu0 %1325
  %1327 = vrot.lane.b32.xlu0 %v834, 59
  %v1328 = vpop.permute.xlu0 %1327
  %1329 = vrot.lane.b32.xlu0 %v835, 59
  %v1330 = vpop.permute.xlu0 %1329
  %1331 = vrot.lane.b32.xlu0 %v836, 59
  %v1332 = vpop.permute.xlu0 %1331
  %1333 = vrot.lane.b32.xlu0 %v837, 59
  %v1334 = vpop.permute.xlu0 %1333
  %1335 = vrot.lane.b32.xlu0 %v838, 59
  %v1336 = vpop.permute.xlu0 %1335
  %1337 = vrot.lane.b32.xlu0 %v839, 59
  %v1338 = vpop.permute.xlu0 %1337
  %1339 = vrot.lane.b32.xlu0 %v840, 59
  %v1340 = vpop.permute.xlu0 %1339
  %1341 = vrot.lane.b32.xlu0 %v841, 59
  %v1342 = vpop.permute.xlu0 %1341
  %1343 = vrot.lane.b32.xlu0 %v842, 59
  %v1344 = vpop.permute.xlu0 %1343
  %1345 = vrot.lane.b32.xlu0 %v843, 59
  %v1346 = vpop.permute.xlu0 %1345
  %1347 = vrot.lane.b32.xlu0 %v844, 59
  %v1348 = vpop.permute.xlu0 %1347
  %1349 = vrot.lane.b32.xlu0 %v845, 59
  %v1350 = vpop.permute.xlu0 %1349
  %1351 = vrot.lane.b32.xlu0 %v846, 59
  %v1352 = vpop.permute.xlu0 %1351
  %1353 = vrot.lane.b32.xlu0 %v847, 59
  %v1354 = vpop.permute.xlu0 %1353
  %v1355 = vsel %vm637, %v1318, %v1320
  %v1356 = vsel %vm637, %v1320, %v1322
  %v1357 = vsel %vm637, %v1322, %v1324
  %v1358 = vsel %vm637, %v1324, %v1326
  %v1359 = vsel %vm637, %v1326, %v1328
  %v1360 = vsel %vm637, %v1328, %v1330
  %v1361 = vsel %vm637, %v1330, %v1332
  %v1362 = vsel %vm637, %v1332, %v1334
  %v1363 = vsel %vm637, %v1334, %v1336
  %v1364 = vsel %vm637, %v1336, %v1338
  %v1365 = vsel %vm637, %v1338, %v1340
  %v1366 = vsel %vm637, %v1340, %v1342
  %v1367 = vsel %vm637, %v1342, %v1344
  %v1368 = vsel %vm637, %v1344, %v1346
  %v1369 = vsel %vm637, %v1346, %v1348
  %v1370 = vsel %vm637, %v1348, %v1350
  %v1371 = vsel %vm637, %v1350, %v1352
  %v1372 = vsel %vm637, %v1352, %v1354
  %1392 = vrot.lane.b32.xlu0 %v829, 58
  %v1393 = vpop.permute.xlu0 %1392
  %1394 = vrot.lane.b32.xlu0 %v830, 58
  %v1395 = vpop.permute.xlu0 %1394
  %1396 = vrot.lane.b32.xlu0 %v831, 58
  %v1397 = vpop.permute.xlu0 %1396
  %1398 = vrot.lane.b32.xlu0 %v832, 58
  %v1399 = vpop.permute.xlu0 %1398
  %1400 = vrot.lane.b32.xlu0 %v833, 58
  %v1401 = vpop.permute.xlu0 %1400
  %1402 = vrot.lane.b32.xlu0 %v834, 58
  %v1403 = vpop.permute.xlu0 %1402
  %1404 = vrot.lane.b32.xlu0 %v835, 58
  %v1405 = vpop.permute.xlu0 %1404
  %1406 = vrot.lane.b32.xlu0 %v836, 58
  %v1407 = vpop.permute.xlu0 %1406
  %1408 = vrot.lane.b32.xlu0 %v837, 58
  %v1409 = vpop.permute.xlu0 %1408
  %1410 = vrot.lane.b32.xlu0 %v838, 58
  %v1411 = vpop.permute.xlu0 %1410
  %1412 = vrot.lane.b32.xlu0 %v839, 58
  %v1413 = vpop.permute.xlu0 %1412
  %1414 = vrot.lane.b32.xlu0 %v840, 58
  %v1415 = vpop.permute.xlu0 %1414
  %1416 = vrot.lane.b32.xlu0 %v841, 58
  %v1417 = vpop.permute.xlu0 %1416
  %1418 = vrot.lane.b32.xlu0 %v842, 58
  %v1419 = vpop.permute.xlu0 %1418
  %1420 = vrot.lane.b32.xlu0 %v843, 58
  %v1421 = vpop.permute.xlu0 %1420
  %1422 = vrot.lane.b32.xlu0 %v844, 58
  %v1423 = vpop.permute.xlu0 %1422
  %1424 = vrot.lane.b32.xlu0 %v845, 58
  %v1425 = vpop.permute.xlu0 %1424
  %1426 = vrot.lane.b32.xlu0 %v846, 58
  %v1427 = vpop.permute.xlu0 %1426
  %1428 = vrot.lane.b32.xlu0 %v847, 58
  %v1429 = vpop.permute.xlu0 %1428
  %v1430 = vsel %vm713, %v1393, %v1395
  %v1431 = vsel %vm713, %v1395, %v1397
  %v1432 = vsel %vm713, %v1397, %v1399
  %v1433 = vsel %vm713, %v1399, %v1401
  %v1434 = vsel %vm713, %v1401, %v1403
  %v1435 = vsel %vm713, %v1403, %v1405
  %v1436 = vsel %vm713, %v1405, %v1407
  %v1437 = vsel %vm713, %v1407, %v1409
  %v1438 = vsel %vm713, %v1409, %v1411
  %v1439 = vsel %vm713, %v1411, %v1413
  %v1440 = vsel %vm713, %v1413, %v1415
  %v1441 = vsel %vm713, %v1415, %v1417
  %v1442 = vsel %vm713, %v1417, %v1419
  %v1443 = vsel %vm713, %v1419, %v1421
  %v1444 = vsel %vm713, %v1421, %v1423
  %v1445 = vsel %vm713, %v1423, %v1425
  %v1446 = vsel %vm713, %v1425, %v1427
  %v1447 = vsel %vm713, %v1427, %v1429
  %v1467 = vld [vmem:[%s2] sm:$0xff]
  %v1468 = vld [vmem:[%s2 + $0x8] sm:$0xf]
  %v1469 = vld [vmem:[%s2 + $0xc] sm:$0xff]
  %v1470 = vld [vmem:[%s2 + $0x14] sm:$0xf]
  %v1475 = vunpack.c.l.b16 %v1467
  %v1476 = vunpack.c.h.b16 %v1467
  %v1477 = vunpack.c.l.b16 %v1468
  %v1478 = vunpack.c.l.b16 %v1469
  %v1479 = vunpack.c.h.b16 %v1469
  %v1480 = vunpack.c.l.b16 %v1470
  %v1481 = vpack.c.b16 %v1478, %v1475
  %v1482 = vpack.c.b16 %v1479, %v1476
  %v1483 = vpack.c.b16 %v1480, %v1477
  %vm1486 = vcmask 261120
  %v1488 = vsel %vm1486, %v1483, 0
  %1490 = vmatprep.subr.bf16.mxu0 %v106
  %1491 = vmatpush1.bf16.msra.mxu0 %v105
  %1492 = vmatprep.subr.bf16.mxu0 %v183
  %1493 = vmatpush1.bf16.msra.mxu0 %v182
  %1494 = vmatprep.subr.bf16.mxu0 %v259
  %1495 = vmatpush1.bf16.msra.mxu0 %v258
  %1496 = vmatprep.subr.bf16.mxu0 %v335
  %1497 = vmatpush1.bf16.msra.mxu0 %v334
  %1498 = vmatprep.subr.bf16.mxu0 %v411
  %1499 = vmatpush1.bf16.msra.mxu0 %v410
  %1500 = vmatprep.subr.bf16.mxu0 %v487
  %1501 = vmatpush1.bf16.msra.mxu0 %v486
  %1502 = vmatprep.subr.bf16.mxu0 %v563
  %1503 = vmatpush1.bf16.msra.mxu0 %v562
  %1504 = vmatprep.subr.bf16.mxu0 %v639
  %1505 = vmatpush1.bf16.msra.mxu0 %v638
  %1506 = vmatprep.subr.bf16.mxu0 %v715
  %1507 = vmatpush1.bf16.msra.mxu0 %v714
  %1508 = vmatprep.subr.bf16.mxu0 %v830
  %1509 = vmatpush1.bf16.msra.mxu0 %v829
  %1510 = vmatprep.subr.bf16.mxu0 %v906
  %1511 = vmatpush1.bf16.msra.mxu0 %v905
  %1512 = vmatprep.subr.bf16.mxu0 %v981
  %1513 = vmatpush1.bf16.msra.mxu0 %v980
  %1514 = vmatprep.subr.bf16.mxu0 %v1056
  %1515 = vmatpush1.bf16.msra.mxu0 %v1055
  %1516 = vmatprep.subr.bf16.mxu0 %v1131
  %1517 = vmatpush1.bf16.msra.mxu0 %v1130
  %1518 = vmatprep.subr.bf16.mxu0 %v1206
  %1519 = vmatpush1.bf16.msra.mxu0 %v1205
  %1520 = vmatprep.subr.bf16.mxu0 %v1281
  %1521 = vmatpush1.bf16.msra.mxu0 %v1280
  %1522 = vmatprep.mubr.bf16.mxu0 %v1482
  %1523 = vmatmul.mubr.bf16.gmra.mrb[0].mxu0 %v1481
  %v1524 = vpop.f32.mrb[0].mxu0
  %v1525 = vadd.f32 0.0, %v1524
  %v1526 = vpop.f32.mrb[0].mxu0
  %v1527 = vadd.f32 0.0, %v1526
  %v1528 = vpop.f32.mrb[0].mxu0
  %v1529 = vadd.f32 0.0, %v1528
  %v1530 = vpop.f32.mrb[0].mxu0
  %v1531 = vadd.f32 0.0, %v1530
  %1532 = vdwg.mxu0
  %1533 = vmatprep.subr.bf16.mxu0 %v1356
  %1534 = vmatpush1.bf16.msra.mxu0 %v1355
  %1535 = vmatprep.subr.bf16.mxu0 %v1431
  %1536 = vmatpush1.bf16.msra.mxu0 %v1430
  %1537 = vmatprep.subr.bf16.mxu0 0
  %1538 = vmatpush1.bf16.msra.mxu0 0
  %1539 = vmatprep.subr.bf16.mxu0 0
  %1540 = vmatpush1.bf16.msra.mxu0 0
  %1541 = vmatprep.subr.bf16.mxu0 0
  %1542 = vmatpush1.bf16.msra.mxu0 0
  %1543 = vmatprep.subr.bf16.mxu0 0
  %1544 = vmatpush1.bf16.msra.mxu0 0
  %1545 = vmatprep.subr.bf16.mxu0 0
  %1546 = vmatpush1.bf16.msra.mxu0 0
  %1547 = vmatprep.subr.bf16.mxu0 0
  %1548 = vmatpush1.bf16.msra.mxu0 0
  %1549 = vmatprep.subr.bf16.mxu0 0
  %1550 = vmatpush1.bf16.msra.mxu0 0
  %1551 = vmatprep.subr.bf16.mxu0 0
  %1552 = vmatpush1.bf16.msra.mxu0 0
  %1553 = vmatprep.subr.bf16.mxu0 0
  %1554 = vmatpush1.bf16.msra.mxu0 0
  %1555 = vmatprep.subr.bf16.mxu0 0
  %1556 = vmatpush1.bf16.msra.mxu0 0
  %1557 = vmatprep.subr.bf16.mxu0 0
  %1558 = vmatpush1.bf16.msra.mxu0 0
  %1559 = vmatprep.subr.bf16.mxu0 0
  %1560 = vmatpush1.bf16.msra.mxu0 0
  %1561 = vmatprep.subr.bf16.mxu0 0
  %1562 = vmatpush1.bf16.msra.mxu0 0
  %1563 = vmatprep.subr.bf16.mxu0 0
  %1564 = vmatpush1.bf16.msra.mxu0 0
  %1565 = vmatprep.mubr.bf16.mxu0 0
  %1566 = vmatmul.mubr.bf16.gmra.mrb[0].mxu0 %v1488
  %v1567 = vpop.f32.mrb[0].mxu0
  %v1568 = vadd.f32 %v1525, %v1567
  %v1569 = vpop.f32.mrb[0].mxu0
  %v1570 = vadd.f32 %v1527, %v1569
  %v1571 = vpop.f32.mrb[0].mxu0
  %v1572 = vadd.f32 %v1529, %v1571
  %v1573 = vpop.f32.mrb[0].mxu0
  %v1574 = vadd.f32 %v1531, %v1573
  %1575 = vdwg.mxu0
  %1576 = vmatprep.subr.bf16.mxu0 %v108
  %1577 = vmatpush1.bf16.msra.mxu0 %v107
  %1578 = vmatprep.subr.bf16.mxu0 %v185
  %1579 = vmatpush1.bf16.msra.mxu0 %v184
  %1580 = vmatprep.subr.bf16.mxu0 %v261
  %1581 = vmatpush1.bf16.msra.mxu0 %v260
  %1582 = vmatprep.subr.bf16.mxu0 %v337
  %1583 = vmatpush1.bf16.msra.mxu0 %v336
  %1584 = vmatprep.subr.bf16.mxu0 %v413
  %1585 = vmatpush1.bf16.msra.mxu0 %v412
  %1586 = vmatprep.subr.bf16.mxu0 %v489
  %1587 = vmatpush1.bf16.msra.mxu0 %v488
  %1588 = vmatprep.subr.bf16.mxu0 %v565
  %1589 = vmatpush1.bf16.msra.mxu0 %v564
  %1590 = vmatprep.subr.bf16.mxu0 %v641
  %1591 = vmatpush1.bf16.msra.mxu0 %v640
  %1592 = vmatprep.subr.bf16.mxu0 %v717
  %1593 = vmatpush1.bf16.msra.mxu0 %v716
  %1594 = vmatprep.subr.bf16.mxu0 %v832
  %1595 = vmatpush1.bf16.msra.mxu0 %v831
  %1596 = vmatprep.subr.bf16.mxu0 %v908
  %1597 = vmatpush1.bf16.msra.mxu0 %v907
  %1598 = vmatprep.subr.bf16.mxu0 %v983
  %1599 = vmatpush1.bf16.msra.mxu0 %v982
  %1600 = vmatprep.subr.bf16.mxu0 %v1058
  %1601 = vmatpush1.bf16.msra.mxu0 %v1057
  %1602 = vmatprep.subr.bf16.mxu0 %v1133
  %1603 = vmatpush1.bf16.msra.mxu0 %v1132
  %1604 = vmatprep.subr.bf16.mxu0 %v1208
  %1605 = vmatpush1.bf16.msra.mxu0 %v1207
  %1606 = vmatprep.subr.bf16.mxu0 %v1283
  %1607 = vmatpush1.bf16.msra.mxu0 %v1282
  %1608 = vmatprep.mubr.bf16.mxu0 %v1482
  %1609 = vmatmul.mubr.bf16.gmra.mrb[0].mxu0 %v1481
  %v1610 = vpop.f32.mrb[0].mxu0
  %v1611 = vadd.f32 0.0, %v1610
  %v1612 = vpop.f32.mrb[0].mxu0
  %v1613 = vadd.f32 0.0, %v1612
  %v1614 = vpop.f32.mrb[0].mxu0
  %v1615 = vadd.f32 0.0, %v1614
  %v1616 = vpop.f32.mrb[0].mxu0
  %v1617 = vadd.f32 0.0, %v1616
  %1618 = vdwg.mxu0
  %1619 = vmatprep.subr.bf16.mxu0 %v1358
  %1620 = vmatpush1.bf16.msra.mxu0 %v1357
  %1621 = vmatprep.subr.bf16.mxu0 %v1433
  %1622 = vmatpush1.bf16.msra.mxu0 %v1432
  %1623 = vmatprep.subr.bf16.mxu0 0
  %1624 = vmatpush1.bf16.msra.mxu0 0
  %1625 = vmatprep.subr.bf16.mxu0 0
  %1626 = vmatpush1.bf16.msra.mxu0 0
  %1627 = vmatprep.subr.bf16.mxu0 0
  %1628 = vmatpush1.bf16.msra.mxu0 0
  %1629 = vmatprep.subr.bf16.mxu0 0
  %1630 = vmatpush1.bf16.msra.mxu0 0
  %1631 = vmatprep.subr.bf16.mxu0 0
  %1632 = vmatpush1.bf16.msra.mxu0 0
  %1633 = vmatprep.subr.bf16.mxu0 0
  %1634 = vmatpush1.bf16.msra.mxu0 0
  %1635 = vmatprep.subr.bf16.mxu0 0
  %1636 = vmatpush1.bf16.msra.mxu0 0
  %1637 = vmatprep.subr.bf16.mxu0 0
  %1638 = vmatpush1.bf16.msra.mxu0 0
  %1639 = vmatprep.subr.bf16.mxu0 0
  %1640 = vmatpush1.bf16.msra.mxu0 0
  %1641 = vmatprep.subr.bf16.mxu0 0
  %1642 = vmatpush1.bf16.msra.mxu0 0
  %1643 = vmatprep.subr.bf16.mxu0 0
  %1644 = vmatpush1.bf16.msra.mxu0 0
  %1645 = vmatprep.subr.bf16.mxu0 0
  %1646 = vmatpush1.bf16.msra.mxu0 0
  %1647 = vmatprep.subr.bf16.mxu0 0
  %1648 = vmatpush1.bf16.msra.mxu0 0
  %1649 = vmatprep.subr.bf16.mxu0 0
  %1650 = vmatpush1.bf16.msra.mxu0 0
  %1651 = vmatprep.mubr.bf16.mxu0 0
  %1652 = vmatmul.mubr.bf16.gmra.mrb[0].mxu0 %v1488
  %v1653 = vpop.f32.mrb[0].mxu0
  %v1654 = vadd.f32 %v1611, %v1653
  %v1655 = vpop.f32.mrb[0].mxu0
  %v1656 = vadd.f32 %v1613, %v1655
  %v1657 = vpop.f32.mrb[0].mxu0
  %v1658 = vadd.f32 %v1615, %v1657
  %v1659 = vpop.f32.mrb[0].mxu0
  %v1660 = vadd.f32 %v1617, %v1659
  %1661 = vdwg.mxu0
  %1662 = vmatprep.subr.bf16.mxu0 %v110
  %1663 = vmatpush1.bf16.msra.mxu0 %v109
  %1664 = vmatprep.subr.bf16.mxu0 %v187
  %1665 = vmatpush1.bf16.msra.mxu0 %v186
  %1666 = vmatprep.subr.bf16.mxu0 %v263
  %1667 = vmatpush1.bf16.msra.mxu0 %v262
  %1668 = vmatprep.subr.bf16.mxu0 %v339
  %1669 = vmatpush1.bf16.msra.mxu0 %v338
  %1670 = vmatprep.subr.bf16.mxu0 %v415
  %1671 = vmatpush1.bf16.msra.mxu0 %v414
  %1672 = vmatprep.subr.bf16.mxu0 %v491
  %1673 = vmatpush1.bf16.msra.mxu0 %v490
  %1674 = vmatprep.subr.bf16.mxu0 %v567
  %1675 = vmatpush1.bf16.msra.mxu0 %v566
  %1676 = vmatprep.subr.bf16.mxu0 %v643
  %1677 = vmatpush1.bf16.msra.mxu0 %v642
  %1678 = vmatprep.subr.bf16.mxu0 %v719
  %1679 = vmatpush1.bf16.msra.mxu0 %v718
  %1680 = vmatprep.subr.bf16.mxu0 %v834
  %1681 = vmatpush1.bf16.msra.mxu0 %v833
  %1682 = vmatprep.subr.bf16.mxu0 %v910
  %1683 = vmatpush1.bf16.msra.mxu0 %v909
  %1684 = vmatprep.subr.bf16.mxu0 %v985
  %1685 = vmatpush1.bf16.msra.mxu0 %v984
  %1686 = vmatprep.subr.bf16.mxu0 %v1060
  %1687 = vmatpush1.bf16.msra.mxu0 %v1059
  %1688 = vmatprep.subr.bf16.mxu0 %v1135
  %1689 = vmatpush1.bf16.msra.mxu0 %v1134
  %1690 = vmatprep.subr.bf16.mxu0 %v1210
  %1691 = vmatpush1.bf16.msra.mxu0 %v1209
  %1692 = vmatprep.subr.bf16.mxu0 %v1285
  %1693 = vmatpush1.bf16.msra.mxu0 %v1284
  %1694 = vmatprep.mubr.bf16.mxu0 %v1482
  %1695 = vmatmul.mubr.bf16.gmra.mrb[0].mxu0 %v1481
  %v1696 = vpop.f32.mrb[0].mxu0
  %v1697 = vadd.f32 0.0, %v1696
  %v1698 = vpop.f32.mrb[0].mxu0
  %v1699 = vadd.f32 0.0, %v1698
  %v1700 = vpop.f32.mrb[0].mxu0
  %v1701 = vadd.f32 0.0, %v1700
  %v1702 = vpop.f32.mrb[0].mxu0
  %v1703 = vadd.f32 0.0, %v1702
  %1704 = vdwg.mxu0
  %1705 = vmatprep.subr.bf16.mxu0 %v1360
  %1706 = vmatpush1.bf16.msra.mxu0 %v1359
  %1707 = vmatprep.subr.bf16.mxu0 %v1435
  %1708 = vmatpush1.bf16.msra.mxu0 %v1434
  %1709 = vmatprep.subr.bf16.mxu0 0
  %1710 = vmatpush1.bf16.msra.mxu0 0
  %1711 = vmatprep.subr.bf16.mxu0 0
  %1712 = vmatpush1.bf16.msra.mxu0 0
  %1713 = vmatprep.subr.bf16.mxu0 0
  %1714 = vmatpush1.bf16.msra.mxu0 0
  %1715 = vmatprep.subr.bf16.mxu0 0
  %1716 = vmatpush1.bf16.msra.mxu0 0
  %1717 = vmatprep.subr.bf16.mxu0 0
  %1718 = vmatpush1.bf16.msra.mxu0 0
  %1719 = vmatprep.subr.bf16.mxu0 0
  %1720 = vmatpush1.bf16.msra.mxu0 0
  %1721 = vmatprep.subr.bf16.mxu0 0
  %1722 = vmatpush1.bf16.msra.mxu0 0
  %1723 = vmatprep.subr.bf16.mxu0 0
  %1724 = vmatpush1.bf16.msra.mxu0 0
  %1725 = vmatprep.subr.bf16.mxu0 0
  %1726 = vmatpush1.bf16.msra.mxu0 0
  %1727 = vmatprep.subr.bf16.mxu0 0
  %1728 = vmatpush1.bf16.msra.mxu0 0
  %1729 = vmatprep.subr.bf16.mxu0 0
  %1730 = vmatpush1.bf16.msra.mxu0 0
  %1731 = vmatprep.subr.bf16.mxu0 0
  %1732 = vmatpush1.bf16.msra.mxu0 0
  %1733 = vmatprep.subr.bf16.mxu0 0
  %1734 = vmatpush1.bf16.msra.mxu0 0
  %1735 = vmatprep.subr.bf16.mxu0 0
  %1736 = vmatpush1.bf16.msra.mxu0 0
  %1737 = vmatprep.mubr.bf16.mxu0 0
  %1738 = vmatmul.mubr.bf16.gmra.mrb[0].mxu0 %v1488
  %v1739 = vpop.f32.mrb[0].mxu0
  %v1740 = vadd.f32 %v1697, %v1739
  %v1741 = vpop.f32.mrb[0].mxu0
  %v1742 = vadd.f32 %v1699, %v1741
  %v1743 = vpop.f32.mrb[0].mxu0
  %v1744 = vadd.f32 %v1701, %v1743
  %v1745 = vpop.f32.mrb[0].mxu0
  %v1746 = vadd.f32 %v1703, %v1745
  %1747 = vdwg.mxu0
  %1748 = vmatprep.subr.bf16.mxu0 %v112
  %1749 = vmatpush1.bf16.msra.mxu0 %v111
  %1750 = vmatprep.subr.bf16.mxu0 %v189
  %1751 = vmatpush1.bf16.msra.mxu0 %v188
  %1752 = vmatprep.subr.bf16.mxu0 %v265
  %1753 = vmatpush1.bf16.msra.mxu0 %v264
  %1754 = vmatprep.subr.bf16.mxu0 %v341
  %1755 = vmatpush1.bf16.msra.mxu0 %v340
  %1756 = vmatprep.subr.bf16.mxu0 %v417
  %1757 = vmatpush1.bf16.msra.mxu0 %v416
  %1758 = vmatprep.subr.bf16.mxu0 %v493
  %1759 = vmatpush1.bf16.msra.mxu0 %v492
  %1760 = vmatprep.subr.bf16.mxu0 %v569
  %1761 = vmatpush1.bf16.msra.mxu0 %v568
  %1762 = vmatprep.subr.bf16.mxu0 %v645
  %1763 = vmatpush1.bf16.msra.mxu0 %v644
  %1764 = vmatprep.subr.bf16.mxu0 %v721
  %1765 = vmatpush1.bf16.msra.mxu0 %v720
  %1766 = vmatprep.subr.bf16.mxu0 %v836
  %1767 = vmatpush1.bf16.msra.mxu0 %v835
  %1768 = vmatprep.subr.bf16.mxu0 %v912
  %1769 = vmatpush1.bf16.msra.mxu0 %v911
  %1770 = vmatprep.subr.bf16.mxu0 %v987
  %1771 = vmatpush1.bf16.msra.mxu0 %v986
  %1772 = vmatprep.subr.bf16.mxu0 %v1062
  %1773 = vmatpush1.bf16.msra.mxu0 %v1061
  %1774 = vmatprep.subr.bf16.mxu0 %v1137
  %1775 = vmatpush1.bf16.msra.mxu0 %v1136
  %1776 = vmatprep.subr.bf16.mxu0 %v1212
  %1777 = vmatpush1.bf16.msra.mxu0 %v1211
  %1778 = vmatprep.subr.bf16.mxu0 %v1287
  %1779 = vmatpush1.bf16.msra.mxu0 %v1286
  %1780 = vmatprep.mubr.bf16.mxu0 %v1482
  %1781 = vmatmul.mubr.bf16.gmra.mrb[0].mxu0 %v1481
  %v1782 = vpop.f32.mrb[0].mxu0
  %v1783 = vadd.f32 0.0, %v1782
  %v1784 = vpop.f32.mrb[0].mxu0
  %v1785 = vadd.f32 0.0, %v1784
  %v1786 = vpop.f32.mrb[0].mxu0
  %v1787 = vadd.f32 0.0, %v1786
  %v1788 = vpop.f32.mrb[0].mxu0
  %v1789 = vadd.f32 0.0, %v1788
  %1790 = vdwg.mxu0
  %1791 = vmatprep.subr.bf16.mxu0 %v1362
  %1792 = vmatpush1.bf16.msra.mxu0 %v1361
  %1793 = vmatprep.subr.bf16.mxu0 %v1437
  %1794 = vmatpush1.bf16.msra.mxu0 %v1436
  %1795 = vmatprep.subr.bf16.mxu0 0
  %1796 = vmatpush1.bf16.msra.mxu0 0
  %1797 = vmatprep.subr.bf16.mxu0 0
  %1798 = vmatpush1.bf16.msra.mxu0 0
  %1799 = vmatprep.subr.bf16.mxu0 0
  %1800 = vmatpush1.bf16.msra.mxu0 0
  %1801 = vmatprep.subr.bf16.mxu0 0
  %1802 = vmatpush1.bf16.msra.mxu0 0
  %1803 = vmatprep.subr.bf16.mxu0 0
  %1804 = vmatpush1.bf16.msra.mxu0 0
  %1805 = vmatprep.subr.bf16.mxu0 0
  %1806 = vmatpush1.bf16.msra.mxu0 0
  %1807 = vmatprep.subr.bf16.mxu0 0
  %1808 = vmatpush1.bf16.msra.mxu0 0
  %1809 = vmatprep.subr.bf16.mxu0 0
  %1810 = vmatpush1.bf16.msra.mxu0 0
  %1811 = vmatprep.subr.bf16.mxu0 0
  %1812 = vmatpush1.bf16.msra.mxu0 0
  %1813 = vmatprep.subr.bf16.mxu0 0
  %1814 = vmatpush1.bf16.msra.mxu0 0
  %1815 = vmatprep.subr.bf16.mxu0 0
  %1816 = vmatpush1.bf16.msra.mxu0 0
  %1817 = vmatprep.subr.bf16.mxu0 0
  %1818 = vmatpush1.bf16.msra.mxu0 0
  %1819 = vmatprep.subr.bf16.mxu0 0
  %1820 = vmatpush1.bf16.msra.mxu0 0
  %1821 = vmatprep.subr.bf16.mxu0 0
  %1822 = vmatpush1.bf16.msra.mxu0 0
  %1823 = vmatprep.mubr.bf16.mxu0 0
  %1824 = vmatmul.mubr.bf16.gmra.mrb[0].mxu0 %v1488
  %v1825 = vpop.f32.mrb[0].mxu0
  %v1826 = vadd.f32 %v1783, %v1825
  %v1827 = vpop.f32.mrb[0].mxu0
  %v1828 = vadd.f32 %v1785, %v1827
  %v1829 = vpop.f32.mrb[0].mxu0
  %v1830 = vadd.f32 %v1787, %v1829
  %v1831 = vpop.f32.mrb[0].mxu0
  %v1832 = vadd.f32 %v1789, %v1831
  %1833 = vdwg.mxu0
  %1834 = vmatprep.subr.bf16.mxu0 %v114
  %1835 = vmatpush1.bf16.msra.mxu0 %v113
  %1836 = vmatprep.subr.bf16.mxu0 %v191
  %1837 = vmatpush1.bf16.msra.mxu0 %v190
  %1838 = vmatprep.subr.bf16.mxu0 %v267
  %1839 = vmatpush1.bf16.msra.mxu0 %v266
  %1840 = vmatprep.subr.bf16.mxu0 %v343
  %1841 = vmatpush1.bf16.msra.mxu0 %v342
  %1842 = vmatprep.subr.bf16.mxu0 %v419
  %1843 = vmatpush1.bf16.msra.mxu0 %v418
  %1844 = vmatprep.subr.bf16.mxu0 %v495
  %1845 = vmatpush1.bf16.msra.mxu0 %v494
  %1846 = vmatprep.subr.bf16.mxu0 %v571
  %1847 = vmatpush1.bf16.msra.mxu0 %v570
  %1848 = vmatprep.subr.bf16.mxu0 %v647
  %1849 = vmatpush1.bf16.msra.mxu0 %v646
  %1850 = vmatprep.subr.bf16.mxu0 %v723
  %1851 = vmatpush1.bf16.msra.mxu0 %v722
  %1852 = vmatprep.subr.bf16.mxu0 %v838
  %1853 = vmatpush1.bf16.msra.mxu0 %v837
  %1854 = vmatprep.subr.bf16.mxu0 %v914
  %1855 = vmatpush1.bf16.msra.mxu0 %v913
  %1856 = vmatprep.subr.bf16.mxu0 %v989
  %1857 = vmatpush1.bf16.msra.mxu0 %v988
  %1858 = vmatprep.subr.bf16.mxu0 %v1064
  %1859 = vmatpush1.bf16.msra.mxu0 %v1063
  %1860 = vmatprep.subr.bf16.mxu0 %v1139
  %1861 = vmatpush1.bf16.msra.mxu0 %v1138
  %1862 = vmatprep.subr.bf16.mxu0 %v1214
  %1863 = vmatpush1.bf16.msra.mxu0 %v1213
  %1864 = vmatprep.subr.bf16.mxu0 %v1289
  %1865 = vmatpush1.bf16.msra.mxu0 %v1288
  %1866 = vmatprep.mubr.bf16.mxu0 %v1482
  %1867 = vmatmul.mubr.bf16.gmra.mrb[0].mxu0 %v1481
  %v1868 = vpop.f32.mrb[0].mxu0
  %v1869 = vadd.f32 0.0, %v1868
  %v1870 = vpop.f32.mrb[0].mxu0
  %v1871 = vadd.f32 0.0, %v1870
  %v1872 = vpop.f32.mrb[0].mxu0
  %v1873 = vadd.f32 0.0, %v1872
  %v1874 = vpop.f32.mrb[0].mxu0
  %v1875 = vadd.f32 0.0, %v1874
  %1876 = vdwg.mxu0
  %1877 = vmatprep.subr.bf16.mxu0 %v1364
  %1878 = vmatpush1.bf16.msra.mxu0 %v1363
  %1879 = vmatprep.subr.bf16.mxu0 %v1439
  %1880 = vmatpush1.bf16.msra.mxu0 %v1438
  %1881 = vmatprep.subr.bf16.mxu0 0
  %1882 = vmatpush1.bf16.msra.mxu0 0
  %1883 = vmatprep.subr.bf16.mxu0 0
  %1884 = vmatpush1.bf16.msra.mxu0 0
  %1885 = vmatprep.subr.bf16.mxu0 0
  %1886 = vmatpush1.bf16.msra.mxu0 0
  %1887 = vmatprep.subr.bf16.mxu0 0
  %1888 = vmatpush1.bf16.msra.mxu0 0
  %1889 = vmatprep.subr.bf16.mxu0 0
  %1890 = vmatpush1.bf16.msra.mxu0 0
  %1891 = vmatprep.subr.bf16.mxu0 0
  %1892 = vmatpush1.bf16.msra.mxu0 0
  %1893 = vmatprep.subr.bf16.mxu0 0
  %1894 = vmatpush1.bf16.msra.mxu0 0
  %1895 = vmatprep.subr.bf16.mxu0 0
  %1896 = vmatpush1.bf16.msra.mxu0 0
  %1897 = vmatprep.subr.bf16.mxu0 0
  %1898 = vmatpush1.bf16.msra.mxu0 0
  %1899 = vmatprep.subr.bf16.mxu0 0
  %1900 = vmatpush1.bf16.msra.mxu0 0
  %1901 = vmatprep.subr.bf16.mxu0 0
  %1902 = vmatpush1.bf16.msra.mxu0 0
  %1903 = vmatprep.subr.bf16.mxu0 0
  %1904 = vmatpush1.bf16.msra.mxu0 0
  %1905 = vmatprep.subr.bf16.mxu0 0
  %1906 = vmatpush1.bf16.msra.mxu0 0
  %1907 = vmatprep.subr.bf16.mxu0 0
  %1908 = vmatpush1.bf16.msra.mxu0 0
  %1909 = vmatprep.mubr.bf16.mxu0 0
  %1910 = vmatmul.mubr.bf16.gmra.mrb[0].mxu0 %v1488
  %v1911 = vpop.f32.mrb[0].mxu0
  %v1912 = vadd.f32 %v1869, %v1911
  %v1913 = vpop.f32.mrb[0].mxu0
  %v1914 = vadd.f32 %v1871, %v1913
  %v1915 = vpop.f32.mrb[0].mxu0
  %v1916 = vadd.f32 %v1873, %v1915
  %v1917 = vpop.f32.mrb[0].mxu0
  %v1918 = vadd.f32 %v1875, %v1917
  %1919 = vdwg.mxu0
  %1920 = vmatprep.subr.bf16.mxu0 %v116
  %1921 = vmatpush1.bf16.msra.mxu0 %v115
  %1922 = vmatprep.subr.bf16.mxu0 %v193
  %1923 = vmatpush1.bf16.msra.mxu0 %v192
  %1924 = vmatprep.subr.bf16.mxu0 %v269
  %1925 = vmatpush1.bf16.msra.mxu0 %v268
  %1926 = vmatprep.subr.bf16.mxu0 %v345
  %1927 = vmatpush1.bf16.msra.mxu0 %v344
  %1928 = vmatprep.subr.bf16.mxu0 %v421
  %1929 = vmatpush1.bf16.msra.mxu0 %v420
  %1930 = vmatprep.subr.bf16.mxu0 %v497
  %1931 = vmatpush1.bf16.msra.mxu0 %v496
  %1932 = vmatprep.subr.bf16.mxu0 %v573
  %1933 = vmatpush1.bf16.msra.mxu0 %v572
  %1934 = vmatprep.subr.bf16.mxu0 %v649
  %1935 = vmatpush1.bf16.msra.mxu0 %v648
  %1936 = vmatprep.subr.bf16.mxu0 %v725
  %1937 = vmatpush1.bf16.msra.mxu0 %v724
  %1938 = vmatprep.subr.bf16.mxu0 %v840
  %1939 = vmatpush1.bf16.msra.mxu0 %v839
  %1940 = vmatprep.subr.bf16.mxu0 %v916
  %1941 = vmatpush1.bf16.msra.mxu0 %v915
  %1942 = vmatprep.subr.bf16.mxu0 %v991
  %1943 = vmatpush1.bf16.msra.mxu0 %v990
  %1944 = vmatprep.subr.bf16.mxu0 %v1066
  %1945 = vmatpush1.bf16.msra.mxu0 %v1065
  %1946 = vmatprep.subr.bf16.mxu0 %v1141
  %1947 = vmatpush1.bf16.msra.mxu0 %v1140
  %1948 = vmatprep.subr.bf16.mxu0 %v1216
  %1949 = vmatpush1.bf16.msra.mxu0 %v1215
  %1950 = vmatprep.subr.bf16.mxu0 %v1291
  %1951 = vmatpush1.bf16.msra.mxu0 %v1290
  %1952 = vmatprep.mubr.bf16.mxu0 %v1482
  %1953 = vmatmul.mubr.bf16.gmra.mrb[0].mxu0 %v1481
  %v1954 = vpop.f32.mrb[0].mxu0
  %v1955 = vadd.f32 0.0, %v1954
  %v1956 = vpop.f32.mrb[0].mxu0
  %v1957 = vadd.f32 0.0, %v1956
  %v1958 = vpop.f32.mrb[0].mxu0
  %v1959 = vadd.f32 0.0, %v1958
  %v1960 = vpop.f32.mrb[0].mxu0
  %v1961 = vadd.f32 0.0, %v1960
  %1962 = vdwg.mxu0
  %1963 = vmatprep.subr.bf16.mxu0 %v1366
  %1964 = vmatpush1.bf16.msra.mxu0 %v1365
  %1965 = vmatprep.subr.bf16.mxu0 %v1441
  %1966 = vmatpush1.bf16.msra.mxu0 %v1440
  %1967 = vmatprep.subr.bf16.mxu0 0
  %1968 = vmatpush1.bf16.msra.mxu0 0
  %1969 = vmatprep.subr.bf16.mxu0 0
  %1970 = vmatpush1.bf16.msra.mxu0 0
  %1971 = vmatprep.subr.bf16.mxu0 0
  %1972 = vmatpush1.bf16.msra.mxu0 0
  %1973 = vmatprep.subr.bf16.mxu0 0
  %1974 = vmatpush1.bf16.msra.mxu0 0
  %1975 = vmatprep.subr.bf16.mxu0 0
  %1976 = vmatpush1.bf16.msra.mxu0 0
  %1977 = vmatprep.subr.bf16.mxu0 0
  %1978 = vmatpush1.bf16.msra.mxu0 0
  %1979 = vmatprep.subr.bf16.mxu0 0
  %1980 = vmatpush1.bf16.msra.mxu0 0
  %1981 = vmatprep.subr.bf16.mxu0 0
  %1982 = vmatpush1.bf16.msra.mxu0 0
  %1983 = vmatprep.subr.bf16.mxu0 0
  %1984 = vmatpush1.bf16.msra.mxu0 0
  %1985 = vmatprep.subr.bf16.mxu0 0
  %1986 = vmatpush1.bf16.msra.mxu0 0
  %1987 = vmatprep.subr.bf16.mxu0 0
  %1988 = vmatpush1.bf16.msra.mxu0 0
  %1989 = vmatprep.subr.bf16.mxu0 0
  %1990 = vmatpush1.bf16.msra.mxu0 0
  %1991 = vmatprep.subr.bf16.mxu0 0
  %1992 = vmatpush1.bf16.msra.mxu0 0
  %1993 = vmatprep.subr.bf16.mxu0 0
  %1994 = vmatpush1.bf16.msra.mxu0 0
  %1995 = vmatprep.mubr.bf16.mxu0 0
  %1996 = vmatmul.mubr.bf16.gmra.mrb[0].mxu0 %v1488
  %v1997 = vpop.f32.mrb[0].mxu0
  %v1998 = vadd.f32 %v1955, %v1997
  %v1999 = vpop.f32.mrb[0].mxu0
  %v2000 = vadd.f32 %v1957, %v1999
  %v2001 = vpop.f32.mrb[0].mxu0
  %v2002 = vadd.f32 %v1959, %v2001
  %v2003 = vpop.f32.mrb[0].mxu0
  %v2004 = vadd.f32 %v1961, %v2003
  %2005 = vdwg.mxu0
  %2006 = vmatprep.subr.bf16.mxu0 %v118
  %2007 = vmatpush1.bf16.msra.mxu0 %v117
  %2008 = vmatprep.subr.bf16.mxu0 %v195
  %2009 = vmatpush1.bf16.msra.mxu0 %v194
  %2010 = vmatprep.subr.bf16.mxu0 %v271
  %2011 = vmatpush1.bf16.msra.mxu0 %v270
  %2012 = vmatprep.subr.bf16.mxu0 %v347
  %2013 = vmatpush1.bf16.msra.mxu0 %v346
  %2014 = vmatprep.subr.bf16.mxu0 %v423
  %2015 = vmatpush1.bf16.msra.mxu0 %v422
  %2016 = vmatprep.subr.bf16.mxu0 %v499
  %2017 = vmatpush1.bf16.msra.mxu0 %v498
  %2018 = vmatprep.subr.bf16.mxu0 %v575
  %2019 = vmatpush1.bf16.msra.mxu0 %v574
  %2020 = vmatprep.subr.bf16.mxu0 %v651
  %2021 = vmatpush1.bf16.msra.mxu0 %v650
  %2022 = vmatprep.subr.bf16.mxu0 %v727
  %2023 = vmatpush1.bf16.msra.mxu0 %v726
  %2024 = vmatprep.subr.bf16.mxu0 %v842
  %2025 = vmatpush1.bf16.msra.mxu0 %v841
  %2026 = vmatprep.subr.bf16.mxu0 %v918
  %2027 = vmatpush1.bf16.msra.mxu0 %v917
  %2028 = vmatprep.subr.bf16.mxu0 %v993
  %2029 = vmatpush1.bf16.msra.mxu0 %v992
  %2030 = vmatprep.subr.bf16.mxu0 %v1068
  %2031 = vmatpush1.bf16.msra.mxu0 %v1067
  %2032 = vmatprep.subr.bf16.mxu0 %v1143
  %2033 = vmatpush1.bf16.msra.mxu0 %v1142
  %2034 = vmatprep.subr.bf16.mxu0 %v1218
  %2035 = vmatpush1.bf16.msra.mxu0 %v1217
  %2036 = vmatprep.subr.bf16.mxu0 %v1293
  %2037 = vmatpush1.bf16.msra.mxu0 %v1292
  %2038 = vmatprep.mubr.bf16.mxu0 %v1482
  %2039 = vmatmul.mubr.bf16.gmra.mrb[0].mxu0 %v1481
  %v2040 = vpop.f32.mrb[0].mxu0
  %v2041 = vadd.f32 0.0, %v2040
  %v2042 = vpop.f32.mrb[0].mxu0
  %v2043 = vadd.f32 0.0, %v2042
  %v2044 = vpop.f32.mrb[0].mxu0
  %v2045 = vadd.f32 0.0, %v2044
  %v2046 = vpop.f32.mrb[0].mxu0
  %v2047 = vadd.f32 0.0, %v2046
  %2048 = vdwg.mxu0
  %2049 = vmatprep.subr.bf16.mxu0 %v1368
  %2050 = vmatpush1.bf16.msra.mxu0 %v1367
  %2051 = vmatprep.subr.bf16.mxu0 %v1443
  %2052 = vmatpush1.bf16.msra.mxu0 %v1442
  %2053 = vmatprep.subr.bf16.mxu0 0
  %2054 = vmatpush1.bf16.msra.mxu0 0
  %2055 = vmatprep.subr.bf16.mxu0 0
  %2056 = vmatpush1.bf16.msra.mxu0 0
  %2057 = vmatprep.subr.bf16.mxu0 0
  %2058 = vmatpush1.bf16.msra.mxu0 0
  %2059 = vmatprep.subr.bf16.mxu0 0
  %2060 = vmatpush1.bf16.msra.mxu0 0
  %2061 = vmatprep.subr.bf16.mxu0 0
  %2062 = vmatpush1.bf16.msra.mxu0 0
  %2063 = vmatprep.subr.bf16.mxu0 0
  %2064 = vmatpush1.bf16.msra.mxu0 0
  %2065 = vmatprep.subr.bf16.mxu0 0
  %2066 = vmatpush1.bf16.msra.mxu0 0
  %2067 = vmatprep.subr.bf16.mxu0 0
  %2068 = vmatpush1.bf16.msra.mxu0 0
  %2069 = vmatprep.subr.bf16.mxu0 0
  %2070 = vmatpush1.bf16.msra.mxu0 0
  %2071 = vmatprep.subr.bf16.mxu0 0
  %2072 = vmatpush1.bf16.msra.mxu0 0
  %2073 = vmatprep.subr.bf16.mxu0 0
  %2074 = vmatpush1.bf16.msra.mxu0 0
  %2075 = vmatprep.subr.bf16.mxu0 0
  %2076 = vmatpush1.bf16.msra.mxu0 0
  %2077 = vmatprep.subr.bf16.mxu0 0
  %2078 = vmatpush1.bf16.msra.mxu0 0
  %2079 = vmatprep.subr.bf16.mxu0 0
  %2080 = vmatpush1.bf16.msra.mxu0 0
  %2081 = vmatprep.mubr.bf16.mxu0 0
  %2082 = vmatmul.mubr.bf16.gmra.mrb[0].mxu0 %v1488
  %v2083 = vpop.f32.mrb[0].mxu0
  %v2084 = vadd.f32 %v2041, %v2083
  %v2085 = vpop.f32.mrb[0].mxu0
  %v2086 = vadd.f32 %v2043, %v2085
  %v2087 = vpop.f32.mrb[0].mxu0
  %v2088 = vadd.f32 %v2045, %v2087
  %v2089 = vpop.f32.mrb[0].mxu0
  %v2090 = vadd.f32 %v2047, %v2089
  %2091 = vdwg.mxu0
  %2092 = vmatprep.subr.bf16.mxu0 %v120
  %2093 = vmatpush1.bf16.msra.mxu0 %v119
  %2094 = vmatprep.subr.bf16.mxu0 %v197
  %2095 = vmatpush1.bf16.msra.mxu0 %v196
  %2096 = vmatprep.subr.bf16.mxu0 %v273
  %2097 = vmatpush1.bf16.msra.mxu0 %v272
  %2098 = vmatprep.subr.bf16.mxu0 %v349
  %2099 = vmatpush1.bf16.msra.mxu0 %v348
  %2100 = vmatprep.subr.bf16.mxu0 %v425
  %2101 = vmatpush1.bf16.msra.mxu0 %v424
  %2102 = vmatprep.subr.bf16.mxu0 %v501
  %2103 = vmatpush1.bf16.msra.mxu0 %v500
  %2104 = vmatprep.subr.bf16.mxu0 %v577
  %2105 = vmatpush1.bf16.msra.mxu0 %v576
  %2106 = vmatprep.subr.bf16.mxu0 %v653
  %2107 = vmatpush1.bf16.msra.mxu0 %v652
  %2108 = vmatprep.subr.bf16.mxu0 %v729
  %2109 = vmatpush1.bf16.msra.mxu0 %v728
  %2110 = vmatprep.subr.bf16.mxu0 %v844
  %2111 = vmatpush1.bf16.msra.mxu0 %v843
  %2112 = vmatprep.subr.bf16.mxu0 %v920
  %2113 = vmatpush1.bf16.msra.mxu0 %v919
  %2114 = vmatprep.subr.bf16.mxu0 %v995
  %2115 = vmatpush1.bf16.msra.mxu0 %v994
  %2116 = vmatprep.subr.bf16.mxu0 %v1070
  %2117 = vmatpush1.bf16.msra.mxu0 %v1069
  %2118 = vmatprep.subr.bf16.mxu0 %v1145
  %2119 = vmatpush1.bf16.msra.mxu0 %v1144
  %2120 = vmatprep.subr.bf16.mxu0 %v1220
  %2121 = vmatpush1.bf16.msra.mxu0 %v1219
  %2122 = vmatprep.subr.bf16.mxu0 %v1295
  %2123 = vmatpush1.bf16.msra.mxu0 %v1294
  %2124 = vmatprep.mubr.bf16.mxu0 %v1482
  %2125 = vmatmul.mubr.bf16.gmra.mrb[0].mxu0 %v1481
  %v2126 = vpop.f32.mrb[0].mxu0
  %v2127 = vadd.f32 0.0, %v2126
  %v2128 = vpop.f32.mrb[0].mxu0
  %v2129 = vadd.f32 0.0, %v2128
  %v2130 = vpop.f32.mrb[0].mxu0
  %v2131 = vadd.f32 0.0, %v2130
  %v2132 = vpop.f32.mrb[0].mxu0
  %v2133 = vadd.f32 0.0, %v2132
  %2134 = vdwg.mxu0
  %2135 = vmatprep.subr.bf16.mxu0 %v1370
  %2136 = vmatpush1.bf16.msra.mxu0 %v1369
  %2137 = vmatprep.subr.bf16.mxu0 %v1445
  %2138 = vmatpush1.bf16.msra.mxu0 %v1444
  %2139 = vmatprep.subr.bf16.mxu0 0
  %2140 = vmatpush1.bf16.msra.mxu0 0
  %2141 = vmatprep.subr.bf16.mxu0 0
  %2142 = vmatpush1.bf16.msra.mxu0 0
  %2143 = vmatprep.subr.bf16.mxu0 0
  %2144 = vmatpush1.bf16.msra.mxu0 0
  %2145 = vmatprep.subr.bf16.mxu0 0
  %2146 = vmatpush1.bf16.msra.mxu0 0
  %2147 = vmatprep.subr.bf16.mxu0 0
  %2148 = vmatpush1.bf16.msra.mxu0 0
  %2149 = vmatprep.subr.bf16.mxu0 0
  %2150 = vmatpush1.bf16.msra.mxu0 0
  %2151 = vmatprep.subr.bf16.mxu0 0
  %2152 = vmatpush1.bf16.msra.mxu0 0
  %2153 = vmatprep.subr.bf16.mxu0 0
  %2154 = vmatpush1.bf16.msra.mxu0 0
  %2155 = vmatprep.subr.bf16.mxu0 0
  %2156 = vmatpush1.bf16.msra.mxu0 0
  %2157 = vmatprep.subr.bf16.mxu0 0
  %2158 = vmatpush1.bf16.msra.mxu0 0
  %2159 = vmatprep.subr.bf16.mxu0 0
  %2160 = vmatpush1.bf16.msra.mxu0 0
  %2161 = vmatprep.subr.bf16.mxu0 0
  %2162 = vmatpush1.bf16.msra.mxu0 0
  %2163 = vmatprep.subr.bf16.mxu0 0
  %2164 = vmatpush1.bf16.msra.mxu0 0
  %2165 = vmatprep.subr.bf16.mxu0 0
  %2166 = vmatpush1.bf16.msra.mxu0 0
  %2167 = vmatprep.mubr.bf16.mxu0 0
  %2168 = vmatmul.mubr.bf16.gmra.mrb[0].mxu0 %v1488
  %v2169 = vpop.f32.mrb[0].mxu0
  %v2170 = vadd.f32 %v2127, %v2169
  %v2171 = vpop.f32.mrb[0].mxu0
  %v2172 = vadd.f32 %v2129, %v2171
  %v2173 = vpop.f32.mrb[0].mxu0
  %v2174 = vadd.f32 %v2131, %v2173
  %v2175 = vpop.f32.mrb[0].mxu0
  %v2176 = vadd.f32 %v2133, %v2175
  %2177 = vdwg.mxu0
  %2178 = vmatprep.subr.bf16.mxu0 %v122
  %2179 = vmatpush1.bf16.msra.mxu0 %v121
  %2180 = vmatprep.subr.bf16.mxu0 %v199
  %2181 = vmatpush1.bf16.msra.mxu0 %v198
  %2182 = vmatprep.subr.bf16.mxu0 %v275
  %2183 = vmatpush1.bf16.msra.mxu0 %v274
  %2184 = vmatprep.subr.bf16.mxu0 %v351
  %2185 = vmatpush1.bf16.msra.mxu0 %v350
  %2186 = vmatprep.subr.bf16.mxu0 %v427
  %2187 = vmatpush1.bf16.msra.mxu0 %v426
  %2188 = vmatprep.subr.bf16.mxu0 %v503
  %2189 = vmatpush1.bf16.msra.mxu0 %v502
  %2190 = vmatprep.subr.bf16.mxu0 %v579
  %2191 = vmatpush1.bf16.msra.mxu0 %v578
  %2192 = vmatprep.subr.bf16.mxu0 %v655
  %2193 = vmatpush1.bf16.msra.mxu0 %v654
  %2194 = vmatprep.subr.bf16.mxu0 %v731
  %2195 = vmatpush1.bf16.msra.mxu0 %v730
  %2196 = vmatprep.subr.bf16.mxu0 %v846
  %2197 = vmatpush1.bf16.msra.mxu0 %v845
  %2198 = vmatprep.subr.bf16.mxu0 %v922
  %2199 = vmatpush1.bf16.msra.mxu0 %v921
  %2200 = vmatprep.subr.bf16.mxu0 %v997
  %2201 = vmatpush1.bf16.msra.mxu0 %v996
  %2202 = vmatprep.subr.bf16.mxu0 %v1072
  %2203 = vmatpush1.bf16.msra.mxu0 %v1071
  %2204 = vmatprep.subr.bf16.mxu0 %v1147
  %2205 = vmatpush1.bf16.msra.mxu0 %v1146
  %2206 = vmatprep.subr.bf16.mxu0 %v1222
  %2207 = vmatpush1.bf16.msra.mxu0 %v1221
  %2208 = vmatprep.subr.bf16.mxu0 %v1297
  %2209 = vmatpush1.bf16.msra.mxu0 %v1296
  %2210 = vmatprep.mubr.bf16.mxu0 %v1482
  %2211 = vmatmul.mubr.bf16.gmra.mrb[0].mxu0 %v1481
  %v2212 = vpop.f32.mrb[0].mxu0
  %v2213 = vadd.f32 0.0, %v2212
  %v2214 = vpop.f32.mrb[0].mxu0
  %v2215 = vadd.f32 0.0, %v2214
  %v2216 = vpop.f32.mrb[0].mxu0
  %v2217 = vadd.f32 0.0, %v2216
  %v2218 = vpop.f32.mrb[0].mxu0
  %v2219 = vadd.f32 0.0, %v2218
  %2220 = vdwg.mxu0
  %2221 = vmatprep.subr.bf16.mxu0 %v1372
  %2222 = vmatpush1.bf16.msra.mxu0 %v1371
  %2223 = vmatprep.subr.bf16.mxu0 %v1447
  %2224 = vmatpush1.bf16.msra.mxu0 %v1446
  %2225 = vmatprep.subr.bf16.mxu0 0
  %2226 = vmatpush1.bf16.msra.mxu0 0
  %2227 = vmatprep.subr.bf16.mxu0 0
  %2228 = vmatpush1.bf16.msra.mxu0 0
  %2229 = vmatprep.subr.bf16.mxu0 0
  %2230 = vmatpush1.bf16.msra.mxu0 0
  %2231 = vmatprep.subr.bf16.mxu0 0
  %2232 = vmatpush1.bf16.msra.mxu0 0
  %2233 = vmatprep.subr.bf16.mxu0 0
  %2234 = vmatpush1.bf16.msra.mxu0 0
  %2235 = vmatprep.subr.bf16.mxu0 0
  %2236 = vmatpush1.bf16.msra.mxu0 0
  %2237 = vmatprep.subr.bf16.mxu0 0
  %2238 = vmatpush1.bf16.msra.mxu0 0
  %2239 = vmatprep.subr.bf16.mxu0 0
  %2240 = vmatpush1.bf16.msra.mxu0 0
  %2241 = vmatprep.subr.bf16.mxu0 0
  %2242 = vmatpush1.bf16.msra.mxu0 0
  %2243 = vmatprep.subr.bf16.mxu0 0
  %2244 = vmatpush1.bf16.msra.mxu0 0
  %2245 = vmatprep.subr.bf16.mxu0 0
  %2246 = vmatpush1.bf16.msra.mxu0 0
  %2247 = vmatprep.subr.bf16.mxu0 0
  %2248 = vmatpush1.bf16.msra.mxu0 0
  %2249 = vmatprep.subr.bf16.mxu0 0
  %2250 = vmatpush1.bf16.msra.mxu0 0
  %2251 = vmatprep.subr.bf16.mxu0 0
  %2252 = vmatpush1.bf16.msra.mxu0 0
  %2253 = vmatprep.mubr.bf16.mxu0 0
  %2254 = vmatmul.mubr.bf16.gmra.mrb[0].mxu0 %v1488
  %v2255 = vpop.f32.mrb[0].mxu0
  %v2256 = vadd.f32 %v2213, %v2255
  %v2257 = vpop.f32.mrb[0].mxu0
  %v2258 = vadd.f32 %v2215, %v2257
  %v2259 = vpop.f32.mrb[0].mxu0
  %v2260 = vadd.f32 %v2217, %v2259
  %v2261 = vpop.f32.mrb[0].mxu0
  %v2262 = vadd.f32 %v2219, %v2261
  %2263 = vdwg.mxu0
  %2264 = vmatprep.subr.bf16.mxu0 0
  %2265 = vmatpush1.bf16.msra.mxu0 %v123
  %2266 = vmatprep.subr.bf16.mxu0 0
  %2267 = vmatpush1.bf16.msra.mxu0 %v180
  %2268 = vmatprep.subr.bf16.mxu0 0
  %2269 = vmatpush1.bf16.msra.mxu0 %v256
  %2270 = vmatprep.subr.bf16.mxu0 0
  %2271 = vmatpush1.bf16.msra.mxu0 %v332
  %2272 = vmatprep.subr.bf16.mxu0 0
  %2273 = vmatpush1.bf16.msra.mxu0 %v408
  %2274 = vmatprep.subr.bf16.mxu0 0
  %2275 = vmatpush1.bf16.msra.mxu0 %v484
  %2276 = vmatprep.subr.bf16.mxu0 0
  %2277 = vmatpush1.bf16.msra.mxu0 %v560
  %2278 = vmatprep.subr.bf16.mxu0 0
  %2279 = vmatpush1.bf16.msra.mxu0 %v636
  %2280 = vmatprep.subr.bf16.mxu0 0
  %2281 = vmatpush1.bf16.msra.mxu0 %v712
  %2282 = vmatprep.subr.bf16.mxu0 0
  %2283 = vmatpush1.bf16.msra.mxu0 %v847
  %2284 = vmatprep.subr.bf16.mxu0 0
  %2285 = vmatpush1.bf16.msra.mxu0 %v904
  %2286 = vmatprep.subr.bf16.mxu0 0
  %2287 = vmatpush1.bf16.msra.mxu0 %v979
  %2288 = vmatprep.subr.bf16.mxu0 0
  %2289 = vmatpush1.bf16.msra.mxu0 %v1054
  %2290 = vmatprep.subr.bf16.mxu0 0
  %2291 = vmatpush1.bf16.msra.mxu0 %v1129
  %2292 = vmatprep.subr.bf16.mxu0 0
  %2293 = vmatpush1.bf16.msra.mxu0 %v1204
  %2294 = vmatprep.subr.bf16.mxu0 0
  %2295 = vmatpush1.bf16.msra.mxu0 %v1279
  %2296 = vmatprep.mubr.bf16.mxu0 %v1482
  %2297 = vmatmul.mubr.bf16.gmra.mrb[0].mxu0 %v1481
  %v2298 = vpop.f32.mrb[0].mxu0
  %v2299 = vadd.f32 0.0, %v2298
  %v2300 = vpop.f32.mrb[0].mxu0
  %v2301 = vpop.f32.mrb[0].mxu0
  %v2302 = vadd.f32 0.0, %v2301
  %v2303 = vpop.f32.mrb[0].mxu0
  %2304 = vdwg.mxu0
  %2305 = vmatprep.subr.bf16.mxu0 0
  %2306 = vmatpush1.bf16.msra.mxu0 %v1354
  %2307 = vmatprep.subr.bf16.mxu0 0
  %2308 = vmatpush1.bf16.msra.mxu0 %v1429
  %2309 = vmatprep.subr.bf16.mxu0 0
  %2310 = vmatpush1.bf16.msra.mxu0 0
  %2311 = vmatprep.subr.bf16.mxu0 0
  %2312 = vmatpush1.bf16.msra.mxu0 0
  %2313 = vmatprep.subr.bf16.mxu0 0
  %2314 = vmatpush1.bf16.msra.mxu0 0
  %2315 = vmatprep.subr.bf16.mxu0 0
  %2316 = vmatpush1.bf16.msra.mxu0 0
  %2317 = vmatprep.subr.bf16.mxu0 0
  %2318 = vmatpush1.bf16.msra.mxu0 0
  %2319 = vmatprep.subr.bf16.mxu0 0
  %2320 = vmatpush1.bf16.msra.mxu0 0
  %2321 = vmatprep.subr.bf16.mxu0 0
  %2322 = vmatpush1.bf16.msra.mxu0 0
  %2323 = vmatprep.subr.bf16.mxu0 0
  %2324 = vmatpush1.bf16.msra.mxu0 0
  %2325 = vmatprep.subr.bf16.mxu0 0
  %2326 = vmatpush1.bf16.msra.mxu0 0
  %2327 = vmatprep.subr.bf16.mxu0 0
  %2328 = vmatpush1.bf16.msra.mxu0 0
  %2329 = vmatprep.subr.bf16.mxu0 0
  %2330 = vmatpush1.bf16.msra.mxu0 0
  %2331 = vmatprep.subr.bf16.mxu0 0
  %2332 = vmatpush1.bf16.msra.mxu0 0
  %2333 = vmatprep.subr.bf16.mxu0 0
  %2334 = vmatpush1.bf16.msra.mxu0 0
  %2335 = vmatprep.subr.bf16.mxu0 0
  %2336 = vmatpush1.bf16.msra.mxu0 0
  %2337 = vmatprep.mubr.bf16.mxu0 0
  %2338 = vmatmul.mubr.bf16.gmra.mrb[0].mxu0 %v1488
  %v2339 = vpop.f32.mrb[0].mxu0
  %v2340 = vadd.f32 %v2299, %v2339
  %v2341 = vpop.f32.mrb[0].mxu0
  %v2342 = vpop.f32.mrb[0].mxu0
  %v2343 = vadd.f32 %v2302, %v2342
  %v2344 = vpop.f32.mrb[0].mxu0
  %2345 = vdwg.mxu0
  %v2346 = vld [vmem:[%s6] sm:$0xff]
  %v2347 = vld [vmem:[%s6 + $0x8] sm:$0xff]
  %v2348 = vld [vmem:[%s6 + $0x10] sm:$0x7]
  %v2352 = vlaneseq
  %v2353 = vshrl.u32 %v2352, 7
  %v2354 = vsub.s32 0, %v2353
  %v2355 = vrot.slane %v2346, %v2354
  %v2356 = vlaneseq
  %v2357 = vshrl.u32 %v2356, 7
  %v2358 = vsub.s32 1, %v2357
  %v2359 = vrot.slane %v2346, %v2358
  %v2360 = vlaneseq
  %v2361 = vshrl.u32 %v2360, 7
  %v2362 = vsub.s32 2, %v2361
  %v2363 = vrot.slane %v2346, %v2362
  %v2364 = vlaneseq
  %v2365 = vshrl.u32 %v2364, 7
  %v2366 = vsub.s32 3, %v2365
  %v2367 = vrot.slane %v2346, %v2366
  %v2368 = vlaneseq
  %v2369 = vshrl.u32 %v2368, 7
  %v2370 = vsub.s32 4, %v2369
  %v2371 = vrot.slane %v2346, %v2370
  %v2372 = vlaneseq
  %v2373 = vshrl.u32 %v2372, 7
  %v2374 = vsub.s32 5, %v2373
  %v2375 = vrot.slane %v2346, %v2374
  %v2376 = vlaneseq
  %v2377 = vshrl.u32 %v2376, 7
  %v2378 = vsub.s32 6, %v2377
  %v2379 = vrot.slane %v2346, %v2378
  %v2380 = vlaneseq
  %v2381 = vshrl.u32 %v2380, 7
  %v2382 = vsub.s32 7, %v2381
  %v2383 = vrot.slane %v2346, %v2382
  %v2384 = vlaneseq
  %v2385 = vshrl.u32 %v2384, 7
  %v2386 = vsub.s32 0, %v2385
  %v2387 = vrot.slane %v2347, %v2386
  %v2388 = vlaneseq
  %v2389 = vshrl.u32 %v2388, 7
  %v2390 = vsub.s32 1, %v2389
  %v2391 = vrot.slane %v2347, %v2390
  %v2392 = vlaneseq
  %v2393 = vshrl.u32 %v2392, 7
  %v2394 = vsub.s32 2, %v2393
  %v2395 = vrot.slane %v2347, %v2394
  %v2396 = vlaneseq
  %v2397 = vshrl.u32 %v2396, 7
  %v2398 = vsub.s32 3, %v2397
  %v2399 = vrot.slane %v2347, %v2398
  %v2400 = vlaneseq
  %v2401 = vshrl.u32 %v2400, 7
  %v2402 = vsub.s32 4, %v2401
  %v2403 = vrot.slane %v2347, %v2402
  %v2404 = vlaneseq
  %v2405 = vshrl.u32 %v2404, 7
  %v2406 = vsub.s32 5, %v2405
  %v2407 = vrot.slane %v2347, %v2406
  %v2408 = vlaneseq
  %v2409 = vshrl.u32 %v2408, 7
  %v2410 = vsub.s32 6, %v2409
  %v2411 = vrot.slane %v2347, %v2410
  %v2412 = vlaneseq
  %v2413 = vshrl.u32 %v2412, 7
  %v2414 = vsub.s32 7, %v2413
  %v2415 = vrot.slane %v2347, %v2414
  %v2416 = vlaneseq
  %v2417 = vshrl.u32 %v2416, 7
  %v2418 = vsub.s32 0, %v2417
  %v2419 = vrot.slane %v2348, %v2418
  %v2420 = vlaneseq
  %v2421 = vshrl.u32 %v2420, 7
  %v2422 = vsub.s32 1, %v2421
  %v2423 = vrot.slane %v2348, %v2422
  %v2424 = vlaneseq
  %v2425 = vshrl.u32 %v2424, 7
  %v2426 = vsub.s32 2, %v2425
  %v2427 = vrot.slane %v2348, %v2426
  %v2447 = vmul.f32 %v1568, %v2355
  %v2448 = vmul.f32 %v1570, %v2359
  %v2449 = vmul.f32 %v1654, %v2363
  %v2450 = vmul.f32 %v1656, %v2367
  %v2451 = vmul.f32 %v1740, %v2371
  %v2452 = vmul.f32 %v1742, %v2375
  %v2453 = vmul.f32 %v1826, %v2379
  %v2454 = vmul.f32 %v1828, %v2383
  %v2455 = vmul.f32 %v1912, %v2387
  %v2456 = vmul.f32 %v1914, %v2391
  %v2457 = vmul.f32 %v1998, %v2395
  %v2458 = vmul.f32 %v2000, %v2399
  %v2459 = vmul.f32 %v2084, %v2403
  %v2460 = vmul.f32 %v2086, %v2407
  %v2461 = vmul.f32 %v2170, %v2411
  %v2462 = vmul.f32 %v2172, %v2415
  %v2463 = vmul.f32 %v2256, %v2419
  %v2464 = vmul.f32 %v2258, %v2423
  %v2465 = vmul.f32 %v2340, %v2427
  %v2466 = vmul.f32 %v1572, %v2355
  %v2467 = vmul.f32 %v1574, %v2359
  %v2468 = vmul.f32 %v1658, %v2363
  %v2469 = vmul.f32 %v1660, %v2367
  %v2470 = vmul.f32 %v1744, %v2371
  %v2471 = vmul.f32 %v1746, %v2375
  %v2472 = vmul.f32 %v1830, %v2379
  %v2473 = vmul.f32 %v1832, %v2383
  %v2474 = vmul.f32 %v1916, %v2387
  %v2475 = vmul.f32 %v1918, %v2391
  %v2476 = vmul.f32 %v2002, %v2395
  %v2477 = vmul.f32 %v2004, %v2399
  %v2478 = vmul.f32 %v2088, %v2403
  %v2479 = vmul.f32 %v2090, %v2407
  %v2480 = vmul.f32 %v2174, %v2411
  %v2481 = vmul.f32 %v2176, %v2415
  %v2482 = vmul.f32 %v2260, %v2419
  %v2483 = vmul.f32 %v2262, %v2423
  %v2484 = vmul.f32 %v2343, %v2427
  %v2485 = vadd.f32 %v2447, %v2448
  %v2486 = vadd.f32 %v2485, %v2449
  %v2487 = vadd.f32 %v2486, %v2450
  %v2488 = vadd.f32 %v2487, %v2451
  %v2489 = vadd.f32 %v2488, %v2452
  %v2490 = vadd.f32 %v2489, %v2453
  %v2491 = vadd.f32 %v2490, %v2454
  %v2492 = vadd.f32 %v2491, %v2455
  %v2493 = vadd.f32 %v2492, %v2456
  %v2494 = vadd.f32 %v2493, %v2457
  %v2495 = vadd.f32 %v2494, %v2458
  %v2496 = vadd.f32 %v2495, %v2459
  %v2497 = vadd.f32 %v2496, %v2460
  %v2498 = vadd.f32 %v2497, %v2461
  %v2499 = vadd.f32 %v2498, %v2462
  %v2500 = vadd.f32 %v2499, %v2463
  %v2501 = vadd.f32 %v2500, %v2464
  %vm2502 = vcmask 64512
  %v2503 = vsel %vm2502, %v2465, 0.0
  %v2504 = vadd.f32 %v2501, %v2503
  %2505 = vadd.xlane.f32.xlu0 %v2504
  %v2506 = vpop.xlane.xlu0 %2505
  %v2507 = vadd.f32 %v2466, %v2467
  %v2508 = vadd.f32 %v2507, %v2468
  %v2509 = vadd.f32 %v2508, %v2469
  %v2510 = vadd.f32 %v2509, %v2470
  %v2511 = vadd.f32 %v2510, %v2471
  %v2512 = vadd.f32 %v2511, %v2472
  %v2513 = vadd.f32 %v2512, %v2473
  %v2514 = vadd.f32 %v2513, %v2474
  %v2515 = vadd.f32 %v2514, %v2475
  %v2516 = vadd.f32 %v2515, %v2476
  %v2517 = vadd.f32 %v2516, %v2477
  %v2518 = vadd.f32 %v2517, %v2478
  %v2519 = vadd.f32 %v2518, %v2479
  %v2520 = vadd.f32 %v2519, %v2480
  %v2521 = vadd.f32 %v2520, %v2481
  %v2522 = vadd.f32 %v2521, %v2482
  %v2523 = vadd.f32 %v2522, %v2483
  %v2524 = vsel %vm2502, %v2484, 0.0
  %v2525 = vadd.f32 %v2523, %v2524
  %2526 = vadd.xlane.f32.xlu0 %v2525
  %v2527 = vpop.xlane.xlu0 %2526
  %v2528 = vmul.f32 %v2506, 0.00048828125
  %v2529 = vmul.f32 %v2527, 0.00048828125
  %v2530 = vsub.f32 %v1568, %v2528
  %v2531 = vsub.f32 %v1570, %v2528
  %v2532 = vsub.f32 %v1654, %v2528
  %v2533 = vsub.f32 %v1656, %v2528
  %v2534 = vsub.f32 %v1740, %v2528
  %v2535 = vsub.f32 %v1742, %v2528
  %v2536 = vsub.f32 %v1826, %v2528
  %v2537 = vsub.f32 %v1828, %v2528
  %v2538 = vsub.f32 %v1912, %v2528
  %v2539 = vsub.f32 %v1914, %v2528
  %v2540 = vsub.f32 %v1998, %v2528
  %v2541 = vsub.f32 %v2000, %v2528
  %v2542 = vsub.f32 %v2084, %v2528
  %v2543 = vsub.f32 %v2086, %v2528
  %v2544 = vsub.f32 %v2170, %v2528
  %v2545 = vsub.f32 %v2172, %v2528
  %v2546 = vsub.f32 %v2256, %v2528
  %v2547 = vsub.f32 %v2258, %v2528
  %v2548 = vsub.f32 %v2340, %v2528
  %v2549 = vsub.f32 %v1572, %v2529
  %v2550 = vsub.f32 %v1574, %v2529
  %v2551 = vsub.f32 %v1658, %v2529
  %v2552 = vsub.f32 %v1660, %v2529
  %v2553 = vsub.f32 %v1744, %v2529
  %v2554 = vsub.f32 %v1746, %v2529
  %v2555 = vsub.f32 %v1830, %v2529
  %v2556 = vsub.f32 %v1832, %v2529
  %v2557 = vsub.f32 %v1916, %v2529
  %v2558 = vsub.f32 %v1918, %v2529
  %v2559 = vsub.f32 %v2002, %v2529
  %v2560 = vsub.f32 %v2004, %v2529
  %v2561 = vsub.f32 %v2088, %v2529
  %v2562 = vsub.f32 %v2090, %v2529
  %v2563 = vsub.f32 %v2174, %v2529
  %v2564 = vsub.f32 %v2176, %v2529
  %v2565 = vsub.f32 %v2260, %v2529
  %v2566 = vsub.f32 %v2262, %v2529
  %v2567 = vsub.f32 %v2343, %v2529
  %v2568 = vmul.f32 %v2530, %v2355
  %v2569 = vmul.f32 %v2531, %v2359
  %v2570 = vmul.f32 %v2532, %v2363
  %v2571 = vmul.f32 %v2533, %v2367
  %v2572 = vmul.f32 %v2534, %v2371
  %v2573 = vmul.f32 %v2535, %v2375
  %v2574 = vmul.f32 %v2536, %v2379
  %v2575 = vmul.f32 %v2537, %v2383
  %v2576 = vmul.f32 %v2538, %v2387
  %v2577 = vmul.f32 %v2539, %v2391
  %v2578 = vmul.f32 %v2540, %v2395
  %v2579 = vmul.f32 %v2541, %v2399
  %v2580 = vmul.f32 %v2542, %v2403
  %v2581 = vmul.f32 %v2543, %v2407
  %v2582 = vmul.f32 %v2544, %v2411
  %v2583 = vmul.f32 %v2545, %v2415
  %v2584 = vmul.f32 %v2546, %v2419
  %v2585 = vmul.f32 %v2547, %v2423
  %v2586 = vmul.f32 %v2548, %v2427
  %v2587 = vmul.f32 %v2549, %v2355
  %v2588 = vmul.f32 %v2550, %v2359
  %v2589 = vmul.f32 %v2551, %v2363
  %v2590 = vmul.f32 %v2552, %v2367
  %v2591 = vmul.f32 %v2553, %v2371
  %v2592 = vmul.f32 %v2554, %v2375
  %v2593 = vmul.f32 %v2555, %v2379
  %v2594 = vmul.f32 %v2556, %v2383
  %v2595 = vmul.f32 %v2557, %v2387
  %v2596 = vmul.f32 %v2558, %v2391
  %v2597 = vmul.f32 %v2559, %v2395
  %v2598 = vmul.f32 %v2560, %v2399
  %v2599 = vmul.f32 %v2561, %v2403
  %v2600 = vmul.f32 %v2562, %v2407
  %v2601 = vmul.f32 %v2563, %v2411
  %v2602 = vmul.f32 %v2564, %v2415
  %v2603 = vmul.f32 %v2565, %v2419
  %v2604 = vmul.f32 %v2566, %v2423
  %v2605 = vmul.f32 %v2567, %v2427
  %v2606 = vmul.f32 %v2568, %v2568
  %v2607 = vmul.f32 %v2569, %v2569
  %v2608 = vmul.f32 %v2570, %v2570
  %v2609 = vmul.f32 %v2571, %v2571
  %v2610 = vmul.f32 %v2572, %v2572
  %v2611 = vmul.f32 %v2573, %v2573
  %v2612 = vmul.f32 %v2574, %v2574
  %v2613 = vmul.f32 %v2575, %v2575
  %v2614 = vmul.f32 %v2576, %v2576
  %v2615 = vmul.f32 %v2577, %v2577
  %v2616 = vmul.f32 %v2578, %v2578
  %v2617 = vmul.f32 %v2579, %v2579
  %v2618 = vmul.f32 %v2580, %v2580
  %v2619 = vmul.f32 %v2581, %v2581
  %v2620 = vmul.f32 %v2582, %v2582
  %v2621 = vmul.f32 %v2583, %v2583
  %v2622 = vmul.f32 %v2584, %v2584
  %v2623 = vmul.f32 %v2585, %v2585
  %v2624 = vmul.f32 %v2586, %v2586
  %v2625 = vmul.f32 %v2587, %v2587
  %v2626 = vmul.f32 %v2588, %v2588
  %v2627 = vmul.f32 %v2589, %v2589
  %v2628 = vmul.f32 %v2590, %v2590
  %v2629 = vmul.f32 %v2591, %v2591
  %v2630 = vmul.f32 %v2592, %v2592
  %v2631 = vmul.f32 %v2593, %v2593
  %v2632 = vmul.f32 %v2594, %v2594
  %v2633 = vmul.f32 %v2595, %v2595
  %v2634 = vmul.f32 %v2596, %v2596
  %v2635 = vmul.f32 %v2597, %v2597
  %v2636 = vmul.f32 %v2598, %v2598
  %v2637 = vmul.f32 %v2599, %v2599
  %v2638 = vmul.f32 %v2600, %v2600
  %v2639 = vmul.f32 %v2601, %v2601
  %v2640 = vmul.f32 %v2602, %v2602
  %v2641 = vmul.f32 %v2603, %v2603
  %v2642 = vmul.f32 %v2604, %v2604
  %v2643 = vmul.f32 %v2605, %v2605
  %v2644 = vadd.f32 %v2606, %v2607
  %v2645 = vadd.f32 %v2644, %v2608
  %v2646 = vadd.f32 %v2645, %v2609
  %v2647 = vadd.f32 %v2646, %v2610
  %v2648 = vadd.f32 %v2647, %v2611
  %v2649 = vadd.f32 %v2648, %v2612
  %v2650 = vadd.f32 %v2649, %v2613
  %v2651 = vadd.f32 %v2650, %v2614
  %v2652 = vadd.f32 %v2651, %v2615
  %v2653 = vadd.f32 %v2652, %v2616
  %v2654 = vadd.f32 %v2653, %v2617
  %v2655 = vadd.f32 %v2654, %v2618
  %v2656 = vadd.f32 %v2655, %v2619
  %v2657 = vadd.f32 %v2656, %v2620
  %v2658 = vadd.f32 %v2657, %v2621
  %v2659 = vadd.f32 %v2658, %v2622
  %v2660 = vadd.f32 %v2659, %v2623
  %v2661 = vsel %vm2502, %v2624, 0.0
  %v2662 = vadd.f32 %v2660, %v2661
  %2663 = vadd.xlane.f32.xlu0 %v2662
  %v2664 = vpop.xlane.xlu0 %2663
  %v2665 = vadd.f32 %v2625, %v2626
  %v2666 = vadd.f32 %v2665, %v2627
  %v2667 = vadd.f32 %v2666, %v2628
  %v2668 = vadd.f32 %v2667, %v2629
  %v2669 = vadd.f32 %v2668, %v2630
  %v2670 = vadd.f32 %v2669, %v2631
  %v2671 = vadd.f32 %v2670, %v2632
  %v2672 = vadd.f32 %v2671, %v2633
  %v2673 = vadd.f32 %v2672, %v2634
  %v2674 = vadd.f32 %v2673, %v2635
  %v2675 = vadd.f32 %v2674, %v2636
  %v2676 = vadd.f32 %v2675, %v2637
  %v2677 = vadd.f32 %v2676, %v2638
  %v2678 = vadd.f32 %v2677, %v2639
  %v2679 = vadd.f32 %v2678, %v2640
  %v2680 = vadd.f32 %v2679, %v2641
  %v2681 = vadd.f32 %v2680, %v2642
  %v2682 = vsel %vm2502, %v2643, 0.0
  %v2683 = vadd.f32 %v2681, %v2682
  %2684 = vadd.xlane.f32.xlu0 %v2683
  %v2685 = vpop.xlane.xlu0 %2684
  %v2686 = vmul.f32 %v2664, 0.00048828125
  %v2687 = vmul.f32 %v2685, 0.00048828125
  %v2688 = vadd.f32 %v2686, 1e-05
  %v2689 = vadd.f32 %v2687, 1e-05
  %v2690 = vrsqrt.pop %v2688
  %v2691 = vrsqrt.pop %v2689
  %v2692 = vld [vmem:[%s3] sm:$0xff]
  %v2693 = vld [vmem:[%s3 + $0x8] sm:$0xff]
  %v2694 = vmul.f32 %v2692, %v2690
  %v2695 = vmul.f32 %v2693, %v2691
  %v2696 = vld [vmem:[%s4] sm:$0xff]
  %v2697 = vld [vmem:[%s4 + $0x8] sm:$0xff]
  %v2698 = vmul.f32 %v2528, %v2694
  %v2699 = vmul.f32 %v2529, %v2695
  %v2700 = vsub.f32 %v2696, %v2698
  %v2701 = vsub.f32 %v2697, %v2699
  %2703 = vset.pattern.permute.xlu0 0
  %2704 = vperm.xlu0 %2703, %v2694
  %v2705 = vpop.permute.xlu0 %2704
  %2708 = vset.pattern.permute.xlu0 0
  %2709 = vperm.xlu0 %2708, %v2695
  %v2710 = vpop.permute.xlu0 %2709
  %v2712 = vmul.f32 %v1568, %v2705
  %v2713 = vmul.f32 %v1570, %v2705
  %v2714 = vmul.f32 %v1654, %v2705
  %v2715 = vmul.f32 %v1656, %v2705
  %v2716 = vmul.f32 %v1740, %v2705
  %v2717 = vmul.f32 %v1742, %v2705
  %v2718 = vmul.f32 %v1826, %v2705
  %v2719 = vmul.f32 %v1828, %v2705
  %v2720 = vmul.f32 %v1912, %v2705
  %v2721 = vmul.f32 %v1914, %v2705
  %v2722 = vmul.f32 %v1998, %v2705
  %v2723 = vmul.f32 %v2000, %v2705
  %v2724 = vmul.f32 %v2084, %v2705
  %v2725 = vmul.f32 %v2086, %v2705
  %v2726 = vmul.f32 %v2170, %v2705
  %v2727 = vmul.f32 %v2172, %v2705
  %v2728 = vmul.f32 %v2256, %v2705
  %v2729 = vmul.f32 %v2258, %v2705
  %v2730 = vmul.f32 %v2340, %v2705
  %v2731 = vmul.f32 %v1572, %v2710
  %v2732 = vmul.f32 %v1574, %v2710
  %v2733 = vmul.f32 %v1658, %v2710
  %v2734 = vmul.f32 %v1660, %v2710
  %v2735 = vmul.f32 %v1744, %v2710
  %v2736 = vmul.f32 %v1746, %v2710
  %v2737 = vmul.f32 %v1830, %v2710
  %v2738 = vmul.f32 %v1832, %v2710
  %v2739 = vmul.f32 %v1916, %v2710
  %v2740 = vmul.f32 %v1918, %v2710
  %v2741 = vmul.f32 %v2002, %v2710
  %v2742 = vmul.f32 %v2004, %v2710
  %v2743 = vmul.f32 %v2088, %v2710
  %v2744 = vmul.f32 %v2090, %v2710
  %v2745 = vmul.f32 %v2174, %v2710
  %v2746 = vmul.f32 %v2176, %v2710
  %v2747 = vmul.f32 %v2260, %v2710
  %v2748 = vmul.f32 %v2262, %v2710
  %v2749 = vmul.f32 %v2343, %v2710
  %2751 = vset.pattern.permute.xlu0 0
  %2752 = vperm.xlu0 %2751, %v2700
  %v2753 = vpop.permute.xlu0 %2752
  %2756 = vset.pattern.permute.xlu0 0
  %2757 = vperm.xlu0 %2756, %v2701
  %v2758 = vpop.permute.xlu0 %2757
  %v2760 = vadd.f32 %v2712, %v2753
  %v2761 = vadd.f32 %v2713, %v2753
  %v2762 = vadd.f32 %v2714, %v2753
  %v2763 = vadd.f32 %v2715, %v2753
  %v2764 = vadd.f32 %v2716, %v2753
  %v2765 = vadd.f32 %v2717, %v2753
  %v2766 = vadd.f32 %v2718, %v2753
  %v2767 = vadd.f32 %v2719, %v2753
  %v2768 = vadd.f32 %v2720, %v2753
  %v2769 = vadd.f32 %v2721, %v2753
  %v2770 = vadd.f32 %v2722, %v2753
  %v2771 = vadd.f32 %v2723, %v2753
  %v2772 = vadd.f32 %v2724, %v2753
  %v2773 = vadd.f32 %v2725, %v2753
  %v2774 = vadd.f32 %v2726, %v2753
  %v2775 = vadd.f32 %v2727, %v2753
  %v2776 = vadd.f32 %v2728, %v2753
  %v2777 = vadd.f32 %v2729, %v2753
  %v2778 = vadd.f32 %v2730, %v2753
  %v2779 = vadd.f32 %v2731, %v2758
  %v2780 = vadd.f32 %v2732, %v2758
  %v2781 = vadd.f32 %v2733, %v2758
  %v2782 = vadd.f32 %v2734, %v2758
  %v2783 = vadd.f32 %v2735, %v2758
  %v2784 = vadd.f32 %v2736, %v2758
  %v2785 = vadd.f32 %v2737, %v2758
  %v2786 = vadd.f32 %v2738, %v2758
  %v2787 = vadd.f32 %v2739, %v2758
  %v2788 = vadd.f32 %v2740, %v2758
  %v2789 = vadd.f32 %v2741, %v2758
  %v2790 = vadd.f32 %v2742, %v2758
  %v2791 = vadd.f32 %v2743, %v2758
  %v2792 = vadd.f32 %v2744, %v2758
  %v2793 = vadd.f32 %v2745, %v2758
  %v2794 = vadd.f32 %v2746, %v2758
  %v2795 = vadd.f32 %v2747, %v2758
  %v2796 = vadd.f32 %v2748, %v2758
  %v2797 = vadd.f32 %v2749, %v2758
  %vm2798 = vcmp.ge.f32.partialorder %v2760, 0.0
  %vm2799 = vcmp.ge.f32.partialorder %v2761, 0.0
  %vm2800 = vcmp.ge.f32.partialorder %v2762, 0.0
  %vm2801 = vcmp.ge.f32.partialorder %v2763, 0.0
  %vm2802 = vcmp.ge.f32.partialorder %v2764, 0.0
  %vm2803 = vcmp.ge.f32.partialorder %v2765, 0.0
  %vm2804 = vcmp.ge.f32.partialorder %v2766, 0.0
  %vm2805 = vcmp.ge.f32.partialorder %v2767, 0.0
  %vm2806 = vcmp.ge.f32.partialorder %v2768, 0.0
  %vm2807 = vcmp.ge.f32.partialorder %v2769, 0.0
  %vm2808 = vcmp.ge.f32.partialorder %v2770, 0.0
  %vm2809 = vcmp.ge.f32.partialorder %v2771, 0.0
  %vm2810 = vcmp.ge.f32.partialorder %v2772, 0.0
  %vm2811 = vcmp.ge.f32.partialorder %v2773, 0.0
  %vm2812 = vcmp.ge.f32.partialorder %v2774, 0.0
  %vm2813 = vcmp.ge.f32.partialorder %v2775, 0.0
  %vm2814 = vcmp.ge.f32.partialorder %v2776, 0.0
  %vm2815 = vcmp.ge.f32.partialorder %v2777, 0.0
  %vm2816 = vcmp.ge.f32.partialorder %v2778, 0.0
  %vm2817 = vcmp.ge.f32.partialorder %v2779, 0.0
  %vm2818 = vcmp.ge.f32.partialorder %v2780, 0.0
  %vm2819 = vcmp.ge.f32.partialorder %v2781, 0.0
  %vm2820 = vcmp.ge.f32.partialorder %v2782, 0.0
  %vm2821 = vcmp.ge.f32.partialorder %v2783, 0.0
  %vm2822 = vcmp.ge.f32.partialorder %v2784, 0.0
  %vm2823 = vcmp.ge.f32.partialorder %v2785, 0.0
  %vm2824 = vcmp.ge.f32.partialorder %v2786, 0.0
  %vm2825 = vcmp.ge.f32.partialorder %v2787, 0.0
  %vm2826 = vcmp.ge.f32.partialorder %v2788, 0.0
  %vm2827 = vcmp.ge.f32.partialorder %v2789, 0.0
  %vm2828 = vcmp.ge.f32.partialorder %v2790, 0.0
  %vm2829 = vcmp.ge.f32.partialorder %v2791, 0.0
  %vm2830 = vcmp.ge.f32.partialorder %v2792, 0.0
  %vm2831 = vcmp.ge.f32.partialorder %v2793, 0.0
  %vm2832 = vcmp.ge.f32.partialorder %v2794, 0.0
  %vm2833 = vcmp.ge.f32.partialorder %v2795, 0.0
  %vm2834 = vcmp.ge.f32.partialorder %v2796, 0.0
  %vm2835 = vcmp.ge.f32.partialorder %v2797, 0.0
  %v2836 = vmul.f32 %v2760, 0.2
  %v2837 = vmul.f32 %v2761, 0.2
  %v2838 = vmul.f32 %v2762, 0.2
  %v2839 = vmul.f32 %v2763, 0.2
  %v2840 = vmul.f32 %v2764, 0.2
  %v2841 = vmul.f32 %v2765, 0.2
  %v2842 = vmul.f32 %v2766, 0.2
  %v2843 = vmul.f32 %v2767, 0.2
  %v2844 = vmul.f32 %v2768, 0.2
  %v2845 = vmul.f32 %v2769, 0.2
  %v2846 = vmul.f32 %v2770, 0.2
  %v2847 = vmul.f32 %v2771, 0.2
  %v2848 = vmul.f32 %v2772, 0.2
  %v2849 = vmul.f32 %v2773, 0.2
  %v2850 = vmul.f32 %v2774, 0.2
  %v2851 = vmul.f32 %v2775, 0.2
  %v2852 = vmul.f32 %v2776, 0.2
  %v2853 = vmul.f32 %v2777, 0.2
  %v2854 = vmul.f32 %v2778, 0.2
  %v2855 = vmul.f32 %v2779, 0.2
  %v2856 = vmul.f32 %v2780, 0.2
  %v2857 = vmul.f32 %v2781, 0.2
  %v2858 = vmul.f32 %v2782, 0.2
  %v2859 = vmul.f32 %v2783, 0.2
  %v2860 = vmul.f32 %v2784, 0.2
  %v2861 = vmul.f32 %v2785, 0.2
  %v2862 = vmul.f32 %v2786, 0.2
  %v2863 = vmul.f32 %v2787, 0.2
  %v2864 = vmul.f32 %v2788, 0.2
  %v2865 = vmul.f32 %v2789, 0.2
  %v2866 = vmul.f32 %v2790, 0.2
  %v2867 = vmul.f32 %v2791, 0.2
  %v2868 = vmul.f32 %v2792, 0.2
  %v2869 = vmul.f32 %v2793, 0.2
  %v2870 = vmul.f32 %v2794, 0.2
  %v2871 = vmul.f32 %v2795, 0.2
  %v2872 = vmul.f32 %v2796, 0.2
  %v2873 = vmul.f32 %v2797, 0.2
  %v2874 = vsel %vm2798, %v2760, %v2836
  %v2875 = vsel %vm2799, %v2761, %v2837
  %v2876 = vsel %vm2800, %v2762, %v2838
  %v2877 = vsel %vm2801, %v2763, %v2839
  %v2878 = vsel %vm2802, %v2764, %v2840
  %v2879 = vsel %vm2803, %v2765, %v2841
  %v2880 = vsel %vm2804, %v2766, %v2842
  %v2881 = vsel %vm2805, %v2767, %v2843
  %v2882 = vsel %vm2806, %v2768, %v2844
  %v2883 = vsel %vm2807, %v2769, %v2845
  %v2884 = vsel %vm2808, %v2770, %v2846
  %v2885 = vsel %vm2809, %v2771, %v2847
  %v2886 = vsel %vm2810, %v2772, %v2848
  %v2887 = vsel %vm2811, %v2773, %v2849
  %v2888 = vsel %vm2812, %v2774, %v2850
  %v2889 = vsel %vm2813, %v2775, %v2851
  %v2890 = vsel %vm2814, %v2776, %v2852
  %v2891 = vsel %vm2815, %v2777, %v2853
  %v2892 = vsel %vm2816, %v2778, %v2854
  %v2893 = vsel %vm2817, %v2779, %v2855
  %v2894 = vsel %vm2818, %v2780, %v2856
  %v2895 = vsel %vm2819, %v2781, %v2857
  %v2896 = vsel %vm2820, %v2782, %v2858
  %v2897 = vsel %vm2821, %v2783, %v2859
  %v2898 = vsel %vm2822, %v2784, %v2860
  %v2899 = vsel %vm2823, %v2785, %v2861
  %v2900 = vsel %vm2824, %v2786, %v2862
  %v2901 = vsel %vm2825, %v2787, %v2863
  %v2902 = vsel %vm2826, %v2788, %v2864
  %v2903 = vsel %vm2827, %v2789, %v2865
  %v2904 = vsel %vm2828, %v2790, %v2866
  %v2905 = vsel %vm2829, %v2791, %v2867
  %v2906 = vsel %vm2830, %v2792, %v2868
  %v2907 = vsel %vm2831, %v2793, %v2869
  %v2908 = vsel %vm2832, %v2794, %v2870
  %v2909 = vsel %vm2833, %v2795, %v2871
  %v2910 = vsel %vm2834, %v2796, %v2872
  %v2911 = vsel %vm2835, %v2797, %v2873
  %v2912 = vmul.f32 %v2874, %v2355
  %v2913 = vmul.f32 %v2875, %v2359
  %v2914 = vmul.f32 %v2876, %v2363
  %v2915 = vmul.f32 %v2877, %v2367
  %v2916 = vmul.f32 %v2878, %v2371
  %v2917 = vmul.f32 %v2879, %v2375
  %v2918 = vmul.f32 %v2880, %v2379
  %v2919 = vmul.f32 %v2881, %v2383
  %v2920 = vmul.f32 %v2882, %v2387
  %v2921 = vmul.f32 %v2883, %v2391
  %v2922 = vmul.f32 %v2884, %v2395
  %v2923 = vmul.f32 %v2885, %v2399
  %v2924 = vmul.f32 %v2886, %v2403
  %v2925 = vmul.f32 %v2887, %v2407
  %v2926 = vmul.f32 %v2888, %v2411
  %v2927 = vmul.f32 %v2889, %v2415
  %v2928 = vmul.f32 %v2890, %v2419
  %v2929 = vmul.f32 %v2891, %v2423
  %v2930 = vmul.f32 %v2892, %v2427
  %v2931 = vmul.f32 %v2893, %v2355
  %v2932 = vmul.f32 %v2894, %v2359
  %v2933 = vmul.f32 %v2895, %v2363
  %v2934 = vmul.f32 %v2896, %v2367
  %v2935 = vmul.f32 %v2897, %v2371
  %v2936 = vmul.f32 %v2898, %v2375
  %v2937 = vmul.f32 %v2899, %v2379
  %v2938 = vmul.f32 %v2900, %v2383
  %v2939 = vmul.f32 %v2901, %v2387
  %v2940 = vmul.f32 %v2902, %v2391
  %v2941 = vmul.f32 %v2903, %v2395
  %v2942 = vmul.f32 %v2904, %v2399
  %v2943 = vmul.f32 %v2905, %v2403
  %v2944 = vmul.f32 %v2906, %v2407
  %v2945 = vmul.f32 %v2907, %v2411
  %v2946 = vmul.f32 %v2908, %v2415
  %v2947 = vmul.f32 %v2909, %v2419
  %v2948 = vmul.f32 %v2910, %v2423
  %v2949 = vmul.f32 %v2911, %v2427
  %2950 = vst [vmem:[#allocation2] sm:$0xff] 0
  %2951 = vst [vmem:[#allocation2 + $0x8] sm:$0xff] 0
  %2952 = vst [vmem:[#allocation2 + $0x10] sm:$0xff] 0
  %2953 = vst [vmem:[#allocation2 + $0x18] sm:$0xff] 0
  %2954 = vst [vmem:[#allocation2 + $0x20] sm:$0xff] 0
  %2955 = vst [vmem:[#allocation2 + $0x28] sm:$0xff] 0
  %2956 = vst [vmem:[#allocation2 + $0x30] sm:$0xff] 0
  %2957 = vst [vmem:[#allocation2 + $0x38] sm:$0xff] 0
  %2958 = vst [vmem:[#allocation2 + $0x40] sm:$0xff] 0
  %2959 = vst [vmem:[#allocation2 + $0x48] sm:$0xff] 0
  %2960 = vst [vmem:[#allocation2 + $0x50] sm:$0xff] 0
  %2961 = vst [vmem:[#allocation2 + $0x58] sm:$0xff] 0
  %2962 = vst [vmem:[#allocation2 + $0x60] sm:$0xff] 0
  %2963 = vst [vmem:[#allocation2 + $0x68] sm:$0xff] 0
  %2964 = vst [vmem:[#allocation2 + $0x70] sm:$0xff] 0
  %2965 = vst [vmem:[#allocation2 + $0x78] sm:$0xff] 0
  %2966 = vst [vmem:[#allocation2 + $0x80] sm:$0xff] 0
  %2967 = vst [vmem:[#allocation2 + $0x88] sm:$0xff] 0
  %vm2968 = vcmask 637952
  %2969 = vst.msk [vmem:[#allocation2 + $0x90] sm:$0xff] %vm2968, 0
  %v2970 = vpack.c.bf16 %v2931, %v2912
  %v2971 = vpack.c.bf16 %v2932, %v2913
  %v2972 = vpack.c.bf16 %v2933, %v2914
  %v2973 = vpack.c.bf16 %v2934, %v2915
  %v2974 = vpack.c.bf16 %v2935, %v2916
  %v2975 = vpack.c.bf16 %v2936, %v2917
  %v2976 = vpack.c.bf16 %v2937, %v2918
  %v2977 = vpack.c.bf16 %v2938, %v2919
  %v2978 = vpack.c.bf16 %v2939, %v2920
  %v2979 = vpack.c.bf16 %v2940, %v2921
  %v2980 = vpack.c.bf16 %v2941, %v2922
  %v2981 = vpack.c.bf16 %v2942, %v2923
  %v2982 = vpack.c.bf16 %v2943, %v2924
  %v2983 = vpack.c.bf16 %v2944, %v2925
  %v2984 = vpack.c.bf16 %v2945, %v2926
  %v2985 = vpack.c.bf16 %v2946, %v2927
  %v2986 = vpack.c.bf16 %v2947, %v2928
  %v2987 = vpack.c.bf16 %v2948, %v2929
  %v2988 = vpack.c.bf16 %v2949, %v2930
  %3008 = vrot.lane.b32.xlu0 %v2970, 35
  %v3009 = vpop.permute.xlu0 %3008
  %3010 = vrot.lane.b32.xlu0 %v2971, 35
  %v3011 = vpop.permute.xlu0 %3010
  %3012 = vrot.lane.b32.xlu0 %v2972, 35
  %v3013 = vpop.permute.xlu0 %3012
  %3014 = vrot.lane.b32.xlu0 %v2973, 35
  %v3015 = vpop.permute.xlu0 %3014
  %3016 = vrot.lane.b32.xlu0 %v2974, 35
  %v3017 = vpop.permute.xlu0 %3016
  %3018 = vrot.lane.b32.xlu0 %v2975, 35
  %v3019 = vpop.permute.xlu0 %3018
  %3020 = vrot.lane.b32.xlu0 %v2976, 35
  %v3021 = vpop.permute.xlu0 %3020
  %3022 = vrot.lane.b32.xlu0 %v2977, 35
  %v3023 = vpop.permute.xlu0 %3022
  %3024 = vrot.lane.b32.xlu0 %v2978, 35
  %v3025 = vpop.permute.xlu0 %3024
  %3026 = vrot.lane.b32.xlu0 %v2979, 35
  %v3027 = vpop.permute.xlu0 %3026
  %3028 = vrot.lane.b32.xlu0 %v2980, 35
  %v3029 = vpop.permute.xlu0 %3028
  %3030 = vrot.lane.b32.xlu0 %v2981, 35
  %v3031 = vpop.permute.xlu0 %3030
  %3032 = vrot.lane.b32.xlu0 %v2982, 35
  %v3033 = vpop.permute.xlu0 %3032
  %3034 = vrot.lane.b32.xlu0 %v2983, 35
  %v3035 = vpop.permute.xlu0 %3034
  %3036 = vrot.lane.b32.xlu0 %v2984, 35
  %v3037 = vpop.permute.xlu0 %3036
  %3038 = vrot.lane.b32.xlu0 %v2985, 35
  %v3039 = vpop.permute.xlu0 %3038
  %3040 = vrot.lane.b32.xlu0 %v2986, 35
  %v3041 = vpop.permute.xlu0 %3040
  %3042 = vrot.lane.b32.xlu0 %v2987, 35
  %v3043 = vpop.permute.xlu0 %3042
  %3044 = vrot.lane.b32.xlu0 %v2988, 35
  %v3045 = vpop.permute.xlu0 %3044
  %vm3046 = vcmask 285696
  %v3047 = vsel %vm3046, %v3009, %v3011
  %v3048 = vsel %vm3046, %v3011, %v3013
  %v3049 = vsel %vm3046, %v3013, %v3015
  %v3050 = vsel %vm3046, %v3015, %v3017
  %v3051 = vsel %vm3046, %v3017, %v3019
  %v3052 = vsel %vm3046, %v3019, %v3021
  %v3053 = vsel %vm3046, %v3021, %v3023
  %v3054 = vsel %vm3046, %v3023, %v3025
  %v3055 = vsel %vm3046, %v3025, %v3027
  %v3056 = vsel %vm3046, %v3027, %v3029
  %v3057 = vsel %vm3046, %v3029, %v3031
  %v3058 = vsel %vm3046, %v3031, %v3033
  %v3059 = vsel %vm3046, %v3033, %v3035
  %v3060 = vsel %vm3046, %v3035, %v3037
  %v3061 = vsel %vm3046, %v3037, %v3039
  %v3062 = vsel %vm3046, %v3039, %v3041
  %v3063 = vsel %vm3046, %v3041, %v3043
  %v3064 = vsel %vm3046, %v3043, %v3045
  %vm3084 = vcmask 1047832
  %3085 = vst.msk [vmem:[#allocation2] sm:$0xff] %vm3084, %v3009
  %3086 = vst [vmem:[#allocation2 + $0x8] sm:$0xff] %v3047
  %3087 = vst [vmem:[#allocation2 + $0x10] sm:$0xff] %v3048
  %3088 = vst [vmem:[#allocation2 + $0x18] sm:$0xff] %v3049
  %3089 = vst [vmem:[#allocation2 + $0x20] sm:$0xff] %v3050
  %3090 = vst [vmem:[#allocation2 + $0x28] sm:$0xff] %v3051
  %3091 = vst [vmem:[#allocation2 + $0x30] sm:$0xff] %v3052
  %3092 = vst [vmem:[#allocation2 + $0x38] sm:$0xff] %v3053
  %3093 = vst [vmem:[#allocation2 + $0x40] sm:$0xff] %v3054
  %3094 = vst [vmem:[#allocation2 + $0x48] sm:$0xff] %v3055
  %3095 = vst [vmem:[#allocation2 + $0x50] sm:$0xff] %v3056
  %3096 = vst [vmem:[#allocation2 + $0x58] sm:$0xff] %v3057
  %3097 = vst [vmem:[#allocation2 + $0x60] sm:$0xff] %v3058
  %3098 = vst [vmem:[#allocation2 + $0x68] sm:$0xff] %v3059
  %3099 = vst [vmem:[#allocation2 + $0x70] sm:$0xff] %v3060
  %3100 = vst [vmem:[#allocation2 + $0x78] sm:$0xff] %v3061
  %3101 = vst [vmem:[#allocation2 + $0x80] sm:$0xff] %v3062
  %3102 = vst [vmem:[#allocation2 + $0x88] sm:$0xff] %v3063
  %vm3103 = vcmask 351232
  %3104 = vst.msk [vmem:[#allocation2 + $0x90] sm:$0xff] %vm3103, %v3064
  %v3105 = vld [vmem:[#allocation2] sm:$0xff]
  %v3106 = vld [vmem:[#allocation2 + $0x8] sm:$0xff]
  %v3107 = vld [vmem:[#allocation2 + $0x10] sm:$0xff]
  %v3108 = vld [vmem:[#allocation2 + $0x18] sm:$0xff]
  %v3109 = vld [vmem:[#allocation2 + $0x20] sm:$0xff]
  %v3110 = vld [vmem:[#allocation2 + $0x28] sm:$0xff]
  %v3111 = vld [vmem:[#allocation2 + $0x30] sm:$0xff]
  %v3112 = vld [vmem:[#allocation2 + $0x38] sm:$0xff]
  %v3113 = vld [vmem:[#allocation2 + $0x40] sm:$0xff]
  %v3114 = vld [vmem:[#allocation2 + $0x48] sm:$0xff]
  %v3115 = vld [vmem:[#allocation2 + $0x50] sm:$0xff]
  %v3116 = vld [vmem:[#allocation2 + $0x58] sm:$0xff]
  %v3117 = vld [vmem:[#allocation2 + $0x60] sm:$0xff]
  %v3118 = vld [vmem:[#allocation2 + $0x68] sm:$0xff]
  %v3119 = vld [vmem:[#allocation2 + $0x70] sm:$0xff]
  %v3120 = vld [vmem:[#allocation2 + $0x78] sm:$0xff]
  %v3121 = vld [vmem:[#allocation2 + $0x80] sm:$0xff]
  %v3122 = vld [vmem:[#allocation2 + $0x88] sm:$0xff]
  %v3123 = vld [vmem:[#allocation2 + $0x90] sm:$0xff]
  %3143 = vrot.lane.b32.xlu0 %v3105, 127
  %v3144 = vpop.permute.xlu0 %3143
  %3145 = vrot.lane.b32.xlu0 %v3106, 127
  %v3146 = vpop.permute.xlu0 %3145
  %3147 = vrot.lane.b32.xlu0 %v3107, 127
  %v3148 = vpop.permute.xlu0 %3147
  %3149 = vrot.lane.b32.xlu0 %v3108, 127
  %v3150 = vpop.permute.xlu0 %3149
  %3151 = vrot.lane.b32.xlu0 %v3109, 127
  %v3152 = vpop.permute.xlu0 %3151
  %3153 = vrot.lane.b32.xlu0 %v3110, 127
  %v3154 = vpop.permute.xlu0 %3153
  %3155 = vrot.lane.b32.xlu0 %v3111, 127
  %v3156 = vpop.permute.xlu0 %3155
  %3157 = vrot.lane.b32.xlu0 %v3112, 127
  %v3158 = vpop.permute.xlu0 %3157
  %3159 = vrot.lane.b32.xlu0 %v3113, 127
  %v3160 = vpop.permute.xlu0 %3159
  %3161 = vrot.lane.b32.xlu0 %v3114, 127
  %v3162 = vpop.permute.xlu0 %3161
  %3163 = vrot.lane.b32.xlu0 %v3115, 127
  %v3164 = vpop.permute.xlu0 %3163
  %3165 = vrot.lane.b32.xlu0 %v3116, 127
  %v3166 = vpop.permute.xlu0 %3165
  %3167 = vrot.lane.b32.xlu0 %v3117, 127
  %v3168 = vpop.permute.xlu0 %3167
  %3169 = vrot.lane.b32.xlu0 %v3118, 127
  %v3170 = vpop.permute.xlu0 %3169
  %3171 = vrot.lane.b32.xlu0 %v3119, 127
  %v3172 = vpop.permute.xlu0 %3171
  %3173 = vrot.lane.b32.xlu0 %v3120, 127
  %v3174 = vpop.permute.xlu0 %3173
  %3175 = vrot.lane.b32.xlu0 %v3121, 127
  %v3176 = vpop.permute.xlu0 %3175
  %3177 = vrot.lane.b32.xlu0 %v3122, 127
  %v3178 = vpop.permute.xlu0 %3177
  %3179 = vrot.lane.b32.xlu0 %v3123, 127
  %v3180 = vpop.permute.xlu0 %3179
  %v3181 = vsel %vm181, %v3144, %v3146
  %v3182 = vsel %vm181, %v3146, %v3148
  %v3183 = vsel %vm181, %v3148, %v3150
  %v3184 = vsel %vm181, %v3150, %v3152
  %v3185 = vsel %vm181, %v3152, %v3154
  %v3186 = vsel %vm181, %v3154, %v3156
  %v3187 = vsel %vm181, %v3156, %v3158
  %v3188 = vsel %vm181, %v3158, %v3160
  %v3189 = vsel %vm181, %v3160, %v3162
  %v3190 = vsel %vm181, %v3162, %v3164
  %v3191 = vsel %vm181, %v3164, %v3166
  %v3192 = vsel %vm181, %v3166, %v3168
  %v3193 = vsel %vm181, %v3168, %v3170
  %v3194 = vsel %vm181, %v3170, %v3172
  %v3195 = vsel %vm181, %v3172, %v3174
  %v3196 = vsel %vm181, %v3174, %v3176
  %v3197 = vsel %vm181, %v3176, %v3178
  %v3198 = vsel %vm181, %v3178, %v3180
  %3218 = vrot.lane.b32.xlu0 %v3105, 126
  %v3219 = vpop.permute.xlu0 %3218
  %3220 = vrot.lane.b32.xlu0 %v3106, 126
  %v3221 = vpop.permute.xlu0 %3220
  %3222 = vrot.lane.b32.xlu0 %v3107, 126
  %v3223 = vpop.permute.xlu0 %3222
  %3224 = vrot.lane.b32.xlu0 %v3108, 126
  %v3225 = vpop.permute.xlu0 %3224
  %3226 = vrot.lane.b32.xlu0 %v3109, 126
  %v3227 = vpop.permute.xlu0 %3226
  %3228 = vrot.lane.b32.xlu0 %v3110, 126
  %v3229 = vpop.permute.xlu0 %3228
  %3230 = vrot.lane.b32.xlu0 %v3111, 126
  %v3231 = vpop.permute.xlu0 %3230
  %3232 = vrot.lane.b32.xlu0 %v3112, 126
  %v3233 = vpop.permute.xlu0 %3232
  %3234 = vrot.lane.b32.xlu0 %v3113, 126
  %v3235 = vpop.permute.xlu0 %3234
  %3236 = vrot.lane.b32.xlu0 %v3114, 126
  %v3237 = vpop.permute.xlu0 %3236
  %3238 = vrot.lane.b32.xlu0 %v3115, 126
  %v3239 = vpop.permute.xlu0 %3238
  %3240 = vrot.lane.b32.xlu0 %v3116, 126
  %v3241 = vpop.permute.xlu0 %3240
  %3242 = vrot.lane.b32.xlu0 %v3117, 126
  %v3243 = vpop.permute.xlu0 %3242
  %3244 = vrot.lane.b32.xlu0 %v3118, 126
  %v3245 = vpop.permute.xlu0 %3244
  %3246 = vrot.lane.b32.xlu0 %v3119, 126
  %v3247 = vpop.permute.xlu0 %3246
  %3248 = vrot.lane.b32.xlu0 %v3120, 126
  %v3249 = vpop.permute.xlu0 %3248
  %3250 = vrot.lane.b32.xlu0 %v3121, 126
  %v3251 = vpop.permute.xlu0 %3250
  %3252 = vrot.lane.b32.xlu0 %v3122, 126
  %v3253 = vpop.permute.xlu0 %3252
  %3254 = vrot.lane.b32.xlu0 %v3123, 126
  %v3255 = vpop.permute.xlu0 %3254
  %v3256 = vsel %vm257, %v3219, %v3221
  %v3257 = vsel %vm257, %v3221, %v3223
  %v3258 = vsel %vm257, %v3223, %v3225
  %v3259 = vsel %vm257, %v3225, %v3227
  %v3260 = vsel %vm257, %v3227, %v3229
  %v3261 = vsel %vm257, %v3229, %v3231
  %v3262 = vsel %vm257, %v3231, %v3233
  %v3263 = vsel %vm257, %v3233, %v3235
  %v3264 = vsel %vm257, %v3235, %v3237
  %v3265 = vsel %vm257, %v3237, %v3239
  %v3266 = vsel %vm257, %v3239, %v3241
  %v3267 = vsel %vm257, %v3241, %v3243
  %v3268 = vsel %vm257, %v3243, %v3245
  %v3269 = vsel %vm257, %v3245, %v3247
  %v3270 = vsel %vm257, %v3247, %v3249
  %v3271 = vsel %vm257, %v3249, %v3251
  %v3272 = vsel %vm257, %v3251, %v3253
  %v3273 = vsel %vm257, %v3253, %v3255
  %3293 = vrot.lane.b32.xlu0 %v3105, 94
  %v3294 = vpop.permute.xlu0 %3293
  %3295 = vrot.lane.b32.xlu0 %v3106, 94
  %v3296 = vpop.permute.xlu0 %3295
  %3297 = vrot.lane.b32.xlu0 %v3107, 94
  %v3298 = vpop.permute.xlu0 %3297
  %3299 = vrot.lane.b32.xlu0 %v3108, 94
  %v3300 = vpop.permute.xlu0 %3299
  %3301 = vrot.lane.b32.xlu0 %v3109, 94
  %v3302 = vpop.permute.xlu0 %3301
  %3303 = vrot.lane.b32.xlu0 %v3110, 94
  %v3304 = vpop.permute.xlu0 %3303
  %3305 = vrot.lane.b32.xlu0 %v3111, 94
  %v3306 = vpop.permute.xlu0 %3305
  %3307 = vrot.lane.b32.xlu0 %v3112, 94
  %v3308 = vpop.permute.xlu0 %3307
  %3309 = vrot.lane.b32.xlu0 %v3113, 94
  %v3310 = vpop.permute.xlu0 %3309
  %3311 = vrot.lane.b32.xlu0 %v3114, 94
  %v3312 = vpop.permute.xlu0 %3311
  %3313 = vrot.lane.b32.xlu0 %v3115, 94
  %v3314 = vpop.permute.xlu0 %3313
  %3315 = vrot.lane.b32.xlu0 %v3116, 94
  %v3316 = vpop.permute.xlu0 %3315
  %3317 = vrot.lane.b32.xlu0 %v3117, 94
  %v3318 = vpop.permute.xlu0 %3317
  %3319 = vrot.lane.b32.xlu0 %v3118, 94
  %v3320 = vpop.permute.xlu0 %3319
  %3321 = vrot.lane.b32.xlu0 %v3119, 94
  %v3322 = vpop.permute.xlu0 %3321
  %3323 = vrot.lane.b32.xlu0 %v3120, 94
  %v3324 = vpop.permute.xlu0 %3323
  %3325 = vrot.lane.b32.xlu0 %v3121, 94
  %v3326 = vpop.permute.xlu0 %3325
  %3327 = vrot.lane.b32.xlu0 %v3122, 94
  %v3328 = vpop.permute.xlu0 %3327
  %3329 = vrot.lane.b32.xlu0 %v3123, 94
  %v3330 = vpop.permute.xlu0 %3329
  %v3331 = vsel %vm333, %v3294, %v3296
  %v3332 = vsel %vm333, %v3296, %v3298
  %v3333 = vsel %vm333, %v3298, %v3300
  %v3334 = vsel %vm333, %v3300, %v3302
  %v3335 = vsel %vm333, %v3302, %v3304
  %v3336 = vsel %vm333, %v3304, %v3306
  %v3337 = vsel %vm333, %v3306, %v3308
  %v3338 = vsel %vm333, %v3308, %v3310
  %v3339 = vsel %vm333, %v3310, %v3312
  %v3340 = vsel %vm333, %v3312, %v3314
  %v3341 = vsel %vm333, %v3314, %v3316
  %v3342 = vsel %vm333, %v3316, %v3318
  %v3343 = vsel %vm333, %v3318, %v3320
  %v3344 = vsel %vm333, %v3320, %v3322
  %v3345 = vsel %vm333, %v3322, %v3324
  %v3346 = vsel %vm333, %v3324, %v3326
  %v3347 = vsel %vm333, %v3326, %v3328
  %v3348 = vsel %vm333, %v3328, %v3330
  %3368 = vrot.lane.b32.xlu0 %v3105, 93
  %v3369 = vpop.permute.xlu0 %3368
  %3370 = vrot.lane.b32.xlu0 %v3106, 93
  %v3371 = vpop.permute.xlu0 %3370
  %3372 = vrot.lane.b32.xlu0 %v3107, 93
  %v3373 = vpop.permute.xlu0 %3372
  %3374 = vrot.lane.b32.xlu0 %v3108, 93
  %v3375 = vpop.permute.xlu0 %3374
  %3376 = vrot.lane.b32.xlu0 %v3109, 93
  %v3377 = vpop.permute.xlu0 %3376
  %3378 = vrot.lane.b32.xlu0 %v3110, 93
  %v3379 = vpop.permute.xlu0 %3378
  %3380 = vrot.lane.b32.xlu0 %v3111, 93
  %v3381 = vpop.permute.xlu0 %3380
  %3382 = vrot.lane.b32.xlu0 %v3112, 93
  %v3383 = vpop.permute.xlu0 %3382
  %3384 = vrot.lane.b32.xlu0 %v3113, 93
  %v3385 = vpop.permute.xlu0 %3384
  %3386 = vrot.lane.b32.xlu0 %v3114, 93
  %v3387 = vpop.permute.xlu0 %3386
  %3388 = vrot.lane.b32.xlu0 %v3115, 93
  %v3389 = vpop.permute.xlu0 %3388
  %3390 = vrot.lane.b32.xlu0 %v3116, 93
  %v3391 = vpop.permute.xlu0 %3390
  %3392 = vrot.lane.b32.xlu0 %v3117, 93
  %v3393 = vpop.permute.xlu0 %3392
  %3394 = vrot.lane.b32.xlu0 %v3118, 93
  %v3395 = vpop.permute.xlu0 %3394
  %3396 = vrot.lane.b32.xlu0 %v3119, 93
  %v3397 = vpop.permute.xlu0 %3396
  %3398 = vrot.lane.b32.xlu0 %v3120, 93
  %v3399 = vpop.permute.xlu0 %3398
  %3400 = vrot.lane.b32.xlu0 %v3121, 93
  %v3401 = vpop.permute.xlu0 %3400
  %3402 = vrot.lane.b32.xlu0 %v3122, 93
  %v3403 = vpop.permute.xlu0 %3402
  %3404 = vrot.lane.b32.xlu0 %v3123, 93
  %v3405 = vpop.permute.xlu0 %3404
  %v3406 = vsel %vm409, %v3369, %v3371
  %v3407 = vsel %vm409, %v3371, %v3373
  %v3408 = vsel %vm409, %v3373, %v3375
  %v3409 = vsel %vm409, %v3375, %v3377
  %v3410 = vsel %vm409, %v3377, %v3379
  %v3411 = vsel %vm409, %v3379, %v3381
  %v3412 = vsel %vm409, %v3381, %v3383
  %v3413 = vsel %vm409, %v3383, %v3385
  %v3414 = vsel %vm409, %v3385, %v3387
  %v3415 = vsel %vm409, %v3387, %v3389
  %v3416 = vsel %vm409, %v3389, %v3391
  %v3417 = vsel %vm409, %v3391, %v3393
  %v3418 = vsel %vm409, %v3393, %v3395
  %v3419 = vsel %vm409, %v3395, %v3397
  %v3420 = vsel %vm409, %v3397, %v3399
  %v3421 = vsel %vm409, %v3399, %v3401
  %v3422 = vsel %vm409, %v3401, %v3403
  %v3423 = vsel %vm409, %v3403, %v3405
  %3443 = vrot.lane.b32.xlu0 %v3105, 92
  %v3444 = vpop.permute.xlu0 %3443
  %3445 = vrot.lane.b32.xlu0 %v3106, 92
  %v3446 = vpop.permute.xlu0 %3445
  %3447 = vrot.lane.b32.xlu0 %v3107, 92
  %v3448 = vpop.permute.xlu0 %3447
  %3449 = vrot.lane.b32.xlu0 %v3108, 92
  %v3450 = vpop.permute.xlu0 %3449
  %3451 = vrot.lane.b32.xlu0 %v3109, 92
  %v3452 = vpop.permute.xlu0 %3451
  %3453 = vrot.lane.b32.xlu0 %v3110, 92
  %v3454 = vpop.permute.xlu0 %3453
  %3455 = vrot.lane.b32.xlu0 %v3111, 92
  %v3456 = vpop.permute.xlu0 %3455
  %3457 = vrot.lane.b32.xlu0 %v3112, 92
  %v3458 = vpop.permute.xlu0 %3457
  %3459 = vrot.lane.b32.xlu0 %v3113, 92
  %v3460 = vpop.permute.xlu0 %3459
  %3461 = vrot.lane.b32.xlu0 %v3114, 92
  %v3462 = vpop.permute.xlu0 %3461
  %3463 = vrot.lane.b32.xlu0 %v3115, 92
  %v3464 = vpop.permute.xlu0 %3463
  %3465 = vrot.lane.b32.xlu0 %v3116, 92
  %v3466 = vpop.permute.xlu0 %3465
  %3467 = vrot.lane.b32.xlu0 %v3117, 92
  %v3468 = vpop.permute.xlu0 %3467
  %3469 = vrot.lane.b32.xlu0 %v3118, 92
  %v3470 = vpop.permute.xlu0 %3469
  %3471 = vrot.lane.b32.xlu0 %v3119, 92
  %v3472 = vpop.permute.xlu0 %3471
  %3473 = vrot.lane.b32.xlu0 %v3120, 92
  %v3474 = vpop.permute.xlu0 %3473
  %3475 = vrot.lane.b32.xlu0 %v3121, 92
  %v3476 = vpop.permute.xlu0 %3475
  %3477 = vrot.lane.b32.xlu0 %v3122, 92
  %v3478 = vpop.permute.xlu0 %3477
  %3479 = vrot.lane.b32.xlu0 %v3123, 92
  %v3480 = vpop.permute.xlu0 %3479
  %v3481 = vsel %vm485, %v3444, %v3446
  %v3482 = vsel %vm485, %v3446, %v3448
  %v3483 = vsel %vm485, %v3448, %v3450
  %v3484 = vsel %vm485, %v3450, %v3452
  %v3485 = vsel %vm485, %v3452, %v3454
  %v3486 = vsel %vm485, %v3454, %v3456
  %v3487 = vsel %vm485, %v3456, %v3458
  %v3488 = vsel %vm485, %v3458, %v3460
  %v3489 = vsel %vm485, %v3460, %v3462
  %v3490 = vsel %vm485, %v3462, %v3464
  %v3491 = vsel %vm485, %v3464, %v3466
  %v3492 = vsel %vm485, %v3466, %v3468
  %v3493 = vsel %vm485, %v3468, %v3470
  %v3494 = vsel %vm485, %v3470, %v3472
  %v3495 = vsel %vm485, %v3472, %v3474
  %v3496 = vsel %vm485, %v3474, %v3476
  %v3497 = vsel %vm485, %v3476, %v3478
  %v3498 = vsel %vm485, %v3478, %v3480
  %3518 = vrot.lane.b32.xlu0 %v3105, 60
  %v3519 = vpop.permute.xlu0 %3518
  %3520 = vrot.lane.b32.xlu0 %v3106, 60
  %v3521 = vpop.permute.xlu0 %3520
  %3522 = vrot.lane.b32.xlu0 %v3107, 60
  %v3523 = vpop.permute.xlu0 %3522
  %3524 = vrot.lane.b32.xlu0 %v3108, 60
  %v3525 = vpop.permute.xlu0 %3524
  %3526 = vrot.lane.b32.xlu0 %v3109, 60
  %v3527 = vpop.permute.xlu0 %3526
  %3528 = vrot.lane.b32.xlu0 %v3110, 60
  %v3529 = vpop.permute.xlu0 %3528
  %3530 = vrot.lane.b32.xlu0 %v3111, 60
  %v3531 = vpop.permute.xlu0 %3530
  %3532 = vrot.lane.b32.xlu0 %v3112, 60
  %v3533 = vpop.permute.xlu0 %3532
  %3534 = vrot.lane.b32.xlu0 %v3113, 60
  %v3535 = vpop.permute.xlu0 %3534
  %3536 = vrot.lane.b32.xlu0 %v3114, 60
  %v3537 = vpop.permute.xlu0 %3536
  %3538 = vrot.lane.b32.xlu0 %v3115, 60
  %v3539 = vpop.permute.xlu0 %3538
  %3540 = vrot.lane.b32.xlu0 %v3116, 60
  %v3541 = vpop.permute.xlu0 %3540
  %3542 = vrot.lane.b32.xlu0 %v3117, 60
  %v3543 = vpop.permute.xlu0 %3542
  %3544 = vrot.lane.b32.xlu0 %v3118, 60
  %v3545 = vpop.permute.xlu0 %3544
  %3546 = vrot.lane.b32.xlu0 %v3119, 60
  %v3547 = vpop.permute.xlu0 %3546
  %3548 = vrot.lane.b32.xlu0 %v3120, 60
  %v3549 = vpop.permute.xlu0 %3548
  %3550 = vrot.lane.b32.xlu0 %v3121, 60
  %v3551 = vpop.permute.xlu0 %3550
  %3552 = vrot.lane.b32.xlu0 %v3122, 60
  %v3553 = vpop.permute.xlu0 %3552
  %3554 = vrot.lane.b32.xlu0 %v3123, 60
  %v3555 = vpop.permute.xlu0 %3554
  %v3556 = vsel %vm561, %v3519, %v3521
  %v3557 = vsel %vm561, %v3521, %v3523
  %v3558 = vsel %vm561, %v3523, %v3525
  %v3559 = vsel %vm561, %v3525, %v3527
  %v3560 = vsel %vm561, %v3527, %v3529
  %v3561 = vsel %vm561, %v3529, %v3531
  %v3562 = vsel %vm561, %v3531, %v3533
  %v3563 = vsel %vm561, %v3533, %v3535
  %v3564 = vsel %vm561, %v3535, %v3537
  %v3565 = vsel %vm561, %v3537, %v3539
  %v3566 = vsel %vm561, %v3539, %v3541
  %v3567 = vsel %vm561, %v3541, %v3543
  %v3568 = vsel %vm561, %v3543, %v3545
  %v3569 = vsel %vm561, %v3545, %v3547
  %v3570 = vsel %vm561, %v3547, %v3549
  %v3571 = vsel %vm561, %v3549, %v3551
  %v3572 = vsel %vm561, %v3551, %v3553
  %v3573 = vsel %vm561, %v3553, %v3555
  %3593 = vrot.lane.b32.xlu0 %v3105, 59
  %v3594 = vpop.permute.xlu0 %3593
  %3595 = vrot.lane.b32.xlu0 %v3106, 59
  %v3596 = vpop.permute.xlu0 %3595
  %3597 = vrot.lane.b32.xlu0 %v3107, 59
  %v3598 = vpop.permute.xlu0 %3597
  %3599 = vrot.lane.b32.xlu0 %v3108, 59
  %v3600 = vpop.permute.xlu0 %3599
  %3601 = vrot.lane.b32.xlu0 %v3109, 59
  %v3602 = vpop.permute.xlu0 %3601
  %3603 = vrot.lane.b32.xlu0 %v3110, 59
  %v3604 = vpop.permute.xlu0 %3603
  %3605 = vrot.lane.b32.xlu0 %v3111, 59
  %v3606 = vpop.permute.xlu0 %3605
  %3607 = vrot.lane.b32.xlu0 %v3112, 59
  %v3608 = vpop.permute.xlu0 %3607
  %3609 = vrot.lane.b32.xlu0 %v3113, 59
  %v3610 = vpop.permute.xlu0 %3609
  %3611 = vrot.lane.b32.xlu0 %v3114, 59
  %v3612 = vpop.permute.xlu0 %3611
  %3613 = vrot.lane.b32.xlu0 %v3115, 59
  %v3614 = vpop.permute.xlu0 %3613
  %3615 = vrot.lane.b32.xlu0 %v3116, 59
  %v3616 = vpop.permute.xlu0 %3615
  %3617 = vrot.lane.b32.xlu0 %v3117, 59
  %v3618 = vpop.permute.xlu0 %3617
  %3619 = vrot.lane.b32.xlu0 %v3118, 59
  %v3620 = vpop.permute.xlu0 %3619
  %3621 = vrot.lane.b32.xlu0 %v3119, 59
  %v3622 = vpop.permute.xlu0 %3621
  %3623 = vrot.lane.b32.xlu0 %v3120, 59
  %v3624 = vpop.permute.xlu0 %3623
  %3625 = vrot.lane.b32.xlu0 %v3121, 59
  %v3626 = vpop.permute.xlu0 %3625
  %3627 = vrot.lane.b32.xlu0 %v3122, 59
  %v3628 = vpop.permute.xlu0 %3627
  %3629 = vrot.lane.b32.xlu0 %v3123, 59
  %v3630 = vpop.permute.xlu0 %3629
  %v3631 = vsel %vm637, %v3594, %v3596
  %v3632 = vsel %vm637, %v3596, %v3598
  %v3633 = vsel %vm637, %v3598, %v3600
  %v3634 = vsel %vm637, %v3600, %v3602
  %v3635 = vsel %vm637, %v3602, %v3604
  %v3636 = vsel %vm637, %v3604, %v3606
  %v3637 = vsel %vm637, %v3606, %v3608
  %v3638 = vsel %vm637, %v3608, %v3610
  %v3639 = vsel %vm637, %v3610, %v3612
  %v3640 = vsel %vm637, %v3612, %v3614
  %v3641 = vsel %vm637, %v3614, %v3616
  %v3642 = vsel %vm637, %v3616, %v3618
  %v3643 = vsel %vm637, %v3618, %v3620
  %v3644 = vsel %vm637, %v3620, %v3622
  %v3645 = vsel %vm637, %v3622, %v3624
  %v3646 = vsel %vm637, %v3624, %v3626
  %v3647 = vsel %vm637, %v3626, %v3628
  %v3648 = vsel %vm637, %v3628, %v3630
  %3668 = vrot.lane.b32.xlu0 %v3105, 58
  %v3669 = vpop.permute.xlu0 %3668
  %3670 = vrot.lane.b32.xlu0 %v3106, 58
  %v3671 = vpop.permute.xlu0 %3670
  %3672 = vrot.lane.b32.xlu0 %v3107, 58
  %v3673 = vpop.permute.xlu0 %3672
  %3674 = vrot.lane.b32.xlu0 %v3108, 58
  %v3675 = vpop.permute.xlu0 %3674
  %3676 = vrot.lane.b32.xlu0 %v3109, 58
  %v3677 = vpop.permute.xlu0 %3676
  %3678 = vrot.lane.b32.xlu0 %v3110, 58
  %v3679 = vpop.permute.xlu0 %3678
  %3680 = vrot.lane.b32.xlu0 %v3111, 58
  %v3681 = vpop.permute.xlu0 %3680
  %3682 = vrot.lane.b32.xlu0 %v3112, 58
  %v3683 = vpop.permute.xlu0 %3682
  %3684 = vrot.lane.b32.xlu0 %v3113, 58
  %v3685 = vpop.permute.xlu0 %3684
  %3686 = vrot.lane.b32.xlu0 %v3114, 58
  %v3687 = vpop.permute.xlu0 %3686
  %3688 = vrot.lane.b32.xlu0 %v3115, 58
  %v3689 = vpop.permute.xlu0 %3688
  %3690 = vrot.lane.b32.xlu0 %v3116, 58
  %v3691 = vpop.permute.xlu0 %3690
  %3692 = vrot.lane.b32.xlu0 %v3117, 58
  %v3693 = vpop.permute.xlu0 %3692
  %3694 = vrot.lane.b32.xlu0 %v3118, 58
  %v3695 = vpop.permute.xlu0 %3694
  %3696 = vrot.lane.b32.xlu0 %v3119, 58
  %v3697 = vpop.permute.xlu0 %3696
  %3698 = vrot.lane.b32.xlu0 %v3120, 58
  %v3699 = vpop.permute.xlu0 %3698
  %3700 = vrot.lane.b32.xlu0 %v3121, 58
  %v3701 = vpop.permute.xlu0 %3700
  %3702 = vrot.lane.b32.xlu0 %v3122, 58
  %v3703 = vpop.permute.xlu0 %3702
  %3704 = vrot.lane.b32.xlu0 %v3123, 58
  %v3705 = vpop.permute.xlu0 %3704
  %v3706 = vsel %vm713, %v3669, %v3671
  %v3707 = vsel %vm713, %v3671, %v3673
  %v3708 = vsel %vm713, %v3673, %v3675
  %v3709 = vsel %vm713, %v3675, %v3677
  %v3710 = vsel %vm713, %v3677, %v3679
  %v3711 = vsel %vm713, %v3679, %v3681
  %v3712 = vsel %vm713, %v3681, %v3683
  %v3713 = vsel %vm713, %v3683, %v3685
  %v3714 = vsel %vm713, %v3685, %v3687
  %v3715 = vsel %vm713, %v3687, %v3689
  %v3716 = vsel %vm713, %v3689, %v3691
  %v3717 = vsel %vm713, %v3691, %v3693
  %v3718 = vsel %vm713, %v3693, %v3695
  %v3719 = vsel %vm713, %v3695, %v3697
  %v3720 = vsel %vm713, %v3697, %v3699
  %v3721 = vsel %vm713, %v3699, %v3701
  %v3722 = vsel %vm713, %v3701, %v3703
  %v3723 = vsel %vm713, %v3703, %v3705
  %v3743 = vld [vmem:[%s5] sm:$0xff]
  %v3744 = vld [vmem:[%s5 + $0x8] sm:$0xff]
  %v3747 = vunpack.c.l.b16 %v3743
  %v3748 = vunpack.c.h.b16 %v3743
  %v3749 = vunpack.c.l.b16 %v3744
  %v3750 = vunpack.c.h.b16 %v3744
  %v3751 = vpack.c.b16 %v3749, %v3747
  %v3752 = vpack.c.b16 %v3750, %v3748
  %vm3754 = vcmask 130048
  %v3756 = vsel %vm3754, %v3752, 0
  %3758 = vmatprep.subr.bf16.mxu0 %v3106
  %3759 = vmatpush1.bf16.msra.mxu0 %v3105
  %3760 = vmatprep.subr.bf16.mxu0 %v3182
  %3761 = vmatpush1.bf16.msra.mxu0 %v3181
  %3762 = vmatprep.subr.bf16.mxu0 %v3257
  %3763 = vmatpush1.bf16.msra.mxu0 %v3256
  %3764 = vmatprep.subr.bf16.mxu0 %v3332
  %3765 = vmatpush1.bf16.msra.mxu0 %v3331
  %3766 = vmatprep.subr.bf16.mxu0 %v3407
  %3767 = vmatpush1.bf16.msra.mxu0 %v3406
  %3768 = vmatprep.subr.bf16.mxu0 %v3482
  %3769 = vmatpush1.bf16.msra.mxu0 %v3481
  %3770 = vmatprep.subr.bf16.mxu0 %v3557
  %3771 = vmatpush1.bf16.msra.mxu0 %v3556
  %3772 = vmatprep.subr.bf16.mxu0 %v3632
  %3773 = vmatpush1.bf16.msra.mxu0 %v3631
  %3774 = vmatprep.subr.bf16.mxu0 %v3707
  %3775 = vmatpush1.bf16.msra.mxu0 %v3706
  %3776 = vmatprep.subr.bf16.mxu0 0
  %3777 = vmatpush1.bf16.msra.mxu0 0
  %3778 = vmatprep.subr.bf16.mxu0 0
  %3779 = vmatpush1.bf16.msra.mxu0 0
  %3780 = vmatprep.subr.bf16.mxu0 0
  %3781 = vmatpush1.bf16.msra.mxu0 0
  %3782 = vmatprep.subr.bf16.mxu0 0
  %3783 = vmatpush1.bf16.msra.mxu0 0
  %3784 = vmatprep.subr.bf16.mxu0 0
  %3785 = vmatpush1.bf16.msra.mxu0 0
  %3786 = vmatprep.subr.bf16.mxu0 0
  %3787 = vmatpush1.bf16.msra.mxu0 0
  %3788 = vmatprep.subr.bf16.mxu0 0
  %3789 = vmatpush1.bf16.msra.mxu0 0
  %3790 = vmatprep.mubr.bf16.mxu0 %v3756
  %3791 = vmatmul.mubr.bf16.gmra.mrb[0].mxu0 %v3751
  %v3792 = vpop.f32.mrb[0].mxu0
  %v3793 = vadd.f32 0.0, %v3792
  %v3794 = vpop.f32.mrb[0].mxu0
  %v3795 = vadd.f32 0.0, %v3794
  %v3796 = vpop.f32.mrb[0].mxu0
  %v3797 = vadd.f32 0.0, %v3796
  %v3798 = vpop.f32.mrb[0].mxu0
  %v3799 = vadd.f32 0.0, %v3798
  %3800 = vdwg.mxu0
  %3801 = vmatprep.subr.bf16.mxu0 %v3108
  %3802 = vmatpush1.bf16.msra.mxu0 %v3107
  %3803 = vmatprep.subr.bf16.mxu0 %v3184
  %3804 = vmatpush1.bf16.msra.mxu0 %v3183
  %3805 = vmatprep.subr.bf16.mxu0 %v3259
  %3806 = vmatpush1.bf16.msra.mxu0 %v3258
  %3807 = vmatprep.subr.bf16.mxu0 %v3334
  %3808 = vmatpush1.bf16.msra.mxu0 %v3333
  %3809 = vmatprep.subr.bf16.mxu0 %v3409
  %3810 = vmatpush1.bf16.msra.mxu0 %v3408
  %3811 = vmatprep.subr.bf16.mxu0 %v3484
  %3812 = vmatpush1.bf16.msra.mxu0 %v3483
  %3813 = vmatprep.subr.bf16.mxu0 %v3559
  %3814 = vmatpush1.bf16.msra.mxu0 %v3558
  %3815 = vmatprep.subr.bf16.mxu0 %v3634
  %3816 = vmatpush1.bf16.msra.mxu0 %v3633
  %3817 = vmatprep.subr.bf16.mxu0 %v3709
  %3818 = vmatpush1.bf16.msra.mxu0 %v3708
  %3819 = vmatprep.subr.bf16.mxu0 0
  %3820 = vmatpush1.bf16.msra.mxu0 0
  %3821 = vmatprep.subr.bf16.mxu0 0
  %3822 = vmatpush1.bf16.msra.mxu0 0
  %3823 = vmatprep.subr.bf16.mxu0 0
  %3824 = vmatpush1.bf16.msra.mxu0 0
  %3825 = vmatprep.subr.bf16.mxu0 0
  %3826 = vmatpush1.bf16.msra.mxu0 0
  %3827 = vmatprep.subr.bf16.mxu0 0
  %3828 = vmatpush1.bf16.msra.mxu0 0
  %3829 = vmatprep.subr.bf16.mxu0 0
  %3830 = vmatpush1.bf16.msra.mxu0 0
  %3831 = vmatprep.subr.bf16.mxu0 0
  %3832 = vmatpush1.bf16.msra.mxu0 0
  %3833 = vmatprep.mubr.bf16.mxu0 %v3756
  %3834 = vmatmul.mubr.bf16.gmra.mrb[0].mxu0 %v3751
  %v3835 = vpop.f32.mrb[0].mxu0
  %v3836 = vadd.f32 0.0, %v3835
  %v3837 = vpop.f32.mrb[0].mxu0
  %v3838 = vadd.f32 0.0, %v3837
  %v3839 = vpop.f32.mrb[0].mxu0
  %v3840 = vadd.f32 0.0, %v3839
  %v3841 = vpop.f32.mrb[0].mxu0
  %v3842 = vadd.f32 0.0, %v3841
  %3843 = vdwg.mxu0
  %3844 = vmatprep.subr.bf16.mxu0 %v3110
  %3845 = vmatpush1.bf16.msra.mxu0 %v3109
  %3846 = vmatprep.subr.bf16.mxu0 %v3186
  %3847 = vmatpush1.bf16.msra.mxu0 %v3185
  %3848 = vmatprep.subr.bf16.mxu0 %v3261
  %3849 = vmatpush1.bf16.msra.mxu0 %v3260
  %3850 = vmatprep.subr.bf16.mxu0 %v3336
  %3851 = vmatpush1.bf16.msra.mxu0 %v3335
  %3852 = vmatprep.subr.bf16.mxu0 %v3411
  %3853 = vmatpush1.bf16.msra.mxu0 %v3410
  %3854 = vmatprep.subr.bf16.mxu0 %v3486
  %3855 = vmatpush1.bf16.msra.mxu0 %v3485
  %3856 = vmatprep.subr.bf16.mxu0 %v3561
  %3857 = vmatpush1.bf16.msra.mxu0 %v3560
  %3858 = vmatprep.subr.bf16.mxu0 %v3636
  %3859 = vmatpush1.bf16.msra.mxu0 %v3635
  %3860 = vmatprep.subr.bf16.mxu0 %v3711
  %3861 = vmatpush1.bf16.msra.mxu0 %v3710
  %3862 = vmatprep.subr.bf16.mxu0 0
  %3863 = vmatpush1.bf16.msra.mxu0 0
  %3864 = vmatprep.subr.bf16.mxu0 0
  %3865 = vmatpush1.bf16.msra.mxu0 0
  %3866 = vmatprep.subr.bf16.mxu0 0
  %3867 = vmatpush1.bf16.msra.mxu0 0
  %3868 = vmatprep.subr.bf16.mxu0 0
  %3869 = vmatpush1.bf16.msra.mxu0 0
  %3870 = vmatprep.subr.bf16.mxu0 0
  %3871 = vmatpush1.bf16.msra.mxu0 0
  %3872 = vmatprep.subr.bf16.mxu0 0
  %3873 = vmatpush1.bf16.msra.mxu0 0
  %3874 = vmatprep.subr.bf16.mxu0 0
  %3875 = vmatpush1.bf16.msra.mxu0 0
  %3876 = vmatprep.mubr.bf16.mxu0 %v3756
  %3877 = vmatmul.mubr.bf16.gmra.mrb[0].mxu0 %v3751
  %v3878 = vpop.f32.mrb[0].mxu0
  %v3879 = vadd.f32 0.0, %v3878
  %v3880 = vpop.f32.mrb[0].mxu0
  %v3881 = vadd.f32 0.0, %v3880
  %v3882 = vpop.f32.mrb[0].mxu0
  %v3883 = vadd.f32 0.0, %v3882
  %v3884 = vpop.f32.mrb[0].mxu0
  %v3885 = vadd.f32 0.0, %v3884
  %3886 = vdwg.mxu0
  %3887 = vmatprep.subr.bf16.mxu0 %v3112
  %3888 = vmatpush1.bf16.msra.mxu0 %v3111
  %3889 = vmatprep.subr.bf16.mxu0 %v3188
  %3890 = vmatpush1.bf16.msra.mxu0 %v3187
  %3891 = vmatprep.subr.bf16.mxu0 %v3263
  %3892 = vmatpush1.bf16.msra.mxu0 %v3262
  %3893 = vmatprep.subr.bf16.mxu0 %v3338
  %3894 = vmatpush1.bf16.msra.mxu0 %v3337
  %3895 = vmatprep.subr.bf16.mxu0 %v3413
  %3896 = vmatpush1.bf16.msra.mxu0 %v3412
  %3897 = vmatprep.subr.bf16.mxu0 %v3488
  %3898 = vmatpush1.bf16.msra.mxu0 %v3487
  %3899 = vmatprep.subr.bf16.mxu0 %v3563
  %3900 = vmatpush1.bf16.msra.mxu0 %v3562
  %3901 = vmatprep.subr.bf16.mxu0 %v3638
  %3902 = vmatpush1.bf16.msra.mxu0 %v3637
  %3903 = vmatprep.subr.bf16.mxu0 %v3713
  %3904 = vmatpush1.bf16.msra.mxu0 %v3712
  %3905 = vmatprep.subr.bf16.mxu0 0
  %3906 = vmatpush1.bf16.msra.mxu0 0
  %3907 = vmatprep.subr.bf16.mxu0 0
  %3908 = vmatpush1.bf16.msra.mxu0 0
  %3909 = vmatprep.subr.bf16.mxu0 0
  %3910 = vmatpush1.bf16.msra.mxu0 0
  %3911 = vmatprep.subr.bf16.mxu0 0
  %3912 = vmatpush1.bf16.msra.mxu0 0
  %3913 = vmatprep.subr.bf16.mxu0 0
  %3914 = vmatpush1.bf16.msra.mxu0 0
  %3915 = vmatprep.subr.bf16.mxu0 0
  %3916 = vmatpush1.bf16.msra.mxu0 0
  %3917 = vmatprep.subr.bf16.mxu0 0
  %3918 = vmatpush1.bf16.msra.mxu0 0
  %3919 = vmatprep.mubr.bf16.mxu0 %v3756
  %3920 = vmatmul.mubr.bf16.gmra.mrb[0].mxu0 %v3751
  %v3921 = vpop.f32.mrb[0].mxu0
  %v3922 = vadd.f32 0.0, %v3921
  %v3923 = vpop.f32.mrb[0].mxu0
  %v3924 = vadd.f32 0.0, %v3923
  %v3925 = vpop.f32.mrb[0].mxu0
  %v3926 = vadd.f32 0.0, %v3925
  %v3927 = vpop.f32.mrb[0].mxu0
  %v3928 = vadd.f32 0.0, %v3927
  %3929 = vdwg.mxu0
  %3930 = vmatprep.subr.bf16.mxu0 %v3114
  %3931 = vmatpush1.bf16.msra.mxu0 %v3113
  %3932 = vmatprep.subr.bf16.mxu0 %v3190
  %3933 = vmatpush1.bf16.msra.mxu0 %v3189
  %3934 = vmatprep.subr.bf16.mxu0 %v3265
  %3935 = vmatpush1.bf16.msra.mxu0 %v3264
  %3936 = vmatprep.subr.bf16.mxu0 %v3340
  %3937 = vmatpush1.bf16.msra.mxu0 %v3339
  %3938 = vmatprep.subr.bf16.mxu0 %v3415
  %3939 = vmatpush1.bf16.msra.mxu0 %v3414
  %3940 = vmatprep.subr.bf16.mxu0 %v3490
  %3941 = vmatpush1.bf16.msra.mxu0 %v3489
  %3942 = vmatprep.subr.bf16.mxu0 %v3565
  %3943 = vmatpush1.bf16.msra.mxu0 %v3564
  %3944 = vmatprep.subr.bf16.mxu0 %v3640
  %3945 = vmatpush1.bf16.msra.mxu0 %v3639
  %3946 = vmatprep.subr.bf16.mxu0 %v3715
  %3947 = vmatpush1.bf16.msra.mxu0 %v3714
  %3948 = vmatprep.subr.bf16.mxu0 0
  %3949 = vmatpush1.bf16.msra.mxu0 0
  %3950 = vmatprep.subr.bf16.mxu0 0
  %3951 = vmatpush1.bf16.msra.mxu0 0
  %3952 = vmatprep.subr.bf16.mxu0 0
  %3953 = vmatpush1.bf16.msra.mxu0 0
  %3954 = vmatprep.subr.bf16.mxu0 0
  %3955 = vmatpush1.bf16.msra.mxu0 0
  %3956 = vmatprep.subr.bf16.mxu0 0
  %3957 = vmatpush1.bf16.msra.mxu0 0
  %3958 = vmatprep.subr.bf16.mxu0 0
  %3959 = vmatpush1.bf16.msra.mxu0 0
  %3960 = vmatprep.subr.bf16.mxu0 0
  %3961 = vmatpush1.bf16.msra.mxu0 0
  %3962 = vmatprep.mubr.bf16.mxu0 %v3756
  %3963 = vmatmul.mubr.bf16.gmra.mrb[0].mxu0 %v3751
  %v3964 = vpop.f32.mrb[0].mxu0
  %v3965 = vadd.f32 0.0, %v3964
  %v3966 = vpop.f32.mrb[0].mxu0
  %v3967 = vadd.f32 0.0, %v3966
  %v3968 = vpop.f32.mrb[0].mxu0
  %v3969 = vadd.f32 0.0, %v3968
  %v3970 = vpop.f32.mrb[0].mxu0
  %v3971 = vadd.f32 0.0, %v3970
  %3972 = vdwg.mxu0
  %3973 = vmatprep.subr.bf16.mxu0 %v3116
  %3974 = vmatpush1.bf16.msra.mxu0 %v3115
  %3975 = vmatprep.subr.bf16.mxu0 %v3192
  %3976 = vmatpush1.bf16.msra.mxu0 %v3191
  %3977 = vmatprep.subr.bf16.mxu0 %v3267
  %3978 = vmatpush1.bf16.msra.mxu0 %v3266
  %3979 = vmatprep.subr.bf16.mxu0 %v3342
  %3980 = vmatpush1.bf16.msra.mxu0 %v3341
  %3981 = vmatprep.subr.bf16.mxu0 %v3417
  %3982 = vmatpush1.bf16.msra.mxu0 %v3416
  %3983 = vmatprep.subr.bf16.mxu0 %v3492
  %3984 = vmatpush1.bf16.msra.mxu0 %v3491
  %3985 = vmatprep.subr.bf16.mxu0 %v3567
  %3986 = vmatpush1.bf16.msra.mxu0 %v3566
  %3987 = vmatprep.subr.bf16.mxu0 %v3642
  %3988 = vmatpush1.bf16.msra.mxu0 %v3641
  %3989 = vmatprep.subr.bf16.mxu0 %v3717
  %3990 = vmatpush1.bf16.msra.mxu0 %v3716
  %3991 = vmatprep.subr.bf16.mxu0 0
  %3992 = vmatpush1.bf16.msra.mxu0 0
  %3993 = vmatprep.subr.bf16.mxu0 0
  %3994 = vmatpush1.bf16.msra.mxu0 0
  %3995 = vmatprep.subr.bf16.mxu0 0
  %3996 = vmatpush1.bf16.msra.mxu0 0
  %3997 = vmatprep.subr.bf16.mxu0 0
  %3998 = vmatpush1.bf16.msra.mxu0 0
  %3999 = vmatprep.subr.bf16.mxu0 0
  %4000 = vmatpush1.bf16.msra.mxu0 0
  %4001 = vmatprep.subr.bf16.mxu0 0
  %4002 = vmatpush1.bf16.msra.mxu0 0
  %4003 = vmatprep.subr.bf16.mxu0 0
  %4004 = vmatpush1.bf16.msra.mxu0 0
  %4005 = vmatprep.mubr.bf16.mxu0 %v3756
  %4006 = vmatmul.mubr.bf16.gmra.mrb[0].mxu0 %v3751
  %v4007 = vpop.f32.mrb[0].mxu0
  %v4008 = vadd.f32 0.0, %v4007
  %v4009 = vpop.f32.mrb[0].mxu0
  %v4010 = vadd.f32 0.0, %v4009
  %v4011 = vpop.f32.mrb[0].mxu0
  %v4012 = vadd.f32 0.0, %v4011
  %v4013 = vpop.f32.mrb[0].mxu0
  %v4014 = vadd.f32 0.0, %v4013
  %4015 = vdwg.mxu0
  %4016 = vmatprep.subr.bf16.mxu0 %v3118
  %4017 = vmatpush1.bf16.msra.mxu0 %v3117
  %4018 = vmatprep.subr.bf16.mxu0 %v3194
  %4019 = vmatpush1.bf16.msra.mxu0 %v3193
  %4020 = vmatprep.subr.bf16.mxu0 %v3269
  %4021 = vmatpush1.bf16.msra.mxu0 %v3268
  %4022 = vmatprep.subr.bf16.mxu0 %v3344
  %4023 = vmatpush1.bf16.msra.mxu0 %v3343
  %4024 = vmatprep.subr.bf16.mxu0 %v3419
  %4025 = vmatpush1.bf16.msra.mxu0 %v3418
  %4026 = vmatprep.subr.bf16.mxu0 %v3494
  %4027 = vmatpush1.bf16.msra.mxu0 %v3493
  %4028 = vmatprep.subr.bf16.mxu0 %v3569
  %4029 = vmatpush1.bf16.msra.mxu0 %v3568
  %4030 = vmatprep.subr.bf16.mxu0 %v3644
  %4031 = vmatpush1.bf16.msra.mxu0 %v3643
  %4032 = vmatprep.subr.bf16.mxu0 %v3719
  %4033 = vmatpush1.bf16.msra.mxu0 %v3718
  %4034 = vmatprep.subr.bf16.mxu0 0
  %4035 = vmatpush1.bf16.msra.mxu0 0
  %4036 = vmatprep.subr.bf16.mxu0 0
  %4037 = vmatpush1.bf16.msra.mxu0 0
  %4038 = vmatprep.subr.bf16.mxu0 0
  %4039 = vmatpush1.bf16.msra.mxu0 0
  %4040 = vmatprep.subr.bf16.mxu0 0
  %4041 = vmatpush1.bf16.msra.mxu0 0
  %4042 = vmatprep.subr.bf16.mxu0 0
  %4043 = vmatpush1.bf16.msra.mxu0 0
  %4044 = vmatprep.subr.bf16.mxu0 0
  %4045 = vmatpush1.bf16.msra.mxu0 0
  %4046 = vmatprep.subr.bf16.mxu0 0
  %4047 = vmatpush1.bf16.msra.mxu0 0
  %4048 = vmatprep.mubr.bf16.mxu0 %v3756
  %4049 = vmatmul.mubr.bf16.gmra.mrb[0].mxu0 %v3751
  %v4050 = vpop.f32.mrb[0].mxu0
  %v4051 = vadd.f32 0.0, %v4050
  %v4052 = vpop.f32.mrb[0].mxu0
  %v4053 = vadd.f32 0.0, %v4052
  %v4054 = vpop.f32.mrb[0].mxu0
  %v4055 = vadd.f32 0.0, %v4054
  %v4056 = vpop.f32.mrb[0].mxu0
  %v4057 = vadd.f32 0.0, %v4056
  %4058 = vdwg.mxu0
  %4059 = vmatprep.subr.bf16.mxu0 %v3120
  %4060 = vmatpush1.bf16.msra.mxu0 %v3119
  %4061 = vmatprep.subr.bf16.mxu0 %v3196
  %4062 = vmatpush1.bf16.msra.mxu0 %v3195
  %4063 = vmatprep.subr.bf16.mxu0 %v3271
  %4064 = vmatpush1.bf16.msra.mxu0 %v3270
  %4065 = vmatprep.subr.bf16.mxu0 %v3346
  %4066 = vmatpush1.bf16.msra.mxu0 %v3345
  %4067 = vmatprep.subr.bf16.mxu0 %v3421
  %4068 = vmatpush1.bf16.msra.mxu0 %v3420
  %4069 = vmatprep.subr.bf16.mxu0 %v3496
  %4070 = vmatpush1.bf16.msra.mxu0 %v3495
  %4071 = vmatprep.subr.bf16.mxu0 %v3571
  %4072 = vmatpush1.bf16.msra.mxu0 %v3570
  %4073 = vmatprep.subr.bf16.mxu0 %v3646
  %4074 = vmatpush1.bf16.msra.mxu0 %v3645
  %4075 = vmatprep.subr.bf16.mxu0 %v3721
  %4076 = vmatpush1.bf16.msra.mxu0 %v3720
  %4077 = vmatprep.subr.bf16.mxu0 0
  %4078 = vmatpush1.bf16.msra.mxu0 0
  %4079 = vmatprep.subr.bf16.mxu0 0
  %4080 = vmatpush1.bf16.msra.mxu0 0
  %4081 = vmatprep.subr.bf16.mxu0 0
  %4082 = vmatpush1.bf16.msra.mxu0 0
  %4083 = vmatprep.subr.bf16.mxu0 0
  %4084 = vmatpush1.bf16.msra.mxu0 0
  %4085 = vmatprep.subr.bf16.mxu0 0
  %4086 = vmatpush1.bf16.msra.mxu0 0
  %4087 = vmatprep.subr.bf16.mxu0 0
  %4088 = vmatpush1.bf16.msra.mxu0 0
  %4089 = vmatprep.subr.bf16.mxu0 0
  %4090 = vmatpush1.bf16.msra.mxu0 0
  %4091 = vmatprep.mubr.bf16.mxu0 %v3756
  %4092 = vmatmul.mubr.bf16.gmra.mrb[0].mxu0 %v3751
  %v4093 = vpop.f32.mrb[0].mxu0
  %v4094 = vadd.f32 0.0, %v4093
  %v4095 = vpop.f32.mrb[0].mxu0
  %v4096 = vadd.f32 0.0, %v4095
  %v4097 = vpop.f32.mrb[0].mxu0
  %v4098 = vadd.f32 0.0, %v4097
  %v4099 = vpop.f32.mrb[0].mxu0
  %v4100 = vadd.f32 0.0, %v4099
  %4101 = vdwg.mxu0
  %4102 = vmatprep.subr.bf16.mxu0 %v3122
  %4103 = vmatpush1.bf16.msra.mxu0 %v3121
  %4104 = vmatprep.subr.bf16.mxu0 %v3198
  %4105 = vmatpush1.bf16.msra.mxu0 %v3197
  %4106 = vmatprep.subr.bf16.mxu0 %v3273
  %4107 = vmatpush1.bf16.msra.mxu0 %v3272
  %4108 = vmatprep.subr.bf16.mxu0 %v3348
  %4109 = vmatpush1.bf16.msra.mxu0 %v3347
  %4110 = vmatprep.subr.bf16.mxu0 %v3423
  %4111 = vmatpush1.bf16.msra.mxu0 %v3422
  %4112 = vmatprep.subr.bf16.mxu0 %v3498
  %4113 = vmatpush1.bf16.msra.mxu0 %v3497
  %4114 = vmatprep.subr.bf16.mxu0 %v3573
  %4115 = vmatpush1.bf16.msra.mxu0 %v3572
  %4116 = vmatprep.subr.bf16.mxu0 %v3648
  %4117 = vmatpush1.bf16.msra.mxu0 %v3647
  %4118 = vmatprep.subr.bf16.mxu0 %v3723
  %4119 = vmatpush1.bf16.msra.mxu0 %v3722
  %4120 = vmatprep.subr.bf16.mxu0 0
  %4121 = vmatpush1.bf16.msra.mxu0 0
  %4122 = vmatprep.subr.bf16.mxu0 0
  %4123 = vmatpush1.bf16.msra.mxu0 0
  %4124 = vmatprep.subr.bf16.mxu0 0
  %4125 = vmatpush1.bf16.msra.mxu0 0
  %4126 = vmatprep.subr.bf16.mxu0 0
  %4127 = vmatpush1.bf16.msra.mxu0 0
  %4128 = vmatprep.subr.bf16.mxu0 0
  %4129 = vmatpush1.bf16.msra.mxu0 0
  %4130 = vmatprep.subr.bf16.mxu0 0
  %4131 = vmatpush1.bf16.msra.mxu0 0
  %4132 = vmatprep.subr.bf16.mxu0 0
  %4133 = vmatpush1.bf16.msra.mxu0 0
  %4134 = vmatprep.mubr.bf16.mxu0 %v3756
  %4135 = vmatmul.mubr.bf16.gmra.mrb[0].mxu0 %v3751
  %v4136 = vpop.f32.mrb[0].mxu0
  %v4137 = vadd.f32 0.0, %v4136
  %v4138 = vpop.f32.mrb[0].mxu0
  %v4139 = vadd.f32 0.0, %v4138
  %v4140 = vpop.f32.mrb[0].mxu0
  %v4141 = vadd.f32 0.0, %v4140
  %v4142 = vpop.f32.mrb[0].mxu0
  %v4143 = vadd.f32 0.0, %v4142
  %4144 = vdwg.mxu0
  %4145 = vmatprep.subr.bf16.mxu0 0
  %4146 = vmatpush1.bf16.msra.mxu0 %v3123
  %4147 = vmatprep.subr.bf16.mxu0 0
  %4148 = vmatpush1.bf16.msra.mxu0 %v3180
  %4149 = vmatprep.subr.bf16.mxu0 0
  %4150 = vmatpush1.bf16.msra.mxu0 %v3255
  %4151 = vmatprep.subr.bf16.mxu0 0
  %4152 = vmatpush1.bf16.msra.mxu0 %v3330
  %4153 = vmatprep.subr.bf16.mxu0 0
  %4154 = vmatpush1.bf16.msra.mxu0 %v3405
  %4155 = vmatprep.subr.bf16.mxu0 0
  %4156 = vmatpush1.bf16.msra.mxu0 %v3480
  %4157 = vmatprep.subr.bf16.mxu0 0
  %4158 = vmatpush1.bf16.msra.mxu0 %v3555
  %4159 = vmatprep.subr.bf16.mxu0 0
  %4160 = vmatpush1.bf16.msra.mxu0 %v3630
  %4161 = vmatprep.subr.bf16.mxu0 0
  %4162 = vmatpush1.bf16.msra.mxu0 %v3705
  %4163 = vmatprep.subr.bf16.mxu0 0
  %4164 = vmatpush1.bf16.msra.mxu0 0
  %4165 = vmatprep.subr.bf16.mxu0 0
  %4166 = vmatpush1.bf16.msra.mxu0 0
  %4167 = vmatprep.subr.bf16.mxu0 0
  %4168 = vmatpush1.bf16.msra.mxu0 0
  %4169 = vmatprep.subr.bf16.mxu0 0
  %4170 = vmatpush1.bf16.msra.mxu0 0
  %4171 = vmatprep.subr.bf16.mxu0 0
  %4172 = vmatpush1.bf16.msra.mxu0 0
  %4173 = vmatprep.subr.bf16.mxu0 0
  %4174 = vmatpush1.bf16.msra.mxu0 0
  %4175 = vmatprep.subr.bf16.mxu0 0
  %4176 = vmatpush1.bf16.msra.mxu0 0
  %4177 = vmatprep.mubr.bf16.mxu0 %v3756
  %4178 = vmatmul.mubr.bf16.gmra.mrb[0].mxu0 %v3751
  %v4179 = vpop.f32.mrb[0].mxu0
  %v4180 = vadd.f32 0.0, %v4179
  %v4181 = vpop.f32.mrb[0].mxu0
  %v4182 = vpop.f32.mrb[0].mxu0
  %v4183 = vadd.f32 0.0, %v4182
  %v4184 = vpop.f32.mrb[0].mxu0
  %4185 = vdwg.mxu0
  %v4186 = vtanh.pop %v3793
  %v4187 = vtanh.pop %v3795
  %v4188 = vtanh.pop %v3836
  %v4189 = vtanh.pop %v3838
  %v4190 = vtanh.pop %v3879
  %v4191 = vtanh.pop %v3881
  %v4192 = vtanh.pop %v3922
  %v4193 = vtanh.pop %v3924
  %v4194 = vtanh.pop %v3965
  %v4195 = vtanh.pop %v3967
  %v4196 = vtanh.pop %v4008
  %v4197 = vtanh.pop %v4010
  %v4198 = vtanh.pop %v4051
  %v4199 = vtanh.pop %v4053
  %v4200 = vtanh.pop %v4094
  %v4201 = vtanh.pop %v4096
  %v4202 = vtanh.pop %v4137
  %v4203 = vtanh.pop %v4139
  %v4204 = vtanh.pop %v4180
  %v4205 = vtanh.pop %v3797
  %v4206 = vtanh.pop %v3799
  %v4207 = vtanh.pop %v3840
  %v4208 = vtanh.pop %v3842
  %v4209 = vtanh.pop %v3883
  %v4210 = vtanh.pop %v3885
  %v4211 = vtanh.pop %v3926
  %v4212 = vtanh.pop %v3928
  %v4213 = vtanh.pop %v3969
  %v4214 = vtanh.pop %v3971
  %v4215 = vtanh.pop %v4012
  %v4216 = vtanh.pop %v4014
  %v4217 = vtanh.pop %v4055
  %v4218 = vtanh.pop %v4057
  %v4219 = vtanh.pop %v4098
  %v4220 = vtanh.pop %v4100
  %v4221 = vtanh.pop %v4141
  %v4222 = vtanh.pop %v4143
  %v4223 = vtanh.pop %v4183
  %4224 = vst [vmem:[%s7] sm:$0xff] %v4186
  %4225 = vst [vmem:[%s7 + $0x8] sm:$0xff] %v4187
  %4226 = vst [vmem:[%s7 + $0x10] sm:$0xff] %v4188
  %4227 = vst [vmem:[%s7 + $0x18] sm:$0xff] %v4189
  %4228 = vst [vmem:[%s7 + $0x20] sm:$0xff] %v4190
  %4229 = vst [vmem:[%s7 + $0x28] sm:$0xff] %v4191
  %4230 = vst [vmem:[%s7 + $0x30] sm:$0xff] %v4192
  %4231 = vst [vmem:[%s7 + $0x38] sm:$0xff] %v4193
  %4232 = vst [vmem:[%s7 + $0x40] sm:$0xff] %v4194
  %4233 = vst [vmem:[%s7 + $0x48] sm:$0xff] %v4195
  %4234 = vst [vmem:[%s7 + $0x50] sm:$0xff] %v4196
  %4235 = vst [vmem:[%s7 + $0x58] sm:$0xff] %v4197
  %4236 = vst [vmem:[%s7 + $0x60] sm:$0xff] %v4198
  %4237 = vst [vmem:[%s7 + $0x68] sm:$0xff] %v4199
  %4238 = vst [vmem:[%s7 + $0x70] sm:$0xff] %v4200
  %4239 = vst [vmem:[%s7 + $0x78] sm:$0xff] %v4201
  %4240 = vst [vmem:[%s7 + $0x80] sm:$0xff] %v4202
  %4241 = vst [vmem:[%s7 + $0x88] sm:$0xff] %v4203
  %4242 = vst.msk [vmem:[%s7 + $0x90] sm:$0xff] %vm2502, %v4204
  %4243 = vst [vmem:[%s7 + $0x98] sm:$0xff] %v4205
  %4244 = vst [vmem:[%s7 + $0xa0] sm:$0xff] %v4206
  %4245 = vst [vmem:[%s7 + $0xa8] sm:$0xff] %v4207
  %4246 = vst [vmem:[%s7 + $0xb0] sm:$0xff] %v4208
  %4247 = vst [vmem:[%s7 + $0xb8] sm:$0xff] %v4209
  %4248 = vst [vmem:[%s7 + $0xc0] sm:$0xff] %v4210
  %4249 = vst [vmem:[%s7 + $0xc8] sm:$0xff] %v4211
  %4250 = vst [vmem:[%s7 + $0xd0] sm:$0xff] %v4212
  %4251 = vst [vmem:[%s7 + $0xd8] sm:$0xff] %v4213
  %4252 = vst [vmem:[%s7 + $0xe0] sm:$0xff] %v4214
  %4253 = vst [vmem:[%s7 + $0xe8] sm:$0xff] %v4215
  %4254 = vst [vmem:[%s7 + $0xf0] sm:$0xff] %v4216
  %4255 = vst [vmem:[%s7 + $0xf8] sm:$0xff] %v4217
  %4256 = vst [vmem:[%s7 + $0x100] sm:$0xff] %v4218
  %4257 = vst [vmem:[%s7 + $0x108] sm:$0xff] %v4219
  %4258 = vst [vmem:[%s7 + $0x110] sm:$0xff] %v4220
  %4259 = vst [vmem:[%s7 + $0x118] sm:$0xff] %v4221
  %4260 = vst [vmem:[%s7 + $0x120] sm:$0xff] %v4222
  %4261 = vst.msk [vmem:[%s7 + $0x128] sm:$0xff] %vm2502, %v4223
  // Predicated region
  $region30: #{net_t32_forward.7} parent=0 // pred_check
    _
  $region31: #{net_t32_forward.7} parent=0 // pred_check_branch
    %4263 = sbr.rel (0) target = $region33
  $region32: #{net_t32_forward.7} parent=0 // pred_region
    _
  $region33: #{net_t32_forward.7} parent=0 // pred_fallthru
    _
  // Predicated region
  $region34: #{net_t32_forward.7} parent=0 // pred_check
    _
  $region35: #{net_t32_forward.7} parent=0 // pred_check_branch
    %4265 = sbr.rel (0) target = $region37
  $region36: #{net_t32_forward.7} parent=0 // pred_region
    _
  $region37: #{net_t32_forward.7} parent=0 // pred_fallthru
    _

</llo_original>
